<compile_context>
chip_gen: v5e
topology: v5e:2x2
jax: 0.10.0
libtpu: 0.0.40
codegen_flags: <defaults>
</compile_context>

<pallas_src>
import math

import jax
import jax.numpy as jnp
from jax.experimental import pallas as pl
from jax.experimental.pallas import tpu as pltpu

# ----------------------------- small synthetic config -----------------------------
CFG = dict(
    in_channels=4,
    out_channels=8,          # PixArt predicts mean + learned-sigma -> 2 * in_channels
    patch_size=2,
    sample_size=16,          # latent H = W
    num_heads=2,
    head_dim=16,             # inner_dim = 32
    num_layers=2,
    ff_mult=4,
    caption_channels=32,     # text-encoder feature dim (cross-attn input)
    caption_seq=8,
    timestep_freq_dim=256,
)

D_MODEL = CFG["num_heads"] * CFG["head_dim"]                # 32
N_HEADS = CFG["num_heads"]
HEAD_DIM = CFG["head_dim"]
N_LAYERS = CFG["num_layers"]
FF_DIM = CFG["ff_mult"] * D_MODEL                           # 128
PATCH_IN = CFG["patch_size"] ** 2 * CFG["in_channels"]      # 16
PATCH_OUT = CFG["patch_size"] ** 2 * CFG["out_channels"]    # 32
SEQ = (CFG["sample_size"] // CFG["patch_size"]) ** 2        # 64
LN_EPS = 1e-6

OUT_LANES = 128            # proj_out padded to a full lane tile -> unmasked stores
BLOB_WIDTH = 256           # >= widest packed row (adaln_w: 6*D = 192)

# ------------------------ static layout of the two weight blobs ------------------------

def _weight_entries():
    D = D_MODEL
    e = [
        ("patch_w", (PATCH_IN, D)),
        ("t_emb_w1", (CFG["timestep_freq_dim"], D)),
        ("t_emb_w2", (D, D)),
        ("adaln_w", (D, 6 * D)),
        ("cap_w1", (CFG["caption_channels"], D)),
        ("cap_w2", (D, D)),
    ]
    for l in range(N_LAYERS):
        e += [
            (f"a1_qkv_w{l}", (D, 3 * D)),
            (f"a1_o_w{l}", (D, D)),
            (f"a2_q_w{l}", (D, D)),
            (f"a2_kv_w{l}", (D, 2 * D)),
            (f"a2_o_w{l}", (D, D)),
            (f"ff_w1{l}", (D, FF_DIM)),
            (f"ff_w2{l}", (FF_DIM, D)),
        ]
    e.append(("proj_w", (D, PATCH_OUT)))
    return e


def _bias_entries():
    D = D_MODEL
    e = [
        ("pos_embed", (SEQ, D)),
        ("patch_b", (1, D)),
        ("t_emb_b1", (1, D)),
        ("t_emb_b2", (1, D)),
        ("adaln_b", (1, 6 * D)),
        ("cap_b1", (1, D)),
        ("cap_b2", (1, D)),
    ]
    for l in range(N_LAYERS):
        e += [
            (f"sst{l}", (6, D)),
            (f"a1_qkv_b{l}", (1, 3 * D)),
            (f"a1_o_b{l}", (1, D)),
            (f"a2_q_b{l}", (1, D)),
            (f"a2_kv_b{l}", (1, 2 * D)),
            (f"a2_o_b{l}", (1, D)),
            (f"ff_b1{l}", (1, FF_DIM)),
            (f"ff_b2{l}", (1, D)),
        ]
    e += [("final_sst", (2, D)), ("proj_b", (1, PATCH_OUT))]
    return e


def _layout(entries, row_align):
    offs, row = {}, 0
    for name, (r, c) in entries:
        offs[name] = (row, r, c)
        row += (-(-r // row_align)) * row_align
    return offs, row


W_ENTRIES = _weight_entries()
B_ENTRIES = _bias_entries()
W_LAYOUT, W_ROWS = _layout(W_ENTRIES, 16)   # bf16 sublane tile = 16 rows
B_LAYOUT, B_ROWS = _layout(B_ENTRIES, 8)    # f32 sublane tile = 8 rows

# ================================ fused Pallas kernel ================================

def _make_kernel(B, S, Sc):
    D, H, dh, FF = D_MODEL, N_HEADS, HEAD_DIM, FF_DIM

    def kernel(patches_ref, tfreq_ref, ctx_ref, encb_ref, wref, bref, out_ref):
        def wv(name, ncols=None):
            r0, r, c = W_LAYOUT[name]
            return wref[r0:r0 + r, 0:(c if ncols is None else ncols)]

        def bv(name, ncols=None):
            r0, r, c = B_LAYOUT[name]
            return bref[r0:r0 + r, 0:(c if ncols is None else ncols)]

        def mm(a, b):
            # MXU matmul: bf16 operands, f32 accumulation.
            return jnp.dot(a.astype(jnp.bfloat16), b.astype(jnp.bfloat16),
                           preferred_element_type=jnp.float32)

        def gelu_tanh(y):
            return 0.5 * y * (1.0 + jnp.tanh(0.7978845608028654 * (y + 0.044715 * y * y * y)))

        def silu(y):
            return y * jax.nn.sigmoid(y)

        def layernorm(z):
            mu = jnp.mean(z, axis=-1, keepdims=True)
            zc = z - mu
            var = jnp.mean(zc * zc, axis=-1, keepdims=True)
            return zc * jax.lax.rsqrt(var + LN_EPS)

        def per_batch(fn):
            # sublane-tile-aligned (S = 64) axis-0 concat of per-batch pieces
            return jnp.concatenate([fn(b) for b in range(B)], axis=0)

        def attention(q, k, v, Skv, o_w, bias=None):
            # q: (B*S, D); k/v: (B*Skv, D); bias: None or (B, Skv).
            # Softmax scale already folded into Q weights.
            # Per-head O-projection is accumulated in f32 (no lane concat of heads).
            acc = None
            for h in range(H):
                cs = slice(h * dh, (h + 1) * dh)
                pv_parts = []
                for b in range(B):
                    qh = q[b * S:(b + 1) * S, cs]
                    kh = k[b * Skv:(b + 1) * Skv, cs]
                    vh = v[b * Skv:(b + 1) * Skv, cs]
                    s = jax.lax.dot_general(
                        qh.astype(jnp.bfloat16), kh.astype(jnp.bfloat16),
                        (((1,), (1,)), ((), ())),
                        preferred_element_type=jnp.float32)            # (S, Skv)
                    if bias is not None:
                        s = s + bias[b:b + 1, :]
                    m = jnp.max(s, axis=-1, keepdims=True)
                    p = jnp.exp(s - m)
                    denom = jnp.sum(p, axis=-1, keepdims=True)
                    pv_parts.append(mm(p, vh) * pl.reciprocal(denom, approx=True))
                pv_h = jnp.concatenate(pv_parts, axis=0)               # (B*S, dh)
                contrib = mm(pv_h, o_w[h * dh:(h + 1) * dh, :])        # (B*S, D)
                acc = contrib if acc is None else acc + contrib
            return acc

        # ----- patch embed + fixed sincos positional embedding (batch folded on M) -----
        pos = bv("pos_embed")                                          # (S, D)
        x = mm(patches_ref[...], wv("patch_w")) + bv("patch_b")
        x = x + jnp.concatenate([pos] * B, axis=0)                     # (B*S, D)

        # ----- AdaLayerNormSingle: timestep conditioning (per batch, M=B) -----
        tf = tfreq_ref[...]                                            # (B, 256)
        emb = silu(mm(tf, wv("t_emb_w1")) + bv("t_emb_b1"))
        embedded_t = mm(emb, wv("t_emb_w2")) + bv("t_emb_b2")          # (B, D)
        t6 = mm(silu(embedded_t), wv("adaln_w")) + bv("adaln_b")       # (B, 6D)

        # ----- caption projection (batch folded on M) -----
        c = gelu_tanh(mm(ctx_ref[...], wv("cap_w1")) + bv("cap_b1"))
        ctx = mm(c, wv("cap_w2")) + bv("cap_b2")                       # (B*Sc, D)

        encb = encb_ref[...]                                           # (B, Sc) additive mask bias

        # ----- transformer blocks (weights resident in VMEM, loop unrolled) -----
        for l in range(N_LAYERS):
            sst = bv(f"sst{l}")                                        # (6, D)

            def mod(zn, sh_row, sc_row):
                def f(b):
                    sh = sst[sh_row:sh_row + 1] + t6[b:b + 1, sh_row * D:(sh_row + 1) * D]
                    sc = sst[sc_row:sc_row + 1] + t6[b:b + 1, sc_row * D:(sc_row + 1) * D]
                    return zn[b * S:(b + 1) * S] * (1.0 + sc) + sh
                return per_batch(f)

            def gate(z, g_row):
                def f(b):
                    g = sst[g_row:g_row + 1] + t6[b:b + 1, g_row * D:(g_row + 1) * D]
                    return z[b * S:(b + 1) * S] * g
                return per_batch(f)

            # self-attention: fused QKV (softmax scale pre-folded into Q), gated residual
            xn = mod(layernorm(x), 0, 1)
            qkv = mm(xn, wv(f"a1_qkv_w{l}")) + bv(f"a1_qkv_b{l}")      # (B*S, 3D)
            a1 = attention(qkv[:, 0:D], qkv[:, D:2 * D], qkv[:, 2 * D:3 * D],
                           S, wv(f"a1_o_w{l}"))
            a1 = a1 + bv(f"a1_o_b{l}")
            x = x + gate(a1, 2)

            # cross-attention (PixArt: no pre-norm, no gate), fused KV, mask bias broadcast
            q = mm(x, wv(f"a2_q_w{l}")) + bv(f"a2_q_b{l}")             # (B*S, D)
            kv = mm(ctx, wv(f"a2_kv_w{l}")) + bv(f"a2_kv_b{l}")        # (B*Sc, 2D)
            a2 = attention(q, kv[:, 0:D], kv[:, D:2 * D], Sc, wv(f"a2_o_w{l}"), bias=encb)
            a2 = a2 + bv(f"a2_o_b{l}")
            x = x + a2

            # feed-forward: linear -> gelu_tanh -> linear, gated residual
            xn = mod(layernorm(x), 3, 4)
            hdn = gelu_tanh(mm(xn, wv(f"ff_w1{l}")) + bv(f"ff_b1{l}"))
            hdn = mm(hdn, wv(f"ff_w2{l}")) + bv(f"ff_b2{l}")
            x = x + gate(hdn, 5)

        # ----- final AdaLN + proj_out (output lane-padded to 128 -> unmasked stores) -----
        fsst = bv("final_sst")                                         # (2, D)
        xn = layernorm(x)

        def fin(b):
            sh = fsst[0:1] + embedded_t[b:b + 1]
            sc = fsst[1:2] + embedded_t[b:b + 1]
            return xn[b * S:(b + 1) * S] * (1.0 + sc) + sh

        x = per_batch(fin)
        out_ref[...] = mm(x, wv("proj_w", OUT_LANES)) + bv("proj_b", OUT_LANES)

    return kernel


def fused_transformer(patches2, tfreq, ctx2, encb, wblob, bblob):
    BS, Cp = patches2.shape
    B, TF = tfreq.shape
    S = BS // B
    Sc = encb.shape[1]
    Cc = ctx2.shape[1]
    D, H, dh, FF, P = D_MODEL, N_HEADS, HEAD_DIM, FF_DIM, PATCH_OUT

    # rough roofline numbers so XLA can schedule surrounding layout ops around the call
    macs = BS * Cp * D + B * (TF * D + D * D + D * 6 * D) + B * Sc * (Cc * D + D * D)
    per_layer = (BS * D * 3 * D + 2 * B * H * S * S * dh + BS * D * D      # self-attn
                 + BS * D * D + B * Sc * D * 2 * D + 2 * B * H * S * Sc * dh + BS * D * D  # cross
                 + 2 * BS * D * FF)                                        # feed-forward
    macs += N_LAYERS * per_layer + BS * D * P
    trans = (N_LAYERS * (B * H * (S * S + S * Sc) + BS * FF) + B * Sc * D + 4 * B * D)
    bytes_acc = (patches2.size * 4 + tfreq.size * 4 + ctx2.size * 4 + encb.size * 4
                 + wblob.size * 2 + bblob.size * 4 + BS * OUT_LANES * 4)

    kernel = _make_kernel(B, S, Sc)
    return pl.pallas_call(
        kernel,
        out_shape=jax.ShapeDtypeStruct((BS, OUT_LANES), jnp.float32),
        cost_estimate=pl.CostEstimate(flops=int(2 * macs),
                                      transcendentals=int(trans),
                                      bytes_accessed=int(bytes_acc)),
    )(patches2, tfreq, ctx2, encb, wblob, bblob)

# =============================== glue (plain JAX) =================================

def timestep_sinusoidal(t, dim, max_period=10000.0):
    # diffusers Timesteps(256, flip_sin_to_cos=True, downscale_freq_shift=0) -> [cos, sin]
    half = dim // 2
    exponent = -math.log(max_period) * jnp.arange(half, dtype=jnp.float32) / half
    freqs = jnp.exp(exponent)
    args = t.astype(jnp.float32)[:, None] * freqs[None, :]
    return jnp.concatenate([jnp.cos(args), jnp.sin(args)], axis=-1)


def _sincos_1d(embed_dim, pos):
    omega = jnp.arange(embed_dim // 2, dtype=jnp.float32) / (embed_dim / 2.0)
    omega = 1.0 / (10000.0 ** omega)
    out = pos[:, None] * omega[None, :]
    return jnp.concatenate([jnp.sin(out), jnp.cos(out)], axis=1)


def get_2d_sincos_pos_embed(embed_dim, grid_size):
    gh = jnp.arange(grid_size, dtype=jnp.float32)
    gw = jnp.arange(grid_size, dtype=jnp.float32)
    grid_w, grid_h = jnp.meshgrid(gw, gh)
    emb_h = _sincos_1d(embed_dim // 2, grid_h.reshape(-1))
    emb_w = _sincos_1d(embed_dim // 2, grid_w.reshape(-1))
    return jnp.concatenate([emb_h, emb_w], axis=1)     # (grid_size**2, embed_dim)


def forward(weights, hidden_states, encoder_hidden_states, timestep, encoder_attention_mask):
    """Equivalent of TracingTransformerWrapper.forward: returns (output,) (return_dict=False).
    added_cond_kwargs = {'resolution': None, 'aspect_ratio': None} -> no additional conditions."""
    B, C, Hh, Ww = hidden_states.shape
    p_sz = CFG["patch_size"]
    h, w = Hh // p_sz, Ww // p_sz
    S = h * w
    Sc = encoder_hidden_states.shape[1]

    # patchify (layout plumbing only; all compute happens inside the fused kernel)
    patches = hidden_states.reshape(B, C, h, p_sz, w, p_sz)
    patches = patches.transpose(0, 2, 4, 1, 3, 5).reshape(B * S, C * p_sz * p_sz)

    t_freq = timestep_sinusoidal(timestep, CFG["timestep_freq_dim"])          # (B, 256)
    ctx = encoder_hidden_states.reshape(B * Sc, -1).astype(jnp.float32)        # (B*Sc, Cc)
    enc_bias = (1.0 - encoder_attention_mask.astype(jnp.float32)) * -10000.0   # (B, Sc)

    out = fused_transformer(patches.astype(jnp.float32), t_freq, ctx, enc_bias,
                            weights["wblob"], weights["bblob"])                # (B*S, 128)
    y = out[:, :PATCH_OUT].reshape(B, S, PATCH_OUT)

    # unpatchify
    out_c = CFG["out_channels"]
    x = y.reshape(B, h, w, p_sz, p_sz, out_c)
    x = jnp.einsum("nhwpqc->nchpwq", x)
    return (x.reshape(B, out_c, h * p_sz, w * p_sz),)

# ===================== deterministic params + weight-blob preparation =====================

def init_params(key):
    D = D_MODEL
    C, p_sz = CFG["in_channels"], CFG["patch_size"]
    ff = FF_DIM
    keys = iter(jax.random.split(key, 256))

    def dense(kin, kout):
        w = 0.02 * jax.random.normal(next(keys), (kin, kout), jnp.float32)
        return w, jnp.zeros((kout,), jnp.float32)

    params = {}
    params["patch_w"], params["patch_b"] = dense(C * p_sz * p_sz, D)
    params["pos_embed"] = get_2d_sincos_pos_embed(D, CFG["sample_size"] // p_sz)
    params["t_emb_w1"], params["t_emb_b1"] = dense(CFG["timestep_freq_dim"], D)
    params["t_emb_w2"], params["t_emb_b2"] = dense(D, D)
    params["adaln_w"], params["adaln_b"] = dense(D, 6 * D)
    params["cap_w1"], params["cap_b1"] = dense(CFG["caption_channels"], D)
    params["cap_w2"], params["cap_b2"] = dense(D, D)

    blocks = []
    for _ in range(N_LAYERS):
        blk = {"scale_shift_table": jax.random.normal(next(keys), (6, D), jnp.float32) / math.sqrt(D)}
        for name in ("attn1", "attn2"):
            a = {}
            a["q_w"], a["q_b"] = dense(D, D)
            a["k_w"], a["k_b"] = dense(D, D)
            a["v_w"], a["v_b"] = dense(D, D)
            a["o_w"], a["o_b"] = dense(D, D)
            blk[name] = a
        blk["ff_w1"], blk["ff_b1"] = dense(D, ff)
        blk["ff_w2"], blk["ff_b2"] = dense(ff, D)
        blocks.append(blk)
    params["blocks"] = blocks

    params["final_scale_shift_table"] = jax.random.normal(next(keys), (2, D), jnp.float32) / math.sqrt(D)
    params["proj_out_w"], params["proj_out_b"] = dense(D, p_sz * p_sz * CFG["out_channels"])
    return params


def prepare_weights(params):
    """Fuse QKV/KV, fold the softmax scale into Q, and pack everything into two blobs:
    one bf16 blob for MXU weights, one f32 blob for biases/tables."""
    scale = 1.0 / math.sqrt(HEAD_DIM)
    arr = {
        "patch_w": params["patch_w"], "patch_b": params["patch_b"][None],
        "pos_embed": params["pos_embed"],
        "t_emb_w1": params["t_emb_w1"], "t_emb_b1": params["t_emb_b1"][None],
        "t_emb_w2": params["t_emb_w2"], "t_emb_b2": params["t_emb_b2"][None],
        "adaln_w": params["adaln_w"], "adaln_b": params["adaln_b"][None],
        "cap_w1": params["cap_w1"], "cap_b1": params["cap_b1"][None],
        "cap_w2": params["cap_w2"], "cap_b2": params["cap_b2"][None],
        "final_sst": params["final_scale_shift_table"],
        "proj_w": params["proj_out_w"], "proj_b": params["proj_out_b"][None],
    }
    for l, blk in enumerate(params["blocks"]):
        a1, a2 = blk["attn1"], blk["attn2"]
        arr[f"sst{l}"] = blk["scale_shift_table"]
        arr[f"a1_qkv_w{l}"] = jnp.concatenate([a1["q_w"] * scale, a1["k_w"], a1["v_w"]], axis=1)
        arr[f"a1_qkv_b{l}"] = jnp.concatenate([a1["q_b"] * scale, a1["k_b"], a1["v_b"]])[None]
        arr[f"a1_o_w{l}"] = a1["o_w"]
        arr[f"a1_o_b{l}"] = a1["o_b"][None]
        arr[f"a2_q_w{l}"] = a2["q_w"] * scale
        arr[f"a2_q_b{l}"] = (a2["q_b"] * scale)[None]
        arr[f"a2_kv_w{l}"] = jnp.concatenate([a2["k_w"], a2["v_w"]], axis=1)
        arr[f"a2_kv_b{l}"] = jnp.concatenate([a2["k_b"], a2["v_b"]])[None]
        arr[f"a2_o_w{l}"] = a2["o_w"]
        arr[f"a2_o_b{l}"] = a2["o_b"][None]
        arr[f"ff_w1{l}"] = blk["ff_w1"]
        arr[f"ff_b1{l}"] = blk["ff_b1"][None]
        arr[f"ff_w2{l}"] = blk["ff_w2"]
        arr[f"ff_b2{l}"] = blk["ff_b2"][None]

    wblob = jnp.zeros((W_ROWS, BLOB_WIDTH), jnp.bfloat16)
    for name, (r, c) in W_ENTRIES:
        r0 = W_LAYOUT[name][0]
        wblob = wblob.at[r0:r0 + r, :c].set(arr[name].astype(jnp.bfloat16))

    bblob = jnp.zeros((B_ROWS, BLOB_WIDTH), jnp.float32)
    for name, (r, c) in B_ENTRIES:
        r0 = B_LAYOUT[name][0]
        bblob = bblob.at[r0:r0 + r, :c].set(arr[name].astype(jnp.float32))

    return {"wblob": wblob, "bblob": bblob}

# ===================== pure-JAX f32 reference (for correctness check) =====================

def forward_ref(params, hidden_states, encoder_hidden_states, timestep, encoder_attention_mask):
    B, C, Hh, Ww = hidden_states.shape
    p_sz = CFG["patch_size"]
    D, nh = D_MODEL, N_HEADS
    dh = D // nh
    h, w = Hh // p_sz, Ww // p_sz
    S = h * w

    def lin(x, wgt, bias, act=None):
        y = x @ wgt + bias
        if act == "gelu":
            y = 0.5 * y * (1.0 + jnp.tanh(0.7978845608028654 * (y + 0.044715 * y * y * y)))
        elif act == "silu":
            y = y * jax.nn.sigmoid(y)
        return y

    def ln_mod(x, shift, scale):
        mu = x.mean(-1, keepdims=True)
        xc = x - mu
        var = (xc * xc).mean(-1, keepdims=True)
        return xc * jax.lax.rsqrt(var + LN_EPS) * (1.0 + scale) + shift

    def attn(pp, xq, xkv, bias):
        Bq, Sq, _ = xq.shape
        Sk = xkv.shape[1]
        q = lin(xq, pp["q_w"], pp["q_b"]).reshape(Bq, Sq, nh, dh).transpose(0, 2, 1, 3)
        k = lin(xkv, pp["k_w"], pp["k_b"]).reshape(Bq, Sk, nh, dh).transpose(0, 2, 1, 3)
        v = lin(xkv, pp["v_w"], pp["v_b"]).reshape(Bq, Sk, nh, dh).transpose(0, 2, 1, 3)
        s = jnp.einsum("bhqd,bhkd->bhqk", q, k) / math.sqrt(dh) + bias[:, None]
        a = jax.nn.softmax(s, axis=-1)
        o = jnp.einsum("bhqk,bhkd->bhqd", a, v).transpose(0, 2, 1, 3).reshape(Bq, Sq, D)
        return lin(o, pp["o_w"], pp["o_b"])

    x = hidden_states.reshape(B, C, h, p_sz, w, p_sz).transpose(0, 2, 4, 1, 3, 5)
    x = x.reshape(B, S, C * p_sz * p_sz)
    x = lin(x, params["patch_w"], params["patch_b"]) + params["pos_embed"][None]

    t_freq = timestep_sinusoidal(timestep, CFG["timestep_freq_dim"])
    emb = lin(t_freq, params["t_emb_w1"], params["t_emb_b1"], "silu")
    embedded_t = lin(emb, params["t_emb_w2"], params["t_emb_b2"])
    t6 = lin(jax.nn.silu(embedded_t), params["adaln_w"], params["adaln_b"])

    ctx = lin(encoder_hidden_states, params["cap_w1"], params["cap_b1"], "gelu")
    ctx = lin(ctx, params["cap_w2"], params["cap_b2"])

    enc_bias = (1.0 - encoder_attention_mask.astype(jnp.float32)) * -10000.0
    enc_bias = jnp.broadcast_to(enc_bias[:, None, :], (B, S, enc_bias.shape[-1]))
    self_bias = jnp.zeros((B, S, S), jnp.float32)

    for blk in params["blocks"]:
        mod = blk["scale_shift_table"][None] + t6.reshape(B, 6, D)
        sm, scm, gm, sp, scp, gp = [mod[:, i:i + 1] for i in range(6)]
        xn = ln_mod(x, sm, scm)
        x = x + gm * attn(blk["attn1"], xn, xn, self_bias)
        x = x + attn(blk["attn2"], x, ctx, enc_bias)
        xn = ln_mod(x, sp, scp)
        hdn = lin(xn, blk["ff_w1"], blk["ff_b1"], "gelu")
        x = x + gp * lin(hdn, blk["ff_w2"], blk["ff_b2"])

    mod = params["final_scale_shift_table"][None] + embedded_t[:, None]
    x = ln_mod(x, mod[:, 0:1], mod[:, 1:2])
    x = lin(x, params["proj_out_w"], params["proj_out_b"])
    x = x.reshape(B, h, w, p_sz, p_sz, CFG["out_channels"])
    x = jnp.einsum("nhwpqc->nchpwq", x)
    return (x.reshape(B, CFG["out_channels"], h * p_sz, w * p_sz),)

# ====================================== main ======================================

if __name__ == "__main__":
    key = jax.random.PRNGKey(0)
    pk, k1, k2 = jax.random.split(key, 3)
    params = init_params(pk)
    weights = prepare_weights(params)

    B = 2
    hidden_states = jax.random.normal(
        k1, (B, CFG["in_channels"], CFG["sample_size"], CFG["sample_size"]), jnp.float32)
    encoder_hidden_states = jax.random.normal(
        k2, (B, CFG["caption_seq"], CFG["caption_channels"]), jnp.float32)
    timestep = jnp.array([999.0, 500.0], jnp.float32)
    encoder_attention_mask = jnp.array([[1, 1, 1, 1, 1, 1, 1, 1],
                                        [1, 1, 1, 1, 1, 0, 0, 0]], jnp.float32)

    out = jax.jit(forward)(weights, hidden_states, encoder_hidden_states,
                           timestep, encoder_attention_mask)
    jax.block_until_ready(out)

    assert out[0].shape == (B, CFG["out_channels"], CFG["sample_size"], CFG["sample_size"])
    assert jnp.isfinite(out[0]).all()

    # Cross-check against a pure-JAX f32 reference (loose tolerance: bf16 MXU + approx reciprocal).
    ref = jax.jit(forward_ref)(params, hidden_states, encoder_hidden_states,
                               timestep, encoder_attention_mask)
    jax.block_until_ready(ref)
    max_diff = float(jnp.max(jnp.abs(out[0] - ref[0])))
    assert max_diff < 1e-1, f"fused kernel mismatch vs reference: max|diff|={max_diff}"

    print("KERNEL_OK")
</pallas_src>

<mosaic_0001>
module attributes {stable_mosaic.version = 11 : i64} {
  func.func @kernel(%arg0: memref<128x16xf32, #tpu.memory_space<vmem>>, %arg1: memref<2x256xf32, #tpu.memory_space<vmem>>, %arg2: memref<16x32xf32, #tpu.memory_space<vmem>>, %arg3: memref<2x8xf32, #tpu.memory_space<vmem>>, %arg4: memref<1072x256xbf16, #tpu.memory_space<vmem>>, %arg5: memref<256x256xf32, #tpu.memory_space<vmem>>, %arg6: memref<128x128xf32, #tpu.memory_space<vmem>>) attributes {dimension_semantics = [], scalar_prefetch = 0 : i64, scratch_operands = 0 : i64, tpu.core_type = #tpu.core_type<tc>} {
    %c0 = arith.constant 0 : index
    %c0_0 = arith.constant 0 : index
    %0 = vector.load %arg5[%c0, %c0_0] : memref<256x256xf32, #tpu.memory_space<vmem>>, vector<64x32xf32>
    %c0_1 = arith.constant 0 : index
    %c0_2 = arith.constant 0 : index
    %1 = vector.load %arg0[%c0_1, %c0_2] : memref<128x16xf32, #tpu.memory_space<vmem>>, vector<128x16xf32>
    %c0_3 = arith.constant 0 : index
    %c0_4 = arith.constant 0 : index
    %2 = vector.load %arg4[%c0_3, %c0_4] : memref<1072x256xbf16, #tpu.memory_space<vmem>>, vector<16x32xbf16>
    %3 = arith.truncf %1 : vector<128x16xf32> to vector<128x16xbf16>
    %cst = arith.constant dense<0.000000e+00> : vector<128x32xf32>
    %4 = tpu.matmul %3, %2, %cst {dimension_numbers = #tpu.dot_dimension_numbers<[1], [0], [0], [1], [0, 0, 1, 1], [], []>} : vector<128x16xbf16>, vector<16x32xbf16>, vector<128x32xf32> -> vector<128x32xf32>
    %c64 = arith.constant 64 : index
    %c0_5 = arith.constant 0 : index
    %5 = vector.load %arg5[%c64, %c0_5] : memref<256x256xf32, #tpu.memory_space<vmem>>, vector<1x32xf32>
    %6 = vector.broadcast %5 : vector<1x32xf32> to vector<128x32xf32>
    %7 = arith.addf %4, %6 : vector<128x32xf32>
    %8 = tpu.concatenate %0, %0 in 0 : vector<64x32xf32>, vector<64x32xf32> -> vector<128x32xf32>
    %9 = arith.addf %7, %8 : vector<128x32xf32>
    %c0_6 = arith.constant 0 : index
    %c0_7 = arith.constant 0 : index
    %10 = vector.load %arg1[%c0_6, %c0_7] : memref<2x256xf32, #tpu.memory_space<vmem>>, vector<2x256xf32>
    %c16 = arith.constant 16 : index
    %c0_8 = arith.constant 0 : index
    %11 = vector.load %arg4[%c16, %c0_8] : memref<1072x256xbf16, #tpu.memory_space<vmem>>, vector<256x32xbf16>
    %12 = arith.truncf %10 : vector<2x256xf32> to vector<2x256xbf16>
    %cst_9 = arith.constant dense<0.000000e+00> : vector<2x32xf32>
    %13 = tpu.matmul %12, %11, %cst_9 {dimension_numbers = #tpu.dot_dimension_numbers<[1], [0], [0], [1], [0, 0, 1, 1], [], []>} : vector<2x256xbf16>, vector<256x32xbf16>, vector<2x32xf32> -> vector<2x32xf32>
    %c72 = arith.constant 72 : index
    %c0_10 = arith.constant 0 : index
    %14 = vector.load %arg5[%c72, %c0_10] : memref<256x256xf32, #tpu.memory_space<vmem>>, vector<1x32xf32>
    %15 = vector.broadcast %14 : vector<1x32xf32> to vector<2x32xf32>
    %16 = arith.addf %13, %15 : vector<2x32xf32>
    %17 = arith.negf %16 : vector<2x32xf32>
    %18 = math.exp %17 : vector<2x32xf32>
    %cst_11 = arith.constant 1.000000e+00 : f32
    %19 = vector.broadcast %cst_11 : f32 to vector<2x32xf32>
    %20 = arith.addf %19, %18 : vector<2x32xf32>
    %21 = arith.divf %19, %20 : vector<2x32xf32>
    %22 = arith.mulf %16, %21 : vector<2x32xf32>
    %c272 = arith.constant 272 : index
    %c0_12 = arith.constant 0 : index
    %23 = vector.load %arg4[%c272, %c0_12] : memref<1072x256xbf16, #tpu.memory_space<vmem>>, vector<32x32xbf16>
    %24 = arith.truncf %22 : vector<2x32xf32> to vector<2x32xbf16>
    %cst_13 = arith.constant dense<0.000000e+00> : vector<2x32xf32>
    %25 = tpu.matmul %24, %23, %cst_13 {dimension_numbers = #tpu.dot_dimension_numbers<[1], [0], [0], [1], [0, 0, 1, 1], [], []>} : vector<2x32xbf16>, vector<32x32xbf16>, vector<2x32xf32> -> vector<2x32xf32>
    %c80 = arith.constant 80 : index
    %c0_14 = arith.constant 0 : index
    %26 = vector.load %arg5[%c80, %c0_14] : memref<256x256xf32, #tpu.memory_space<vmem>>, vector<1x32xf32>
    %27 = vector.broadcast %26 : vector<1x32xf32> to vector<2x32xf32>
    %28 = arith.addf %25, %27 : vector<2x32xf32>
    %29 = arith.negf %28 : vector<2x32xf32>
    %30 = math.exp %29 : vector<2x32xf32>
    %cst_15 = arith.constant 1.000000e+00 : f32
    %31 = vector.broadcast %cst_15 : f32 to vector<2x32xf32>
    %32 = arith.addf %31, %30 : vector<2x32xf32>
    %33 = arith.divf %31, %32 : vector<2x32xf32>
    %34 = arith.mulf %28, %33 : vector<2x32xf32>
    %c304 = arith.constant 304 : index
    %c0_16 = arith.constant 0 : index
    %35 = vector.load %arg4[%c304, %c0_16] : memref<1072x256xbf16, #tpu.memory_space<vmem>>, vector<32x192xbf16>
    %36 = arith.truncf %34 : vector<2x32xf32> to vector<2x32xbf16>
    %cst_17 = arith.constant dense<0.000000e+00> : vector<2x192xf32>
    %37 = tpu.matmul %36, %35, %cst_17 {dimension_numbers = #tpu.dot_dimension_numbers<[1], [0], [0], [1], [0, 0, 1, 1], [], []>} : vector<2x32xbf16>, vector<32x192xbf16>, vector<2x192xf32> -> vector<2x192xf32>
    %c88 = arith.constant 88 : index
    %c0_18 = arith.constant 0 : index
    %38 = vector.load %arg5[%c88, %c0_18] : memref<256x256xf32, #tpu.memory_space<vmem>>, vector<1x192xf32>
    %39 = vector.broadcast %38 : vector<1x192xf32> to vector<2x192xf32>
    %40 = arith.addf %37, %39 : vector<2x192xf32>
    %c0_19 = arith.constant 0 : index
    %c0_20 = arith.constant 0 : index
    %41 = vector.load %arg2[%c0_19, %c0_20] : memref<16x32xf32, #tpu.memory_space<vmem>>, vector<16x32xf32>
    %c336 = arith.constant 336 : index
    %c0_21 = arith.constant 0 : index
    %42 = vector.load %arg4[%c336, %c0_21] : memref<1072x256xbf16, #tpu.memory_space<vmem>>, vector<32x32xbf16>
    %43 = arith.truncf %41 : vector<16x32xf32> to vector<16x32xbf16>
    %cst_22 = arith.constant dense<0.000000e+00> : vector<16x32xf32>
    %44 = tpu.matmul %43, %42, %cst_22 {dimension_numbers = #tpu.dot_dimension_numbers<[1], [0], [0], [1], [0, 0, 1, 1], [], []>} : vector<16x32xbf16>, vector<32x32xbf16>, vector<16x32xf32> -> vector<16x32xf32>
    %c96 = arith.constant 96 : index
    %c0_23 = arith.constant 0 : index
    %45 = vector.load %arg5[%c96, %c0_23] : memref<256x256xf32, #tpu.memory_space<vmem>>, vector<1x32xf32>
    %46 = vector.broadcast %45 : vector<1x32xf32> to vector<16x32xf32>
    %47 = arith.addf %44, %46 : vector<16x32xf32>
    %cst_24 = arith.constant 5.000000e-01 : f32
    %48 = vector.broadcast %cst_24 : f32 to vector<16x32xf32>
    %49 = arith.mulf %48, %47 : vector<16x32xf32>
    %cst_25 = arith.constant 4.471500e-02 : f32
    %50 = vector.broadcast %cst_25 : f32 to vector<16x32xf32>
    %51 = arith.mulf %50, %47 : vector<16x32xf32>
    %52 = arith.mulf %51, %47 : vector<16x32xf32>
    %53 = arith.mulf %52, %47 : vector<16x32xf32>
    %54 = arith.addf %47, %53 : vector<16x32xf32>
    %cst_26 = arith.constant 0.797884583 : f32
    %55 = vector.broadcast %cst_26 : f32 to vector<16x32xf32>
    %56 = arith.mulf %55, %54 : vector<16x32xf32>
    %57 = math.tanh %56 : vector<16x32xf32>
    %cst_27 = arith.constant 1.000000e+00 : f32
    %58 = vector.broadcast %cst_27 : f32 to vector<16x32xf32>
    %59 = arith.addf %58, %57 : vector<16x32xf32>
    %60 = arith.mulf %49, %59 : vector<16x32xf32>
    %c368 = arith.constant 368 : index
    %c0_28 = arith.constant 0 : index
    %61 = vector.load %arg4[%c368, %c0_28] : memref<1072x256xbf16, #tpu.memory_space<vmem>>, vector<32x32xbf16>
    %62 = arith.truncf %60 : vector<16x32xf32> to vector<16x32xbf16>
    %cst_29 = arith.constant dense<0.000000e+00> : vector<16x32xf32>
    %63 = tpu.matmul %62, %61, %cst_29 {dimension_numbers = #tpu.dot_dimension_numbers<[1], [0], [0], [1], [0, 0, 1, 1], [], []>} : vector<16x32xbf16>, vector<32x32xbf16>, vector<16x32xf32> -> vector<16x32xf32>
    %c104 = arith.constant 104 : index
    %c0_30 = arith.constant 0 : index
    %64 = vector.load %arg5[%c104, %c0_30] : memref<256x256xf32, #tpu.memory_space<vmem>>, vector<1x32xf32>
    %65 = vector.broadcast %64 : vector<1x32xf32> to vector<16x32xf32>
    %66 = arith.addf %63, %65 : vector<16x32xf32>
    %c0_31 = arith.constant 0 : index
    %c0_32 = arith.constant 0 : index
    %67 = vector.load %arg3[%c0_31, %c0_32] : memref<2x8xf32, #tpu.memory_space<vmem>>, vector<2x8xf32>
    %c112 = arith.constant 112 : index
    %c0_33 = arith.constant 0 : index
    %68 = vector.load %arg5[%c112, %c0_33] : memref<256x256xf32, #tpu.memory_space<vmem>>, vector<6x32xf32>
    %cst_34 = arith.constant dense<0.000000e+00> : vector<128xf32>
    %69 = vector.multi_reduction <add>, %9, %cst_34 [1] : vector<128x32xf32> to vector<128xf32>
    %70 = vector.shape_cast %69 : vector<128xf32> to vector<128x1xf32>
    %cst_35 = arith.constant 3.200000e+01 : f32
    %71 = vector.broadcast %cst_35 : f32 to vector<128x1xf32>
    %72 = arith.divf %70, %71 : vector<128x1xf32>
    %73 = vector.broadcast %72 : vector<128x1xf32> to vector<128x32xf32>
    %74 = arith.subf %9, %73 : vector<128x32xf32>
    %75 = arith.mulf %74, %74 : vector<128x32xf32>
    %cst_36 = arith.constant dense<0.000000e+00> : vector<128xf32>
    %76 = vector.multi_reduction <add>, %75, %cst_36 [1] : vector<128x32xf32> to vector<128xf32>
    %77 = vector.shape_cast %76 : vector<128xf32> to vector<128x1xf32>
    %cst_37 = arith.constant 3.200000e+01 : f32
    %78 = vector.broadcast %cst_37 : f32 to vector<128x1xf32>
    %79 = arith.divf %77, %78 : vector<128x1xf32>
    %cst_38 = arith.constant 9.99999997E-7 : f32
    %80 = vector.broadcast %cst_38 : f32 to vector<128x1xf32>
    %81 = arith.addf %79, %80 : vector<128x1xf32>
    %82 = math.rsqrt %81 : vector<128x1xf32>
    %83 = vector.broadcast %82 : vector<128x1xf32> to vector<128x32xf32>
    %84 = arith.mulf %74, %83 : vector<128x32xf32>
    %85 = vector.extract_strided_slice %68 {offsets = [0, 0], sizes = [1, 32], strides = [1, 1]} : vector<6x32xf32> to vector<1x32xf32>
    %86 = vector.extract_strided_slice %40 {offsets = [0, 0], sizes = [1, 32], strides = [1, 1]} : vector<2x192xf32> to vector<1x32xf32>
    %87 = arith.addf %85, %86 : vector<1x32xf32>
    %88 = vector.extract_strided_slice %68 {offsets = [1, 0], sizes = [1, 32], strides = [1, 1]} : vector<6x32xf32> to vector<1x32xf32>
    %89 = vector.extract_strided_slice %40 {offsets = [0, 32], sizes = [1, 32], strides = [1, 1]} : vector<2x192xf32> to vector<1x32xf32>
    %90 = arith.addf %88, %89 : vector<1x32xf32>
    %91 = vector.extract_strided_slice %84 {offsets = [0, 0], sizes = [64, 32], strides = [1, 1]} : vector<128x32xf32> to vector<64x32xf32>
    %cst_39 = arith.constant 1.000000e+00 : f32
    %92 = vector.broadcast %cst_39 : f32 to vector<1x32xf32>
    %93 = arith.addf %92, %90 : vector<1x32xf32>
    %94 = vector.broadcast %93 : vector<1x32xf32> to vector<64x32xf32>
    %95 = arith.mulf %91, %94 : vector<64x32xf32>
    %96 = vector.broadcast %87 : vector<1x32xf32> to vector<64x32xf32>
    %97 = arith.addf %95, %96 : vector<64x32xf32>
    %98 = vector.extract_strided_slice %68 {offsets = [0, 0], sizes = [1, 32], strides = [1, 1]} : vector<6x32xf32> to vector<1x32xf32>
    %99 = vector.extract_strided_slice %40 {offsets = [1, 0], sizes = [1, 32], strides = [1, 1]} : vector<2x192xf32> to vector<1x32xf32>
    %100 = arith.addf %98, %99 : vector<1x32xf32>
    %101 = vector.extract_strided_slice %68 {offsets = [1, 0], sizes = [1, 32], strides = [1, 1]} : vector<6x32xf32> to vector<1x32xf32>
    %102 = vector.extract_strided_slice %40 {offsets = [1, 32], sizes = [1, 32], strides = [1, 1]} : vector<2x192xf32> to vector<1x32xf32>
    %103 = arith.addf %101, %102 : vector<1x32xf32>
    %104 = vector.extract_strided_slice %84 {offsets = [64, 0], sizes = [64, 32], strides = [1, 1]} : vector<128x32xf32> to vector<64x32xf32>
    %cst_40 = arith.constant 1.000000e+00 : f32
    %105 = vector.broadcast %cst_40 : f32 to vector<1x32xf32>
    %106 = arith.addf %105, %103 : vector<1x32xf32>
    %107 = vector.broadcast %106 : vector<1x32xf32> to vector<64x32xf32>
    %108 = arith.mulf %104, %107 : vector<64x32xf32>
    %109 = vector.broadcast %100 : vector<1x32xf32> to vector<64x32xf32>
    %110 = arith.addf %108, %109 : vector<64x32xf32>
    %111 = tpu.concatenate %97, %110 in 0 : vector<64x32xf32>, vector<64x32xf32> -> vector<128x32xf32>
    %c400 = arith.constant 400 : index
    %c0_41 = arith.constant 0 : index
    %112 = vector.load %arg4[%c400, %c0_41] : memref<1072x256xbf16, #tpu.memory_space<vmem>>, vector<32x96xbf16>
    %113 = arith.truncf %111 : vector<128x32xf32> to vector<128x32xbf16>
    %cst_42 = arith.constant dense<0.000000e+00> : vector<128x96xf32>
    %114 = tpu.matmul %113, %112, %cst_42 {dimension_numbers = #tpu.dot_dimension_numbers<[1], [0], [0], [1], [0, 0, 1, 1], [], []>} : vector<128x32xbf16>, vector<32x96xbf16>, vector<128x96xf32> -> vector<128x96xf32>
    %c120 = arith.constant 120 : index
    %c0_43 = arith.constant 0 : index
    %115 = vector.load %arg5[%c120, %c0_43] : memref<256x256xf32, #tpu.memory_space<vmem>>, vector<1x96xf32>
    %116 = vector.broadcast %115 : vector<1x96xf32> to vector<128x96xf32>
    %117 = arith.addf %114, %116 : vector<128x96xf32>
    %118 = vector.extract_strided_slice %117 {offsets = [0, 0], sizes = [128, 32], strides = [1, 1]} : vector<128x96xf32> to vector<128x32xf32>
    %119 = vector.extract_strided_slice %117 {offsets = [0, 32], sizes = [128, 32], strides = [1, 1]} : vector<128x96xf32> to vector<128x32xf32>
    %120 = vector.extract_strided_slice %117 {offsets = [0, 64], sizes = [128, 32], strides = [1, 1]} : vector<128x96xf32> to vector<128x32xf32>
    %c432 = arith.constant 432 : index
    %c0_44 = arith.constant 0 : index
    %121 = vector.load %arg4[%c432, %c0_44] : memref<1072x256xbf16, #tpu.memory_space<vmem>>, vector<32x32xbf16>
    %122 = vector.extract_strided_slice %118 {offsets = [0, 0], sizes = [64, 16], strides = [1, 1]} : vector<128x32xf32> to vector<64x16xf32>
    %123 = vector.extract_strided_slice %119 {offsets = [0, 0], sizes = [64, 16], strides = [1, 1]} : vector<128x32xf32> to vector<64x16xf32>
    %124 = vector.extract_strided_slice %120 {offsets = [0, 0], sizes = [64, 16], strides = [1, 1]} : vector<128x32xf32> to vector<64x16xf32>
    %125 = arith.truncf %122 : vector<64x16xf32> to vector<64x16xbf16>
    %126 = arith.truncf %123 : vector<64x16xf32> to vector<64x16xbf16>
    %cst_45 = arith.constant dense<0.000000e+00> : vector<64x64xf32>
    %127 = tpu.matmul %125, %126, %cst_45 {dimension_numbers = #tpu.dot_dimension_numbers<[1], [1], [0], [0], [0, 0, 1, 0], [], []>} : vector<64x16xbf16>, vector<64x16xbf16>, vector<64x64xf32> -> vector<64x64xf32>
    %cst_46 = arith.constant dense<0xFF800000> : vector<64xf32>
    %128 = vector.multi_reduction <maximumf>, %127, %cst_46 [1] : vector<64x64xf32> to vector<64xf32>
    %129 = vector.shape_cast %128 : vector<64xf32> to vector<64x1xf32>
    %130 = vector.broadcast %129 : vector<64x1xf32> to vector<64x64xf32>
    %131 = arith.subf %127, %130 : vector<64x64xf32>
    %132 = math.exp %131 : vector<64x64xf32>
    %cst_47 = arith.constant dense<0.000000e+00> : vector<64xf32>
    %133 = vector.multi_reduction <add>, %132, %cst_47 [1] : vector<64x64xf32> to vector<64xf32>
    %134 = vector.shape_cast %133 : vector<64xf32> to vector<64x1xf32>
    %135 = arith.truncf %132 : vector<64x64xf32> to vector<64x64xbf16>
    %136 = arith.truncf %124 : vector<64x16xf32> to vector<64x16xbf16>
    %cst_48 = arith.constant dense<0.000000e+00> : vector<64x16xf32>
    %137 = tpu.matmul %135, %136, %cst_48 {dimension_numbers = #tpu.dot_dimension_numbers<[1], [0], [0], [1], [0, 0, 1, 1], [], []>} : vector<64x64xbf16>, vector<64x16xbf16>, vector<64x16xf32> -> vector<64x16xf32>
    %138 = tpu.reciprocal %134 {approx = true} : vector<64x1xf32> -> vector<64x1xf32>
    %139 = vector.broadcast %138 : vector<64x1xf32> to vector<64x16xf32>
    %140 = arith.mulf %137, %139 : vector<64x16xf32>
    %141 = vector.extract_strided_slice %118 {offsets = [64, 0], sizes = [64, 16], strides = [1, 1]} : vector<128x32xf32> to vector<64x16xf32>
    %142 = vector.extract_strided_slice %119 {offsets = [64, 0], sizes = [64, 16], strides = [1, 1]} : vector<128x32xf32> to vector<64x16xf32>
    %143 = vector.extract_strided_slice %120 {offsets = [64, 0], sizes = [64, 16], strides = [1, 1]} : vector<128x32xf32> to vector<64x16xf32>
    %144 = arith.truncf %141 : vector<64x16xf32> to vector<64x16xbf16>
    %145 = arith.truncf %142 : vector<64x16xf32> to vector<64x16xbf16>
    %cst_49 = arith.constant dense<0.000000e+00> : vector<64x64xf32>
    %146 = tpu.matmul %144, %145, %cst_49 {dimension_numbers = #tpu.dot_dimension_numbers<[1], [1], [0], [0], [0, 0, 1, 0], [], []>} : vector<64x16xbf16>, vector<64x16xbf16>, vector<64x64xf32> -> vector<64x64xf32>
    %cst_50 = arith.constant dense<0xFF800000> : vector<64xf32>
    %147 = vector.multi_reduction <maximumf>, %146, %cst_50 [1] : vector<64x64xf32> to vector<64xf32>
    %148 = vector.shape_cast %147 : vector<64xf32> to vector<64x1xf32>
    %149 = vector.broadcast %148 : vector<64x1xf32> to vector<64x64xf32>
    %150 = arith.subf %146, %149 : vector<64x64xf32>
    %151 = math.exp %150 : vector<64x64xf32>
    %cst_51 = arith.constant dense<0.000000e+00> : vector<64xf32>
    %152 = vector.multi_reduction <add>, %151, %cst_51 [1] : vector<64x64xf32> to vector<64xf32>
    %153 = vector.shape_cast %152 : vector<64xf32> to vector<64x1xf32>
    %154 = arith.truncf %151 : vector<64x64xf32> to vector<64x64xbf16>
    %155 = arith.truncf %143 : vector<64x16xf32> to vector<64x16xbf16>
    %cst_52 = arith.constant dense<0.000000e+00> : vector<64x16xf32>
    %156 = tpu.matmul %154, %155, %cst_52 {dimension_numbers = #tpu.dot_dimension_numbers<[1], [0], [0], [1], [0, 0, 1, 1], [], []>} : vector<64x64xbf16>, vector<64x16xbf16>, vector<64x16xf32> -> vector<64x16xf32>
    %157 = tpu.reciprocal %153 {approx = true} : vector<64x1xf32> -> vector<64x1xf32>
    %158 = vector.broadcast %157 : vector<64x1xf32> to vector<64x16xf32>
    %159 = arith.mulf %156, %158 : vector<64x16xf32>
    %160 = tpu.concatenate %140, %159 in 0 : vector<64x16xf32>, vector<64x16xf32> -> vector<128x16xf32>
    %161 = vector.extract_strided_slice %121 {offsets = [0, 0], sizes = [16, 32], strides = [1, 1]} : vector<32x32xbf16> to vector<16x32xbf16>
    %162 = arith.truncf %160 : vector<128x16xf32> to vector<128x16xbf16>
    %cst_53 = arith.constant dense<0.000000e+00> : vector<128x32xf32>
    %163 = tpu.matmul %162, %161, %cst_53 {dimension_numbers = #tpu.dot_dimension_numbers<[1], [0], [0], [1], [0, 0, 1, 1], [], []>} : vector<128x16xbf16>, vector<16x32xbf16>, vector<128x32xf32> -> vector<128x32xf32>
    %164 = vector.extract_strided_slice %118 {offsets = [0, 16], sizes = [64, 16], strides = [1, 1]} : vector<128x32xf32> to vector<64x16xf32>
    %165 = vector.extract_strided_slice %119 {offsets = [0, 16], sizes = [64, 16], strides = [1, 1]} : vector<128x32xf32> to vector<64x16xf32>
    %166 = vector.extract_strided_slice %120 {offsets = [0, 16], sizes = [64, 16], strides = [1, 1]} : vector<128x32xf32> to vector<64x16xf32>
    %167 = arith.truncf %164 : vector<64x16xf32> to vector<64x16xbf16>
    %168 = arith.truncf %165 : vector<64x16xf32> to vector<64x16xbf16>
    %cst_54 = arith.constant dense<0.000000e+00> : vector<64x64xf32>
    %169 = tpu.matmul %167, %168, %cst_54 {dimension_numbers = #tpu.dot_dimension_numbers<[1], [1], [0], [0], [0, 0, 1, 0], [], []>} : vector<64x16xbf16>, vector<64x16xbf16>, vector<64x64xf32> -> vector<64x64xf32>
    %cst_55 = arith.constant dense<0xFF800000> : vector<64xf32>
    %170 = vector.multi_reduction <maximumf>, %169, %cst_55 [1] : vector<64x64xf32> to vector<64xf32>
    %171 = vector.shape_cast %170 : vector<64xf32> to vector<64x1xf32>
    %172 = vector.broadcast %171 : vector<64x1xf32> to vector<64x64xf32>
    %173 = arith.subf %169, %172 : vector<64x64xf32>
    %174 = math.exp %173 : vector<64x64xf32>
    %cst_56 = arith.constant dense<0.000000e+00> : vector<64xf32>
    %175 = vector.multi_reduction <add>, %174, %cst_56 [1] : vector<64x64xf32> to vector<64xf32>
    %176 = vector.shape_cast %175 : vector<64xf32> to vector<64x1xf32>
    %177 = arith.truncf %174 : vector<64x64xf32> to vector<64x64xbf16>
    %178 = arith.truncf %166 : vector<64x16xf32> to vector<64x16xbf16>
    %cst_57 = arith.constant dense<0.000000e+00> : vector<64x16xf32>
    %179 = tpu.matmul %177, %178, %cst_57 {dimension_numbers = #tpu.dot_dimension_numbers<[1], [0], [0], [1], [0, 0, 1, 1], [], []>} : vector<64x64xbf16>, vector<64x16xbf16>, vector<64x16xf32> -> vector<64x16xf32>
    %180 = tpu.reciprocal %176 {approx = true} : vector<64x1xf32> -> vector<64x1xf32>
    %181 = vector.broadcast %180 : vector<64x1xf32> to vector<64x16xf32>
    %182 = arith.mulf %179, %181 : vector<64x16xf32>
    %183 = vector.extract_strided_slice %118 {offsets = [64, 16], sizes = [64, 16], strides = [1, 1]} : vector<128x32xf32> to vector<64x16xf32>
    %184 = vector.extract_strided_slice %119 {offsets = [64, 16], sizes = [64, 16], strides = [1, 1]} : vector<128x32xf32> to vector<64x16xf32>
    %185 = vector.extract_strided_slice %120 {offsets = [64, 16], sizes = [64, 16], strides = [1, 1]} : vector<128x32xf32> to vector<64x16xf32>
    %186 = arith.truncf %183 : vector<64x16xf32> to vector<64x16xbf16>
    %187 = arith.truncf %184 : vector<64x16xf32> to vector<64x16xbf16>
    %cst_58 = arith.constant dense<0.000000e+00> : vector<64x64xf32>
    %188 = tpu.matmul %186, %187, %cst_58 {dimension_numbers = #tpu.dot_dimension_numbers<[1], [1], [0], [0], [0, 0, 1, 0], [], []>} : vector<64x16xbf16>, vector<64x16xbf16>, vector<64x64xf32> -> vector<64x64xf32>
    %cst_59 = arith.constant dense<0xFF800000> : vector<64xf32>
    %189 = vector.multi_reduction <maximumf>, %188, %cst_59 [1] : vector<64x64xf32> to vector<64xf32>
    %190 = vector.shape_cast %189 : vector<64xf32> to vector<64x1xf32>
    %191 = vector.broadcast %190 : vector<64x1xf32> to vector<64x64xf32>
    %192 = arith.subf %188, %191 : vector<64x64xf32>
    %193 = math.exp %192 : vector<64x64xf32>
    %cst_60 = arith.constant dense<0.000000e+00> : vector<64xf32>
    %194 = vector.multi_reduction <add>, %193, %cst_60 [1] : vector<64x64xf32> to vector<64xf32>
    %195 = vector.shape_cast %194 : vector<64xf32> to vector<64x1xf32>
    %196 = arith.truncf %193 : vector<64x64xf32> to vector<64x64xbf16>
    %197 = arith.truncf %185 : vector<64x16xf32> to vector<64x16xbf16>
    %cst_61 = arith.constant dense<0.000000e+00> : vector<64x16xf32>
    %198 = tpu.matmul %196, %197, %cst_61 {dimension_numbers = #tpu.dot_dimension_numbers<[1], [0], [0], [1], [0, 0, 1, 1], [], []>} : vector<64x64xbf16>, vector<64x16xbf16>, vector<64x16xf32> -> vector<64x16xf32>
    %199 = tpu.reciprocal %195 {approx = true} : vector<64x1xf32> -> vector<64x1xf32>
    %200 = vector.broadcast %199 : vector<64x1xf32> to vector<64x16xf32>
    %201 = arith.mulf %198, %200 : vector<64x16xf32>
    %202 = tpu.concatenate %182, %201 in 0 : vector<64x16xf32>, vector<64x16xf32> -> vector<128x16xf32>
    %203 = vector.extract_strided_slice %121 {offsets = [16, 0], sizes = [16, 32], strides = [1, 1]} : vector<32x32xbf16> to vector<16x32xbf16>
    %204 = arith.truncf %202 : vector<128x16xf32> to vector<128x16xbf16>
    %cst_62 = arith.constant dense<0.000000e+00> : vector<128x32xf32>
    %205 = tpu.matmul %204, %203, %cst_62 {dimension_numbers = #tpu.dot_dimension_numbers<[1], [0], [0], [1], [0, 0, 1, 1], [], []>} : vector<128x16xbf16>, vector<16x32xbf16>, vector<128x32xf32> -> vector<128x32xf32>
    %206 = arith.addf %163, %205 : vector<128x32xf32>
    %c128 = arith.constant 128 : index
    %c0_63 = arith.constant 0 : index
    %207 = vector.load %arg5[%c128, %c0_63] : memref<256x256xf32, #tpu.memory_space<vmem>>, vector<1x32xf32>
    %208 = vector.broadcast %207 : vector<1x32xf32> to vector<128x32xf32>
    %209 = arith.addf %206, %208 : vector<128x32xf32>
    %210 = vector.extract_strided_slice %68 {offsets = [2, 0], sizes = [1, 32], strides = [1, 1]} : vector<6x32xf32> to vector<1x32xf32>
    %211 = vector.extract_strided_slice %40 {offsets = [0, 64], sizes = [1, 32], strides = [1, 1]} : vector<2x192xf32> to vector<1x32xf32>
    %212 = arith.addf %210, %211 : vector<1x32xf32>
    %213 = vector.extract_strided_slice %209 {offsets = [0, 0], sizes = [64, 32], strides = [1, 1]} : vector<128x32xf32> to vector<64x32xf32>
    %214 = vector.broadcast %212 : vector<1x32xf32> to vector<64x32xf32>
    %215 = arith.mulf %213, %214 : vector<64x32xf32>
    %216 = vector.extract_strided_slice %68 {offsets = [2, 0], sizes = [1, 32], strides = [1, 1]} : vector<6x32xf32> to vector<1x32xf32>
    %217 = vector.extract_strided_slice %40 {offsets = [1, 64], sizes = [1, 32], strides = [1, 1]} : vector<2x192xf32> to vector<1x32xf32>
    %218 = arith.addf %216, %217 : vector<1x32xf32>
    %219 = vector.extract_strided_slice %209 {offsets = [64, 0], sizes = [64, 32], strides = [1, 1]} : vector<128x32xf32> to vector<64x32xf32>
    %220 = vector.broadcast %218 : vector<1x32xf32> to vector<64x32xf32>
    %221 = arith.mulf %219, %220 : vector<64x32xf32>
    %222 = tpu.concatenate %215, %221 in 0 : vector<64x32xf32>, vector<64x32xf32> -> vector<128x32xf32>
    %223 = arith.addf %9, %222 : vector<128x32xf32>
    %c464 = arith.constant 464 : index
    %c0_64 = arith.constant 0 : index
    %224 = vector.load %arg4[%c464, %c0_64] : memref<1072x256xbf16, #tpu.memory_space<vmem>>, vector<32x32xbf16>
    %225 = arith.truncf %223 : vector<128x32xf32> to vector<128x32xbf16>
    %cst_65 = arith.constant dense<0.000000e+00> : vector<128x32xf32>
    %226 = tpu.matmul %225, %224, %cst_65 {dimension_numbers = #tpu.dot_dimension_numbers<[1], [0], [0], [1], [0, 0, 1, 1], [], []>} : vector<128x32xbf16>, vector<32x32xbf16>, vector<128x32xf32> -> vector<128x32xf32>
    %c136 = arith.constant 136 : index
    %c0_66 = arith.constant 0 : index
    %227 = vector.load %arg5[%c136, %c0_66] : memref<256x256xf32, #tpu.memory_space<vmem>>, vector<1x32xf32>
    %228 = vector.broadcast %227 : vector<1x32xf32> to vector<128x32xf32>
    %229 = arith.addf %226, %228 : vector<128x32xf32>
    %c496 = arith.constant 496 : index
    %c0_67 = arith.constant 0 : index
    %230 = vector.load %arg4[%c496, %c0_67] : memref<1072x256xbf16, #tpu.memory_space<vmem>>, vector<32x64xbf16>
    %231 = arith.truncf %66 : vector<16x32xf32> to vector<16x32xbf16>
    %cst_68 = arith.constant dense<0.000000e+00> : vector<16x64xf32>
    %232 = tpu.matmul %231, %230, %cst_68 {dimension_numbers = #tpu.dot_dimension_numbers<[1], [0], [0], [1], [0, 0, 1, 1], [], []>} : vector<16x32xbf16>, vector<32x64xbf16>, vector<16x64xf32> -> vector<16x64xf32>
    %c144 = arith.constant 144 : index
    %c0_69 = arith.constant 0 : index
    %233 = vector.load %arg5[%c144, %c0_69] : memref<256x256xf32, #tpu.memory_space<vmem>>, vector<1x64xf32>
    %234 = vector.broadcast %233 : vector<1x64xf32> to vector<16x64xf32>
    %235 = arith.addf %232, %234 : vector<16x64xf32>
    %236 = vector.extract_strided_slice %235 {offsets = [0, 0], sizes = [16, 32], strides = [1, 1]} : vector<16x64xf32> to vector<16x32xf32>
    %237 = vector.extract_strided_slice %235 {offsets = [0, 32], sizes = [16, 32], strides = [1, 1]} : vector<16x64xf32> to vector<16x32xf32>
    %c528 = arith.constant 528 : index
    %c0_70 = arith.constant 0 : index
    %238 = vector.load %arg4[%c528, %c0_70] : memref<1072x256xbf16, #tpu.memory_space<vmem>>, vector<32x32xbf16>
    %239 = vector.extract_strided_slice %229 {offsets = [0, 0], sizes = [64, 16], strides = [1, 1]} : vector<128x32xf32> to vector<64x16xf32>
    %240 = vector.extract_strided_slice %236 {offsets = [0, 0], sizes = [8, 16], strides = [1, 1]} : vector<16x32xf32> to vector<8x16xf32>
    %241 = vector.extract_strided_slice %237 {offsets = [0, 0], sizes = [8, 16], strides = [1, 1]} : vector<16x32xf32> to vector<8x16xf32>
    %242 = arith.truncf %239 : vector<64x16xf32> to vector<64x16xbf16>
    %243 = arith.truncf %240 : vector<8x16xf32> to vector<8x16xbf16>
    %cst_71 = arith.constant dense<0.000000e+00> : vector<64x8xf32>
    %244 = tpu.matmul %242, %243, %cst_71 {dimension_numbers = #tpu.dot_dimension_numbers<[1], [1], [0], [0], [0, 0, 1, 0], [], []>} : vector<64x16xbf16>, vector<8x16xbf16>, vector<64x8xf32> -> vector<64x8xf32>
    %245 = vector.extract_strided_slice %67 {offsets = [0, 0], sizes = [1, 8], strides = [1, 1]} : vector<2x8xf32> to vector<1x8xf32>
    %246 = vector.broadcast %245 : vector<1x8xf32> to vector<64x8xf32>
    %247 = arith.addf %244, %246 : vector<64x8xf32>
    %cst_72 = arith.constant dense<0xFF800000> : vector<64xf32>
    %248 = vector.multi_reduction <maximumf>, %247, %cst_72 [1] : vector<64x8xf32> to vector<64xf32>
    %249 = vector.shape_cast %248 : vector<64xf32> to vector<64x1xf32>
    %250 = vector.broadcast %249 : vector<64x1xf32> to vector<64x8xf32>
    %251 = arith.subf %247, %250 : vector<64x8xf32>
    %252 = math.exp %251 : vector<64x8xf32>
    %cst_73 = arith.constant dense<0.000000e+00> : vector<64xf32>
    %253 = vector.multi_reduction <add>, %252, %cst_73 [1] : vector<64x8xf32> to vector<64xf32>
    %254 = vector.shape_cast %253 : vector<64xf32> to vector<64x1xf32>
    %255 = arith.truncf %252 : vector<64x8xf32> to vector<64x8xbf16>
    %256 = arith.truncf %241 : vector<8x16xf32> to vector<8x16xbf16>
    %cst_74 = arith.constant dense<0.000000e+00> : vector<64x16xf32>
    %257 = tpu.matmul %255, %256, %cst_74 {dimension_numbers = #tpu.dot_dimension_numbers<[1], [0], [0], [1], [0, 0, 1, 1], [], []>} : vector<64x8xbf16>, vector<8x16xbf16>, vector<64x16xf32> -> vector<64x16xf32>
    %258 = tpu.reciprocal %254 {approx = true} : vector<64x1xf32> -> vector<64x1xf32>
    %259 = vector.broadcast %258 : vector<64x1xf32> to vector<64x16xf32>
    %260 = arith.mulf %257, %259 : vector<64x16xf32>
    %261 = vector.extract_strided_slice %229 {offsets = [64, 0], sizes = [64, 16], strides = [1, 1]} : vector<128x32xf32> to vector<64x16xf32>
    %262 = vector.extract_strided_slice %236 {offsets = [8, 0], sizes = [8, 16], strides = [1, 1]} : vector<16x32xf32> to vector<8x16xf32>
    %263 = vector.extract_strided_slice %237 {offsets = [8, 0], sizes = [8, 16], strides = [1, 1]} : vector<16x32xf32> to vector<8x16xf32>
    %264 = arith.truncf %261 : vector<64x16xf32> to vector<64x16xbf16>
    %265 = arith.truncf %262 : vector<8x16xf32> to vector<8x16xbf16>
    %cst_75 = arith.constant dense<0.000000e+00> : vector<64x8xf32>
    %266 = tpu.matmul %264, %265, %cst_75 {dimension_numbers = #tpu.dot_dimension_numbers<[1], [1], [0], [0], [0, 0, 1, 0], [], []>} : vector<64x16xbf16>, vector<8x16xbf16>, vector<64x8xf32> -> vector<64x8xf32>
    %267 = vector.extract_strided_slice %67 {offsets = [1, 0], sizes = [1, 8], strides = [1, 1]} : vector<2x8xf32> to vector<1x8xf32>
    %268 = vector.broadcast %267 : vector<1x8xf32> to vector<64x8xf32>
    %269 = arith.addf %266, %268 : vector<64x8xf32>
    %cst_76 = arith.constant dense<0xFF800000> : vector<64xf32>
    %270 = vector.multi_reduction <maximumf>, %269, %cst_76 [1] : vector<64x8xf32> to vector<64xf32>
    %271 = vector.shape_cast %270 : vector<64xf32> to vector<64x1xf32>
    %272 = vector.broadcast %271 : vector<64x1xf32> to vector<64x8xf32>
    %273 = arith.subf %269, %272 : vector<64x8xf32>
    %274 = math.exp %273 : vector<64x8xf32>
    %cst_77 = arith.constant dense<0.000000e+00> : vector<64xf32>
    %275 = vector.multi_reduction <add>, %274, %cst_77 [1] : vector<64x8xf32> to vector<64xf32>
    %276 = vector.shape_cast %275 : vector<64xf32> to vector<64x1xf32>
    %277 = arith.truncf %274 : vector<64x8xf32> to vector<64x8xbf16>
    %278 = arith.truncf %263 : vector<8x16xf32> to vector<8x16xbf16>
    %cst_78 = arith.constant dense<0.000000e+00> : vector<64x16xf32>
    %279 = tpu.matmul %277, %278, %cst_78 {dimension_numbers = #tpu.dot_dimension_numbers<[1], [0], [0], [1], [0, 0, 1, 1], [], []>} : vector<64x8xbf16>, vector<8x16xbf16>, vector<64x16xf32> -> vector<64x16xf32>
    %280 = tpu.reciprocal %276 {approx = true} : vector<64x1xf32> -> vector<64x1xf32>
    %281 = vector.broadcast %280 : vector<64x1xf32> to vector<64x16xf32>
    %282 = arith.mulf %279, %281 : vector<64x16xf32>
    %283 = tpu.concatenate %260, %282 in 0 : vector<64x16xf32>, vector<64x16xf32> -> vector<128x16xf32>
    %284 = vector.extract_strided_slice %238 {offsets = [0, 0], sizes = [16, 32], strides = [1, 1]} : vector<32x32xbf16> to vector<16x32xbf16>
    %285 = arith.truncf %283 : vector<128x16xf32> to vector<128x16xbf16>
    %cst_79 = arith.constant dense<0.000000e+00> : vector<128x32xf32>
    %286 = tpu.matmul %285, %284, %cst_79 {dimension_numbers = #tpu.dot_dimension_numbers<[1], [0], [0], [1], [0, 0, 1, 1], [], []>} : vector<128x16xbf16>, vector<16x32xbf16>, vector<128x32xf32> -> vector<128x32xf32>
    %287 = vector.extract_strided_slice %229 {offsets = [0, 16], sizes = [64, 16], strides = [1, 1]} : vector<128x32xf32> to vector<64x16xf32>
    %288 = vector.extract_strided_slice %236 {offsets = [0, 16], sizes = [8, 16], strides = [1, 1]} : vector<16x32xf32> to vector<8x16xf32>
    %289 = vector.extract_strided_slice %237 {offsets = [0, 16], sizes = [8, 16], strides = [1, 1]} : vector<16x32xf32> to vector<8x16xf32>
    %290 = arith.truncf %287 : vector<64x16xf32> to vector<64x16xbf16>
    %291 = arith.truncf %288 : vector<8x16xf32> to vector<8x16xbf16>
    %cst_80 = arith.constant dense<0.000000e+00> : vector<64x8xf32>
    %292 = tpu.matmul %290, %291, %cst_80 {dimension_numbers = #tpu.dot_dimension_numbers<[1], [1], [0], [0], [0, 0, 1, 0], [], []>} : vector<64x16xbf16>, vector<8x16xbf16>, vector<64x8xf32> -> vector<64x8xf32>
    %293 = vector.extract_strided_slice %67 {offsets = [0, 0], sizes = [1, 8], strides = [1, 1]} : vector<2x8xf32> to vector<1x8xf32>
    %294 = vector.broadcast %293 : vector<1x8xf32> to vector<64x8xf32>
    %295 = arith.addf %292, %294 : vector<64x8xf32>
    %cst_81 = arith.constant dense<0xFF800000> : vector<64xf32>
    %296 = vector.multi_reduction <maximumf>, %295, %cst_81 [1] : vector<64x8xf32> to vector<64xf32>
    %297 = vector.shape_cast %296 : vector<64xf32> to vector<64x1xf32>
    %298 = vector.broadcast %297 : vector<64x1xf32> to vector<64x8xf32>
    %299 = arith.subf %295, %298 : vector<64x8xf32>
    %300 = math.exp %299 : vector<64x8xf32>
    %cst_82 = arith.constant dense<0.000000e+00> : vector<64xf32>
    %301 = vector.multi_reduction <add>, %300, %cst_82 [1] : vector<64x8xf32> to vector<64xf32>
    %302 = vector.shape_cast %301 : vector<64xf32> to vector<64x1xf32>
    %303 = arith.truncf %300 : vector<64x8xf32> to vector<64x8xbf16>
    %304 = arith.truncf %289 : vector<8x16xf32> to vector<8x16xbf16>
    %cst_83 = arith.constant dense<0.000000e+00> : vector<64x16xf32>
    %305 = tpu.matmul %303, %304, %cst_83 {dimension_numbers = #tpu.dot_dimension_numbers<[1], [0], [0], [1], [0, 0, 1, 1], [], []>} : vector<64x8xbf16>, vector<8x16xbf16>, vector<64x16xf32> -> vector<64x16xf32>
    %306 = tpu.reciprocal %302 {approx = true} : vector<64x1xf32> -> vector<64x1xf32>
    %307 = vector.broadcast %306 : vector<64x1xf32> to vector<64x16xf32>
    %308 = arith.mulf %305, %307 : vector<64x16xf32>
    %309 = vector.extract_strided_slice %229 {offsets = [64, 16], sizes = [64, 16], strides = [1, 1]} : vector<128x32xf32> to vector<64x16xf32>
    %310 = vector.extract_strided_slice %236 {offsets = [8, 16], sizes = [8, 16], strides = [1, 1]} : vector<16x32xf32> to vector<8x16xf32>
    %311 = vector.extract_strided_slice %237 {offsets = [8, 16], sizes = [8, 16], strides = [1, 1]} : vector<16x32xf32> to vector<8x16xf32>
    %312 = arith.truncf %309 : vector<64x16xf32> to vector<64x16xbf16>
    %313 = arith.truncf %310 : vector<8x16xf32> to vector<8x16xbf16>
    %cst_84 = arith.constant dense<0.000000e+00> : vector<64x8xf32>
    %314 = tpu.matmul %312, %313, %cst_84 {dimension_numbers = #tpu.dot_dimension_numbers<[1], [1], [0], [0], [0, 0, 1, 0], [], []>} : vector<64x16xbf16>, vector<8x16xbf16>, vector<64x8xf32> -> vector<64x8xf32>
    %315 = vector.extract_strided_slice %67 {offsets = [1, 0], sizes = [1, 8], strides = [1, 1]} : vector<2x8xf32> to vector<1x8xf32>
    %316 = vector.broadcast %315 : vector<1x8xf32> to vector<64x8xf32>
    %317 = arith.addf %314, %316 : vector<64x8xf32>
    %cst_85 = arith.constant dense<0xFF800000> : vector<64xf32>
    %318 = vector.multi_reduction <maximumf>, %317, %cst_85 [1] : vector<64x8xf32> to vector<64xf32>
    %319 = vector.shape_cast %318 : vector<64xf32> to vector<64x1xf32>
    %320 = vector.broadcast %319 : vector<64x1xf32> to vector<64x8xf32>
    %321 = arith.subf %317, %320 : vector<64x8xf32>
    %322 = math.exp %321 : vector<64x8xf32>
    %cst_86 = arith.constant dense<0.000000e+00> : vector<64xf32>
    %323 = vector.multi_reduction <add>, %322, %cst_86 [1] : vector<64x8xf32> to vector<64xf32>
    %324 = vector.shape_cast %323 : vector<64xf32> to vector<64x1xf32>
    %325 = arith.truncf %322 : vector<64x8xf32> to vector<64x8xbf16>
    %326 = arith.truncf %311 : vector<8x16xf32> to vector<8x16xbf16>
    %cst_87 = arith.constant dense<0.000000e+00> : vector<64x16xf32>
    %327 = tpu.matmul %325, %326, %cst_87 {dimension_numbers = #tpu.dot_dimension_numbers<[1], [0], [0], [1], [0, 0, 1, 1], [], []>} : vector<64x8xbf16>, vector<8x16xbf16>, vector<64x16xf32> -> vector<64x16xf32>
    %328 = tpu.reciprocal %324 {approx = true} : vector<64x1xf32> -> vector<64x1xf32>
    %329 = vector.broadcast %328 : vector<64x1xf32> to vector<64x16xf32>
    %330 = arith.mulf %327, %329 : vector<64x16xf32>
    %331 = tpu.concatenate %308, %330 in 0 : vector<64x16xf32>, vector<64x16xf32> -> vector<128x16xf32>
    %332 = vector.extract_strided_slice %238 {offsets = [16, 0], sizes = [16, 32], strides = [1, 1]} : vector<32x32xbf16> to vector<16x32xbf16>
    %333 = arith.truncf %331 : vector<128x16xf32> to vector<128x16xbf16>
    %cst_88 = arith.constant dense<0.000000e+00> : vector<128x32xf32>
    %334 = tpu.matmul %333, %332, %cst_88 {dimension_numbers = #tpu.dot_dimension_numbers<[1], [0], [0], [1], [0, 0, 1, 1], [], []>} : vector<128x16xbf16>, vector<16x32xbf16>, vector<128x32xf32> -> vector<128x32xf32>
    %335 = arith.addf %286, %334 : vector<128x32xf32>
    %c152 = arith.constant 152 : index
    %c0_89 = arith.constant 0 : index
    %336 = vector.load %arg5[%c152, %c0_89] : memref<256x256xf32, #tpu.memory_space<vmem>>, vector<1x32xf32>
    %337 = vector.broadcast %336 : vector<1x32xf32> to vector<128x32xf32>
    %338 = arith.addf %335, %337 : vector<128x32xf32>
    %339 = arith.addf %223, %338 : vector<128x32xf32>
    %cst_90 = arith.constant dense<0.000000e+00> : vector<128xf32>
    %340 = vector.multi_reduction <add>, %339, %cst_90 [1] : vector<128x32xf32> to vector<128xf32>
    %341 = vector.shape_cast %340 : vector<128xf32> to vector<128x1xf32>
    %cst_91 = arith.constant 3.200000e+01 : f32
    %342 = vector.broadcast %cst_91 : f32 to vector<128x1xf32>
    %343 = arith.divf %341, %342 : vector<128x1xf32>
    %344 = vector.broadcast %343 : vector<128x1xf32> to vector<128x32xf32>
    %345 = arith.subf %339, %344 : vector<128x32xf32>
    %346 = arith.mulf %345, %345 : vector<128x32xf32>
    %cst_92 = arith.constant dense<0.000000e+00> : vector<128xf32>
    %347 = vector.multi_reduction <add>, %346, %cst_92 [1] : vector<128x32xf32> to vector<128xf32>
    %348 = vector.shape_cast %347 : vector<128xf32> to vector<128x1xf32>
    %cst_93 = arith.constant 3.200000e+01 : f32
    %349 = vector.broadcast %cst_93 : f32 to vector<128x1xf32>
    %350 = arith.divf %348, %349 : vector<128x1xf32>
    %cst_94 = arith.constant 9.99999997E-7 : f32
    %351 = vector.broadcast %cst_94 : f32 to vector<128x1xf32>
    %352 = arith.addf %350, %351 : vector<128x1xf32>
    %353 = math.rsqrt %352 : vector<128x1xf32>
    %354 = vector.broadcast %353 : vector<128x1xf32> to vector<128x32xf32>
    %355 = arith.mulf %345, %354 : vector<128x32xf32>
    %356 = vector.extract_strided_slice %68 {offsets = [3, 0], sizes = [1, 32], strides = [1, 1]} : vector<6x32xf32> to vector<1x32xf32>
    %357 = vector.extract_strided_slice %40 {offsets = [0, 96], sizes = [1, 32], strides = [1, 1]} : vector<2x192xf32> to vector<1x32xf32>
    %358 = arith.addf %356, %357 : vector<1x32xf32>
    %359 = vector.extract_strided_slice %68 {offsets = [4, 0], sizes = [1, 32], strides = [1, 1]} : vector<6x32xf32> to vector<1x32xf32>
    %360 = vector.extract_strided_slice %40 {offsets = [0, 128], sizes = [1, 32], strides = [1, 1]} : vector<2x192xf32> to vector<1x32xf32>
    %361 = arith.addf %359, %360 : vector<1x32xf32>
    %362 = vector.extract_strided_slice %355 {offsets = [0, 0], sizes = [64, 32], strides = [1, 1]} : vector<128x32xf32> to vector<64x32xf32>
    %cst_95 = arith.constant 1.000000e+00 : f32
    %363 = vector.broadcast %cst_95 : f32 to vector<1x32xf32>
    %364 = arith.addf %363, %361 : vector<1x32xf32>
    %365 = vector.broadcast %364 : vector<1x32xf32> to vector<64x32xf32>
    %366 = arith.mulf %362, %365 : vector<64x32xf32>
    %367 = vector.broadcast %358 : vector<1x32xf32> to vector<64x32xf32>
    %368 = arith.addf %366, %367 : vector<64x32xf32>
    %369 = vector.extract_strided_slice %68 {offsets = [3, 0], sizes = [1, 32], strides = [1, 1]} : vector<6x32xf32> to vector<1x32xf32>
    %370 = vector.extract_strided_slice %40 {offsets = [1, 96], sizes = [1, 32], strides = [1, 1]} : vector<2x192xf32> to vector<1x32xf32>
    %371 = arith.addf %369, %370 : vector<1x32xf32>
    %372 = vector.extract_strided_slice %68 {offsets = [4, 0], sizes = [1, 32], strides = [1, 1]} : vector<6x32xf32> to vector<1x32xf32>
    %373 = vector.extract_strided_slice %40 {offsets = [1, 128], sizes = [1, 32], strides = [1, 1]} : vector<2x192xf32> to vector<1x32xf32>
    %374 = arith.addf %372, %373 : vector<1x32xf32>
    %375 = vector.extract_strided_slice %355 {offsets = [64, 0], sizes = [64, 32], strides = [1, 1]} : vector<128x32xf32> to vector<64x32xf32>
    %cst_96 = arith.constant 1.000000e+00 : f32
    %376 = vector.broadcast %cst_96 : f32 to vector<1x32xf32>
    %377 = arith.addf %376, %374 : vector<1x32xf32>
    %378 = vector.broadcast %377 : vector<1x32xf32> to vector<64x32xf32>
    %379 = arith.mulf %375, %378 : vector<64x32xf32>
    %380 = vector.broadcast %371 : vector<1x32xf32> to vector<64x32xf32>
    %381 = arith.addf %379, %380 : vector<64x32xf32>
    %382 = tpu.concatenate %368, %381 in 0 : vector<64x32xf32>, vector<64x32xf32> -> vector<128x32xf32>
    %c560 = arith.constant 560 : index
    %c0_97 = arith.constant 0 : index
    %383 = vector.load %arg4[%c560, %c0_97] : memref<1072x256xbf16, #tpu.memory_space<vmem>>, vector<32x128xbf16>
    %384 = arith.truncf %382 : vector<128x32xf32> to vector<128x32xbf16>
    %cst_98 = arith.constant dense<0.000000e+00> : vector<128x128xf32>
    %385 = tpu.matmul %384, %383, %cst_98 {dimension_numbers = #tpu.dot_dimension_numbers<[1], [0], [0], [1], [0, 0, 1, 1], [], []>} : vector<128x32xbf16>, vector<32x128xbf16>, vector<128x128xf32> -> vector<128x128xf32>
    %c160 = arith.constant 160 : index
    %c0_99 = arith.constant 0 : index
    %386 = vector.load %arg5[%c160, %c0_99] : memref<256x256xf32, #tpu.memory_space<vmem>>, vector<1x128xf32>
    %387 = vector.broadcast %386 : vector<1x128xf32> to vector<128x128xf32>
    %388 = arith.addf %385, %387 : vector<128x128xf32>
    %cst_100 = arith.constant 5.000000e-01 : f32
    %389 = vector.broadcast %cst_100 : f32 to vector<128x128xf32>
    %390 = arith.mulf %389, %388 : vector<128x128xf32>
    %cst_101 = arith.constant 4.471500e-02 : f32
    %391 = vector.broadcast %cst_101 : f32 to vector<128x128xf32>
    %392 = arith.mulf %391, %388 : vector<128x128xf32>
    %393 = arith.mulf %392, %388 : vector<128x128xf32>
    %394 = arith.mulf %393, %388 : vector<128x128xf32>
    %395 = arith.addf %388, %394 : vector<128x128xf32>
    %cst_102 = arith.constant 0.797884583 : f32
    %396 = vector.broadcast %cst_102 : f32 to vector<128x128xf32>
    %397 = arith.mulf %396, %395 : vector<128x128xf32>
    %398 = math.tanh %397 : vector<128x128xf32>
    %cst_103 = arith.constant 1.000000e+00 : f32
    %399 = vector.broadcast %cst_103 : f32 to vector<128x128xf32>
    %400 = arith.addf %399, %398 : vector<128x128xf32>
    %401 = arith.mulf %390, %400 : vector<128x128xf32>
    %c592 = arith.constant 592 : index
    %c0_104 = arith.constant 0 : index
    %402 = vector.load %arg4[%c592, %c0_104] : memref<1072x256xbf16, #tpu.memory_space<vmem>>, vector<128x32xbf16>
    %403 = arith.truncf %401 : vector<128x128xf32> to vector<128x128xbf16>
    %cst_105 = arith.constant dense<0.000000e+00> : vector<128x32xf32>
    %404 = tpu.matmul %403, %402, %cst_105 {dimension_numbers = #tpu.dot_dimension_numbers<[1], [0], [0], [1], [0, 0, 1, 1], [], []>} : vector<128x128xbf16>, vector<128x32xbf16>, vector<128x32xf32> -> vector<128x32xf32>
    %c168 = arith.constant 168 : index
    %c0_106 = arith.constant 0 : index
    %405 = vector.load %arg5[%c168, %c0_106] : memref<256x256xf32, #tpu.memory_space<vmem>>, vector<1x32xf32>
    %406 = vector.broadcast %405 : vector<1x32xf32> to vector<128x32xf32>
    %407 = arith.addf %404, %406 : vector<128x32xf32>
    %408 = vector.extract_strided_slice %68 {offsets = [5, 0], sizes = [1, 32], strides = [1, 1]} : vector<6x32xf32> to vector<1x32xf32>
    %409 = vector.extract_strided_slice %40 {offsets = [0, 160], sizes = [1, 32], strides = [1, 1]} : vector<2x192xf32> to vector<1x32xf32>
    %410 = arith.addf %408, %409 : vector<1x32xf32>
    %411 = vector.extract_strided_slice %407 {offsets = [0, 0], sizes = [64, 32], strides = [1, 1]} : vector<128x32xf32> to vector<64x32xf32>
    %412 = vector.broadcast %410 : vector<1x32xf32> to vector<64x32xf32>
    %413 = arith.mulf %411, %412 : vector<64x32xf32>
    %414 = vector.extract_strided_slice %68 {offsets = [5, 0], sizes = [1, 32], strides = [1, 1]} : vector<6x32xf32> to vector<1x32xf32>
    %415 = vector.extract_strided_slice %40 {offsets = [1, 160], sizes = [1, 32], strides = [1, 1]} : vector<2x192xf32> to vector<1x32xf32>
    %416 = arith.addf %414, %415 : vector<1x32xf32>
    %417 = vector.extract_strided_slice %407 {offsets = [64, 0], sizes = [64, 32], strides = [1, 1]} : vector<128x32xf32> to vector<64x32xf32>
    %418 = vector.broadcast %416 : vector<1x32xf32> to vector<64x32xf32>
    %419 = arith.mulf %417, %418 : vector<64x32xf32>
    %420 = tpu.concatenate %413, %419 in 0 : vector<64x32xf32>, vector<64x32xf32> -> vector<128x32xf32>
    %421 = arith.addf %339, %420 : vector<128x32xf32>
    %c176 = arith.constant 176 : index
    %c0_107 = arith.constant 0 : index
    %422 = vector.load %arg5[%c176, %c0_107] : memref<256x256xf32, #tpu.memory_space<vmem>>, vector<6x32xf32>
    %cst_108 = arith.constant dense<0.000000e+00> : vector<128xf32>
    %423 = vector.multi_reduction <add>, %421, %cst_108 [1] : vector<128x32xf32> to vector<128xf32>
    %424 = vector.shape_cast %423 : vector<128xf32> to vector<128x1xf32>
    %cst_109 = arith.constant 3.200000e+01 : f32
    %425 = vector.broadcast %cst_109 : f32 to vector<128x1xf32>
    %426 = arith.divf %424, %425 : vector<128x1xf32>
    %427 = vector.broadcast %426 : vector<128x1xf32> to vector<128x32xf32>
    %428 = arith.subf %421, %427 : vector<128x32xf32>
    %429 = arith.mulf %428, %428 : vector<128x32xf32>
    %cst_110 = arith.constant dense<0.000000e+00> : vector<128xf32>
    %430 = vector.multi_reduction <add>, %429, %cst_110 [1] : vector<128x32xf32> to vector<128xf32>
    %431 = vector.shape_cast %430 : vector<128xf32> to vector<128x1xf32>
    %cst_111 = arith.constant 3.200000e+01 : f32
    %432 = vector.broadcast %cst_111 : f32 to vector<128x1xf32>
    %433 = arith.divf %431, %432 : vector<128x1xf32>
    %cst_112 = arith.constant 9.99999997E-7 : f32
    %434 = vector.broadcast %cst_112 : f32 to vector<128x1xf32>
    %435 = arith.addf %433, %434 : vector<128x1xf32>
    %436 = math.rsqrt %435 : vector<128x1xf32>
    %437 = vector.broadcast %436 : vector<128x1xf32> to vector<128x32xf32>
    %438 = arith.mulf %428, %437 : vector<128x32xf32>
    %439 = vector.extract_strided_slice %422 {offsets = [0, 0], sizes = [1, 32], strides = [1, 1]} : vector<6x32xf32> to vector<1x32xf32>
    %440 = vector.extract_strided_slice %40 {offsets = [0, 0], sizes = [1, 32], strides = [1, 1]} : vector<2x192xf32> to vector<1x32xf32>
    %441 = arith.addf %439, %440 : vector<1x32xf32>
    %442 = vector.extract_strided_slice %422 {offsets = [1, 0], sizes = [1, 32], strides = [1, 1]} : vector<6x32xf32> to vector<1x32xf32>
    %443 = vector.extract_strided_slice %40 {offsets = [0, 32], sizes = [1, 32], strides = [1, 1]} : vector<2x192xf32> to vector<1x32xf32>
    %444 = arith.addf %442, %443 : vector<1x32xf32>
    %445 = vector.extract_strided_slice %438 {offsets = [0, 0], sizes = [64, 32], strides = [1, 1]} : vector<128x32xf32> to vector<64x32xf32>
    %cst_113 = arith.constant 1.000000e+00 : f32
    %446 = vector.broadcast %cst_113 : f32 to vector<1x32xf32>
    %447 = arith.addf %446, %444 : vector<1x32xf32>
    %448 = vector.broadcast %447 : vector<1x32xf32> to vector<64x32xf32>
    %449 = arith.mulf %445, %448 : vector<64x32xf32>
    %450 = vector.broadcast %441 : vector<1x32xf32> to vector<64x32xf32>
    %451 = arith.addf %449, %450 : vector<64x32xf32>
    %452 = vector.extract_strided_slice %422 {offsets = [0, 0], sizes = [1, 32], strides = [1, 1]} : vector<6x32xf32> to vector<1x32xf32>
    %453 = vector.extract_strided_slice %40 {offsets = [1, 0], sizes = [1, 32], strides = [1, 1]} : vector<2x192xf32> to vector<1x32xf32>
    %454 = arith.addf %452, %453 : vector<1x32xf32>
    %455 = vector.extract_strided_slice %422 {offsets = [1, 0], sizes = [1, 32], strides = [1, 1]} : vector<6x32xf32> to vector<1x32xf32>
    %456 = vector.extract_strided_slice %40 {offsets = [1, 32], sizes = [1, 32], strides = [1, 1]} : vector<2x192xf32> to vector<1x32xf32>
    %457 = arith.addf %455, %456 : vector<1x32xf32>
    %458 = vector.extract_strided_slice %438 {offsets = [64, 0], sizes = [64, 32], strides = [1, 1]} : vector<128x32xf32> to vector<64x32xf32>
    %cst_114 = arith.constant 1.000000e+00 : f32
    %459 = vector.broadcast %cst_114 : f32 to vector<1x32xf32>
    %460 = arith.addf %459, %457 : vector<1x32xf32>
    %461 = vector.broadcast %460 : vector<1x32xf32> to vector<64x32xf32>
    %462 = arith.mulf %458, %461 : vector<64x32xf32>
    %463 = vector.broadcast %454 : vector<1x32xf32> to vector<64x32xf32>
    %464 = arith.addf %462, %463 : vector<64x32xf32>
    %465 = tpu.concatenate %451, %464 in 0 : vector<64x32xf32>, vector<64x32xf32> -> vector<128x32xf32>
    %c720 = arith.constant 720 : index
    %c0_115 = arith.constant 0 : index
    %466 = vector.load %arg4[%c720, %c0_115] : memref<1072x256xbf16, #tpu.memory_space<vmem>>, vector<32x96xbf16>
    %467 = arith.truncf %465 : vector<128x32xf32> to vector<128x32xbf16>
    %cst_116 = arith.constant dense<0.000000e+00> : vector<128x96xf32>
    %468 = tpu.matmul %467, %466, %cst_116 {dimension_numbers = #tpu.dot_dimension_numbers<[1], [0], [0], [1], [0, 0, 1, 1], [], []>} : vector<128x32xbf16>, vector<32x96xbf16>, vector<128x96xf32> -> vector<128x96xf32>
    %c184 = arith.constant 184 : index
    %c0_117 = arith.constant 0 : index
    %469 = vector.load %arg5[%c184, %c0_117] : memref<256x256xf32, #tpu.memory_space<vmem>>, vector<1x96xf32>
    %470 = vector.broadcast %469 : vector<1x96xf32> to vector<128x96xf32>
    %471 = arith.addf %468, %470 : vector<128x96xf32>
    %472 = vector.extract_strided_slice %471 {offsets = [0, 0], sizes = [128, 32], strides = [1, 1]} : vector<128x96xf32> to vector<128x32xf32>
    %473 = vector.extract_strided_slice %471 {offsets = [0, 32], sizes = [128, 32], strides = [1, 1]} : vector<128x96xf32> to vector<128x32xf32>
    %474 = vector.extract_strided_slice %471 {offsets = [0, 64], sizes = [128, 32], strides = [1, 1]} : vector<128x96xf32> to vector<128x32xf32>
    %c752 = arith.constant 752 : index
    %c0_118 = arith.constant 0 : index
    %475 = vector.load %arg4[%c752, %c0_118] : memref<1072x256xbf16, #tpu.memory_space<vmem>>, vector<32x32xbf16>
    %476 = vector.extract_strided_slice %472 {offsets = [0, 0], sizes = [64, 16], strides = [1, 1]} : vector<128x32xf32> to vector<64x16xf32>
    %477 = vector.extract_strided_slice %473 {offsets = [0, 0], sizes = [64, 16], strides = [1, 1]} : vector<128x32xf32> to vector<64x16xf32>
    %478 = vector.extract_strided_slice %474 {offsets = [0, 0], sizes = [64, 16], strides = [1, 1]} : vector<128x32xf32> to vector<64x16xf32>
    %479 = arith.truncf %476 : vector<64x16xf32> to vector<64x16xbf16>
    %480 = arith.truncf %477 : vector<64x16xf32> to vector<64x16xbf16>
    %cst_119 = arith.constant dense<0.000000e+00> : vector<64x64xf32>
    %481 = tpu.matmul %479, %480, %cst_119 {dimension_numbers = #tpu.dot_dimension_numbers<[1], [1], [0], [0], [0, 0, 1, 0], [], []>} : vector<64x16xbf16>, vector<64x16xbf16>, vector<64x64xf32> -> vector<64x64xf32>
    %cst_120 = arith.constant dense<0xFF800000> : vector<64xf32>
    %482 = vector.multi_reduction <maximumf>, %481, %cst_120 [1] : vector<64x64xf32> to vector<64xf32>
    %483 = vector.shape_cast %482 : vector<64xf32> to vector<64x1xf32>
    %484 = vector.broadcast %483 : vector<64x1xf32> to vector<64x64xf32>
    %485 = arith.subf %481, %484 : vector<64x64xf32>
    %486 = math.exp %485 : vector<64x64xf32>
    %cst_121 = arith.constant dense<0.000000e+00> : vector<64xf32>
    %487 = vector.multi_reduction <add>, %486, %cst_121 [1] : vector<64x64xf32> to vector<64xf32>
    %488 = vector.shape_cast %487 : vector<64xf32> to vector<64x1xf32>
    %489 = arith.truncf %486 : vector<64x64xf32> to vector<64x64xbf16>
    %490 = arith.truncf %478 : vector<64x16xf32> to vector<64x16xbf16>
    %cst_122 = arith.constant dense<0.000000e+00> : vector<64x16xf32>
    %491 = tpu.matmul %489, %490, %cst_122 {dimension_numbers = #tpu.dot_dimension_numbers<[1], [0], [0], [1], [0, 0, 1, 1], [], []>} : vector<64x64xbf16>, vector<64x16xbf16>, vector<64x16xf32> -> vector<64x16xf32>
    %492 = tpu.reciprocal %488 {approx = true} : vector<64x1xf32> -> vector<64x1xf32>
    %493 = vector.broadcast %492 : vector<64x1xf32> to vector<64x16xf32>
    %494 = arith.mulf %491, %493 : vector<64x16xf32>
    %495 = vector.extract_strided_slice %472 {offsets = [64, 0], sizes = [64, 16], strides = [1, 1]} : vector<128x32xf32> to vector<64x16xf32>
    %496 = vector.extract_strided_slice %473 {offsets = [64, 0], sizes = [64, 16], strides = [1, 1]} : vector<128x32xf32> to vector<64x16xf32>
    %497 = vector.extract_strided_slice %474 {offsets = [64, 0], sizes = [64, 16], strides = [1, 1]} : vector<128x32xf32> to vector<64x16xf32>
    %498 = arith.truncf %495 : vector<64x16xf32> to vector<64x16xbf16>
    %499 = arith.truncf %496 : vector<64x16xf32> to vector<64x16xbf16>
    %cst_123 = arith.constant dense<0.000000e+00> : vector<64x64xf32>
    %500 = tpu.matmul %498, %499, %cst_123 {dimension_numbers = #tpu.dot_dimension_numbers<[1], [1], [0], [0], [0, 0, 1, 0], [], []>} : vector<64x16xbf16>, vector<64x16xbf16>, vector<64x64xf32> -> vector<64x64xf32>
    %cst_124 = arith.constant dense<0xFF800000> : vector<64xf32>
    %501 = vector.multi_reduction <maximumf>, %500, %cst_124 [1] : vector<64x64xf32> to vector<64xf32>
    %502 = vector.shape_cast %501 : vector<64xf32> to vector<64x1xf32>
    %503 = vector.broadcast %502 : vector<64x1xf32> to vector<64x64xf32>
    %504 = arith.subf %500, %503 : vector<64x64xf32>
    %505 = math.exp %504 : vector<64x64xf32>
    %cst_125 = arith.constant dense<0.000000e+00> : vector<64xf32>
    %506 = vector.multi_reduction <add>, %505, %cst_125 [1] : vector<64x64xf32> to vector<64xf32>
    %507 = vector.shape_cast %506 : vector<64xf32> to vector<64x1xf32>
    %508 = arith.truncf %505 : vector<64x64xf32> to vector<64x64xbf16>
    %509 = arith.truncf %497 : vector<64x16xf32> to vector<64x16xbf16>
    %cst_126 = arith.constant dense<0.000000e+00> : vector<64x16xf32>
    %510 = tpu.matmul %508, %509, %cst_126 {dimension_numbers = #tpu.dot_dimension_numbers<[1], [0], [0], [1], [0, 0, 1, 1], [], []>} : vector<64x64xbf16>, vector<64x16xbf16>, vector<64x16xf32> -> vector<64x16xf32>
    %511 = tpu.reciprocal %507 {approx = true} : vector<64x1xf32> -> vector<64x1xf32>
    %512 = vector.broadcast %511 : vector<64x1xf32> to vector<64x16xf32>
    %513 = arith.mulf %510, %512 : vector<64x16xf32>
    %514 = tpu.concatenate %494, %513 in 0 : vector<64x16xf32>, vector<64x16xf32> -> vector<128x16xf32>
    %515 = vector.extract_strided_slice %475 {offsets = [0, 0], sizes = [16, 32], strides = [1, 1]} : vector<32x32xbf16> to vector<16x32xbf16>
    %516 = arith.truncf %514 : vector<128x16xf32> to vector<128x16xbf16>
    %cst_127 = arith.constant dense<0.000000e+00> : vector<128x32xf32>
    %517 = tpu.matmul %516, %515, %cst_127 {dimension_numbers = #tpu.dot_dimension_numbers<[1], [0], [0], [1], [0, 0, 1, 1], [], []>} : vector<128x16xbf16>, vector<16x32xbf16>, vector<128x32xf32> -> vector<128x32xf32>
    %518 = vector.extract_strided_slice %472 {offsets = [0, 16], sizes = [64, 16], strides = [1, 1]} : vector<128x32xf32> to vector<64x16xf32>
    %519 = vector.extract_strided_slice %473 {offsets = [0, 16], sizes = [64, 16], strides = [1, 1]} : vector<128x32xf32> to vector<64x16xf32>
    %520 = vector.extract_strided_slice %474 {offsets = [0, 16], sizes = [64, 16], strides = [1, 1]} : vector<128x32xf32> to vector<64x16xf32>
    %521 = arith.truncf %518 : vector<64x16xf32> to vector<64x16xbf16>
    %522 = arith.truncf %519 : vector<64x16xf32> to vector<64x16xbf16>
    %cst_128 = arith.constant dense<0.000000e+00> : vector<64x64xf32>
    %523 = tpu.matmul %521, %522, %cst_128 {dimension_numbers = #tpu.dot_dimension_numbers<[1], [1], [0], [0], [0, 0, 1, 0], [], []>} : vector<64x16xbf16>, vector<64x16xbf16>, vector<64x64xf32> -> vector<64x64xf32>
    %cst_129 = arith.constant dense<0xFF800000> : vector<64xf32>
    %524 = vector.multi_reduction <maximumf>, %523, %cst_129 [1] : vector<64x64xf32> to vector<64xf32>
    %525 = vector.shape_cast %524 : vector<64xf32> to vector<64x1xf32>
    %526 = vector.broadcast %525 : vector<64x1xf32> to vector<64x64xf32>
    %527 = arith.subf %523, %526 : vector<64x64xf32>
    %528 = math.exp %527 : vector<64x64xf32>
    %cst_130 = arith.constant dense<0.000000e+00> : vector<64xf32>
    %529 = vector.multi_reduction <add>, %528, %cst_130 [1] : vector<64x64xf32> to vector<64xf32>
    %530 = vector.shape_cast %529 : vector<64xf32> to vector<64x1xf32>
    %531 = arith.truncf %528 : vector<64x64xf32> to vector<64x64xbf16>
    %532 = arith.truncf %520 : vector<64x16xf32> to vector<64x16xbf16>
    %cst_131 = arith.constant dense<0.000000e+00> : vector<64x16xf32>
    %533 = tpu.matmul %531, %532, %cst_131 {dimension_numbers = #tpu.dot_dimension_numbers<[1], [0], [0], [1], [0, 0, 1, 1], [], []>} : vector<64x64xbf16>, vector<64x16xbf16>, vector<64x16xf32> -> vector<64x16xf32>
    %534 = tpu.reciprocal %530 {approx = true} : vector<64x1xf32> -> vector<64x1xf32>
    %535 = vector.broadcast %534 : vector<64x1xf32> to vector<64x16xf32>
    %536 = arith.mulf %533, %535 : vector<64x16xf32>
    %537 = vector.extract_strided_slice %472 {offsets = [64, 16], sizes = [64, 16], strides = [1, 1]} : vector<128x32xf32> to vector<64x16xf32>
    %538 = vector.extract_strided_slice %473 {offsets = [64, 16], sizes = [64, 16], strides = [1, 1]} : vector<128x32xf32> to vector<64x16xf32>
    %539 = vector.extract_strided_slice %474 {offsets = [64, 16], sizes = [64, 16], strides = [1, 1]} : vector<128x32xf32> to vector<64x16xf32>
    %540 = arith.truncf %537 : vector<64x16xf32> to vector<64x16xbf16>
    %541 = arith.truncf %538 : vector<64x16xf32> to vector<64x16xbf16>
    %cst_132 = arith.constant dense<0.000000e+00> : vector<64x64xf32>
    %542 = tpu.matmul %540, %541, %cst_132 {dimension_numbers = #tpu.dot_dimension_numbers<[1], [1], [0], [0], [0, 0, 1, 0], [], []>} : vector<64x16xbf16>, vector<64x16xbf16>, vector<64x64xf32> -> vector<64x64xf32>
    %cst_133 = arith.constant dense<0xFF800000> : vector<64xf32>
    %543 = vector.multi_reduction <maximumf>, %542, %cst_133 [1] : vector<64x64xf32> to vector<64xf32>
    %544 = vector.shape_cast %543 : vector<64xf32> to vector<64x1xf32>
    %545 = vector.broadcast %544 : vector<64x1xf32> to vector<64x64xf32>
    %546 = arith.subf %542, %545 : vector<64x64xf32>
    %547 = math.exp %546 : vector<64x64xf32>
    %cst_134 = arith.constant dense<0.000000e+00> : vector<64xf32>
    %548 = vector.multi_reduction <add>, %547, %cst_134 [1] : vector<64x64xf32> to vector<64xf32>
    %549 = vector.shape_cast %548 : vector<64xf32> to vector<64x1xf32>
    %550 = arith.truncf %547 : vector<64x64xf32> to vector<64x64xbf16>
    %551 = arith.truncf %539 : vector<64x16xf32> to vector<64x16xbf16>
    %cst_135 = arith.constant dense<0.000000e+00> : vector<64x16xf32>
    %552 = tpu.matmul %550, %551, %cst_135 {dimension_numbers = #tpu.dot_dimension_numbers<[1], [0], [0], [1], [0, 0, 1, 1], [], []>} : vector<64x64xbf16>, vector<64x16xbf16>, vector<64x16xf32> -> vector<64x16xf32>
    %553 = tpu.reciprocal %549 {approx = true} : vector<64x1xf32> -> vector<64x1xf32>
    %554 = vector.broadcast %553 : vector<64x1xf32> to vector<64x16xf32>
    %555 = arith.mulf %552, %554 : vector<64x16xf32>
    %556 = tpu.concatenate %536, %555 in 0 : vector<64x16xf32>, vector<64x16xf32> -> vector<128x16xf32>
    %557 = vector.extract_strided_slice %475 {offsets = [16, 0], sizes = [16, 32], strides = [1, 1]} : vector<32x32xbf16> to vector<16x32xbf16>
    %558 = arith.truncf %556 : vector<128x16xf32> to vector<128x16xbf16>
    %cst_136 = arith.constant dense<0.000000e+00> : vector<128x32xf32>
    %559 = tpu.matmul %558, %557, %cst_136 {dimension_numbers = #tpu.dot_dimension_numbers<[1], [0], [0], [1], [0, 0, 1, 1], [], []>} : vector<128x16xbf16>, vector<16x32xbf16>, vector<128x32xf32> -> vector<128x32xf32>
    %560 = arith.addf %517, %559 : vector<128x32xf32>
    %c192 = arith.constant 192 : index
    %c0_137 = arith.constant 0 : index
    %561 = vector.load %arg5[%c192, %c0_137] : memref<256x256xf32, #tpu.memory_space<vmem>>, vector<1x32xf32>
    %562 = vector.broadcast %561 : vector<1x32xf32> to vector<128x32xf32>
    %563 = arith.addf %560, %562 : vector<128x32xf32>
    %564 = vector.extract_strided_slice %422 {offsets = [2, 0], sizes = [1, 32], strides = [1, 1]} : vector<6x32xf32> to vector<1x32xf32>
    %565 = vector.extract_strided_slice %40 {offsets = [0, 64], sizes = [1, 32], strides = [1, 1]} : vector<2x192xf32> to vector<1x32xf32>
    %566 = arith.addf %564, %565 : vector<1x32xf32>
    %567 = vector.extract_strided_slice %563 {offsets = [0, 0], sizes = [64, 32], strides = [1, 1]} : vector<128x32xf32> to vector<64x32xf32>
    %568 = vector.broadcast %566 : vector<1x32xf32> to vector<64x32xf32>
    %569 = arith.mulf %567, %568 : vector<64x32xf32>
    %570 = vector.extract_strided_slice %422 {offsets = [2, 0], sizes = [1, 32], strides = [1, 1]} : vector<6x32xf32> to vector<1x32xf32>
    %571 = vector.extract_strided_slice %40 {offsets = [1, 64], sizes = [1, 32], strides = [1, 1]} : vector<2x192xf32> to vector<1x32xf32>
    %572 = arith.addf %570, %571 : vector<1x32xf32>
    %573 = vector.extract_strided_slice %563 {offsets = [64, 0], sizes = [64, 32], strides = [1, 1]} : vector<128x32xf32> to vector<64x32xf32>
    %574 = vector.broadcast %572 : vector<1x32xf32> to vector<64x32xf32>
    %575 = arith.mulf %573, %574 : vector<64x32xf32>
    %576 = tpu.concatenate %569, %575 in 0 : vector<64x32xf32>, vector<64x32xf32> -> vector<128x32xf32>
    %577 = arith.addf %421, %576 : vector<128x32xf32>
    %c784 = arith.constant 784 : index
    %c0_138 = arith.constant 0 : index
    %578 = vector.load %arg4[%c784, %c0_138] : memref<1072x256xbf16, #tpu.memory_space<vmem>>, vector<32x32xbf16>
    %579 = arith.truncf %577 : vector<128x32xf32> to vector<128x32xbf16>
    %cst_139 = arith.constant dense<0.000000e+00> : vector<128x32xf32>
    %580 = tpu.matmul %579, %578, %cst_139 {dimension_numbers = #tpu.dot_dimension_numbers<[1], [0], [0], [1], [0, 0, 1, 1], [], []>} : vector<128x32xbf16>, vector<32x32xbf16>, vector<128x32xf32> -> vector<128x32xf32>
    %c200 = arith.constant 200 : index
    %c0_140 = arith.constant 0 : index
    %581 = vector.load %arg5[%c200, %c0_140] : memref<256x256xf32, #tpu.memory_space<vmem>>, vector<1x32xf32>
    %582 = vector.broadcast %581 : vector<1x32xf32> to vector<128x32xf32>
    %583 = arith.addf %580, %582 : vector<128x32xf32>
    %c816 = arith.constant 816 : index
    %c0_141 = arith.constant 0 : index
    %584 = vector.load %arg4[%c816, %c0_141] : memref<1072x256xbf16, #tpu.memory_space<vmem>>, vector<32x64xbf16>
    %585 = arith.truncf %66 : vector<16x32xf32> to vector<16x32xbf16>
    %cst_142 = arith.constant dense<0.000000e+00> : vector<16x64xf32>
    %586 = tpu.matmul %585, %584, %cst_142 {dimension_numbers = #tpu.dot_dimension_numbers<[1], [0], [0], [1], [0, 0, 1, 1], [], []>} : vector<16x32xbf16>, vector<32x64xbf16>, vector<16x64xf32> -> vector<16x64xf32>
    %c208 = arith.constant 208 : index
    %c0_143 = arith.constant 0 : index
    %587 = vector.load %arg5[%c208, %c0_143] : memref<256x256xf32, #tpu.memory_space<vmem>>, vector<1x64xf32>
    %588 = vector.broadcast %587 : vector<1x64xf32> to vector<16x64xf32>
    %589 = arith.addf %586, %588 : vector<16x64xf32>
    %590 = vector.extract_strided_slice %589 {offsets = [0, 0], sizes = [16, 32], strides = [1, 1]} : vector<16x64xf32> to vector<16x32xf32>
    %591 = vector.extract_strided_slice %589 {offsets = [0, 32], sizes = [16, 32], strides = [1, 1]} : vector<16x64xf32> to vector<16x32xf32>
    %c848 = arith.constant 848 : index
    %c0_144 = arith.constant 0 : index
    %592 = vector.load %arg4[%c848, %c0_144] : memref<1072x256xbf16, #tpu.memory_space<vmem>>, vector<32x32xbf16>
    %593 = vector.extract_strided_slice %583 {offsets = [0, 0], sizes = [64, 16], strides = [1, 1]} : vector<128x32xf32> to vector<64x16xf32>
    %594 = vector.extract_strided_slice %590 {offsets = [0, 0], sizes = [8, 16], strides = [1, 1]} : vector<16x32xf32> to vector<8x16xf32>
    %595 = vector.extract_strided_slice %591 {offsets = [0, 0], sizes = [8, 16], strides = [1, 1]} : vector<16x32xf32> to vector<8x16xf32>
    %596 = arith.truncf %593 : vector<64x16xf32> to vector<64x16xbf16>
    %597 = arith.truncf %594 : vector<8x16xf32> to vector<8x16xbf16>
    %cst_145 = arith.constant dense<0.000000e+00> : vector<64x8xf32>
    %598 = tpu.matmul %596, %597, %cst_145 {dimension_numbers = #tpu.dot_dimension_numbers<[1], [1], [0], [0], [0, 0, 1, 0], [], []>} : vector<64x16xbf16>, vector<8x16xbf16>, vector<64x8xf32> -> vector<64x8xf32>
    %599 = vector.extract_strided_slice %67 {offsets = [0, 0], sizes = [1, 8], strides = [1, 1]} : vector<2x8xf32> to vector<1x8xf32>
    %600 = vector.broadcast %599 : vector<1x8xf32> to vector<64x8xf32>
    %601 = arith.addf %598, %600 : vector<64x8xf32>
    %cst_146 = arith.constant dense<0xFF800000> : vector<64xf32>
    %602 = vector.multi_reduction <maximumf>, %601, %cst_146 [1] : vector<64x8xf32> to vector<64xf32>
    %603 = vector.shape_cast %602 : vector<64xf32> to vector<64x1xf32>
    %604 = vector.broadcast %603 : vector<64x1xf32> to vector<64x8xf32>
    %605 = arith.subf %601, %604 : vector<64x8xf32>
    %606 = math.exp %605 : vector<64x8xf32>
    %cst_147 = arith.constant dense<0.000000e+00> : vector<64xf32>
    %607 = vector.multi_reduction <add>, %606, %cst_147 [1] : vector<64x8xf32> to vector<64xf32>
    %608 = vector.shape_cast %607 : vector<64xf32> to vector<64x1xf32>
    %609 = arith.truncf %606 : vector<64x8xf32> to vector<64x8xbf16>
    %610 = arith.truncf %595 : vector<8x16xf32> to vector<8x16xbf16>
    %cst_148 = arith.constant dense<0.000000e+00> : vector<64x16xf32>
    %611 = tpu.matmul %609, %610, %cst_148 {dimension_numbers = #tpu.dot_dimension_numbers<[1], [0], [0], [1], [0, 0, 1, 1], [], []>} : vector<64x8xbf16>, vector<8x16xbf16>, vector<64x16xf32> -> vector<64x16xf32>
    %612 = tpu.reciprocal %608 {approx = true} : vector<64x1xf32> -> vector<64x1xf32>
    %613 = vector.broadcast %612 : vector<64x1xf32> to vector<64x16xf32>
    %614 = arith.mulf %611, %613 : vector<64x16xf32>
    %615 = vector.extract_strided_slice %583 {offsets = [64, 0], sizes = [64, 16], strides = [1, 1]} : vector<128x32xf32> to vector<64x16xf32>
    %616 = vector.extract_strided_slice %590 {offsets = [8, 0], sizes = [8, 16], strides = [1, 1]} : vector<16x32xf32> to vector<8x16xf32>
    %617 = vector.extract_strided_slice %591 {offsets = [8, 0], sizes = [8, 16], strides = [1, 1]} : vector<16x32xf32> to vector<8x16xf32>
    %618 = arith.truncf %615 : vector<64x16xf32> to vector<64x16xbf16>
    %619 = arith.truncf %616 : vector<8x16xf32> to vector<8x16xbf16>
    %cst_149 = arith.constant dense<0.000000e+00> : vector<64x8xf32>
    %620 = tpu.matmul %618, %619, %cst_149 {dimension_numbers = #tpu.dot_dimension_numbers<[1], [1], [0], [0], [0, 0, 1, 0], [], []>} : vector<64x16xbf16>, vector<8x16xbf16>, vector<64x8xf32> -> vector<64x8xf32>
    %621 = vector.extract_strided_slice %67 {offsets = [1, 0], sizes = [1, 8], strides = [1, 1]} : vector<2x8xf32> to vector<1x8xf32>
    %622 = vector.broadcast %621 : vector<1x8xf32> to vector<64x8xf32>
    %623 = arith.addf %620, %622 : vector<64x8xf32>
    %cst_150 = arith.constant dense<0xFF800000> : vector<64xf32>
    %624 = vector.multi_reduction <maximumf>, %623, %cst_150 [1] : vector<64x8xf32> to vector<64xf32>
    %625 = vector.shape_cast %624 : vector<64xf32> to vector<64x1xf32>
    %626 = vector.broadcast %625 : vector<64x1xf32> to vector<64x8xf32>
    %627 = arith.subf %623, %626 : vector<64x8xf32>
    %628 = math.exp %627 : vector<64x8xf32>
    %cst_151 = arith.constant dense<0.000000e+00> : vector<64xf32>
    %629 = vector.multi_reduction <add>, %628, %cst_151 [1] : vector<64x8xf32> to vector<64xf32>
    %630 = vector.shape_cast %629 : vector<64xf32> to vector<64x1xf32>
    %631 = arith.truncf %628 : vector<64x8xf32> to vector<64x8xbf16>
    %632 = arith.truncf %617 : vector<8x16xf32> to vector<8x16xbf16>
    %cst_152 = arith.constant dense<0.000000e+00> : vector<64x16xf32>
    %633 = tpu.matmul %631, %632, %cst_152 {dimension_numbers = #tpu.dot_dimension_numbers<[1], [0], [0], [1], [0, 0, 1, 1], [], []>} : vector<64x8xbf16>, vector<8x16xbf16>, vector<64x16xf32> -> vector<64x16xf32>
    %634 = tpu.reciprocal %630 {approx = true} : vector<64x1xf32> -> vector<64x1xf32>
    %635 = vector.broadcast %634 : vector<64x1xf32> to vector<64x16xf32>
    %636 = arith.mulf %633, %635 : vector<64x16xf32>
    %637 = tpu.concatenate %614, %636 in 0 : vector<64x16xf32>, vector<64x16xf32> -> vector<128x16xf32>
    %638 = vector.extract_strided_slice %592 {offsets = [0, 0], sizes = [16, 32], strides = [1, 1]} : vector<32x32xbf16> to vector<16x32xbf16>
    %639 = arith.truncf %637 : vector<128x16xf32> to vector<128x16xbf16>
    %cst_153 = arith.constant dense<0.000000e+00> : vector<128x32xf32>
    %640 = tpu.matmul %639, %638, %cst_153 {dimension_numbers = #tpu.dot_dimension_numbers<[1], [0], [0], [1], [0, 0, 1, 1], [], []>} : vector<128x16xbf16>, vector<16x32xbf16>, vector<128x32xf32> -> vector<128x32xf32>
    %641 = vector.extract_strided_slice %583 {offsets = [0, 16], sizes = [64, 16], strides = [1, 1]} : vector<128x32xf32> to vector<64x16xf32>
    %642 = vector.extract_strided_slice %590 {offsets = [0, 16], sizes = [8, 16], strides = [1, 1]} : vector<16x32xf32> to vector<8x16xf32>
    %643 = vector.extract_strided_slice %591 {offsets = [0, 16], sizes = [8, 16], strides = [1, 1]} : vector<16x32xf32> to vector<8x16xf32>
    %644 = arith.truncf %641 : vector<64x16xf32> to vector<64x16xbf16>
    %645 = arith.truncf %642 : vector<8x16xf32> to vector<8x16xbf16>
    %cst_154 = arith.constant dense<0.000000e+00> : vector<64x8xf32>
    %646 = tpu.matmul %644, %645, %cst_154 {dimension_numbers = #tpu.dot_dimension_numbers<[1], [1], [0], [0], [0, 0, 1, 0], [], []>} : vector<64x16xbf16>, vector<8x16xbf16>, vector<64x8xf32> -> vector<64x8xf32>
    %647 = vector.extract_strided_slice %67 {offsets = [0, 0], sizes = [1, 8], strides = [1, 1]} : vector<2x8xf32> to vector<1x8xf32>
    %648 = vector.broadcast %647 : vector<1x8xf32> to vector<64x8xf32>
    %649 = arith.addf %646, %648 : vector<64x8xf32>
    %cst_155 = arith.constant dense<0xFF800000> : vector<64xf32>
    %650 = vector.multi_reduction <maximumf>, %649, %cst_155 [1] : vector<64x8xf32> to vector<64xf32>
    %651 = vector.shape_cast %650 : vector<64xf32> to vector<64x1xf32>
    %652 = vector.broadcast %651 : vector<64x1xf32> to vector<64x8xf32>
    %653 = arith.subf %649, %652 : vector<64x8xf32>
    %654 = math.exp %653 : vector<64x8xf32>
    %cst_156 = arith.constant dense<0.000000e+00> : vector<64xf32>
    %655 = vector.multi_reduction <add>, %654, %cst_156 [1] : vector<64x8xf32> to vector<64xf32>
    %656 = vector.shape_cast %655 : vector<64xf32> to vector<64x1xf32>
    %657 = arith.truncf %654 : vector<64x8xf32> to vector<64x8xbf16>
    %658 = arith.truncf %643 : vector<8x16xf32> to vector<8x16xbf16>
    %cst_157 = arith.constant dense<0.000000e+00> : vector<64x16xf32>
    %659 = tpu.matmul %657, %658, %cst_157 {dimension_numbers = #tpu.dot_dimension_numbers<[1], [0], [0], [1], [0, 0, 1, 1], [], []>} : vector<64x8xbf16>, vector<8x16xbf16>, vector<64x16xf32> -> vector<64x16xf32>
    %660 = tpu.reciprocal %656 {approx = true} : vector<64x1xf32> -> vector<64x1xf32>
    %661 = vector.broadcast %660 : vector<64x1xf32> to vector<64x16xf32>
    %662 = arith.mulf %659, %661 : vector<64x16xf32>
    %663 = vector.extract_strided_slice %583 {offsets = [64, 16], sizes = [64, 16], strides = [1, 1]} : vector<128x32xf32> to vector<64x16xf32>
    %664 = vector.extract_strided_slice %590 {offsets = [8, 16], sizes = [8, 16], strides = [1, 1]} : vector<16x32xf32> to vector<8x16xf32>
    %665 = vector.extract_strided_slice %591 {offsets = [8, 16], sizes = [8, 16], strides = [1, 1]} : vector<16x32xf32> to vector<8x16xf32>
    %666 = arith.truncf %663 : vector<64x16xf32> to vector<64x16xbf16>
    %667 = arith.truncf %664 : vector<8x16xf32> to vector<8x16xbf16>
    %cst_158 = arith.constant dense<0.000000e+00> : vector<64x8xf32>
    %668 = tpu.matmul %666, %667, %cst_158 {dimension_numbers = #tpu.dot_dimension_numbers<[1], [1], [0], [0], [0, 0, 1, 0], [], []>} : vector<64x16xbf16>, vector<8x16xbf16>, vector<64x8xf32> -> vector<64x8xf32>
    %669 = vector.extract_strided_slice %67 {offsets = [1, 0], sizes = [1, 8], strides = [1, 1]} : vector<2x8xf32> to vector<1x8xf32>
    %670 = vector.broadcast %669 : vector<1x8xf32> to vector<64x8xf32>
    %671 = arith.addf %668, %670 : vector<64x8xf32>
    %cst_159 = arith.constant dense<0xFF800000> : vector<64xf32>
    %672 = vector.multi_reduction <maximumf>, %671, %cst_159 [1] : vector<64x8xf32> to vector<64xf32>
    %673 = vector.shape_cast %672 : vector<64xf32> to vector<64x1xf32>
    %674 = vector.broadcast %673 : vector<64x1xf32> to vector<64x8xf32>
    %675 = arith.subf %671, %674 : vector<64x8xf32>
    %676 = math.exp %675 : vector<64x8xf32>
    %cst_160 = arith.constant dense<0.000000e+00> : vector<64xf32>
    %677 = vector.multi_reduction <add>, %676, %cst_160 [1] : vector<64x8xf32> to vector<64xf32>
    %678 = vector.shape_cast %677 : vector<64xf32> to vector<64x1xf32>
    %679 = arith.truncf %676 : vector<64x8xf32> to vector<64x8xbf16>
    %680 = arith.truncf %665 : vector<8x16xf32> to vector<8x16xbf16>
    %cst_161 = arith.constant dense<0.000000e+00> : vector<64x16xf32>
    %681 = tpu.matmul %679, %680, %cst_161 {dimension_numbers = #tpu.dot_dimension_numbers<[1], [0], [0], [1], [0, 0, 1, 1], [], []>} : vector<64x8xbf16>, vector<8x16xbf16>, vector<64x16xf32> -> vector<64x16xf32>
    %682 = tpu.reciprocal %678 {approx = true} : vector<64x1xf32> -> vector<64x1xf32>
    %683 = vector.broadcast %682 : vector<64x1xf32> to vector<64x16xf32>
    %684 = arith.mulf %681, %683 : vector<64x16xf32>
    %685 = tpu.concatenate %662, %684 in 0 : vector<64x16xf32>, vector<64x16xf32> -> vector<128x16xf32>
    %686 = vector.extract_strided_slice %592 {offsets = [16, 0], sizes = [16, 32], strides = [1, 1]} : vector<32x32xbf16> to vector<16x32xbf16>
    %687 = arith.truncf %685 : vector<128x16xf32> to vector<128x16xbf16>
    %cst_162 = arith.constant dense<0.000000e+00> : vector<128x32xf32>
    %688 = tpu.matmul %687, %686, %cst_162 {dimension_numbers = #tpu.dot_dimension_numbers<[1], [0], [0], [1], [0, 0, 1, 1], [], []>} : vector<128x16xbf16>, vector<16x32xbf16>, vector<128x32xf32> -> vector<128x32xf32>
    %689 = arith.addf %640, %688 : vector<128x32xf32>
    %c216 = arith.constant 216 : index
    %c0_163 = arith.constant 0 : index
    %690 = vector.load %arg5[%c216, %c0_163] : memref<256x256xf32, #tpu.memory_space<vmem>>, vector<1x32xf32>
    %691 = vector.broadcast %690 : vector<1x32xf32> to vector<128x32xf32>
    %692 = arith.addf %689, %691 : vector<128x32xf32>
    %693 = arith.addf %577, %692 : vector<128x32xf32>
    %cst_164 = arith.constant dense<0.000000e+00> : vector<128xf32>
    %694 = vector.multi_reduction <add>, %693, %cst_164 [1] : vector<128x32xf32> to vector<128xf32>
    %695 = vector.shape_cast %694 : vector<128xf32> to vector<128x1xf32>
    %cst_165 = arith.constant 3.200000e+01 : f32
    %696 = vector.broadcast %cst_165 : f32 to vector<128x1xf32>
    %697 = arith.divf %695, %696 : vector<128x1xf32>
    %698 = vector.broadcast %697 : vector<128x1xf32> to vector<128x32xf32>
    %699 = arith.subf %693, %698 : vector<128x32xf32>
    %700 = arith.mulf %699, %699 : vector<128x32xf32>
    %cst_166 = arith.constant dense<0.000000e+00> : vector<128xf32>
    %701 = vector.multi_reduction <add>, %700, %cst_166 [1] : vector<128x32xf32> to vector<128xf32>
    %702 = vector.shape_cast %701 : vector<128xf32> to vector<128x1xf32>
    %cst_167 = arith.constant 3.200000e+01 : f32
    %703 = vector.broadcast %cst_167 : f32 to vector<128x1xf32>
    %704 = arith.divf %702, %703 : vector<128x1xf32>
    %cst_168 = arith.constant 9.99999997E-7 : f32
    %705 = vector.broadcast %cst_168 : f32 to vector<128x1xf32>
    %706 = arith.addf %704, %705 : vector<128x1xf32>
    %707 = math.rsqrt %706 : vector<128x1xf32>
    %708 = vector.broadcast %707 : vector<128x1xf32> to vector<128x32xf32>
    %709 = arith.mulf %699, %708 : vector<128x32xf32>
    %710 = vector.extract_strided_slice %422 {offsets = [3, 0], sizes = [1, 32], strides = [1, 1]} : vector<6x32xf32> to vector<1x32xf32>
    %711 = vector.extract_strided_slice %40 {offsets = [0, 96], sizes = [1, 32], strides = [1, 1]} : vector<2x192xf32> to vector<1x32xf32>
    %712 = arith.addf %710, %711 : vector<1x32xf32>
    %713 = vector.extract_strided_slice %422 {offsets = [4, 0], sizes = [1, 32], strides = [1, 1]} : vector<6x32xf32> to vector<1x32xf32>
    %714 = vector.extract_strided_slice %40 {offsets = [0, 128], sizes = [1, 32], strides = [1, 1]} : vector<2x192xf32> to vector<1x32xf32>
    %715 = arith.addf %713, %714 : vector<1x32xf32>
    %716 = vector.extract_strided_slice %709 {offsets = [0, 0], sizes = [64, 32], strides = [1, 1]} : vector<128x32xf32> to vector<64x32xf32>
    %cst_169 = arith.constant 1.000000e+00 : f32
    %717 = vector.broadcast %cst_169 : f32 to vector<1x32xf32>
    %718 = arith.addf %717, %715 : vector<1x32xf32>
    %719 = vector.broadcast %718 : vector<1x32xf32> to vector<64x32xf32>
    %720 = arith.mulf %716, %719 : vector<64x32xf32>
    %721 = vector.broadcast %712 : vector<1x32xf32> to vector<64x32xf32>
    %722 = arith.addf %720, %721 : vector<64x32xf32>
    %723 = vector.extract_strided_slice %422 {offsets = [3, 0], sizes = [1, 32], strides = [1, 1]} : vector<6x32xf32> to vector<1x32xf32>
    %724 = vector.extract_strided_slice %40 {offsets = [1, 96], sizes = [1, 32], strides = [1, 1]} : vector<2x192xf32> to vector<1x32xf32>
    %725 = arith.addf %723, %724 : vector<1x32xf32>
    %726 = vector.extract_strided_slice %422 {offsets = [4, 0], sizes = [1, 32], strides = [1, 1]} : vector<6x32xf32> to vector<1x32xf32>
    %727 = vector.extract_strided_slice %40 {offsets = [1, 128], sizes = [1, 32], strides = [1, 1]} : vector<2x192xf32> to vector<1x32xf32>
    %728 = arith.addf %726, %727 : vector<1x32xf32>
    %729 = vector.extract_strided_slice %709 {offsets = [64, 0], sizes = [64, 32], strides = [1, 1]} : vector<128x32xf32> to vector<64x32xf32>
    %cst_170 = arith.constant 1.000000e+00 : f32
    %730 = vector.broadcast %cst_170 : f32 to vector<1x32xf32>
    %731 = arith.addf %730, %728 : vector<1x32xf32>
    %732 = vector.broadcast %731 : vector<1x32xf32> to vector<64x32xf32>
    %733 = arith.mulf %729, %732 : vector<64x32xf32>
    %734 = vector.broadcast %725 : vector<1x32xf32> to vector<64x32xf32>
    %735 = arith.addf %733, %734 : vector<64x32xf32>
    %736 = tpu.concatenate %722, %735 in 0 : vector<64x32xf32>, vector<64x32xf32> -> vector<128x32xf32>
    %c880 = arith.constant 880 : index
    %c0_171 = arith.constant 0 : index
    %737 = vector.load %arg4[%c880, %c0_171] : memref<1072x256xbf16, #tpu.memory_space<vmem>>, vector<32x128xbf16>
    %738 = arith.truncf %736 : vector<128x32xf32> to vector<128x32xbf16>
    %cst_172 = arith.constant dense<0.000000e+00> : vector<128x128xf32>
    %739 = tpu.matmul %738, %737, %cst_172 {dimension_numbers = #tpu.dot_dimension_numbers<[1], [0], [0], [1], [0, 0, 1, 1], [], []>} : vector<128x32xbf16>, vector<32x128xbf16>, vector<128x128xf32> -> vector<128x128xf32>
    %c224 = arith.constant 224 : index
    %c0_173 = arith.constant 0 : index
    %740 = vector.load %arg5[%c224, %c0_173] : memref<256x256xf32, #tpu.memory_space<vmem>>, vector<1x128xf32>
    %741 = vector.broadcast %740 : vector<1x128xf32> to vector<128x128xf32>
    %742 = arith.addf %739, %741 : vector<128x128xf32>
    %cst_174 = arith.constant 5.000000e-01 : f32
    %743 = vector.broadcast %cst_174 : f32 to vector<128x128xf32>
    %744 = arith.mulf %743, %742 : vector<128x128xf32>
    %cst_175 = arith.constant 4.471500e-02 : f32
    %745 = vector.broadcast %cst_175 : f32 to vector<128x128xf32>
    %746 = arith.mulf %745, %742 : vector<128x128xf32>
    %747 = arith.mulf %746, %742 : vector<128x128xf32>
    %748 = arith.mulf %747, %742 : vector<128x128xf32>
    %749 = arith.addf %742, %748 : vector<128x128xf32>
    %cst_176 = arith.constant 0.797884583 : f32
    %750 = vector.broadcast %cst_176 : f32 to vector<128x128xf32>
    %751 = arith.mulf %750, %749 : vector<128x128xf32>
    %752 = math.tanh %751 : vector<128x128xf32>
    %cst_177 = arith.constant 1.000000e+00 : f32
    %753 = vector.broadcast %cst_177 : f32 to vector<128x128xf32>
    %754 = arith.addf %753, %752 : vector<128x128xf32>
    %755 = arith.mulf %744, %754 : vector<128x128xf32>
    %c912 = arith.constant 912 : index
    %c0_178 = arith.constant 0 : index
    %756 = vector.load %arg4[%c912, %c0_178] : memref<1072x256xbf16, #tpu.memory_space<vmem>>, vector<128x32xbf16>
    %757 = arith.truncf %755 : vector<128x128xf32> to vector<128x128xbf16>
    %cst_179 = arith.constant dense<0.000000e+00> : vector<128x32xf32>
    %758 = tpu.matmul %757, %756, %cst_179 {dimension_numbers = #tpu.dot_dimension_numbers<[1], [0], [0], [1], [0, 0, 1, 1], [], []>} : vector<128x128xbf16>, vector<128x32xbf16>, vector<128x32xf32> -> vector<128x32xf32>
    %c232 = arith.constant 232 : index
    %c0_180 = arith.constant 0 : index
    %759 = vector.load %arg5[%c232, %c0_180] : memref<256x256xf32, #tpu.memory_space<vmem>>, vector<1x32xf32>
    %760 = vector.broadcast %759 : vector<1x32xf32> to vector<128x32xf32>
    %761 = arith.addf %758, %760 : vector<128x32xf32>
    %762 = vector.extract_strided_slice %422 {offsets = [5, 0], sizes = [1, 32], strides = [1, 1]} : vector<6x32xf32> to vector<1x32xf32>
    %763 = vector.extract_strided_slice %40 {offsets = [0, 160], sizes = [1, 32], strides = [1, 1]} : vector<2x192xf32> to vector<1x32xf32>
    %764 = arith.addf %762, %763 : vector<1x32xf32>
    %765 = vector.extract_strided_slice %761 {offsets = [0, 0], sizes = [64, 32], strides = [1, 1]} : vector<128x32xf32> to vector<64x32xf32>
    %766 = vector.broadcast %764 : vector<1x32xf32> to vector<64x32xf32>
    %767 = arith.mulf %765, %766 : vector<64x32xf32>
    %768 = vector.extract_strided_slice %422 {offsets = [5, 0], sizes = [1, 32], strides = [1, 1]} : vector<6x32xf32> to vector<1x32xf32>
    %769 = vector.extract_strided_slice %40 {offsets = [1, 160], sizes = [1, 32], strides = [1, 1]} : vector<2x192xf32> to vector<1x32xf32>
    %770 = arith.addf %768, %769 : vector<1x32xf32>
    %771 = vector.extract_strided_slice %761 {offsets = [64, 0], sizes = [64, 32], strides = [1, 1]} : vector<128x32xf32> to vector<64x32xf32>
    %772 = vector.broadcast %770 : vector<1x32xf32> to vector<64x32xf32>
    %773 = arith.mulf %771, %772 : vector<64x32xf32>
    %774 = tpu.concatenate %767, %773 in 0 : vector<64x32xf32>, vector<64x32xf32> -> vector<128x32xf32>
    %775 = arith.addf %693, %774 : vector<128x32xf32>
    %c240 = arith.constant 240 : index
    %c0_181 = arith.constant 0 : index
    %776 = vector.load %arg5[%c240, %c0_181] : memref<256x256xf32, #tpu.memory_space<vmem>>, vector<2x32xf32>
    %cst_182 = arith.constant dense<0.000000e+00> : vector<128xf32>
    %777 = vector.multi_reduction <add>, %775, %cst_182 [1] : vector<128x32xf32> to vector<128xf32>
    %778 = vector.shape_cast %777 : vector<128xf32> to vector<128x1xf32>
    %cst_183 = arith.constant 3.200000e+01 : f32
    %779 = vector.broadcast %cst_183 : f32 to vector<128x1xf32>
    %780 = arith.divf %778, %779 : vector<128x1xf32>
    %781 = vector.broadcast %780 : vector<128x1xf32> to vector<128x32xf32>
    %782 = arith.subf %775, %781 : vector<128x32xf32>
    %783 = arith.mulf %782, %782 : vector<128x32xf32>
    %cst_184 = arith.constant dense<0.000000e+00> : vector<128xf32>
    %784 = vector.multi_reduction <add>, %783, %cst_184 [1] : vector<128x32xf32> to vector<128xf32>
    %785 = vector.shape_cast %784 : vector<128xf32> to vector<128x1xf32>
    %cst_185 = arith.constant 3.200000e+01 : f32
    %786 = vector.broadcast %cst_185 : f32 to vector<128x1xf32>
    %787 = arith.divf %785, %786 : vector<128x1xf32>
    %cst_186 = arith.constant 9.99999997E-7 : f32
    %788 = vector.broadcast %cst_186 : f32 to vector<128x1xf32>
    %789 = arith.addf %787, %788 : vector<128x1xf32>
    %790 = math.rsqrt %789 : vector<128x1xf32>
    %791 = vector.broadcast %790 : vector<128x1xf32> to vector<128x32xf32>
    %792 = arith.mulf %782, %791 : vector<128x32xf32>
    %793 = vector.extract_strided_slice %776 {offsets = [0, 0], sizes = [1, 32], strides = [1, 1]} : vector<2x32xf32> to vector<1x32xf32>
    %794 = vector.extract_strided_slice %28 {offsets = [0, 0], sizes = [1, 32], strides = [1, 1]} : vector<2x32xf32> to vector<1x32xf32>
    %795 = arith.addf %793, %794 : vector<1x32xf32>
    %796 = vector.extract_strided_slice %776 {offsets = [1, 0], sizes = [1, 32], strides = [1, 1]} : vector<2x32xf32> to vector<1x32xf32>
    %797 = vector.extract_strided_slice %28 {offsets = [0, 0], sizes = [1, 32], strides = [1, 1]} : vector<2x32xf32> to vector<1x32xf32>
    %798 = arith.addf %796, %797 : vector<1x32xf32>
    %799 = vector.extract_strided_slice %792 {offsets = [0, 0], sizes = [64, 32], strides = [1, 1]} : vector<128x32xf32> to vector<64x32xf32>
    %cst_187 = arith.constant 1.000000e+00 : f32
    %800 = vector.broadcast %cst_187 : f32 to vector<1x32xf32>
    %801 = arith.addf %800, %798 : vector<1x32xf32>
    %802 = vector.broadcast %801 : vector<1x32xf32> to vector<64x32xf32>
    %803 = arith.mulf %799, %802 : vector<64x32xf32>
    %804 = vector.broadcast %795 : vector<1x32xf32> to vector<64x32xf32>
    %805 = arith.addf %803, %804 : vector<64x32xf32>
    %806 = vector.extract_strided_slice %776 {offsets = [0, 0], sizes = [1, 32], strides = [1, 1]} : vector<2x32xf32> to vector<1x32xf32>
    %807 = vector.extract_strided_slice %28 {offsets = [1, 0], sizes = [1, 32], strides = [1, 1]} : vector<2x32xf32> to vector<1x32xf32>
    %808 = arith.addf %806, %807 : vector<1x32xf32>
    %809 = vector.extract_strided_slice %776 {offsets = [1, 0], sizes = [1, 32], strides = [1, 1]} : vector<2x32xf32> to vector<1x32xf32>
    %810 = vector.extract_strided_slice %28 {offsets = [1, 0], sizes = [1, 32], strides = [1, 1]} : vector<2x32xf32> to vector<1x32xf32>
    %811 = arith.addf %809, %810 : vector<1x32xf32>
    %812 = vector.extract_strided_slice %792 {offsets = [64, 0], sizes = [64, 32], strides = [1, 1]} : vector<128x32xf32> to vector<64x32xf32>
    %cst_188 = arith.constant 1.000000e+00 : f32
    %813 = vector.broadcast %cst_188 : f32 to vector<1x32xf32>
    %814 = arith.addf %813, %811 : vector<1x32xf32>
    %815 = vector.broadcast %814 : vector<1x32xf32> to vector<64x32xf32>
    %816 = arith.mulf %812, %815 : vector<64x32xf32>
    %817 = vector.broadcast %808 : vector<1x32xf32> to vector<64x32xf32>
    %818 = arith.addf %816, %817 : vector<64x32xf32>
    %819 = tpu.concatenate %805, %818 in 0 : vector<64x32xf32>, vector<64x32xf32> -> vector<128x32xf32>
    %c1040 = arith.constant 1040 : index
    %c0_189 = arith.constant 0 : index
    %820 = vector.load %arg4[%c1040, %c0_189] : memref<1072x256xbf16, #tpu.memory_space<vmem>>, vector<32x128xbf16>
    %821 = arith.truncf %819 : vector<128x32xf32> to vector<128x32xbf16>
    %cst_190 = arith.constant dense<0.000000e+00> : vector<128x128xf32>
    %822 = tpu.matmul %821, %820, %cst_190 {dimension_numbers = #tpu.dot_dimension_numbers<[1], [0], [0], [1], [0, 0, 1, 1], [], []>} : vector<128x32xbf16>, vector<32x128xbf16>, vector<128x128xf32> -> vector<128x128xf32>
    %c248 = arith.constant 248 : index
    %c0_191 = arith.constant 0 : index
    %823 = vector.load %arg5[%c248, %c0_191] : memref<256x256xf32, #tpu.memory_space<vmem>>, vector<1x128xf32>
    %824 = vector.broadcast %823 : vector<1x128xf32> to vector<128x128xf32>
    %825 = arith.addf %822, %824 : vector<128x128xf32>
    %c0_192 = arith.constant 0 : index
    %c0_193 = arith.constant 0 : index
    %826 = vector.load %arg6[%c0_192, %c0_193] : memref<128x128xf32, #tpu.memory_space<vmem>>, vector<128x128xf32>
    tpu.vector_store %arg6[%c0_192, %c0_193], %825 {strides = array<i32>} : memref<128x128xf32, #tpu.memory_space<vmem>>, vector<128x128xf32>,
    return
  }
}

</mosaic_0001>

<llo_original>
// kernel: forward.1
$region0: #{forward.1}
  #allocation0 [shape = 'u32[]', space=smem, size = 0x4, offset = 0x4, fixed_abs, tag = 'smem constant byte address 0x4 - core index']
  #allocation1 [shape = 'u32[72,128]{1,0:T(1,128)}', space=vmem, size = 0x9000, scoped, tag = 'internal scratch']
  %s0 = inlined_call_operand.vmem [shape: f32[128,16], index: 0, kind: input, shape index: {}]
  %s1 = inlined_call_operand.vmem [shape: f32[2,256], index: 1, kind: input, shape index: {}]
  %s2 = inlined_call_operand.vmem [shape: f32[16,32], index: 2, kind: input, shape index: {}]
  %s3 = inlined_call_operand.vmem [shape: f32[2,8], index: 3, kind: input, shape index: {}]
  %s4 = inlined_call_operand.vmem [shape: bf16[1072,256], index: 4, kind: input, shape index: {}]
  %s5 = inlined_call_operand.vmem [shape: f32[256,256], index: 5, kind: input, shape index: {}]
  %s6 = inlined_call_operand.vmem [shape: f32[128,128], index: 6, kind: output, shape index: {}]
  %s7 = sld [smem:[#allocation0]]
  $region34: #{forward.1} parent=0
    _
  %s9 = ssub.s32 1, %s7
  %s10 = scalar_select 0, %s9, %s7
  // Predicated region
  $region2: #{forward.1} parent=0 // pred_check
    _
  $region3: #{forward.1} parent=0 // pred_check_branch
    %12 = sbr.rel (0) target = $region5
  $region4: #{forward.1} parent=0 // pred_region
    _
  $region5: #{forward.1} parent=0 // pred_fallthru
    _
  // Predicated region
  $region6: #{forward.1} parent=0 // pred_check
    _
  $region7: #{forward.1} parent=0 // pred_check_branch
    %14 = sbr.rel (0) target = $region9
  $region8: #{forward.1} parent=0 // pred_region
    _
  $region9: #{forward.1} parent=0 // pred_fallthru
    _
  // Predicated region
  $region10: #{forward.1} parent=0 // pred_check
    _
  $region11: #{forward.1} parent=0 // pred_check_branch
    %16 = sbr.rel (0) target = $region13
  $region12: #{forward.1} parent=0 // pred_region
    _
  $region13: #{forward.1} parent=0 // pred_fallthru
    _
  // Predicated region
  $region14: #{forward.1} parent=0 // pred_check
    _
  $region15: #{forward.1} parent=0 // pred_check_branch
    %18 = sbr.rel (0) target = $region17
  $region16: #{forward.1} parent=0 // pred_region
    _
  $region17: #{forward.1} parent=0 // pred_fallthru
    _
  // Predicated region
  $region18: #{forward.1} parent=0 // pred_check
    _
  $region19: #{forward.1} parent=0 // pred_check_branch
    %20 = sbr.rel (0) target = $region21
  $region20: #{forward.1} parent=0 // pred_region
    _
  $region21: #{forward.1} parent=0 // pred_fallthru
    _
  // Predicated region
  $region22: #{forward.1} parent=0 // pred_check
    _
  $region23: #{forward.1} parent=0 // pred_check_branch
    %22 = sbr.rel (0) target = $region25
  $region24: #{forward.1} parent=0 // pred_region
    _
  $region25: #{forward.1} parent=0 // pred_fallthru
    _
  %v24 = vld [vmem:[%s5] sm:$0xff]
  %v25 = vld [vmem:[%s5 + $0x10] sm:$0xff]
  %v26 = vld [vmem:[%s5 + $0x20] sm:$0xff]
  %v27 = vld [vmem:[%s5 + $0x30] sm:$0xff]
  %v28 = vld [vmem:[%s5 + $0x40] sm:$0xff]
  %v29 = vld [vmem:[%s5 + $0x50] sm:$0xff]
  %v30 = vld [vmem:[%s5 + $0x60] sm:$0xff]
  %v31 = vld [vmem:[%s5 + $0x70] sm:$0xff]
  %v32 = vld [vmem:[%s0] sm:$0xff]
  %v33 = vld [vmem:[%s0 + $0x8] sm:$0xff]
  %v34 = vld [vmem:[%s0 + $0x10] sm:$0xff]
  %v35 = vld [vmem:[%s0 + $0x18] sm:$0xff]
  %v36 = vld [vmem:[%s0 + $0x20] sm:$0xff]
  %v37 = vld [vmem:[%s0 + $0x28] sm:$0xff]
  %v38 = vld [vmem:[%s0 + $0x30] sm:$0xff]
  %v39 = vld [vmem:[%s0 + $0x38] sm:$0xff]
  %v40 = vld [vmem:[%s0 + $0x40] sm:$0xff]
  %v41 = vld [vmem:[%s0 + $0x48] sm:$0xff]
  %v42 = vld [vmem:[%s0 + $0x50] sm:$0xff]
  %v43 = vld [vmem:[%s0 + $0x58] sm:$0xff]
  %v44 = vld [vmem:[%s0 + $0x60] sm:$0xff]
  %v45 = vld [vmem:[%s0 + $0x68] sm:$0xff]
  %v46 = vld [vmem:[%s0 + $0x70] sm:$0xff]
  %v47 = vld [vmem:[%s0 + $0x78] sm:$0xff]
  %v48 = vld [vmem:[%s4] sm:$0xf]
  %v49 = vld [vmem:[%s4 + $0x8] sm:$0xf]
  %v50 = vpack.c.bf16 %v33, %v32
  %v51 = vpack.c.bf16 %v35, %v34
  %v52 = vpack.c.bf16 %v37, %v36
  %v53 = vpack.c.bf16 %v39, %v38
  %v54 = vpack.c.bf16 %v41, %v40
  %v55 = vpack.c.bf16 %v43, %v42
  %v56 = vpack.c.bf16 %v45, %v44
  %v57 = vpack.c.bf16 %v47, %v46
  %v58 = vld [vmem:[%s5 + $0x80] ss:$0 sm:$0xff]
  %v61 = vunpack.c.l.b16 %v48
  %v62 = vunpack.c.l.b16 %v49
  %v63 = vpack.c.b16 %v62, %v61
  %vm65 = vcmask 130048
  %v67 = vsel %vm65, %v50, 0
  %v70 = vsel %vm65, %v51, 0
  %v73 = vsel %vm65, %v52, 0
  %v76 = vsel %vm65, %v53, 0
  %v79 = vsel %vm65, %v54, 0
  %v82 = vsel %vm65, %v55, 0
  %v85 = vsel %vm65, %v56, 0
  %v88 = vsel %vm65, %v57, 0
  %90 = vmatpush.bf16.msra.mxu0 0
  %91 = vmatpush.bf16.msra.mxu0 0
  %92 = vmatpush.bf16.msra.mxu0 0
  %93 = vmatpush.bf16.msra.mxu0 0
  %94 = vmatpush.bf16.msra.mxu0 0
  %95 = vmatpush.bf16.msra.mxu0 0
  %96 = vmatpush.bf16.msra.mxu0 0
  %97 = vmatpush.bf16.msra.mxu0 %v63
  %98 = vmatmul.bf16.gmra.mxu0 %v67
  %v99 = vpop.f32.mrf.mxu0
  %v100 = vadd.f32 %v58, %v99
  %v101 = vpop.f32.mrf.mxu0
  %v102 = vadd.f32 %v58, %v101
  %103 = vmatmul.bf16.gmra.mxu0 %v70
  %v104 = vpop.f32.mrf.mxu0
  %v105 = vadd.f32 %v58, %v104
  %v106 = vpop.f32.mrf.mxu0
  %v107 = vadd.f32 %v58, %v106
  %108 = vmatmul.bf16.gmra.mxu0 %v73
  %v109 = vpop.f32.mrf.mxu0
  %v110 = vadd.f32 %v58, %v109
  %v111 = vpop.f32.mrf.mxu0
  %v112 = vadd.f32 %v58, %v111
  %113 = vmatmul.bf16.gmra.mxu0 %v76
  %v114 = vpop.f32.mrf.mxu0
  %v115 = vadd.f32 %v58, %v114
  %v116 = vpop.f32.mrf.mxu0
  %v117 = vadd.f32 %v58, %v116
  %118 = vmatmul.bf16.gmra.mxu0 %v79
  %v119 = vpop.f32.mrf.mxu0
  %v120 = vadd.f32 %v58, %v119
  %v121 = vpop.f32.mrf.mxu0
  %v122 = vadd.f32 %v58, %v121
  %123 = vmatmul.bf16.gmra.mxu0 %v82
  %v124 = vpop.f32.mrf.mxu0
  %v125 = vadd.f32 %v58, %v124
  %v126 = vpop.f32.mrf.mxu0
  %v127 = vadd.f32 %v58, %v126
  %128 = vmatmul.bf16.gmra.mxu0 %v85
  %v129 = vpop.f32.mrf.mxu0
  %v130 = vadd.f32 %v58, %v129
  %v131 = vpop.f32.mrf.mxu0
  %v132 = vadd.f32 %v58, %v131
  %133 = vmatmul.bf16.gmra.mxu0 %v88
  %v134 = vpop.f32.mrf.mxu0
  %v135 = vadd.f32 %v58, %v134
  %v136 = vpop.f32.mrf.mxu0
  %v137 = vadd.f32 %v58, %v136
  %138 = vdwg.mxu0
  %v139 = vadd.f32 %v100, %v24
  %v140 = vadd.f32 %v102, %v25
  %v141 = vadd.f32 %v105, %v26
  %v142 = vadd.f32 %v107, %v27
  %v143 = vadd.f32 %v110, %v28
  %v144 = vadd.f32 %v112, %v29
  %v145 = vadd.f32 %v115, %v30
  %v146 = vadd.f32 %v117, %v31
  %v147 = vadd.f32 %v120, %v24
  %v148 = vadd.f32 %v122, %v25
  %v149 = vadd.f32 %v125, %v26
  %v150 = vadd.f32 %v127, %v27
  %v151 = vadd.f32 %v130, %v28
  %v152 = vadd.f32 %v132, %v29
  %v153 = vadd.f32 %v135, %v30
  %v154 = vadd.f32 %v137, %v31
  %v155 = vld [vmem:[%s1] sm:$0xf]
  %v156 = vld [vmem:[%s4 + $0x10] sm:$0xf]
  %v157 = vld [vmem:[%s4 + $0x18] sm:$0xf]
  %v158 = vld [vmem:[%s4 + $0x20] sm:$0xf]
  %v159 = vld [vmem:[%s4 + $0x28] sm:$0xf]
  %v160 = vld [vmem:[%s4 + $0x30] sm:$0xf]
  %v161 = vld [vmem:[%s4 + $0x38] sm:$0xf]
  %v162 = vld [vmem:[%s4 + $0x40] sm:$0xf]
  %v163 = vld [vmem:[%s4 + $0x48] sm:$0xf]
  %v164 = vld [vmem:[%s4 + $0x50] sm:$0xf]
  %v165 = vld [vmem:[%s4 + $0x58] sm:$0xf]
  %v166 = vld [vmem:[%s4 + $0x60] sm:$0xf]
  %v167 = vld [vmem:[%s4 + $0x68] sm:$0xf]
  %v168 = vld [vmem:[%s4 + $0x70] sm:$0xf]
  %v169 = vld [vmem:[%s4 + $0x78] sm:$0xf]
  %v170 = vld [vmem:[%s4 + $0x80] sm:$0xf]
  %v171 = vld [vmem:[%s4 + $0x88] sm:$0xf]
  %v172 = vld [vmem:[%s4 + $0x90] sm:$0xf]
  %v173 = vld [vmem:[%s4 + $0x98] sm:$0xf]
  %v174 = vld [vmem:[%s4 + $0xa0] sm:$0xf]
  %v175 = vld [vmem:[%s4 + $0xa8] sm:$0xf]
  %v176 = vld [vmem:[%s4 + $0xb0] sm:$0xf]
  %v177 = vld [vmem:[%s4 + $0xb8] sm:$0xf]
  %v178 = vld [vmem:[%s4 + $0xc0] sm:$0xf]
  %v179 = vld [vmem:[%s4 + $0xc8] sm:$0xf]
  %v180 = vld [vmem:[%s4 + $0xd0] sm:$0xf]
  %v181 = vld [vmem:[%s4 + $0xd8] sm:$0xf]
  %v182 = vld [vmem:[%s4 + $0xe0] sm:$0xf]
  %v183 = vld [vmem:[%s4 + $0xe8] sm:$0xf]
  %v184 = vld [vmem:[%s4 + $0xf0] sm:$0xf]
  %v185 = vld [vmem:[%s4 + $0xf8] sm:$0xf]
  %v186 = vld [vmem:[%s4 + $0x100] sm:$0xf]
  %v187 = vld [vmem:[%s4 + $0x108] sm:$0xf]
  %189 = vst [vmem:[#allocation1] ss:$4 sm:$0xff] %v155
  %v190 = vld.sshfl [vmem:[#allocation1] sm:$0xff pattern:$0x73625140]
  %v191 = vld.sshfl [vmem:[#allocation1 + $0x8] sm:$0xff pattern:$0x73625140]
  %v194 = vpack.c.bf16 %v190, %v190
  %v195 = vpack.c.bf16 %v191, %v191
  %v196 = vld [vmem:[%s5 + $0x90] ss:$0 sm:$0xff]
  %v229 = vunpack.c.l.b16 %v156
  %v230 = vunpack.c.l.b16 %v157
  %v231 = vunpack.c.l.b16 %v158
  %v232 = vunpack.c.l.b16 %v159
  %v233 = vunpack.c.l.b16 %v160
  %v234 = vunpack.c.l.b16 %v161
  %v235 = vunpack.c.l.b16 %v162
  %v236 = vunpack.c.l.b16 %v163
  %v237 = vunpack.c.l.b16 %v164
  %v238 = vunpack.c.l.b16 %v165
  %v239 = vunpack.c.l.b16 %v166
  %v240 = vunpack.c.l.b16 %v167
  %v241 = vunpack.c.l.b16 %v168
  %v242 = vunpack.c.l.b16 %v169
  %v243 = vunpack.c.l.b16 %v170
  %v244 = vunpack.c.l.b16 %v171
  %v245 = vunpack.c.l.b16 %v172
  %v246 = vunpack.c.l.b16 %v173
  %v247 = vunpack.c.l.b16 %v174
  %v248 = vunpack.c.l.b16 %v175
  %v249 = vunpack.c.l.b16 %v176
  %v250 = vunpack.c.l.b16 %v177
  %v251 = vunpack.c.l.b16 %v178
  %v252 = vunpack.c.l.b16 %v179
  %v253 = vunpack.c.l.b16 %v180
  %v254 = vunpack.c.l.b16 %v181
  %v255 = vunpack.c.l.b16 %v182
  %v256 = vunpack.c.l.b16 %v183
  %v257 = vunpack.c.l.b16 %v184
  %v258 = vunpack.c.l.b16 %v185
  %v259 = vunpack.c.l.b16 %v186
  %v260 = vunpack.c.l.b16 %v187
  %v261 = vpack.c.b16 %v230, %v229
  %v262 = vpack.c.b16 %v232, %v231
  %v263 = vpack.c.b16 %v234, %v233
  %v264 = vpack.c.b16 %v236, %v235
  %v265 = vpack.c.b16 %v238, %v237
  %v266 = vpack.c.b16 %v240, %v239
  %v267 = vpack.c.b16 %v242, %v241
  %v268 = vpack.c.b16 %v244, %v243
  %v269 = vpack.c.b16 %v246, %v245
  %v270 = vpack.c.b16 %v248, %v247
  %v271 = vpack.c.b16 %v250, %v249
  %v272 = vpack.c.b16 %v252, %v251
  %v273 = vpack.c.b16 %v254, %v253
  %v274 = vpack.c.b16 %v256, %v255
  %v275 = vpack.c.b16 %v258, %v257
  %v276 = vpack.c.b16 %v260, %v259
  %293 = vmatpush.bf16.msra.mxu0 %v268
  %294 = vmatpush.bf16.msra.mxu0 %v267
  %295 = vmatpush.bf16.msra.mxu0 %v266
  %296 = vmatpush.bf16.msra.mxu0 %v265
  %297 = vmatpush.bf16.msra.mxu0 %v264
  %298 = vmatpush.bf16.msra.mxu0 %v263
  %299 = vmatpush.bf16.msra.mxu0 %v262
  %300 = vmatpush.bf16.msra.mxu0 %v261
  %301 = vmatmul.bf16.gmra.mxu0 %v194
  %v302 = vpop.f32.mrf.mxu0
  %v303 = vadd.f32 %v196, %v302
  %v304 = vpop.f32.mrf.mxu0
  %305 = vdwg.mxu0
  %306 = vmatpush.bf16.msra.mxu0 %v276
  %307 = vmatpush.bf16.msra.mxu0 %v275
  %308 = vmatpush.bf16.msra.mxu0 %v274
  %309 = vmatpush.bf16.msra.mxu0 %v273
  %310 = vmatpush.bf16.msra.mxu0 %v272
  %311 = vmatpush.bf16.msra.mxu0 %v271
  %312 = vmatpush.bf16.msra.mxu0 %v270
  %313 = vmatpush.bf16.msra.mxu0 %v269
  %314 = vmatmul.bf16.gmra.mxu0 %v195
  %v315 = vpop.f32.mrf.mxu0
  %v316 = vadd.f32 %v303, %v315
  %v317 = vpop.f32.mrf.mxu0
  %318 = vdwg.mxu0
  %v319 = vxor.u32 %v316, 2147483648
  %v320 = vmul.f32 %v319, 1.442695
  %v321 = vpow.pop %v320
  %v322 = vadd.f32 %v321, 1.0
  %v323 = vrcp.pop %v322
  %v324 = vmul.f32 %v322, %v323
  %v325 = vsub.f32 1.0, %v324
  %v326 = vmul.f32 %v323, %v325
  %v327 = vadd.f32 %v323, %v326
  %vm328 = vweird.f32 %v322
  %vm329 = vweird.f32 %v323
  %vm330 = vmor %vm328, %vm329
  %v331 = vsel %vm330, %v323, %v327
  %v332 = vand.u32 2147483647, %v322
  %vm333 = vcmp.eq.f32.partialorder %v332, 8.507059e+37
  %v334 = vand.u32 %v322, 2147483648
  %v335 = vor.u32 1.1754944e-38, %v334
  %v336 = vsel %vm333, %v335, %v331
  %v337 = vmul.f32 1.0, %v336
  %v338 = vmul.f32 %v316, %v337
  %v339 = vld [vmem:[%s4 + $0x110] sm:$0xf]
  %v340 = vld [vmem:[%s4 + $0x118] sm:$0xf]
  %v341 = vld [vmem:[%s4 + $0x120] sm:$0xf]
  %v342 = vld [vmem:[%s4 + $0x128] sm:$0xf]
  %v343 = vpack.c.bf16 %v338, %v338
  %v344 = vld [vmem:[%s5 + $0xa0] ss:$0 sm:$0xff]
  %v349 = vunpack.c.l.b16 %v339
  %v350 = vunpack.c.l.b16 %v340
  %v351 = vunpack.c.l.b16 %v341
  %v352 = vunpack.c.l.b16 %v342
  %v353 = vpack.c.b16 %v350, %v349
  %v354 = vpack.c.b16 %v352, %v351
  %vm357 = vcmask 261120
  %v359 = vsel %vm357, %v343, 0
  %361 = vmatpush.bf16.msra.mxu0 0
  %362 = vmatpush.bf16.msra.mxu0 0
  %363 = vmatpush.bf16.msra.mxu0 0
  %364 = vmatpush.bf16.msra.mxu0 0
  %365 = vmatpush.bf16.msra.mxu0 0
  %366 = vmatpush.bf16.msra.mxu0 0
  %367 = vmatpush.bf16.msra.mxu0 %v354
  %368 = vmatpush.bf16.msra.mxu0 %v353
  %369 = vmatmul.bf16.gmra.mxu0 %v359
  %v370 = vpop.f32.mrf.mxu0
  %v371 = vadd.f32 %v344, %v370
  %v372 = vpop.f32.mrf.mxu0
  %373 = vdwg.mxu0
  %v374 = vxor.u32 %v371, 2147483648
  %v375 = vmul.f32 %v374, 1.442695
  %v376 = vpow.pop %v375
  %v377 = vadd.f32 %v376, 1.0
  %v378 = vrcp.pop %v377
  %v379 = vmul.f32 %v377, %v378
  %v380 = vsub.f32 1.0, %v379
  %v381 = vmul.f32 %v378, %v380
  %v382 = vadd.f32 %v378, %v381
  %vm383 = vweird.f32 %v377
  %vm384 = vweird.f32 %v378
  %vm385 = vmor %vm383, %vm384
  %v386 = vsel %vm385, %v378, %v382
  %v387 = vand.u32 2147483647, %v377
  %vm388 = vcmp.eq.f32.partialorder %v387, 8.507059e+37
  %v389 = vand.u32 %v377, 2147483648
  %v390 = vor.u32 1.1754944e-38, %v389
  %v391 = vsel %vm388, %v390, %v386
  %v392 = vmul.f32 1.0, %v391
  %v393 = vmul.f32 %v371, %v392
  %v394 = vld [vmem:[%s4 + $0x130] sm:$0xff]
  %v395 = vld [vmem:[%s4 + $0x138] sm:$0xff]
  %v396 = vld [vmem:[%s4 + $0x140] sm:$0xff]
  %v397 = vld [vmem:[%s4 + $0x148] sm:$0xff]
  %v398 = vpack.c.bf16 %v393, %v393
  %s399 = scalar_lea.vmem %s5, 176
  %v400 = vld [vmem:[%s399] ss:$8 sm:$0x3]
  %v402 = vperm.slane %v400, 0
  %v403 = vperm.slane %v400, 1
  %v410 = vunpack.c.l.b16 %v394
  %v411 = vunpack.c.h.b16 %v394
  %v412 = vunpack.c.l.b16 %v395
  %v413 = vunpack.c.h.b16 %v395
  %v414 = vunpack.c.l.b16 %v396
  %v415 = vunpack.c.h.b16 %v396
  %v416 = vunpack.c.l.b16 %v397
  %v417 = vunpack.c.h.b16 %v397
  %v418 = vpack.c.b16 %v412, %v410
  %v419 = vpack.c.b16 %v413, %v411
  %v420 = vpack.c.b16 %v416, %v414
  %v421 = vpack.c.b16 %v417, %v415
  %v427 = vsel %vm357, %v398, 0
  %429 = vmatpush.bf16.msra.mxu0 0
  %430 = vmatpush.bf16.msra.mxu0 0
  %431 = vmatpush.bf16.msra.mxu0 0
  %432 = vmatpush.bf16.msra.mxu0 0
  %433 = vmatpush.bf16.msra.mxu0 0
  %434 = vmatpush.bf16.msra.mxu0 0
  %435 = vmatpush.bf16.msra.mxu0 %v420
  %436 = vmatpush.bf16.msra.mxu0 %v418
  %437 = vmatmul.bf16.gmra.mxu0 %v427
  %v438 = vpop.f32.mrf.mxu0
  %v439 = vadd.f32 %v402, %v438
  %v440 = vpop.f32.mrf.mxu0
  %441 = vdwg.mxu0
  %442 = vmatpush.bf16.msra.mxu0 0
  %443 = vmatpush.bf16.msra.mxu0 0
  %444 = vmatpush.bf16.msra.mxu0 0
  %445 = vmatpush.bf16.msra.mxu0 0
  %446 = vmatpush.bf16.msra.mxu0 0
  %447 = vmatpush.bf16.msra.mxu0 0
  %448 = vmatpush.bf16.msra.mxu0 %v421
  %449 = vmatpush.bf16.msra.mxu0 %v419
  %450 = vmatmul.bf16.gmra.mxu0 %v427
  %v451 = vpop.f32.mrf.mxu0
  %v452 = vadd.f32 %v403, %v451
  %v453 = vpop.f32.mrf.mxu0
  %454 = vdwg.mxu0
  %v455 = vld [vmem:[%s2] sm:$0xff]
  %v456 = vld [vmem:[%s2 + $0x8] sm:$0xff]
  %v457 = vld [vmem:[%s4 + $0x150] sm:$0xf]
  %v458 = vld [vmem:[%s4 + $0x158] sm:$0xf]
  %v459 = vld [vmem:[%s4 + $0x160] sm:$0xf]
  %v460 = vld [vmem:[%s4 + $0x168] sm:$0xf]
  %v461 = vpack.c.bf16 %v456, %v455
  %v462 = vld [vmem:[%s5 + $0xc0] ss:$0 sm:$0xff]
  %v467 = vunpack.c.l.b16 %v457
  %v468 = vunpack.c.l.b16 %v458
  %v469 = vunpack.c.l.b16 %v459
  %v470 = vunpack.c.l.b16 %v460
  %v471 = vpack.c.b16 %v468, %v467
  %v472 = vpack.c.b16 %v470, %v469
  %v476 = vsel %vm357, %v461, 0
  %478 = vmatpush.bf16.msra.mxu0 0
  %479 = vmatpush.bf16.msra.mxu0 0
  %480 = vmatpush.bf16.msra.mxu0 0
  %481 = vmatpush.bf16.msra.mxu0 0
  %482 = vmatpush.bf16.msra.mxu0 0
  %483 = vmatpush.bf16.msra.mxu0 0
  %484 = vmatpush.bf16.msra.mxu0 %v472
  %485 = vmatpush.bf16.msra.mxu0 %v471
  %486 = vmatmul.bf16.gmra.mxu0 %v476
  %v487 = vpop.f32.mrf.mxu0
  %v488 = vadd.f32 %v462, %v487
  %v489 = vpop.f32.mrf.mxu0
  %v490 = vadd.f32 %v462, %v489
  %491 = vdwg.mxu0
  %v492 = vmul.f32 %v488, 0.5
  %v493 = vmul.f32 %v490, 0.5
  %v494 = vmul.f32 %v488, 0.044715
  %v495 = vmul.f32 %v490, 0.044715
  %v496 = vmul.f32 %v494, %v488
  %v497 = vmul.f32 %v495, %v490
  %v498 = vmul.f32 %v496, %v488
  %v499 = vmul.f32 %v497, %v490
  %v500 = vadd.f32 %v488, %v498
  %v501 = vadd.f32 %v490, %v499
  %v502 = vmul.f32 %v500, 0.7978846
  %v503 = vmul.f32 %v501, 0.7978846
  %v504 = vtanh.pop %v502
  %v505 = vtanh.pop %v503
  %v506 = vadd.f32 %v504, 1.0
  %v507 = vadd.f32 %v505, 1.0
  %v508 = vmul.f32 %v492, %v506
  %v509 = vmul.f32 %v493, %v507
  %v510 = vld [vmem:[%s4 + $0x170] sm:$0xf]
  %v511 = vld [vmem:[%s4 + $0x178] sm:$0xf]
  %v512 = vld [vmem:[%s4 + $0x180] sm:$0xf]
  %v513 = vld [vmem:[%s4 + $0x188] sm:$0xf]
  %v514 = vpack.c.bf16 %v509, %v508
  %v515 = vld [vmem:[%s5 + $0xd0] ss:$0 sm:$0xff]
  %v520 = vunpack.c.l.b16 %v510
  %v521 = vunpack.c.l.b16 %v511
  %v522 = vunpack.c.l.b16 %v512
  %v523 = vunpack.c.l.b16 %v513
  %v524 = vpack.c.b16 %v521, %v520
  %v525 = vpack.c.b16 %v523, %v522
  %v529 = vsel %vm357, %v514, 0
  %531 = vmatpush.bf16.msra.mxu0 0
  %532 = vmatpush.bf16.msra.mxu0 0
  %533 = vmatpush.bf16.msra.mxu0 0
  %534 = vmatpush.bf16.msra.mxu0 0
  %535 = vmatpush.bf16.msra.mxu0 0
  %536 = vmatpush.bf16.msra.mxu0 0
  %537 = vmatpush.bf16.msra.mxu0 %v525
  %538 = vmatpush.bf16.msra.mxu0 %v524
  %539 = vmatmul.bf16.gmra.mxu0 %v529
  %v540 = vpop.f32.mrf.mxu0
  %v541 = vadd.f32 %v515, %v540
  %v542 = vpop.f32.mrf.mxu0
  %v543 = vadd.f32 %v515, %v542
  %544 = vdwg.mxu0
  %v545 = vld [vmem:[%s3] sm:$0x3]
  %v546 = vld [vmem:[%s5 + $0xe0] sm:$0x3f]
  %v547 = vsel %vm357, %v139, 0.0
  %548 = vadd.xlane.f32.xlu0 %v547
  %v549 = vpop.xlane.xlu0 %548
  %v550 = vsel %vm357, %v140, 0.0
  %551 = vadd.xlane.f32.xlu0 %v550
  %v552 = vpop.xlane.xlu0 %551
  %v553 = vsel %vm357, %v141, 0.0
  %554 = vadd.xlane.f32.xlu0 %v553
  %v555 = vpop.xlane.xlu0 %554
  %v556 = vsel %vm357, %v142, 0.0
  %557 = vadd.xlane.f32.xlu0 %v556
  %v558 = vpop.xlane.xlu0 %557
  %v559 = vsel %vm357, %v143, 0.0
  %560 = vadd.xlane.f32.xlu0 %v559
  %v561 = vpop.xlane.xlu0 %560
  %v562 = vsel %vm357, %v144, 0.0
  %563 = vadd.xlane.f32.xlu0 %v562
  %v564 = vpop.xlane.xlu0 %563
  %v565 = vsel %vm357, %v145, 0.0
  %566 = vadd.xlane.f32.xlu0 %v565
  %v567 = vpop.xlane.xlu0 %566
  %v568 = vsel %vm357, %v146, 0.0
  %569 = vadd.xlane.f32.xlu0 %v568
  %v570 = vpop.xlane.xlu0 %569
  %v571 = vsel %vm357, %v147, 0.0
  %572 = vadd.xlane.f32.xlu0 %v571
  %v573 = vpop.xlane.xlu0 %572
  %v574 = vsel %vm357, %v148, 0.0
  %575 = vadd.xlane.f32.xlu0 %v574
  %v576 = vpop.xlane.xlu0 %575
  %v577 = vsel %vm357, %v149, 0.0
  %578 = vadd.xlane.f32.xlu0 %v577
  %v579 = vpop.xlane.xlu0 %578
  %v580 = vsel %vm357, %v150, 0.0
  %581 = vadd.xlane.f32.xlu0 %v580
  %v582 = vpop.xlane.xlu0 %581
  %v583 = vsel %vm357, %v151, 0.0
  %584 = vadd.xlane.f32.xlu0 %v583
  %v585 = vpop.xlane.xlu0 %584
  %v586 = vsel %vm357, %v152, 0.0
  %587 = vadd.xlane.f32.xlu0 %v586
  %v588 = vpop.xlane.xlu0 %587
  %v589 = vsel %vm357, %v153, 0.0
  %590 = vadd.xlane.f32.xlu0 %v589
  %v591 = vpop.xlane.xlu0 %590
  %v592 = vsel %vm357, %v154, 0.0
  %593 = vadd.xlane.f32.xlu0 %v592
  %v594 = vpop.xlane.xlu0 %593
  %v595 = vrcp.pop 32.0
  %v596 = vmul.f32 32.0, %v595
  %v597 = vsub.f32 1.0, %v596
  %v598 = vmul.f32 %v595, %v597
  %v599 = vadd.f32 %v595, %v598
  %vm600 = vweird.f32 %v595
  %v601 = vsel %vm600, %v595, %v599
  %v602 = vmul.f32 %v549, %v601
  %v603 = vmul.f32 %v552, %v601
  %v604 = vmul.f32 %v555, %v601
  %v605 = vmul.f32 %v558, %v601
  %v606 = vmul.f32 %v561, %v601
  %v607 = vmul.f32 %v564, %v601
  %v608 = vmul.f32 %v567, %v601
  %v609 = vmul.f32 %v570, %v601
  %v610 = vmul.f32 %v573, %v601
  %v611 = vmul.f32 %v576, %v601
  %v612 = vmul.f32 %v579, %v601
  %v613 = vmul.f32 %v582, %v601
  %v614 = vmul.f32 %v585, %v601
  %v615 = vmul.f32 %v588, %v601
  %v616 = vmul.f32 %v591, %v601
  %v617 = vmul.f32 %v594, %v601
  %v618 = vsub.f32 %v139, %v602
  %v619 = vsub.f32 %v140, %v603
  %v620 = vsub.f32 %v141, %v604
  %v621 = vsub.f32 %v142, %v605
  %v622 = vsub.f32 %v143, %v606
  %v623 = vsub.f32 %v144, %v607
  %v624 = vsub.f32 %v145, %v608
  %v625 = vsub.f32 %v146, %v609
  %v626 = vsub.f32 %v147, %v610
  %v627 = vsub.f32 %v148, %v611
  %v628 = vsub.f32 %v149, %v612
  %v629 = vsub.f32 %v150, %v613
  %v630 = vsub.f32 %v151, %v614
  %v631 = vsub.f32 %v152, %v615
  %v632 = vsub.f32 %v153, %v616
  %v633 = vsub.f32 %v154, %v617
  %v634 = vmul.f32 %v618, %v618
  %v635 = vmul.f32 %v619, %v619
  %v636 = vmul.f32 %v620, %v620
  %v637 = vmul.f32 %v621, %v621
  %v638 = vmul.f32 %v622, %v622
  %v639 = vmul.f32 %v623, %v623
  %v640 = vmul.f32 %v624, %v624
  %v641 = vmul.f32 %v625, %v625
  %v642 = vmul.f32 %v626, %v626
  %v643 = vmul.f32 %v627, %v627
  %v644 = vmul.f32 %v628, %v628
  %v645 = vmul.f32 %v629, %v629
  %v646 = vmul.f32 %v630, %v630
  %v647 = vmul.f32 %v631, %v631
  %v648 = vmul.f32 %v632, %v632
  %v649 = vmul.f32 %v633, %v633
  %v650 = vsel %vm357, %v634, 0.0
  %651 = vadd.xlane.f32.xlu0 %v650
  %v652 = vpop.xlane.xlu0 %651
  %v653 = vsel %vm357, %v635, 0.0
  %654 = vadd.xlane.f32.xlu0 %v653
  %v655 = vpop.xlane.xlu0 %654
  %v656 = vsel %vm357, %v636, 0.0
  %657 = vadd.xlane.f32.xlu0 %v656
  %v658 = vpop.xlane.xlu0 %657
  %v659 = vsel %vm357, %v637, 0.0
  %660 = vadd.xlane.f32.xlu0 %v659
  %v661 = vpop.xlane.xlu0 %660
  %v662 = vsel %vm357, %v638, 0.0
  %663 = vadd.xlane.f32.xlu0 %v662
  %v664 = vpop.xlane.xlu0 %663
  %v665 = vsel %vm357, %v639, 0.0
  %666 = vadd.xlane.f32.xlu0 %v665
  %v667 = vpop.xlane.xlu0 %666
  %v668 = vsel %vm357, %v640, 0.0
  %669 = vadd.xlane.f32.xlu0 %v668
  %v670 = vpop.xlane.xlu0 %669
  %v671 = vsel %vm357, %v641, 0.0
  %672 = vadd.xlane.f32.xlu0 %v671
  %v673 = vpop.xlane.xlu0 %672
  %v674 = vsel %vm357, %v642, 0.0
  %675 = vadd.xlane.f32.xlu0 %v674
  %v676 = vpop.xlane.xlu0 %675
  %v677 = vsel %vm357, %v643, 0.0
  %678 = vadd.xlane.f32.xlu0 %v677
  %v679 = vpop.xlane.xlu0 %678
  %v680 = vsel %vm357, %v644, 0.0
  %681 = vadd.xlane.f32.xlu0 %v680
  %v682 = vpop.xlane.xlu0 %681
  %v683 = vsel %vm357, %v645, 0.0
  %684 = vadd.xlane.f32.xlu0 %v683
  %v685 = vpop.xlane.xlu0 %684
  %v686 = vsel %vm357, %v646, 0.0
  %687 = vadd.xlane.f32.xlu0 %v686
  %v688 = vpop.xlane.xlu0 %687
  %v689 = vsel %vm357, %v647, 0.0
  %690 = vadd.xlane.f32.xlu0 %v689
  %v691 = vpop.xlane.xlu0 %690
  %v692 = vsel %vm357, %v648, 0.0
  %693 = vadd.xlane.f32.xlu0 %v692
  %v694 = vpop.xlane.xlu0 %693
  %v695 = vsel %vm357, %v649, 0.0
  %696 = vadd.xlane.f32.xlu0 %v695
  %v697 = vpop.xlane.xlu0 %696
  %v698 = vmul.f32 %v652, %v601
  %v699 = vmul.f32 %v655, %v601
  %v700 = vmul.f32 %v658, %v601
  %v701 = vmul.f32 %v661, %v601
  %v702 = vmul.f32 %v664, %v601
  %v703 = vmul.f32 %v667, %v601
  %v704 = vmul.f32 %v670, %v601
  %v705 = vmul.f32 %v673, %v601
  %v706 = vmul.f32 %v676, %v601
  %v707 = vmul.f32 %v679, %v601
  %v708 = vmul.f32 %v682, %v601
  %v709 = vmul.f32 %v685, %v601
  %v710 = vmul.f32 %v688, %v601
  %v711 = vmul.f32 %v691, %v601
  %v712 = vmul.f32 %v694, %v601
  %v713 = vmul.f32 %v697, %v601
  %v714 = vadd.f32 %v698, 1e-06
  %v715 = vadd.f32 %v699, 1e-06
  %v716 = vadd.f32 %v700, 1e-06
  %v717 = vadd.f32 %v701, 1e-06
  %v718 = vadd.f32 %v702, 1e-06
  %v719 = vadd.f32 %v703, 1e-06
  %v720 = vadd.f32 %v704, 1e-06
  %v721 = vadd.f32 %v705, 1e-06
  %v722 = vadd.f32 %v706, 1e-06
  %v723 = vadd.f32 %v707, 1e-06
  %v724 = vadd.f32 %v708, 1e-06
  %v725 = vadd.f32 %v709, 1e-06
  %v726 = vadd.f32 %v710, 1e-06
  %v727 = vadd.f32 %v711, 1e-06
  %v728 = vadd.f32 %v712, 1e-06
  %v729 = vadd.f32 %v713, 1e-06
  %v730 = vrsqrt.pop %v714
  %v731 = vmul.f32 %v730, %v714
  %v732 = vmul.f32 %v731, %v730
  %v733 = vmul.f32 0.5, %v732
  %v734 = vsub.f32 1.5, %v733
  %v735 = vmul.f32 %v730, %v734
  %vm736 = vweird.f32 %v714
  %vm737 = vweird.f32 %v730
  %vm738 = vmor %vm736, %vm737
  %v739 = vsel %vm738, %v730, %v735
  %v740 = vrsqrt.pop %v715
  %v741 = vmul.f32 %v740, %v715
  %v742 = vmul.f32 %v741, %v740
  %v743 = vmul.f32 0.5, %v742
  %v744 = vsub.f32 1.5, %v743
  %v745 = vmul.f32 %v740, %v744
  %vm746 = vweird.f32 %v715
  %vm747 = vweird.f32 %v740
  %vm748 = vmor %vm746, %vm747
  %v749 = vsel %vm748, %v740, %v745
  %v750 = vrsqrt.pop %v716
  %v751 = vmul.f32 %v750, %v716
  %v752 = vmul.f32 %v751, %v750
  %v753 = vmul.f32 0.5, %v752
  %v754 = vsub.f32 1.5, %v753
  %v755 = vmul.f32 %v750, %v754
  %vm756 = vweird.f32 %v716
  %vm757 = vweird.f32 %v750
  %vm758 = vmor %vm756, %vm757
  %v759 = vsel %vm758, %v750, %v755
  %v760 = vrsqrt.pop %v717
  %v761 = vmul.f32 %v760, %v717
  %v762 = vmul.f32 %v761, %v760
  %v763 = vmul.f32 0.5, %v762
  %v764 = vsub.f32 1.5, %v763
  %v765 = vmul.f32 %v760, %v764
  %vm766 = vweird.f32 %v717
  %vm767 = vweird.f32 %v760
  %vm768 = vmor %vm766, %vm767
  %v769 = vsel %vm768, %v760, %v765
  %v770 = vrsqrt.pop %v718
  %v771 = vmul.f32 %v770, %v718
  %v772 = vmul.f32 %v771, %v770
  %v773 = vmul.f32 0.5, %v772
  %v774 = vsub.f32 1.5, %v773
  %v775 = vmul.f32 %v770, %v774
  %vm776 = vweird.f32 %v718
  %vm777 = vweird.f32 %v770
  %vm778 = vmor %vm776, %vm777
  %v779 = vsel %vm778, %v770, %v775
  %v780 = vrsqrt.pop %v719
  %v781 = vmul.f32 %v780, %v719
  %v782 = vmul.f32 %v781, %v780
  %v783 = vmul.f32 0.5, %v782
  %v784 = vsub.f32 1.5, %v783
  %v785 = vmul.f32 %v780, %v784
  %vm786 = vweird.f32 %v719
  %vm787 = vweird.f32 %v780
  %vm788 = vmor %vm786, %vm787
  %v789 = vsel %vm788, %v780, %v785
  %v790 = vrsqrt.pop %v720
  %v791 = vmul.f32 %v790, %v720
  %v792 = vmul.f32 %v791, %v790
  %v793 = vmul.f32 0.5, %v792
  %v794 = vsub.f32 1.5, %v793
  %v795 = vmul.f32 %v790, %v794
  %vm796 = vweird.f32 %v720
  %vm797 = vweird.f32 %v790
  %vm798 = vmor %vm796, %vm797
  %v799 = vsel %vm798, %v790, %v795
  %v800 = vrsqrt.pop %v721
  %v801 = vmul.f32 %v800, %v721
  %v802 = vmul.f32 %v801, %v800
  %v803 = vmul.f32 0.5, %v802
  %v804 = vsub.f32 1.5, %v803
  %v805 = vmul.f32 %v800, %v804
  %vm806 = vweird.f32 %v721
  %vm807 = vweird.f32 %v800
  %vm808 = vmor %vm806, %vm807
  %v809 = vsel %vm808, %v800, %v805
  %v810 = vrsqrt.pop %v722
  %v811 = vmul.f32 %v810, %v722
  %v812 = vmul.f32 %v811, %v810
  %v813 = vmul.f32 0.5, %v812
  %v814 = vsub.f32 1.5, %v813
  %v815 = vmul.f32 %v810, %v814
  %vm816 = vweird.f32 %v722
  %vm817 = vweird.f32 %v810
  %vm818 = vmor %vm816, %vm817
  %v819 = vsel %vm818, %v810, %v815
  %v820 = vrsqrt.pop %v723
  %v821 = vmul.f32 %v820, %v723
  %v822 = vmul.f32 %v821, %v820
  %v823 = vmul.f32 0.5, %v822
  %v824 = vsub.f32 1.5, %v823
  %v825 = vmul.f32 %v820, %v824
  %vm826 = vweird.f32 %v723
  %vm827 = vweird.f32 %v820
  %vm828 = vmor %vm826, %vm827
  %v829 = vsel %vm828, %v820, %v825
  %v830 = vrsqrt.pop %v724
  %v831 = vmul.f32 %v830, %v724
  %v832 = vmul.f32 %v831, %v830
  %v833 = vmul.f32 0.5, %v832
  %v834 = vsub.f32 1.5, %v833
  %v835 = vmul.f32 %v830, %v834
  %vm836 = vweird.f32 %v724
  %vm837 = vweird.f32 %v830
  %vm838 = vmor %vm836, %vm837
  %v839 = vsel %vm838, %v830, %v835
  %v840 = vrsqrt.pop %v725
  %v841 = vmul.f32 %v840, %v725
  %v842 = vmul.f32 %v841, %v840
  %v843 = vmul.f32 0.5, %v842
  %v844 = vsub.f32 1.5, %v843
  %v845 = vmul.f32 %v840, %v844
  %vm846 = vweird.f32 %v725
  %vm847 = vweird.f32 %v840
  %vm848 = vmor %vm846, %vm847
  %v849 = vsel %vm848, %v840, %v845
  %v850 = vrsqrt.pop %v726
  %v851 = vmul.f32 %v850, %v726
  %v852 = vmul.f32 %v851, %v850
  %v853 = vmul.f32 0.5, %v852
  %v854 = vsub.f32 1.5, %v853
  %v855 = vmul.f32 %v850, %v854
  %vm856 = vweird.f32 %v726
  %vm857 = vweird.f32 %v850
  %vm858 = vmor %vm856, %vm857
  %v859 = vsel %vm858, %v850, %v855
  %v860 = vrsqrt.pop %v727
  %v861 = vmul.f32 %v860, %v727
  %v862 = vmul.f32 %v861, %v860
  %v863 = vmul.f32 0.5, %v862
  %v864 = vsub.f32 1.5, %v863
  %v865 = vmul.f32 %v860, %v864
  %vm866 = vweird.f32 %v727
  %vm867 = vweird.f32 %v860
  %vm868 = vmor %vm866, %vm867
  %v869 = vsel %vm868, %v860, %v865
  %v870 = vrsqrt.pop %v728
  %v871 = vmul.f32 %v870, %v728
  %v872 = vmul.f32 %v871, %v870
  %v873 = vmul.f32 0.5, %v872
  %v874 = vsub.f32 1.5, %v873
  %v875 = vmul.f32 %v870, %v874
  %vm876 = vweird.f32 %v728
  %vm877 = vweird.f32 %v870
  %vm878 = vmor %vm876, %vm877
  %v879 = vsel %vm878, %v870, %v875
  %v880 = vrsqrt.pop %v729
  %v881 = vmul.f32 %v880, %v729
  %v882 = vmul.f32 %v881, %v880
  %v883 = vmul.f32 0.5, %v882
  %v884 = vsub.f32 1.5, %v883
  %v885 = vmul.f32 %v880, %v884
  %vm886 = vweird.f32 %v729
  %vm887 = vweird.f32 %v880
  %vm888 = vmor %vm886, %vm887
  %v889 = vsel %vm888, %v880, %v885
  %v890 = vmul.f32 %v618, %v739
  %v891 = vmul.f32 %v619, %v749
  %v892 = vmul.f32 %v620, %v759
  %v893 = vmul.f32 %v621, %v769
  %v894 = vmul.f32 %v622, %v779
  %v895 = vmul.f32 %v623, %v789
  %v896 = vmul.f32 %v624, %v799
  %v897 = vmul.f32 %v625, %v809
  %v898 = vmul.f32 %v626, %v819
  %v899 = vmul.f32 %v627, %v829
  %v900 = vmul.f32 %v628, %v839
  %v901 = vmul.f32 %v629, %v849
  %v902 = vmul.f32 %v630, %v859
  %v903 = vmul.f32 %v631, %v869
  %v904 = vmul.f32 %v632, %v879
  %v905 = vmul.f32 %v633, %v889
  %v906 = vadd.f32 %v546, %v439
  %v908 = vrot.slane %v439, 7
  %909 = vrot.lane.b32.xlu0 %v908, 96
  %v910 = vpop.permute.xlu0 %909
  %v912 = vadd.f32 %v546, %v910
  %v913 = vadd.f32 %v912, 1.0
  %v914 = vperm.slane %v913, 1
  %v915 = vmul.f32 %v890, %v914
  %v916 = vmul.f32 %v891, %v914
  %v917 = vmul.f32 %v892, %v914
  %v918 = vmul.f32 %v893, %v914
  %v919 = vmul.f32 %v894, %v914
  %v920 = vmul.f32 %v895, %v914
  %v921 = vmul.f32 %v896, %v914
  %v922 = vmul.f32 %v897, %v914
  %v923 = vperm.slane %v906, 0
  %v924 = vadd.f32 %v915, %v923
  %v925 = vadd.f32 %v916, %v923
  %v926 = vadd.f32 %v917, %v923
  %v927 = vadd.f32 %v918, %v923
  %v928 = vadd.f32 %v919, %v923
  %v929 = vadd.f32 %v920, %v923
  %v930 = vadd.f32 %v921, %v923
  %v931 = vadd.f32 %v922, %v923
  %v932 = vrot.slane %v439, 1
  %v934 = vadd.f32 %v546, %v932
  %935 = vrot.lane.b32.xlu0 %v439, 96
  %v936 = vpop.permute.xlu0 %935
  %v938 = vadd.f32 %v546, %v936
  %v939 = vadd.f32 %v938, 1.0
  %v940 = vperm.slane %v939, 1
  %v941 = vmul.f32 %v898, %v940
  %v942 = vmul.f32 %v899, %v940
  %v943 = vmul.f32 %v900, %v940
  %v944 = vmul.f32 %v901, %v940
  %v945 = vmul.f32 %v902, %v940
  %v946 = vmul.f32 %v903, %v940
  %v947 = vmul.f32 %v904, %v940
  %v948 = vmul.f32 %v905, %v940
  %v949 = vperm.slane %v934, 0
  %v950 = vadd.f32 %v941, %v949
  %v951 = vadd.f32 %v942, %v949
  %v952 = vadd.f32 %v943, %v949
  %v953 = vadd.f32 %v944, %v949
  %v954 = vadd.f32 %v945, %v949
  %v955 = vadd.f32 %v946, %v949
  %v956 = vadd.f32 %v947, %v949
  %v957 = vadd.f32 %v948, %v949
  %v958 = vld [vmem:[%s4 + $0x190] sm:$0xf]
  %v959 = vld [vmem:[%s4 + $0x198] sm:$0xf]
  %v960 = vld [vmem:[%s4 + $0x1a0] sm:$0xf]
  %v961 = vld [vmem:[%s4 + $0x1a8] sm:$0xf]
  %v962 = vpack.c.bf16 %v925, %v924
  %v963 = vpack.c.bf16 %v927, %v926
  %v964 = vpack.c.bf16 %v929, %v928
  %v965 = vpack.c.bf16 %v931, %v930
  %v966 = vpack.c.bf16 %v951, %v950
  %v967 = vpack.c.bf16 %v953, %v952
  %v968 = vpack.c.bf16 %v955, %v954
  %v969 = vpack.c.bf16 %v957, %v956
  %v970 = vld [vmem:[%s5 + $0xf0] ss:$0 sm:$0xff]
  %v975 = vunpack.c.l.b16 %v958
  %v976 = vunpack.c.l.b16 %v959
  %v977 = vunpack.c.l.b16 %v960
  %v978 = vunpack.c.l.b16 %v961
  %v979 = vpack.c.b16 %v976, %v975
  %v980 = vpack.c.b16 %v978, %v977
  %v984 = vsel %vm357, %v962, 0
  %v987 = vsel %vm357, %v963, 0
  %v990 = vsel %vm357, %v964, 0
  %v993 = vsel %vm357, %v965, 0
  %v996 = vsel %vm357, %v966, 0
  %v999 = vsel %vm357, %v967, 0
  %v1002 = vsel %vm357, %v968, 0
  %v1005 = vsel %vm357, %v969, 0
  %1007 = vmatpush.bf16.msra.mxu0 0
  %1008 = vmatpush.bf16.msra.mxu0 0
  %1009 = vmatpush.bf16.msra.mxu0 0
  %1010 = vmatpush.bf16.msra.mxu0 0
  %1011 = vmatpush.bf16.msra.mxu0 0
  %1012 = vmatpush.bf16.msra.mxu0 0
  %1013 = vmatpush.bf16.msra.mxu0 %v980
  %1014 = vmatpush.bf16.msra.mxu0 %v979
  %1015 = vmatmul.bf16.gmra.mxu0 %v984
  %v1016 = vpop.f32.mrf.mxu0
  %v1017 = vadd.f32 %v970, %v1016
  %v1018 = vpop.f32.mrf.mxu0
  %v1019 = vadd.f32 %v970, %v1018
  %1020 = vmatmul.bf16.gmra.mxu0 %v987
  %v1021 = vpop.f32.mrf.mxu0
  %v1022 = vadd.f32 %v970, %v1021
  %v1023 = vpop.f32.mrf.mxu0
  %v1024 = vadd.f32 %v970, %v1023
  %1025 = vmatmul.bf16.gmra.mxu0 %v990
  %v1026 = vpop.f32.mrf.mxu0
  %v1027 = vadd.f32 %v970, %v1026
  %v1028 = vpop.f32.mrf.mxu0
  %v1029 = vadd.f32 %v970, %v1028
  %1030 = vmatmul.bf16.gmra.mxu0 %v993
  %v1031 = vpop.f32.mrf.mxu0
  %v1032 = vadd.f32 %v970, %v1031
  %v1033 = vpop.f32.mrf.mxu0
  %v1034 = vadd.f32 %v970, %v1033
  %1035 = vmatmul.bf16.gmra.mxu0 %v996
  %v1036 = vpop.f32.mrf.mxu0
  %v1037 = vadd.f32 %v970, %v1036
  %v1038 = vpop.f32.mrf.mxu0
  %v1039 = vadd.f32 %v970, %v1038
  %1040 = vmatmul.bf16.gmra.mxu0 %v999
  %v1041 = vpop.f32.mrf.mxu0
  %v1042 = vadd.f32 %v970, %v1041
  %v1043 = vpop.f32.mrf.mxu0
  %v1044 = vadd.f32 %v970, %v1043
  %1045 = vmatmul.bf16.gmra.mxu0 %v1002
  %v1046 = vpop.f32.mrf.mxu0
  %v1047 = vadd.f32 %v970, %v1046
  %v1048 = vpop.f32.mrf.mxu0
  %v1049 = vadd.f32 %v970, %v1048
  %1050 = vmatmul.bf16.gmra.mxu0 %v1005
  %v1051 = vpop.f32.mrf.mxu0
  %v1052 = vadd.f32 %v970, %v1051
  %v1053 = vpop.f32.mrf.mxu0
  %v1054 = vadd.f32 %v970, %v1053
  %1055 = vdwg.mxu0
  %v1056 = vld [vmem:[%s4 + $0x1b0] sm:$0xf]
  %v1057 = vld [vmem:[%s4 + $0x1b8] sm:$0xf]
  %v1058 = vld [vmem:[%s4 + $0x1c0] sm:$0xf]
  %v1059 = vld [vmem:[%s4 + $0x1c8] sm:$0xf]
  %v1060 = vpack.c.bf16 %v1019, %v1017
  %v1061 = vpack.c.bf16 %v1024, %v1022
  %v1062 = vpack.c.bf16 %v1029, %v1027
  %v1063 = vpack.c.bf16 %v1034, %v1032
  %1068 = vrot.lane.b32.xlu0 %v1060, 96
  %v1069 = vpop.permute.xlu0 %1068
  %1070 = vrot.lane.b32.xlu0 %v1061, 96
  %v1071 = vpop.permute.xlu0 %1070
  %1072 = vrot.lane.b32.xlu0 %v1062, 96
  %v1073 = vpop.permute.xlu0 %1072
  %1074 = vrot.lane.b32.xlu0 %v1063, 96
  %v1075 = vpop.permute.xlu0 %1074
  %v1077 = vsel %vm65, %v1060, 0
  %v1080 = vsel %vm65, %v1061, 0
  %v1083 = vsel %vm65, %v1062, 0
  %v1086 = vsel %vm65, %v1063, 0
  %v1089 = vsel %vm65, %v1069, 0
  %v1092 = vsel %vm65, %v1071, 0
  %v1095 = vsel %vm65, %v1073, 0
  %v1098 = vsel %vm65, %v1075, 0
  %1100 = vmatpush.bf16.xpose.msra.mxu0 0
  %1101 = vmatpush.bf16.xpose.msra.mxu0 0
  %1102 = vmatpush.bf16.xpose.msra.mxu0 0
  %1103 = vmatpush.bf16.xpose.msra.mxu0 0
  %1104 = vmatpush.bf16.xpose.msra.mxu0 %v1098
  %1105 = vmatpush.bf16.xpose.msra.mxu0 %v1095
  %1106 = vmatpush.bf16.xpose.msra.mxu0 %v1092
  %1107 = vmatpush.bf16.xpose.msra.mxu0 %v1089
  %1108 = vmatmul.bf16.gmra.mxu0 %v1077
  %v1109 = vpop.f32.mrf.mxu0
  %v1110 = vadd.f32 0.0, %v1109
  %v1111 = vpop.f32.mrf.mxu0
  %v1112 = vadd.f32 0.0, %v1111
  %1113 = vmatmul.bf16.gmra.mxu0 %v1080
  %v1114 = vpop.f32.mrf.mxu0
  %v1115 = vadd.f32 0.0, %v1114
  %v1116 = vpop.f32.mrf.mxu0
  %v1117 = vadd.f32 0.0, %v1116
  %1118 = vmatmul.bf16.gmra.mxu0 %v1083
  %v1119 = vpop.f32.mrf.mxu0
  %v1120 = vadd.f32 0.0, %v1119
  %v1121 = vpop.f32.mrf.mxu0
  %v1122 = vadd.f32 0.0, %v1121
  %1123 = vmatmul.bf16.gmra.mxu0 %v1086
  %v1124 = vpop.f32.mrf.mxu0
  %v1125 = vadd.f32 0.0, %v1124
  %v1126 = vpop.f32.mrf.mxu0
  %v1127 = vadd.f32 0.0, %v1126
  %1128 = vdwg.mxu0
  %vm1129 = vcmask 523264
  %v1130 = vsel %vm1129, %v1110, -inf
  %1131 = vmax.xlane.f32.xlu0 %v1130
  %v1132 = vpop.xlane.xlu0 %1131
  %v1133 = vsel %vm1129, %v1112, -inf
  %1134 = vmax.xlane.f32.xlu0 %v1133
  %v1135 = vpop.xlane.xlu0 %1134
  %v1136 = vsel %vm1129, %v1115, -inf
  %1137 = vmax.xlane.f32.xlu0 %v1136
  %v1138 = vpop.xlane.xlu0 %1137
  %v1139 = vsel %vm1129, %v1117, -inf
  %1140 = vmax.xlane.f32.xlu0 %v1139
  %v1141 = vpop.xlane.xlu0 %1140
  %v1142 = vsel %vm1129, %v1120, -inf
  %1143 = vmax.xlane.f32.xlu0 %v1142
  %v1144 = vpop.xlane.xlu0 %1143
  %v1145 = vsel %vm1129, %v1122, -inf
  %1146 = vmax.xlane.f32.xlu0 %v1145
  %v1147 = vpop.xlane.xlu0 %1146
  %v1148 = vsel %vm1129, %v1125, -inf
  %1149 = vmax.xlane.f32.xlu0 %v1148
  %v1150 = vpop.xlane.xlu0 %1149
  %v1151 = vsel %vm1129, %v1127, -inf
  %1152 = vmax.xlane.f32.xlu0 %v1151
  %v1153 = vpop.xlane.xlu0 %1152
  %v1154 = vsub.f32 %v1110, %v1132
  %v1155 = vsub.f32 %v1112, %v1135
  %v1156 = vsub.f32 %v1115, %v1138
  %v1157 = vsub.f32 %v1117, %v1141
  %v1158 = vsub.f32 %v1120, %v1144
  %v1159 = vsub.f32 %v1122, %v1147
  %v1160 = vsub.f32 %v1125, %v1150
  %v1161 = vsub.f32 %v1127, %v1153
  %v1162 = vmul.f32 %v1154, 1.442695
  %v1163 = vpow.pop %v1162
  %v1164 = vmul.f32 %v1155, 1.442695
  %v1165 = vpow.pop %v1164
  %v1166 = vmul.f32 %v1156, 1.442695
  %v1167 = vpow.pop %v1166
  %v1168 = vmul.f32 %v1157, 1.442695
  %v1169 = vpow.pop %v1168
  %v1170 = vmul.f32 %v1158, 1.442695
  %v1171 = vpow.pop %v1170
  %v1172 = vmul.f32 %v1159, 1.442695
  %v1173 = vpow.pop %v1172
  %v1174 = vmul.f32 %v1160, 1.442695
  %v1175 = vpow.pop %v1174
  %v1176 = vmul.f32 %v1161, 1.442695
  %v1177 = vpow.pop %v1176
  %v1178 = vsel %vm1129, %v1163, 0.0
  %1179 = vadd.xlane.f32.xlu0 %v1178
  %v1180 = vpop.xlane.xlu0 %1179
  %v1181 = vsel %vm1129, %v1165, 0.0
  %1182 = vadd.xlane.f32.xlu0 %v1181
  %v1183 = vpop.xlane.xlu0 %1182
  %v1184 = vsel %vm1129, %v1167, 0.0
  %1185 = vadd.xlane.f32.xlu0 %v1184
  %v1186 = vpop.xlane.xlu0 %1185
  %v1187 = vsel %vm1129, %v1169, 0.0
  %1188 = vadd.xlane.f32.xlu0 %v1187
  %v1189 = vpop.xlane.xlu0 %1188
  %v1190 = vsel %vm1129, %v1171, 0.0
  %1191 = vadd.xlane.f32.xlu0 %v1190
  %v1192 = vpop.xlane.xlu0 %1191
  %v1193 = vsel %vm1129, %v1173, 0.0
  %1194 = vadd.xlane.f32.xlu0 %v1193
  %v1195 = vpop.xlane.xlu0 %1194
  %v1196 = vsel %vm1129, %v1175, 0.0
  %1197 = vadd.xlane.f32.xlu0 %v1196
  %v1198 = vpop.xlane.xlu0 %1197
  %v1199 = vsel %vm1129, %v1177, 0.0
  %1200 = vadd.xlane.f32.xlu0 %v1199
  %v1201 = vpop.xlane.xlu0 %1200
  %v1202 = vpack.c.bf16 %v1165, %v1163
  %v1203 = vpack.c.bf16 %v1169, %v1167
  %v1204 = vpack.c.bf16 %v1173, %v1171
  %v1205 = vpack.c.bf16 %v1177, %v1175
  %1206 = vrot.lane.b32.xlu0 %v1060, 64
  %v1207 = vpop.permute.xlu0 %1206
  %1208 = vrot.lane.b32.xlu0 %v1061, 64
  %v1209 = vpop.permute.xlu0 %1208
  %1210 = vrot.lane.b32.xlu0 %v1062, 64
  %v1211 = vpop.permute.xlu0 %1210
  %1212 = vrot.lane.b32.xlu0 %v1063, 64
  %v1213 = vpop.permute.xlu0 %1212
  %v1219 = vsel %vm1129, %v1202, 0
  %v1222 = vsel %vm1129, %v1203, 0
  %v1225 = vsel %vm1129, %v1204, 0
  %v1228 = vsel %vm1129, %v1205, 0
  %1230 = vmatpush.bf16.msra.mxu0 0
  %1231 = vmatpush.bf16.msra.mxu0 0
  %1232 = vmatpush.bf16.msra.mxu0 0
  %1233 = vmatpush.bf16.msra.mxu0 0
  %1234 = vmatpush.bf16.msra.mxu0 %v1213
  %1235 = vmatpush.bf16.msra.mxu0 %v1211
  %1236 = vmatpush.bf16.msra.mxu0 %v1209
  %1237 = vmatpush.bf16.msra.mxu0 %v1207
  %1238 = vmatmul.bf16.gmra.mxu0 %v1219
  %v1239 = vpop.f32.mrf.mxu0
  %v1240 = vadd.f32 0.0, %v1239
  %v1241 = vpop.f32.mrf.mxu0
  %v1242 = vadd.f32 0.0, %v1241
  %1243 = vmatmul.bf16.gmra.mxu0 %v1222
  %v1244 = vpop.f32.mrf.mxu0
  %v1245 = vadd.f32 0.0, %v1244
  %v1246 = vpop.f32.mrf.mxu0
  %v1247 = vadd.f32 0.0, %v1246
  %1248 = vmatmul.bf16.gmra.mxu0 %v1225
  %v1249 = vpop.f32.mrf.mxu0
  %v1250 = vadd.f32 0.0, %v1249
  %v1251 = vpop.f32.mrf.mxu0
  %v1252 = vadd.f32 0.0, %v1251
  %1253 = vmatmul.bf16.gmra.mxu0 %v1228
  %v1254 = vpop.f32.mrf.mxu0
  %v1255 = vadd.f32 0.0, %v1254
  %v1256 = vpop.f32.mrf.mxu0
  %v1257 = vadd.f32 0.0, %v1256
  %1258 = vdwg.mxu0
  %v1259 = vrcp.pop %v1180
  %v1260 = vrcp.pop %v1183
  %v1261 = vrcp.pop %v1186
  %v1262 = vrcp.pop %v1189
  %v1263 = vrcp.pop %v1192
  %v1264 = vrcp.pop %v1195
  %v1265 = vrcp.pop %v1198
  %v1266 = vrcp.pop %v1201
  %v1267 = vmul.f32 %v1240, %v1259
  %v1268 = vmul.f32 %v1242, %v1260
  %v1269 = vmul.f32 %v1245, %v1261
  %v1270 = vmul.f32 %v1247, %v1262
  %v1271 = vmul.f32 %v1250, %v1263
  %v1272 = vmul.f32 %v1252, %v1264
  %v1273 = vmul.f32 %v1255, %v1265
  %v1274 = vmul.f32 %v1257, %v1266
  %v1275 = vpack.c.bf16 %v1039, %v1037
  %v1276 = vpack.c.bf16 %v1044, %v1042
  %v1277 = vpack.c.bf16 %v1049, %v1047
  %v1278 = vpack.c.bf16 %v1054, %v1052
  %1283 = vrot.lane.b32.xlu0 %v1275, 96
  %v1284 = vpop.permute.xlu0 %1283
  %1285 = vrot.lane.b32.xlu0 %v1276, 96
  %v1286 = vpop.permute.xlu0 %1285
  %1287 = vrot.lane.b32.xlu0 %v1277, 96
  %v1288 = vpop.permute.xlu0 %1287
  %1289 = vrot.lane.b32.xlu0 %v1278, 96
  %v1290 = vpop.permute.xlu0 %1289
  %v1292 = vsel %vm65, %v1275, 0
  %v1295 = vsel %vm65, %v1276, 0
  %v1298 = vsel %vm65, %v1277, 0
  %v1301 = vsel %vm65, %v1278, 0
  %v1304 = vsel %vm65, %v1284, 0
  %v1307 = vsel %vm65, %v1286, 0
  %v1310 = vsel %vm65, %v1288, 0
  %v1313 = vsel %vm65, %v1290, 0
  %1315 = vmatpush.bf16.xpose.msra.mxu0 0
  %1316 = vmatpush.bf16.xpose.msra.mxu0 0
  %1317 = vmatpush.bf16.xpose.msra.mxu0 0
  %1318 = vmatpush.bf16.xpose.msra.mxu0 0
  %1319 = vmatpush.bf16.xpose.msra.mxu0 %v1313
  %1320 = vmatpush.bf16.xpose.msra.mxu0 %v1310
  %1321 = vmatpush.bf16.xpose.msra.mxu0 %v1307
  %1322 = vmatpush.bf16.xpose.msra.mxu0 %v1304
  %1323 = vmatmul.bf16.gmra.mxu0 %v1292
  %v1324 = vpop.f32.mrf.mxu0
  %v1325 = vadd.f32 0.0, %v1324
  %v1326 = vpop.f32.mrf.mxu0
  %v1327 = vadd.f32 0.0, %v1326
  %1328 = vmatmul.bf16.gmra.mxu0 %v1295
  %v1329 = vpop.f32.mrf.mxu0
  %v1330 = vadd.f32 0.0, %v1329
  %v1331 = vpop.f32.mrf.mxu0
  %v1332 = vadd.f32 0.0, %v1331
  %1333 = vmatmul.bf16.gmra.mxu0 %v1298
  %v1334 = vpop.f32.mrf.mxu0
  %v1335 = vadd.f32 0.0, %v1334
  %v1336 = vpop.f32.mrf.mxu0
  %v1337 = vadd.f32 0.0, %v1336
  %1338 = vmatmul.bf16.gmra.mxu0 %v1301
  %v1339 = vpop.f32.mrf.mxu0
  %v1340 = vadd.f32 0.0, %v1339
  %v1341 = vpop.f32.mrf.mxu0
  %v1342 = vadd.f32 0.0, %v1341
  %1343 = vdwg.mxu0
  %v1344 = vsel %vm1129, %v1325, -inf
  %1345 = vmax.xlane.f32.xlu0 %v1344
  %v1346 = vpop.xlane.xlu0 %1345
  %v1347 = vsel %vm1129, %v1327, -inf
  %1348 = vmax.xlane.f32.xlu0 %v1347
  %v1349 = vpop.xlane.xlu0 %1348
  %v1350 = vsel %vm1129, %v1330, -inf
  %1351 = vmax.xlane.f32.xlu0 %v1350
  %v1352 = vpop.xlane.xlu0 %1351
  %v1353 = vsel %vm1129, %v1332, -inf
  %1354 = vmax.xlane.f32.xlu0 %v1353
  %v1355 = vpop.xlane.xlu0 %1354
  %v1356 = vsel %vm1129, %v1335, -inf
  %1357 = vmax.xlane.f32.xlu0 %v1356
  %v1358 = vpop.xlane.xlu0 %1357
  %v1359 = vsel %vm1129, %v1337, -inf
  %1360 = vmax.xlane.f32.xlu0 %v1359
  %v1361 = vpop.xlane.xlu0 %1360
  %v1362 = vsel %vm1129, %v1340, -inf
  %1363 = vmax.xlane.f32.xlu0 %v1362
  %v1364 = vpop.xlane.xlu0 %1363
  %v1365 = vsel %vm1129, %v1342, -inf
  %1366 = vmax.xlane.f32.xlu0 %v1365
  %v1367 = vpop.xlane.xlu0 %1366
  %v1368 = vsub.f32 %v1325, %v1346
  %v1369 = vsub.f32 %v1327, %v1349
  %v1370 = vsub.f32 %v1330, %v1352
  %v1371 = vsub.f32 %v1332, %v1355
  %v1372 = vsub.f32 %v1335, %v1358
  %v1373 = vsub.f32 %v1337, %v1361
  %v1374 = vsub.f32 %v1340, %v1364
  %v1375 = vsub.f32 %v1342, %v1367
  %v1376 = vmul.f32 %v1368, 1.442695
  %v1377 = vpow.pop %v1376
  %v1378 = vmul.f32 %v1369, 1.442695
  %v1379 = vpow.pop %v1378
  %v1380 = vmul.f32 %v1370, 1.442695
  %v1381 = vpow.pop %v1380
  %v1382 = vmul.f32 %v1371, 1.442695
  %v1383 = vpow.pop %v1382
  %v1384 = vmul.f32 %v1372, 1.442695
  %v1385 = vpow.pop %v1384
  %v1386 = vmul.f32 %v1373, 1.442695
  %v1387 = vpow.pop %v1386
  %v1388 = vmul.f32 %v1374, 1.442695
  %v1389 = vpow.pop %v1388
  %v1390 = vmul.f32 %v1375, 1.442695
  %v1391 = vpow.pop %v1390
  %v1392 = vsel %vm1129, %v1377, 0.0
  %1393 = vadd.xlane.f32.xlu0 %v1392
  %v1394 = vpop.xlane.xlu0 %1393
  %v1395 = vsel %vm1129, %v1379, 0.0
  %1396 = vadd.xlane.f32.xlu0 %v1395
  %v1397 = vpop.xlane.xlu0 %1396
  %v1398 = vsel %vm1129, %v1381, 0.0
  %1399 = vadd.xlane.f32.xlu0 %v1398
  %v1400 = vpop.xlane.xlu0 %1399
  %v1401 = vsel %vm1129, %v1383, 0.0
  %1402 = vadd.xlane.f32.xlu0 %v1401
  %v1403 = vpop.xlane.xlu0 %1402
  %v1404 = vsel %vm1129, %v1385, 0.0
  %1405 = vadd.xlane.f32.xlu0 %v1404
  %v1406 = vpop.xlane.xlu0 %1405
  %v1407 = vsel %vm1129, %v1387, 0.0
  %1408 = vadd.xlane.f32.xlu0 %v1407
  %v1409 = vpop.xlane.xlu0 %1408
  %v1410 = vsel %vm1129, %v1389, 0.0
  %1411 = vadd.xlane.f32.xlu0 %v1410
  %v1412 = vpop.xlane.xlu0 %1411
  %v1413 = vsel %vm1129, %v1391, 0.0
  %1414 = vadd.xlane.f32.xlu0 %v1413
  %v1415 = vpop.xlane.xlu0 %1414
  %v1416 = vpack.c.bf16 %v1379, %v1377
  %v1417 = vpack.c.bf16 %v1383, %v1381
  %v1418 = vpack.c.bf16 %v1387, %v1385
  %v1419 = vpack.c.bf16 %v1391, %v1389
  %1420 = vrot.lane.b32.xlu0 %v1275, 64
  %v1421 = vpop.permute.xlu0 %1420
  %1422 = vrot.lane.b32.xlu0 %v1276, 64
  %v1423 = vpop.permute.xlu0 %1422
  %1424 = vrot.lane.b32.xlu0 %v1277, 64
  %v1425 = vpop.permute.xlu0 %1424
  %1426 = vrot.lane.b32.xlu0 %v1278, 64
  %v1427 = vpop.permute.xlu0 %1426
  %v1433 = vsel %vm1129, %v1416, 0
  %v1436 = vsel %vm1129, %v1417, 0
  %v1439 = vsel %vm1129, %v1418, 0
  %v1442 = vsel %vm1129, %v1419, 0
  %1444 = vmatpush.bf16.msra.mxu0 0
  %1445 = vmatpush.bf16.msra.mxu0 0
  %1446 = vmatpush.bf16.msra.mxu0 0
  %1447 = vmatpush.bf16.msra.mxu0 0
  %1448 = vmatpush.bf16.msra.mxu0 %v1427
  %1449 = vmatpush.bf16.msra.mxu0 %v1425
  %1450 = vmatpush.bf16.msra.mxu0 %v1423
  %1451 = vmatpush.bf16.msra.mxu0 %v1421
  %1452 = vmatmul.bf16.gmra.mxu0 %v1433
  %v1453 = vpop.f32.mrf.mxu0
  %v1454 = vadd.f32 0.0, %v1453
  %v1455 = vpop.f32.mrf.mxu0
  %v1456 = vadd.f32 0.0, %v1455
  %1457 = vmatmul.bf16.gmra.mxu0 %v1436
  %v1458 = vpop.f32.mrf.mxu0
  %v1459 = vadd.f32 0.0, %v1458
  %v1460 = vpop.f32.mrf.mxu0
  %v1461 = vadd.f32 0.0, %v1460
  %1462 = vmatmul.bf16.gmra.mxu0 %v1439
  %v1463 = vpop.f32.mrf.mxu0
  %v1464 = vadd.f32 0.0, %v1463
  %v1465 = vpop.f32.mrf.mxu0
  %v1466 = vadd.f32 0.0, %v1465
  %1467 = vmatmul.bf16.gmra.mxu0 %v1442
  %v1468 = vpop.f32.mrf.mxu0
  %v1469 = vadd.f32 0.0, %v1468
  %v1470 = vpop.f32.mrf.mxu0
  %v1471 = vadd.f32 0.0, %v1470
  %1472 = vdwg.mxu0
  %v1473 = vrcp.pop %v1394
  %v1474 = vrcp.pop %v1397
  %v1475 = vrcp.pop %v1400
  %v1476 = vrcp.pop %v1403
  %v1477 = vrcp.pop %v1406
  %v1478 = vrcp.pop %v1409
  %v1479 = vrcp.pop %v1412
  %v1480 = vrcp.pop %v1415
  %v1481 = vmul.f32 %v1454, %v1473
  %v1482 = vmul.f32 %v1456, %v1474
  %v1483 = vmul.f32 %v1459, %v1475
  %v1484 = vmul.f32 %v1461, %v1476
  %v1485 = vmul.f32 %v1464, %v1477
  %v1486 = vmul.f32 %v1466, %v1478
  %v1487 = vmul.f32 %v1469, %v1479
  %v1488 = vmul.f32 %v1471, %v1480
  %v1489 = vpack.c.bf16 %v1268, %v1267
  %v1490 = vpack.c.bf16 %v1270, %v1269
  %v1491 = vpack.c.bf16 %v1272, %v1271
  %v1492 = vpack.c.bf16 %v1274, %v1273
  %v1493 = vpack.c.bf16 %v1482, %v1481
  %v1494 = vpack.c.bf16 %v1484, %v1483
  %v1495 = vpack.c.bf16 %v1486, %v1485
  %v1496 = vpack.c.bf16 %v1488, %v1487
  %1497 = vrot.lane.b32.xlu0 %v1060, 112
  %v1498 = vpop.permute.xlu0 %1497
  %1499 = vrot.lane.b32.xlu0 %v1061, 112
  %v1500 = vpop.permute.xlu0 %1499
  %1501 = vrot.lane.b32.xlu0 %v1062, 112
  %v1502 = vpop.permute.xlu0 %1501
  %1503 = vrot.lane.b32.xlu0 %v1063, 112
  %v1504 = vpop.permute.xlu0 %1503
  %1505 = vrot.lane.b32.xlu0 %v1060, 80
  %v1506 = vpop.permute.xlu0 %1505
  %1507 = vrot.lane.b32.xlu0 %v1061, 80
  %v1508 = vpop.permute.xlu0 %1507
  %1509 = vrot.lane.b32.xlu0 %v1062, 80
  %v1510 = vpop.permute.xlu0 %1509
  %1511 = vrot.lane.b32.xlu0 %v1063, 80
  %v1512 = vpop.permute.xlu0 %1511
  %v1514 = vsel %vm65, %v1498, 0
  %v1517 = vsel %vm65, %v1500, 0
  %v1520 = vsel %vm65, %v1502, 0
  %v1523 = vsel %vm65, %v1504, 0
  %v1526 = vsel %vm65, %v1506, 0
  %v1529 = vsel %vm65, %v1508, 0
  %v1532 = vsel %vm65, %v1510, 0
  %v1535 = vsel %vm65, %v1512, 0
  %1537 = vmatpush.bf16.xpose.msra.mxu0 0
  %1538 = vmatpush.bf16.xpose.msra.mxu0 0
  %1539 = vmatpush.bf16.xpose.msra.mxu0 0
  %1540 = vmatpush.bf16.xpose.msra.mxu0 0
  %1541 = vmatpush.bf16.xpose.msra.mxu0 %v1535
  %1542 = vmatpush.bf16.xpose.msra.mxu0 %v1532
  %1543 = vmatpush.bf16.xpose.msra.mxu0 %v1529
  %1544 = vmatpush.bf16.xpose.msra.mxu0 %v1526
  %1545 = vmatmul.bf16.gmra.mxu0 %v1514
  %v1546 = vpop.f32.mrf.mxu0
  %v1547 = vadd.f32 0.0, %v1546
  %v1548 = vpop.f32.mrf.mxu0
  %v1549 = vadd.f32 0.0, %v1548
  %1550 = vmatmul.bf16.gmra.mxu0 %v1517
  %v1551 = vpop.f32.mrf.mxu0
  %v1552 = vadd.f32 0.0, %v1551
  %v1553 = vpop.f32.mrf.mxu0
  %v1554 = vadd.f32 0.0, %v1553
  %1555 = vmatmul.bf16.gmra.mxu0 %v1520
  %v1556 = vpop.f32.mrf.mxu0
  %v1557 = vadd.f32 0.0, %v1556
  %v1558 = vpop.f32.mrf.mxu0
  %v1559 = vadd.f32 0.0, %v1558
  %1560 = vmatmul.bf16.gmra.mxu0 %v1523
  %v1561 = vpop.f32.mrf.mxu0
  %v1562 = vadd.f32 0.0, %v1561
  %v1563 = vpop.f32.mrf.mxu0
  %v1564 = vadd.f32 0.0, %v1563
  %1565 = vdwg.mxu0
  %v1566 = vsel %vm1129, %v1547, -inf
  %1567 = vmax.xlane.f32.xlu0 %v1566
  %v1568 = vpop.xlane.xlu0 %1567
  %v1569 = vsel %vm1129, %v1549, -inf
  %1570 = vmax.xlane.f32.xlu0 %v1569
  %v1571 = vpop.xlane.xlu0 %1570
  %v1572 = vsel %vm1129, %v1552, -inf
  %1573 = vmax.xlane.f32.xlu0 %v1572
  %v1574 = vpop.xlane.xlu0 %1573
  %v1575 = vsel %vm1129, %v1554, -inf
  %1576 = vmax.xlane.f32.xlu0 %v1575
  %v1577 = vpop.xlane.xlu0 %1576
  %v1578 = vsel %vm1129, %v1557, -inf
  %1579 = vmax.xlane.f32.xlu0 %v1578
  %v1580 = vpop.xlane.xlu0 %1579
  %v1581 = vsel %vm1129, %v1559, -inf
  %1582 = vmax.xlane.f32.xlu0 %v1581
  %v1583 = vpop.xlane.xlu0 %1582
  %v1584 = vsel %vm1129, %v1562, -inf
  %1585 = vmax.xlane.f32.xlu0 %v1584
  %v1586 = vpop.xlane.xlu0 %1585
  %v1587 = vsel %vm1129, %v1564, -inf
  %1588 = vmax.xlane.f32.xlu0 %v1587
  %v1589 = vpop.xlane.xlu0 %1588
  %v1590 = vsub.f32 %v1547, %v1568
  %v1591 = vsub.f32 %v1549, %v1571
  %v1592 = vsub.f32 %v1552, %v1574
  %v1593 = vsub.f32 %v1554, %v1577
  %v1594 = vsub.f32 %v1557, %v1580
  %v1595 = vsub.f32 %v1559, %v1583
  %v1596 = vsub.f32 %v1562, %v1586
  %v1597 = vsub.f32 %v1564, %v1589
  %v1598 = vmul.f32 %v1590, 1.442695
  %v1599 = vpow.pop %v1598
  %v1600 = vmul.f32 %v1591, 1.442695
  %v1601 = vpow.pop %v1600
  %v1602 = vmul.f32 %v1592, 1.442695
  %v1603 = vpow.pop %v1602
  %v1604 = vmul.f32 %v1593, 1.442695
  %v1605 = vpow.pop %v1604
  %v1606 = vmul.f32 %v1594, 1.442695
  %v1607 = vpow.pop %v1606
  %v1608 = vmul.f32 %v1595, 1.442695
  %v1609 = vpow.pop %v1608
  %v1610 = vmul.f32 %v1596, 1.442695
  %v1611 = vpow.pop %v1610
  %v1612 = vmul.f32 %v1597, 1.442695
  %v1613 = vpow.pop %v1612
  %v1614 = vsel %vm1129, %v1599, 0.0
  %1615 = vadd.xlane.f32.xlu0 %v1614
  %v1616 = vpop.xlane.xlu0 %1615
  %v1617 = vsel %vm1129, %v1601, 0.0
  %1618 = vadd.xlane.f32.xlu0 %v1617
  %v1619 = vpop.xlane.xlu0 %1618
  %v1620 = vsel %vm1129, %v1603, 0.0
  %1621 = vadd.xlane.f32.xlu0 %v1620
  %v1622 = vpop.xlane.xlu0 %1621
  %v1623 = vsel %vm1129, %v1605, 0.0
  %1624 = vadd.xlane.f32.xlu0 %v1623
  %v1625 = vpop.xlane.xlu0 %1624
  %v1626 = vsel %vm1129, %v1607, 0.0
  %1627 = vadd.xlane.f32.xlu0 %v1626
  %v1628 = vpop.xlane.xlu0 %1627
  %v1629 = vsel %vm1129, %v1609, 0.0
  %1630 = vadd.xlane.f32.xlu0 %v1629
  %v1631 = vpop.xlane.xlu0 %1630
  %v1632 = vsel %vm1129, %v1611, 0.0
  %1633 = vadd.xlane.f32.xlu0 %v1632
  %v1634 = vpop.xlane.xlu0 %1633
  %v1635 = vsel %vm1129, %v1613, 0.0
  %1636 = vadd.xlane.f32.xlu0 %v1635
  %v1637 = vpop.xlane.xlu0 %1636
  %v1638 = vpack.c.bf16 %v1601, %v1599
  %v1639 = vpack.c.bf16 %v1605, %v1603
  %v1640 = vpack.c.bf16 %v1609, %v1607
  %v1641 = vpack.c.bf16 %v1613, %v1611
  %1642 = vrot.lane.b32.xlu0 %v1060, 48
  %v1643 = vpop.permute.xlu0 %1642
  %1644 = vrot.lane.b32.xlu0 %v1061, 48
  %v1645 = vpop.permute.xlu0 %1644
  %1646 = vrot.lane.b32.xlu0 %v1062, 48
  %v1647 = vpop.permute.xlu0 %1646
  %1648 = vrot.lane.b32.xlu0 %v1063, 48
  %v1649 = vpop.permute.xlu0 %1648
  %v1655 = vsel %vm1129, %v1638, 0
  %v1658 = vsel %vm1129, %v1639, 0
  %v1661 = vsel %vm1129, %v1640, 0
  %v1664 = vsel %vm1129, %v1641, 0
  %1666 = vmatpush.bf16.msra.mxu0 0
  %1667 = vmatpush.bf16.msra.mxu0 0
  %1668 = vmatpush.bf16.msra.mxu0 0
  %1669 = vmatpush.bf16.msra.mxu0 0
  %1670 = vmatpush.bf16.msra.mxu0 %v1649
  %1671 = vmatpush.bf16.msra.mxu0 %v1647
  %1672 = vmatpush.bf16.msra.mxu0 %v1645
  %1673 = vmatpush.bf16.msra.mxu0 %v1643
  %1674 = vmatmul.bf16.gmra.mxu0 %v1655
  %v1675 = vpop.f32.mrf.mxu0
  %v1676 = vadd.f32 0.0, %v1675
  %v1677 = vpop.f32.mrf.mxu0
  %v1678 = vadd.f32 0.0, %v1677
  %1679 = vmatmul.bf16.gmra.mxu0 %v1658
  %v1680 = vpop.f32.mrf.mxu0
  %v1681 = vadd.f32 0.0, %v1680
  %v1682 = vpop.f32.mrf.mxu0
  %v1683 = vadd.f32 0.0, %v1682
  %1684 = vmatmul.bf16.gmra.mxu0 %v1661
  %v1685 = vpop.f32.mrf.mxu0
  %v1686 = vadd.f32 0.0, %v1685
  %v1687 = vpop.f32.mrf.mxu0
  %v1688 = vadd.f32 0.0, %v1687
  %1689 = vmatmul.bf16.gmra.mxu0 %v1664
  %v1690 = vpop.f32.mrf.mxu0
  %v1691 = vadd.f32 0.0, %v1690
  %v1692 = vpop.f32.mrf.mxu0
  %v1693 = vadd.f32 0.0, %v1692
  %1694 = vdwg.mxu0
  %v1695 = vrcp.pop %v1616
  %v1696 = vrcp.pop %v1619
  %v1697 = vrcp.pop %v1622
  %v1698 = vrcp.pop %v1625
  %v1699 = vrcp.pop %v1628
  %v1700 = vrcp.pop %v1631
  %v1701 = vrcp.pop %v1634
  %v1702 = vrcp.pop %v1637
  %v1703 = vmul.f32 %v1676, %v1695
  %v1704 = vmul.f32 %v1678, %v1696
  %v1705 = vmul.f32 %v1681, %v1697
  %v1706 = vmul.f32 %v1683, %v1698
  %v1707 = vmul.f32 %v1686, %v1699
  %v1708 = vmul.f32 %v1688, %v1700
  %v1709 = vmul.f32 %v1691, %v1701
  %v1710 = vmul.f32 %v1693, %v1702
  %1711 = vrot.lane.b32.xlu0 %v1275, 112
  %v1712 = vpop.permute.xlu0 %1711
  %1713 = vrot.lane.b32.xlu0 %v1276, 112
  %v1714 = vpop.permute.xlu0 %1713
  %1715 = vrot.lane.b32.xlu0 %v1277, 112
  %v1716 = vpop.permute.xlu0 %1715
  %1717 = vrot.lane.b32.xlu0 %v1278, 112
  %v1718 = vpop.permute.xlu0 %1717
  %1719 = vrot.lane.b32.xlu0 %v1275, 80
  %v1720 = vpop.permute.xlu0 %1719
  %1721 = vrot.lane.b32.xlu0 %v1276, 80
  %v1722 = vpop.permute.xlu0 %1721
  %1723 = vrot.lane.b32.xlu0 %v1277, 80
  %v1724 = vpop.permute.xlu0 %1723
  %1725 = vrot.lane.b32.xlu0 %v1278, 80
  %v1726 = vpop.permute.xlu0 %1725
  %v1728 = vsel %vm65, %v1712, 0
  %v1731 = vsel %vm65, %v1714, 0
  %v1734 = vsel %vm65, %v1716, 0
  %v1737 = vsel %vm65, %v1718, 0
  %v1740 = vsel %vm65, %v1720, 0
  %v1743 = vsel %vm65, %v1722, 0
  %v1746 = vsel %vm65, %v1724, 0
  %v1749 = vsel %vm65, %v1726, 0
  %1751 = vmatpush.bf16.xpose.msra.mxu0 0
  %1752 = vmatpush.bf16.xpose.msra.mxu0 0
  %1753 = vmatpush.bf16.xpose.msra.mxu0 0
  %1754 = vmatpush.bf16.xpose.msra.mxu0 0
  %1755 = vmatpush.bf16.xpose.msra.mxu0 %v1749
  %1756 = vmatpush.bf16.xpose.msra.mxu0 %v1746
  %1757 = vmatpush.bf16.xpose.msra.mxu0 %v1743
  %1758 = vmatpush.bf16.xpose.msra.mxu0 %v1740
  %1759 = vmatmul.bf16.gmra.mxu0 %v1728
  %v1760 = vpop.f32.mrf.mxu0
  %v1761 = vadd.f32 0.0, %v1760
  %v1762 = vpop.f32.mrf.mxu0
  %v1763 = vadd.f32 0.0, %v1762
  %1764 = vmatmul.bf16.gmra.mxu0 %v1731
  %v1765 = vpop.f32.mrf.mxu0
  %v1766 = vadd.f32 0.0, %v1765
  %v1767 = vpop.f32.mrf.mxu0
  %v1768 = vadd.f32 0.0, %v1767
  %1769 = vmatmul.bf16.gmra.mxu0 %v1734
  %v1770 = vpop.f32.mrf.mxu0
  %v1771 = vadd.f32 0.0, %v1770
  %v1772 = vpop.f32.mrf.mxu0
  %v1773 = vadd.f32 0.0, %v1772
  %1774 = vmatmul.bf16.gmra.mxu0 %v1737
  %v1775 = vpop.f32.mrf.mxu0
  %v1776 = vadd.f32 0.0, %v1775
  %v1777 = vpop.f32.mrf.mxu0
  %v1778 = vadd.f32 0.0, %v1777
  %1779 = vdwg.mxu0
  %v1780 = vsel %vm1129, %v1761, -inf
  %1781 = vmax.xlane.f32.xlu0 %v1780
  %v1782 = vpop.xlane.xlu0 %1781
  %v1783 = vsel %vm1129, %v1763, -inf
  %1784 = vmax.xlane.f32.xlu0 %v1783
  %v1785 = vpop.xlane.xlu0 %1784
  %v1786 = vsel %vm1129, %v1766, -inf
  %1787 = vmax.xlane.f32.xlu0 %v1786
  %v1788 = vpop.xlane.xlu0 %1787
  %v1789 = vsel %vm1129, %v1768, -inf
  %1790 = vmax.xlane.f32.xlu0 %v1789
  %v1791 = vpop.xlane.xlu0 %1790
  %v1792 = vsel %vm1129, %v1771, -inf
  %1793 = vmax.xlane.f32.xlu0 %v1792
  %v1794 = vpop.xlane.xlu0 %1793
  %v1795 = vsel %vm1129, %v1773, -inf
  %1796 = vmax.xlane.f32.xlu0 %v1795
  %v1797 = vpop.xlane.xlu0 %1796
  %v1798 = vsel %vm1129, %v1776, -inf
  %1799 = vmax.xlane.f32.xlu0 %v1798
  %v1800 = vpop.xlane.xlu0 %1799
  %v1801 = vsel %vm1129, %v1778, -inf
  %1802 = vmax.xlane.f32.xlu0 %v1801
  %v1803 = vpop.xlane.xlu0 %1802
  %v1804 = vsub.f32 %v1761, %v1782
  %v1805 = vsub.f32 %v1763, %v1785
  %v1806 = vsub.f32 %v1766, %v1788
  %v1807 = vsub.f32 %v1768, %v1791
  %v1808 = vsub.f32 %v1771, %v1794
  %v1809 = vsub.f32 %v1773, %v1797
  %v1810 = vsub.f32 %v1776, %v1800
  %v1811 = vsub.f32 %v1778, %v1803
  %v1812 = vmul.f32 %v1804, 1.442695
  %v1813 = vpow.pop %v1812
  %v1814 = vmul.f32 %v1805, 1.442695
  %v1815 = vpow.pop %v1814
  %v1816 = vmul.f32 %v1806, 1.442695
  %v1817 = vpow.pop %v1816
  %v1818 = vmul.f32 %v1807, 1.442695
  %v1819 = vpow.pop %v1818
  %v1820 = vmul.f32 %v1808, 1.442695
  %v1821 = vpow.pop %v1820
  %v1822 = vmul.f32 %v1809, 1.442695
  %v1823 = vpow.pop %v1822
  %v1824 = vmul.f32 %v1810, 1.442695
  %v1825 = vpow.pop %v1824
  %v1826 = vmul.f32 %v1811, 1.442695
  %v1827 = vpow.pop %v1826
  %v1828 = vsel %vm1129, %v1813, 0.0
  %1829 = vadd.xlane.f32.xlu0 %v1828
  %v1830 = vpop.xlane.xlu0 %1829
  %v1831 = vsel %vm1129, %v1815, 0.0
  %1832 = vadd.xlane.f32.xlu0 %v1831
  %v1833 = vpop.xlane.xlu0 %1832
  %v1834 = vsel %vm1129, %v1817, 0.0
  %1835 = vadd.xlane.f32.xlu0 %v1834
  %v1836 = vpop.xlane.xlu0 %1835
  %v1837 = vsel %vm1129, %v1819, 0.0
  %1838 = vadd.xlane.f32.xlu0 %v1837
  %v1839 = vpop.xlane.xlu0 %1838
  %v1840 = vsel %vm1129, %v1821, 0.0
  %1841 = vadd.xlane.f32.xlu0 %v1840
  %v1842 = vpop.xlane.xlu0 %1841
  %v1843 = vsel %vm1129, %v1823, 0.0
  %1844 = vadd.xlane.f32.xlu0 %v1843
  %v1845 = vpop.xlane.xlu0 %1844
  %v1846 = vsel %vm1129, %v1825, 0.0
  %1847 = vadd.xlane.f32.xlu0 %v1846
  %v1848 = vpop.xlane.xlu0 %1847
  %v1849 = vsel %vm1129, %v1827, 0.0
  %1850 = vadd.xlane.f32.xlu0 %v1849
  %v1851 = vpop.xlane.xlu0 %1850
  %v1852 = vpack.c.bf16 %v1815, %v1813
  %v1853 = vpack.c.bf16 %v1819, %v1817
  %v1854 = vpack.c.bf16 %v1823, %v1821
  %v1855 = vpack.c.bf16 %v1827, %v1825
  %1856 = vrot.lane.b32.xlu0 %v1275, 48
  %v1857 = vpop.permute.xlu0 %1856
  %1858 = vrot.lane.b32.xlu0 %v1276, 48
  %v1859 = vpop.permute.xlu0 %1858
  %1860 = vrot.lane.b32.xlu0 %v1277, 48
  %v1861 = vpop.permute.xlu0 %1860
  %1862 = vrot.lane.b32.xlu0 %v1278, 48
  %v1863 = vpop.permute.xlu0 %1862
  %v1869 = vsel %vm1129, %v1852, 0
  %v1872 = vsel %vm1129, %v1853, 0
  %v1875 = vsel %vm1129, %v1854, 0
  %v1878 = vsel %vm1129, %v1855, 0
  %1880 = vmatpush.bf16.msra.mxu0 0
  %1881 = vmatpush.bf16.msra.mxu0 0
  %1882 = vmatpush.bf16.msra.mxu0 0
  %1883 = vmatpush.bf16.msra.mxu0 0
  %1884 = vmatpush.bf16.msra.mxu0 %v1863
  %1885 = vmatpush.bf16.msra.mxu0 %v1861
  %1886 = vmatpush.bf16.msra.mxu0 %v1859
  %1887 = vmatpush.bf16.msra.mxu0 %v1857
  %1888 = vmatmul.bf16.gmra.mxu0 %v1869
  %v1889 = vpop.f32.mrf.mxu0
  %v1890 = vadd.f32 0.0, %v1889
  %v1891 = vpop.f32.mrf.mxu0
  %v1892 = vadd.f32 0.0, %v1891
  %1893 = vmatmul.bf16.gmra.mxu0 %v1872
  %v1894 = vpop.f32.mrf.mxu0
  %v1895 = vadd.f32 0.0, %v1894
  %v1896 = vpop.f32.mrf.mxu0
  %v1897 = vadd.f32 0.0, %v1896
  %1898 = vmatmul.bf16.gmra.mxu0 %v1875
  %v1899 = vpop.f32.mrf.mxu0
  %v1900 = vadd.f32 0.0, %v1899
  %v1901 = vpop.f32.mrf.mxu0
  %v1902 = vadd.f32 0.0, %v1901
  %1903 = vmatmul.bf16.gmra.mxu0 %v1878
  %v1904 = vpop.f32.mrf.mxu0
  %v1905 = vadd.f32 0.0, %v1904
  %v1906 = vpop.f32.mrf.mxu0
  %v1907 = vadd.f32 0.0, %v1906
  %1908 = vdwg.mxu0
  %v1909 = vrcp.pop %v1830
  %v1910 = vrcp.pop %v1833
  %v1911 = vrcp.pop %v1836
  %v1912 = vrcp.pop %v1839
  %v1913 = vrcp.pop %v1842
  %v1914 = vrcp.pop %v1845
  %v1915 = vrcp.pop %v1848
  %v1916 = vrcp.pop %v1851
  %v1917 = vmul.f32 %v1890, %v1909
  %v1918 = vmul.f32 %v1892, %v1910
  %v1919 = vmul.f32 %v1895, %v1911
  %v1920 = vmul.f32 %v1897, %v1912
  %v1921 = vmul.f32 %v1900, %v1913
  %v1922 = vmul.f32 %v1902, %v1914
  %v1923 = vmul.f32 %v1905, %v1915
  %v1924 = vmul.f32 %v1907, %v1916
  %v1925 = vpack.c.bf16 %v1704, %v1703
  %v1926 = vpack.c.bf16 %v1706, %v1705
  %v1927 = vpack.c.bf16 %v1708, %v1707
  %v1928 = vpack.c.bf16 %v1710, %v1709
  %v1929 = vpack.c.bf16 %v1918, %v1917
  %v1930 = vpack.c.bf16 %v1920, %v1919
  %v1931 = vpack.c.bf16 %v1922, %v1921
  %v1932 = vpack.c.bf16 %v1924, %v1923
  %v1935 = vunpack.c.l.b16 %v1058
  %v1936 = vunpack.c.l.b16 %v1059
  %v1937 = vpack.c.b16 %v1936, %v1935
  %v1940 = vsel %vm65, %v1925, 0
  %v1943 = vsel %vm65, %v1926, 0
  %v1946 = vsel %vm65, %v1927, 0
  %v1949 = vsel %vm65, %v1928, 0
  %v1952 = vsel %vm65, %v1929, 0
  %v1955 = vsel %vm65, %v1930, 0
  %v1958 = vsel %vm65, %v1931, 0
  %v1961 = vsel %vm65, %v1932, 0
  %1963 = vmatpush.bf16.msra.mxu0 0
  %1964 = vmatpush.bf16.msra.mxu0 0
  %1965 = vmatpush.bf16.msra.mxu0 0
  %1966 = vmatpush.bf16.msra.mxu0 0
  %1967 = vmatpush.bf16.msra.mxu0 0
  %1968 = vmatpush.bf16.msra.mxu0 0
  %1969 = vmatpush.bf16.msra.mxu0 0
  %1970 = vmatpush.bf16.msra.mxu0 %v1937
  %1971 = vmatmul.bf16.gmra.mxu0 %v1940
  %v1972 = vpop.f32.mrf.mxu0
  %v1973 = vadd.f32 0.0, %v1972
  %v1974 = vpop.f32.mrf.mxu0
  %v1975 = vadd.f32 0.0, %v1974
  %1976 = vmatmul.bf16.gmra.mxu0 %v1943
  %v1977 = vpop.f32.mrf.mxu0
  %v1978 = vadd.f32 0.0, %v1977
  %v1979 = vpop.f32.mrf.mxu0
  %v1980 = vadd.f32 0.0, %v1979
  %1981 = vmatmul.bf16.gmra.mxu0 %v1946
  %v1982 = vpop.f32.mrf.mxu0
  %v1983 = vadd.f32 0.0, %v1982
  %v1984 = vpop.f32.mrf.mxu0
  %v1985 = vadd.f32 0.0, %v1984
  %1986 = vmatmul.bf16.gmra.mxu0 %v1949
  %v1987 = vpop.f32.mrf.mxu0
  %v1988 = vadd.f32 0.0, %v1987
  %v1989 = vpop.f32.mrf.mxu0
  %v1990 = vadd.f32 0.0, %v1989
  %1991 = vmatmul.bf16.gmra.mxu0 %v1952
  %v1992 = vpop.f32.mrf.mxu0
  %v1993 = vadd.f32 0.0, %v1992
  %v1994 = vpop.f32.mrf.mxu0
  %v1995 = vadd.f32 0.0, %v1994
  %1996 = vmatmul.bf16.gmra.mxu0 %v1955
  %v1997 = vpop.f32.mrf.mxu0
  %v1998 = vadd.f32 0.0, %v1997
  %v1999 = vpop.f32.mrf.mxu0
  %v2000 = vadd.f32 0.0, %v1999
  %2001 = vmatmul.bf16.gmra.mxu0 %v1958
  %v2002 = vpop.f32.mrf.mxu0
  %v2003 = vadd.f32 0.0, %v2002
  %v2004 = vpop.f32.mrf.mxu0
  %v2005 = vadd.f32 0.0, %v2004
  %2006 = vmatmul.bf16.gmra.mxu0 %v1961
  %v2007 = vpop.f32.mrf.mxu0
  %v2008 = vadd.f32 0.0, %v2007
  %v2009 = vpop.f32.mrf.mxu0
  %v2010 = vadd.f32 0.0, %v2009
  %2011 = vdwg.mxu0
  %v2014 = vunpack.c.l.b16 %v1056
  %v2015 = vunpack.c.l.b16 %v1057
  %v2016 = vpack.c.b16 %v2015, %v2014
  %v2019 = vsel %vm65, %v1489, 0
  %v2022 = vsel %vm65, %v1490, 0
  %v2025 = vsel %vm65, %v1491, 0
  %v2028 = vsel %vm65, %v1492, 0
  %v2031 = vsel %vm65, %v1493, 0
  %v2034 = vsel %vm65, %v1494, 0
  %v2037 = vsel %vm65, %v1495, 0
  %v2040 = vsel %vm65, %v1496, 0
  %2042 = vmatpush.bf16.msra.mxu0 0
  %2043 = vmatpush.bf16.msra.mxu0 0
  %2044 = vmatpush.bf16.msra.mxu0 0
  %2045 = vmatpush.bf16.msra.mxu0 0
  %2046 = vmatpush.bf16.msra.mxu0 0
  %2047 = vmatpush.bf16.msra.mxu0 0
  %2048 = vmatpush.bf16.msra.mxu0 0
  %2049 = vmatpush.bf16.msra.mxu0 %v2016
  %2050 = vmatmul.bf16.gmra.mxu0 %v2019
  %v2051 = vpop.f32.mrf.mxu0
  %v2052 = vadd.f32 %v1973, %v2051
  %v2053 = vpop.f32.mrf.mxu0
  %v2054 = vadd.f32 %v1975, %v2053
  %2055 = vmatmul.bf16.gmra.mxu0 %v2022
  %v2056 = vpop.f32.mrf.mxu0
  %v2057 = vadd.f32 %v1978, %v2056
  %v2058 = vpop.f32.mrf.mxu0
  %v2059 = vadd.f32 %v1980, %v2058
  %2060 = vmatmul.bf16.gmra.mxu0 %v2025
  %v2061 = vpop.f32.mrf.mxu0
  %v2062 = vadd.f32 %v1983, %v2061
  %v2063 = vpop.f32.mrf.mxu0
  %v2064 = vadd.f32 %v1985, %v2063
  %2065 = vmatmul.bf16.gmra.mxu0 %v2028
  %v2066 = vpop.f32.mrf.mxu0
  %v2067 = vadd.f32 %v1988, %v2066
  %v2068 = vpop.f32.mrf.mxu0
  %v2069 = vadd.f32 %v1990, %v2068
  %2070 = vmatmul.bf16.gmra.mxu0 %v2031
  %v2071 = vpop.f32.mrf.mxu0
  %v2072 = vadd.f32 %v1993, %v2071
  %v2073 = vpop.f32.mrf.mxu0
  %v2074 = vadd.f32 %v1995, %v2073
  %2075 = vmatmul.bf16.gmra.mxu0 %v2034
  %v2076 = vpop.f32.mrf.mxu0
  %v2077 = vadd.f32 %v1998, %v2076
  %v2078 = vpop.f32.mrf.mxu0
  %v2079 = vadd.f32 %v2000, %v2078
  %2080 = vmatmul.bf16.gmra.mxu0 %v2037
  %v2081 = vpop.f32.mrf.mxu0
  %v2082 = vadd.f32 %v2003, %v2081
  %v2083 = vpop.f32.mrf.mxu0
  %v2084 = vadd.f32 %v2005, %v2083
  %2085 = vmatmul.bf16.gmra.mxu0 %v2040
  %v2086 = vpop.f32.mrf.mxu0
  %v2087 = vadd.f32 %v2008, %v2086
  %v2088 = vpop.f32.mrf.mxu0
  %v2089 = vadd.f32 %v2010, %v2088
  %2090 = vdwg.mxu0
  %v2091 = vld [vmem:[%s5 + $0x100] ss:$0 sm:$0xff]
  %v2092 = vadd.f32 %v2052, %v2091
  %v2093 = vadd.f32 %v2054, %v2091
  %v2094 = vadd.f32 %v2057, %v2091
  %v2095 = vadd.f32 %v2059, %v2091
  %v2096 = vadd.f32 %v2062, %v2091
  %v2097 = vadd.f32 %v2064, %v2091
  %v2098 = vadd.f32 %v2067, %v2091
  %v2099 = vadd.f32 %v2069, %v2091
  %v2100 = vadd.f32 %v2072, %v2091
  %v2101 = vadd.f32 %v2074, %v2091
  %v2102 = vadd.f32 %v2077, %v2091
  %v2103 = vadd.f32 %v2079, %v2091
  %v2104 = vadd.f32 %v2082, %v2091
  %v2105 = vadd.f32 %v2084, %v2091
  %v2106 = vadd.f32 %v2087, %v2091
  %v2107 = vadd.f32 %v2089, %v2091
  %v2108 = vrot.slane %v439, 6
  %2109 = vrot.lane.b32.xlu0 %v2108, 64
  %v2110 = vpop.permute.xlu0 %2109
  %v2112 = vadd.f32 %v546, %v2110
  %v2113 = vperm.slane %v2112, 2
  %v2114 = vmul.f32 %v2092, %v2113
  %v2115 = vmul.f32 %v2093, %v2113
  %v2116 = vmul.f32 %v2094, %v2113
  %v2117 = vmul.f32 %v2095, %v2113
  %v2118 = vmul.f32 %v2096, %v2113
  %v2119 = vmul.f32 %v2097, %v2113
  %v2120 = vmul.f32 %v2098, %v2113
  %v2121 = vmul.f32 %v2099, %v2113
  %2122 = vrot.lane.b32.xlu0 %v908, 64
  %v2123 = vpop.permute.xlu0 %2122
  %v2125 = vadd.f32 %v546, %v2123
  %v2126 = vperm.slane %v2125, 2
  %v2127 = vmul.f32 %v2100, %v2126
  %v2128 = vmul.f32 %v2101, %v2126
  %v2129 = vmul.f32 %v2102, %v2126
  %v2130 = vmul.f32 %v2103, %v2126
  %v2131 = vmul.f32 %v2104, %v2126
  %v2132 = vmul.f32 %v2105, %v2126
  %v2133 = vmul.f32 %v2106, %v2126
  %v2134 = vmul.f32 %v2107, %v2126
  %v2135 = vadd.f32 %v139, %v2114
  %v2136 = vadd.f32 %v140, %v2115
  %v2137 = vadd.f32 %v141, %v2116
  %v2138 = vadd.f32 %v142, %v2117
  %v2139 = vadd.f32 %v143, %v2118
  %v2140 = vadd.f32 %v144, %v2119
  %v2141 = vadd.f32 %v145, %v2120
  %v2142 = vadd.f32 %v146, %v2121
  %v2143 = vadd.f32 %v147, %v2127
  %v2144 = vadd.f32 %v148, %v2128
  %v2145 = vadd.f32 %v149, %v2129
  %v2146 = vadd.f32 %v150, %v2130
  %v2147 = vadd.f32 %v151, %v2131
  %v2148 = vadd.f32 %v152, %v2132
  %v2149 = vadd.f32 %v153, %v2133
  %v2150 = vadd.f32 %v154, %v2134
  %v2151 = vld [vmem:[%s4 + $0x1d0] sm:$0xf]
  %v2152 = vld [vmem:[%s4 + $0x1d8] sm:$0xf]
  %v2153 = vld [vmem:[%s4 + $0x1e0] sm:$0xf]
  %v2154 = vld [vmem:[%s4 + $0x1e8] sm:$0xf]
  %v2155 = vpack.c.bf16 %v2136, %v2135
  %v2156 = vpack.c.bf16 %v2138, %v2137
  %v2157 = vpack.c.bf16 %v2140, %v2139
  %v2158 = vpack.c.bf16 %v2142, %v2141
  %v2159 = vpack.c.bf16 %v2144, %v2143
  %v2160 = vpack.c.bf16 %v2146, %v2145
  %v2161 = vpack.c.bf16 %v2148, %v2147
  %v2162 = vpack.c.bf16 %v2150, %v2149
  %v2163 = vld [vmem:[%s5 + $0x110] ss:$0 sm:$0xff]
  %v2168 = vunpack.c.l.b16 %v2151
  %v2169 = vunpack.c.l.b16 %v2152
  %v2170 = vunpack.c.l.b16 %v2153
  %v2171 = vunpack.c.l.b16 %v2154
  %v2172 = vpack.c.b16 %v2169, %v2168
  %v2173 = vpack.c.b16 %v2171, %v2170
  %v2177 = vsel %vm357, %v2155, 0
  %v2180 = vsel %vm357, %v2156, 0
  %v2183 = vsel %vm357, %v2157, 0
  %v2186 = vsel %vm357, %v2158, 0
  %v2189 = vsel %vm357, %v2159, 0
  %v2192 = vsel %vm357, %v2160, 0
  %v2195 = vsel %vm357, %v2161, 0
  %v2198 = vsel %vm357, %v2162, 0
  %2200 = vmatpush.bf16.msra.mxu0 0
  %2201 = vmatpush.bf16.msra.mxu0 0
  %2202 = vmatpush.bf16.msra.mxu0 0
  %2203 = vmatpush.bf16.msra.mxu0 0
  %2204 = vmatpush.bf16.msra.mxu0 0
  %2205 = vmatpush.bf16.msra.mxu0 0
  %2206 = vmatpush.bf16.msra.mxu0 %v2173
  %2207 = vmatpush.bf16.msra.mxu0 %v2172
  %2208 = vmatmul.bf16.gmra.mxu0 %v2177
  %v2209 = vpop.f32.mrf.mxu0
  %v2210 = vadd.f32 %v2163, %v2209
  %v2211 = vpop.f32.mrf.mxu0
  %v2212 = vadd.f32 %v2163, %v2211
  %2213 = vmatmul.bf16.gmra.mxu0 %v2180
  %v2214 = vpop.f32.mrf.mxu0
  %v2215 = vadd.f32 %v2163, %v2214
  %v2216 = vpop.f32.mrf.mxu0
  %v2217 = vadd.f32 %v2163, %v2216
  %2218 = vmatmul.bf16.gmra.mxu0 %v2183
  %v2219 = vpop.f32.mrf.mxu0
  %v2220 = vadd.f32 %v2163, %v2219
  %v2221 = vpop.f32.mrf.mxu0
  %v2222 = vadd.f32 %v2163, %v2221
  %2223 = vmatmul.bf16.gmra.mxu0 %v2186
  %v2224 = vpop.f32.mrf.mxu0
  %v2225 = vadd.f32 %v2163, %v2224
  %v2226 = vpop.f32.mrf.mxu0
  %v2227 = vadd.f32 %v2163, %v2226
  %2228 = vmatmul.bf16.gmra.mxu0 %v2189
  %v2229 = vpop.f32.mrf.mxu0
  %v2230 = vadd.f32 %v2163, %v2229
  %v2231 = vpop.f32.mrf.mxu0
  %v2232 = vadd.f32 %v2163, %v2231
  %2233 = vmatmul.bf16.gmra.mxu0 %v2192
  %v2234 = vpop.f32.mrf.mxu0
  %v2235 = vadd.f32 %v2163, %v2234
  %v2236 = vpop.f32.mrf.mxu0
  %v2237 = vadd.f32 %v2163, %v2236
  %2238 = vmatmul.bf16.gmra.mxu0 %v2195
  %v2239 = vpop.f32.mrf.mxu0
  %v2240 = vadd.f32 %v2163, %v2239
  %v2241 = vpop.f32.mrf.mxu0
  %v2242 = vadd.f32 %v2163, %v2241
  %2243 = vmatmul.bf16.gmra.mxu0 %v2198
  %v2244 = vpop.f32.mrf.mxu0
  %v2245 = vadd.f32 %v2163, %v2244
  %v2246 = vpop.f32.mrf.mxu0
  %v2247 = vadd.f32 %v2163, %v2246
  %2248 = vdwg.mxu0
  %v2249 = vld [vmem:[%s4 + $0x1f0] sm:$0xf]
  %v2250 = vld [vmem:[%s4 + $0x1f8] sm:$0xf]
  %v2251 = vld [vmem:[%s4 + $0x200] sm:$0xf]
  %v2252 = vld [vmem:[%s4 + $0x208] sm:$0xf]
  %v2253 = vpack.c.bf16 %v543, %v541
  %v2254 = vld [vmem:[%s5 + $0x120] ss:$0 sm:$0xff]
  %v2259 = vunpack.c.l.b16 %v2249
  %v2260 = vunpack.c.l.b16 %v2250
  %v2261 = vunpack.c.l.b16 %v2251
  %v2262 = vunpack.c.l.b16 %v2252
  %v2263 = vpack.c.b16 %v2260, %v2259
  %v2264 = vpack.c.b16 %v2262, %v2261
  %v2268 = vsel %vm357, %v2253, 0
  %2270 = vmatpush.bf16.msra.mxu0 0
  %2271 = vmatpush.bf16.msra.mxu0 0
  %2272 = vmatpush.bf16.msra.mxu0 0
  %2273 = vmatpush.bf16.msra.mxu0 0
  %2274 = vmatpush.bf16.msra.mxu0 0
  %2275 = vmatpush.bf16.msra.mxu0 0
  %2276 = vmatpush.bf16.msra.mxu0 %v2264
  %2277 = vmatpush.bf16.msra.mxu0 %v2263
  %2278 = vmatmul.bf16.gmra.mxu0 %v2268
  %v2279 = vpop.f32.mrf.mxu0
  %v2280 = vadd.f32 %v2254, %v2279
  %v2281 = vpop.f32.mrf.mxu0
  %v2282 = vadd.f32 %v2254, %v2281
  %2283 = vdwg.mxu0
  %v2284 = vld [vmem:[%s4 + $0x210] sm:$0xf]
  %v2285 = vld [vmem:[%s4 + $0x218] sm:$0xf]
  %v2286 = vld [vmem:[%s4 + $0x220] sm:$0xf]
  %v2287 = vld [vmem:[%s4 + $0x228] sm:$0xf]
  %v2288 = vpack.c.bf16 %v2212, %v2210
  %v2289 = vpack.c.bf16 %v2217, %v2215
  %v2290 = vpack.c.bf16 %v2222, %v2220
  %v2291 = vpack.c.bf16 %v2227, %v2225
  %v2292 = vpack.c.bf16 %v2280, %v2280
  %v2293 = vperm.slane %v545, 0
  %v2295 = vsel %vm65, %v2288, 0
  %v2298 = vsel %vm65, %v2289, 0
  %v2301 = vsel %vm65, %v2290, 0
  %v2304 = vsel %vm65, %v2291, 0
  %v2307 = vsel %vm65, %v2292, 0
  %2309 = vmatpush.bf16.xpose.msra.mxu0 0
  %2310 = vmatpush.bf16.xpose.msra.mxu0 0
  %2311 = vmatpush.bf16.xpose.msra.mxu0 0
  %2312 = vmatpush.bf16.xpose.msra.mxu0 0
  %2313 = vmatpush.bf16.xpose.msra.mxu0 0
  %2314 = vmatpush.bf16.xpose.msra.mxu0 0
  %2315 = vmatpush.bf16.xpose.msra.mxu0 0
  %2316 = vmatpush.bf16.xpose.msra.mxu0 %v2307
  %2317 = vmatmul.bf16.gmra.mxu0 %v2295
  %v2318 = vpop.f32.mrf.mxu0
  %v2319 = vadd.f32 %v2293, %v2318
  %v2320 = vpop.f32.mrf.mxu0
  %v2321 = vadd.f32 %v2293, %v2320
  %2322 = vmatmul.bf16.gmra.mxu0 %v2298
  %v2323 = vpop.f32.mrf.mxu0
  %v2324 = vadd.f32 %v2293, %v2323
  %v2325 = vpop.f32.mrf.mxu0
  %v2326 = vadd.f32 %v2293, %v2325
  %2327 = vmatmul.bf16.gmra.mxu0 %v2301
  %v2328 = vpop.f32.mrf.mxu0
  %v2329 = vadd.f32 %v2293, %v2328
  %v2330 = vpop.f32.mrf.mxu0
  %v2331 = vadd.f32 %v2293, %v2330
  %2332 = vmatmul.bf16.gmra.mxu0 %v2304
  %v2333 = vpop.f32.mrf.mxu0
  %v2334 = vadd.f32 %v2293, %v2333
  %v2335 = vpop.f32.mrf.mxu0
  %v2336 = vadd.f32 %v2293, %v2335
  %2337 = vdwg.mxu0
  %vm2338 = vcmask 64512
  %v2339 = vsel %vm2338, %v2319, -inf
  %2340 = vmax.xlane.f32.xlu0 %v2339
  %v2341 = vpop.xlane.xlu0 %2340
  %v2342 = vsel %vm2338, %v2321, -inf
  %2343 = vmax.xlane.f32.xlu0 %v2342
  %v2344 = vpop.xlane.xlu0 %2343
  %v2345 = vsel %vm2338, %v2324, -inf
  %2346 = vmax.xlane.f32.xlu0 %v2345
  %v2347 = vpop.xlane.xlu0 %2346
  %v2348 = vsel %vm2338, %v2326, -inf
  %2349 = vmax.xlane.f32.xlu0 %v2348
  %v2350 = vpop.xlane.xlu0 %2349
  %v2351 = vsel %vm2338, %v2329, -inf
  %2352 = vmax.xlane.f32.xlu0 %v2351
  %v2353 = vpop.xlane.xlu0 %2352
  %v2354 = vsel %vm2338, %v2331, -inf
  %2355 = vmax.xlane.f32.xlu0 %v2354
  %v2356 = vpop.xlane.xlu0 %2355
  %v2357 = vsel %vm2338, %v2334, -inf
  %2358 = vmax.xlane.f32.xlu0 %v2357
  %v2359 = vpop.xlane.xlu0 %2358
  %v2360 = vsel %vm2338, %v2336, -inf
  %2361 = vmax.xlane.f32.xlu0 %v2360
  %v2362 = vpop.xlane.xlu0 %2361
  %v2363 = vsub.f32 %v2319, %v2341
  %v2364 = vsub.f32 %v2321, %v2344
  %v2365 = vsub.f32 %v2324, %v2347
  %v2366 = vsub.f32 %v2326, %v2350
  %v2367 = vsub.f32 %v2329, %v2353
  %v2368 = vsub.f32 %v2331, %v2356
  %v2369 = vsub.f32 %v2334, %v2359
  %v2370 = vsub.f32 %v2336, %v2362
  %v2371 = vmul.f32 %v2363, 1.442695
  %v2372 = vpow.pop %v2371
  %v2373 = vmul.f32 %v2364, 1.442695
  %v2374 = vpow.pop %v2373
  %v2375 = vmul.f32 %v2365, 1.442695
  %v2376 = vpow.pop %v2375
  %v2377 = vmul.f32 %v2366, 1.442695
  %v2378 = vpow.pop %v2377
  %v2379 = vmul.f32 %v2367, 1.442695
  %v2380 = vpow.pop %v2379
  %v2381 = vmul.f32 %v2368, 1.442695
  %v2382 = vpow.pop %v2381
  %v2383 = vmul.f32 %v2369, 1.442695
  %v2384 = vpow.pop %v2383
  %v2385 = vmul.f32 %v2370, 1.442695
  %v2386 = vpow.pop %v2385
  %v2387 = vsel %vm2338, %v2372, 0.0
  %2388 = vadd.xlane.f32.xlu0 %v2387
  %v2389 = vpop.xlane.xlu0 %2388
  %v2390 = vsel %vm2338, %v2374, 0.0
  %2391 = vadd.xlane.f32.xlu0 %v2390
  %v2392 = vpop.xlane.xlu0 %2391
  %v2393 = vsel %vm2338, %v2376, 0.0
  %2394 = vadd.xlane.f32.xlu0 %v2393
  %v2395 = vpop.xlane.xlu0 %2394
  %v2396 = vsel %vm2338, %v2378, 0.0
  %2397 = vadd.xlane.f32.xlu0 %v2396
  %v2398 = vpop.xlane.xlu0 %2397
  %v2399 = vsel %vm2338, %v2380, 0.0
  %2400 = vadd.xlane.f32.xlu0 %v2399
  %v2401 = vpop.xlane.xlu0 %2400
  %v2402 = vsel %vm2338, %v2382, 0.0
  %2403 = vadd.xlane.f32.xlu0 %v2402
  %v2404 = vpop.xlane.xlu0 %2403
  %v2405 = vsel %vm2338, %v2384, 0.0
  %2406 = vadd.xlane.f32.xlu0 %v2405
  %v2407 = vpop.xlane.xlu0 %2406
  %v2408 = vsel %vm2338, %v2386, 0.0
  %2409 = vadd.xlane.f32.xlu0 %v2408
  %v2410 = vpop.xlane.xlu0 %2409
  %v2411 = vpack.c.bf16 %v2374, %v2372
  %v2412 = vpack.c.bf16 %v2378, %v2376
  %v2413 = vpack.c.bf16 %v2382, %v2380
  %v2414 = vpack.c.bf16 %v2386, %v2384
  %2416 = vrot.lane.b32.xlu0 %v2292, 96
  %v2417 = vpop.permute.xlu0 %2416
  %v2419 = vsel %vm2338, %v2411, 0
  %v2422 = vsel %vm2338, %v2412, 0
  %v2425 = vsel %vm2338, %v2413, 0
  %v2428 = vsel %vm2338, %v2414, 0
  %vm2430 = vcmask 1043456
  %v2432 = vsel %vm2430, %v2417, 0
  %2434 = vmatpush.bf16.msra.mxu0 0
  %2435 = vmatpush.bf16.msra.mxu0 0
  %2436 = vmatpush.bf16.msra.mxu0 0
  %2437 = vmatpush.bf16.msra.mxu0 0
  %2438 = vmatpush.bf16.msra.mxu0 0
  %2439 = vmatpush.bf16.msra.mxu0 0
  %2440 = vmatpush.bf16.msra.mxu0 0
  %2441 = vmatpush.bf16.msra.mxu0 %v2432
  %2442 = vmatmul.bf16.gmra.mxu0 %v2419
  %v2443 = vpop.f32.mrf.mxu0
  %v2444 = vadd.f32 0.0, %v2443
  %v2445 = vpop.f32.mrf.mxu0
  %v2446 = vadd.f32 0.0, %v2445
  %2447 = vmatmul.bf16.gmra.mxu0 %v2422
  %v2448 = vpop.f32.mrf.mxu0
  %v2449 = vadd.f32 0.0, %v2448
  %v2450 = vpop.f32.mrf.mxu0
  %v2451 = vadd.f32 0.0, %v2450
  %2452 = vmatmul.bf16.gmra.mxu0 %v2425
  %v2453 = vpop.f32.mrf.mxu0
  %v2454 = vadd.f32 0.0, %v2453
  %v2455 = vpop.f32.mrf.mxu0
  %v2456 = vadd.f32 0.0, %v2455
  %2457 = vmatmul.bf16.gmra.mxu0 %v2428
  %v2458 = vpop.f32.mrf.mxu0
  %v2459 = vadd.f32 0.0, %v2458
  %v2460 = vpop.f32.mrf.mxu0
  %v2461 = vadd.f32 0.0, %v2460
  %2462 = vdwg.mxu0
  %v2463 = vrcp.pop %v2389
  %v2464 = vrcp.pop %v2392
  %v2465 = vrcp.pop %v2395
  %v2466 = vrcp.pop %v2398
  %v2467 = vrcp.pop %v2401
  %v2468 = vrcp.pop %v2404
  %v2469 = vrcp.pop %v2407
  %v2470 = vrcp.pop %v2410
  %v2471 = vmul.f32 %v2444, %v2463
  %v2472 = vmul.f32 %v2446, %v2464
  %v2473 = vmul.f32 %v2449, %v2465
  %v2474 = vmul.f32 %v2451, %v2466
  %v2475 = vmul.f32 %v2454, %v2467
  %v2476 = vmul.f32 %v2456, %v2468
  %v2477 = vmul.f32 %v2459, %v2469
  %v2478 = vmul.f32 %v2461, %v2470
  %v2479 = vpack.c.bf16 %v2232, %v2230
  %v2480 = vpack.c.bf16 %v2237, %v2235
  %v2481 = vpack.c.bf16 %v2242, %v2240
  %v2482 = vpack.c.bf16 %v2247, %v2245
  %v2483 = vpack.c.bf16 %v2282, %v2282
  %v2484 = vperm.slane %v545, 1
  %v2486 = vsel %vm65, %v2479, 0
  %v2489 = vsel %vm65, %v2480, 0
  %v2492 = vsel %vm65, %v2481, 0
  %v2495 = vsel %vm65, %v2482, 0
  %v2498 = vsel %vm65, %v2483, 0
  %2500 = vmatpush.bf16.xpose.msra.mxu0 0
  %2501 = vmatpush.bf16.xpose.msra.mxu0 0
  %2502 = vmatpush.bf16.xpose.msra.mxu0 0
  %2503 = vmatpush.bf16.xpose.msra.mxu0 0
  %2504 = vmatpush.bf16.xpose.msra.mxu0 0
  %2505 = vmatpush.bf16.xpose.msra.mxu0 0
  %2506 = vmatpush.bf16.xpose.msra.mxu0 0
  %2507 = vmatpush.bf16.xpose.msra.mxu0 %v2498
  %2508 = vmatmul.bf16.gmra.mxu0 %v2486
  %v2509 = vpop.f32.mrf.mxu0
  %v2510 = vadd.f32 %v2484, %v2509
  %v2511 = vpop.f32.mrf.mxu0
  %v2512 = vadd.f32 %v2484, %v2511
  %2513 = vmatmul.bf16.gmra.mxu0 %v2489
  %v2514 = vpop.f32.mrf.mxu0
  %v2515 = vadd.f32 %v2484, %v2514
  %v2516 = vpop.f32.mrf.mxu0
  %v2517 = vadd.f32 %v2484, %v2516
  %2518 = vmatmul.bf16.gmra.mxu0 %v2492
  %v2519 = vpop.f32.mrf.mxu0
  %v2520 = vadd.f32 %v2484, %v2519
  %v2521 = vpop.f32.mrf.mxu0
  %v2522 = vadd.f32 %v2484, %v2521
  %2523 = vmatmul.bf16.gmra.mxu0 %v2495
  %v2524 = vpop.f32.mrf.mxu0
  %v2525 = vadd.f32 %v2484, %v2524
  %v2526 = vpop.f32.mrf.mxu0
  %v2527 = vadd.f32 %v2484, %v2526
  %2528 = vdwg.mxu0
  %v2529 = vsel %vm2338, %v2510, -inf
  %2530 = vmax.xlane.f32.xlu0 %v2529
  %v2531 = vpop.xlane.xlu0 %2530
  %v2532 = vsel %vm2338, %v2512, -inf
  %2533 = vmax.xlane.f32.xlu0 %v2532
  %v2534 = vpop.xlane.xlu0 %2533
  %v2535 = vsel %vm2338, %v2515, -inf
  %2536 = vmax.xlane.f32.xlu0 %v2535
  %v2537 = vpop.xlane.xlu0 %2536
  %v2538 = vsel %vm2338, %v2517, -inf
  %2539 = vmax.xlane.f32.xlu0 %v2538
  %v2540 = vpop.xlane.xlu0 %2539
  %v2541 = vsel %vm2338, %v2520, -inf
  %2542 = vmax.xlane.f32.xlu0 %v2541
  %v2543 = vpop.xlane.xlu0 %2542
  %v2544 = vsel %vm2338, %v2522, -inf
  %2545 = vmax.xlane.f32.xlu0 %v2544
  %v2546 = vpop.xlane.xlu0 %2545
  %v2547 = vsel %vm2338, %v2525, -inf
  %2548 = vmax.xlane.f32.xlu0 %v2547
  %v2549 = vpop.xlane.xlu0 %2548
  %v2550 = vsel %vm2338, %v2527, -inf
  %2551 = vmax.xlane.f32.xlu0 %v2550
  %v2552 = vpop.xlane.xlu0 %2551
  %v2553 = vsub.f32 %v2510, %v2531
  %v2554 = vsub.f32 %v2512, %v2534
  %v2555 = vsub.f32 %v2515, %v2537
  %v2556 = vsub.f32 %v2517, %v2540
  %v2557 = vsub.f32 %v2520, %v2543
  %v2558 = vsub.f32 %v2522, %v2546
  %v2559 = vsub.f32 %v2525, %v2549
  %v2560 = vsub.f32 %v2527, %v2552
  %v2561 = vmul.f32 %v2553, 1.442695
  %v2562 = vpow.pop %v2561
  %v2563 = vmul.f32 %v2554, 1.442695
  %v2564 = vpow.pop %v2563
  %v2565 = vmul.f32 %v2555, 1.442695
  %v2566 = vpow.pop %v2565
  %v2567 = vmul.f32 %v2556, 1.442695
  %v2568 = vpow.pop %v2567
  %v2569 = vmul.f32 %v2557, 1.442695
  %v2570 = vpow.pop %v2569
  %v2571 = vmul.f32 %v2558, 1.442695
  %v2572 = vpow.pop %v2571
  %v2573 = vmul.f32 %v2559, 1.442695
  %v2574 = vpow.pop %v2573
  %v2575 = vmul.f32 %v2560, 1.442695
  %v2576 = vpow.pop %v2575
  %v2577 = vsel %vm2338, %v2562, 0.0
  %2578 = vadd.xlane.f32.xlu0 %v2577
  %v2579 = vpop.xlane.xlu0 %2578
  %v2580 = vsel %vm2338, %v2564, 0.0
  %2581 = vadd.xlane.f32.xlu0 %v2580
  %v2582 = vpop.xlane.xlu0 %2581
  %v2583 = vsel %vm2338, %v2566, 0.0
  %2584 = vadd.xlane.f32.xlu0 %v2583
  %v2585 = vpop.xlane.xlu0 %2584
  %v2586 = vsel %vm2338, %v2568, 0.0
  %2587 = vadd.xlane.f32.xlu0 %v2586
  %v2588 = vpop.xlane.xlu0 %2587
  %v2589 = vsel %vm2338, %v2570, 0.0
  %2590 = vadd.xlane.f32.xlu0 %v2589
  %v2591 = vpop.xlane.xlu0 %2590
  %v2592 = vsel %vm2338, %v2572, 0.0
  %2593 = vadd.xlane.f32.xlu0 %v2592
  %v2594 = vpop.xlane.xlu0 %2593
  %v2595 = vsel %vm2338, %v2574, 0.0
  %2596 = vadd.xlane.f32.xlu0 %v2595
  %v2597 = vpop.xlane.xlu0 %2596
  %v2598 = vsel %vm2338, %v2576, 0.0
  %2599 = vadd.xlane.f32.xlu0 %v2598
  %v2600 = vpop.xlane.xlu0 %2599
  %v2601 = vpack.c.bf16 %v2564, %v2562
  %v2602 = vpack.c.bf16 %v2568, %v2566
  %v2603 = vpack.c.bf16 %v2572, %v2570
  %v2604 = vpack.c.bf16 %v2576, %v2574
  %2606 = vrot.lane.b32.xlu0 %v2483, 96
  %v2607 = vpop.permute.xlu0 %2606
  %v2609 = vsel %vm2338, %v2601, 0
  %v2612 = vsel %vm2338, %v2602, 0
  %v2615 = vsel %vm2338, %v2603, 0
  %v2618 = vsel %vm2338, %v2604, 0
  %v2621 = vsel %vm2430, %v2607, 0
  %2623 = vmatpush.bf16.msra.mxu0 0
  %2624 = vmatpush.bf16.msra.mxu0 0
  %2625 = vmatpush.bf16.msra.mxu0 0
  %2626 = vmatpush.bf16.msra.mxu0 0
  %2627 = vmatpush.bf16.msra.mxu0 0
  %2628 = vmatpush.bf16.msra.mxu0 0
  %2629 = vmatpush.bf16.msra.mxu0 0
  %2630 = vmatpush.bf16.msra.mxu0 %v2621
  %2631 = vmatmul.bf16.gmra.mxu0 %v2609
  %v2632 = vpop.f32.mrf.mxu0
  %v2633 = vadd.f32 0.0, %v2632
  %v2634 = vpop.f32.mrf.mxu0
  %v2635 = vadd.f32 0.0, %v2634
  %2636 = vmatmul.bf16.gmra.mxu0 %v2612
  %v2637 = vpop.f32.mrf.mxu0
  %v2638 = vadd.f32 0.0, %v2637
  %v2639 = vpop.f32.mrf.mxu0
  %v2640 = vadd.f32 0.0, %v2639
  %2641 = vmatmul.bf16.gmra.mxu0 %v2615
  %v2642 = vpop.f32.mrf.mxu0
  %v2643 = vadd.f32 0.0, %v2642
  %v2644 = vpop.f32.mrf.mxu0
  %v2645 = vadd.f32 0.0, %v2644
  %2646 = vmatmul.bf16.gmra.mxu0 %v2618
  %v2647 = vpop.f32.mrf.mxu0
  %v2648 = vadd.f32 0.0, %v2647
  %v2649 = vpop.f32.mrf.mxu0
  %v2650 = vadd.f32 0.0, %v2649
  %2651 = vdwg.mxu0
  %v2652 = vrcp.pop %v2579
  %v2653 = vrcp.pop %v2582
  %v2654 = vrcp.pop %v2585
  %v2655 = vrcp.pop %v2588
  %v2656 = vrcp.pop %v2591
  %v2657 = vrcp.pop %v2594
  %v2658 = vrcp.pop %v2597
  %v2659 = vrcp.pop %v2600
  %v2660 = vmul.f32 %v2633, %v2652
  %v2661 = vmul.f32 %v2635, %v2653
  %v2662 = vmul.f32 %v2638, %v2654
  %v2663 = vmul.f32 %v2640, %v2655
  %v2664 = vmul.f32 %v2643, %v2656
  %v2665 = vmul.f32 %v2645, %v2657
  %v2666 = vmul.f32 %v2648, %v2658
  %v2667 = vmul.f32 %v2650, %v2659
  %v2668 = vpack.c.bf16 %v2472, %v2471
  %v2669 = vpack.c.bf16 %v2474, %v2473
  %v2670 = vpack.c.bf16 %v2476, %v2475
  %v2671 = vpack.c.bf16 %v2478, %v2477
  %v2672 = vpack.c.bf16 %v2661, %v2660
  %v2673 = vpack.c.bf16 %v2663, %v2662
  %v2674 = vpack.c.bf16 %v2665, %v2664
  %v2675 = vpack.c.bf16 %v2667, %v2666
  %2680 = vrot.lane.b32.xlu0 %v2288, 112
  %v2681 = vpop.permute.xlu0 %2680
  %2682 = vrot.lane.b32.xlu0 %v2289, 112
  %v2683 = vpop.permute.xlu0 %2682
  %2684 = vrot.lane.b32.xlu0 %v2290, 112
  %v2685 = vpop.permute.xlu0 %2684
  %2686 = vrot.lane.b32.xlu0 %v2291, 112
  %v2687 = vpop.permute.xlu0 %2686
  %2688 = vrot.lane.b32.xlu0 %v2292, 112
  %v2689 = vpop.permute.xlu0 %2688
  %v2691 = vsel %vm65, %v2681, 0
  %v2694 = vsel %vm65, %v2683, 0
  %v2697 = vsel %vm65, %v2685, 0
  %v2700 = vsel %vm65, %v2687, 0
  %v2703 = vsel %vm65, %v2689, 0
  %2705 = vmatpush.bf16.xpose.msra.mxu0 0
  %2706 = vmatpush.bf16.xpose.msra.mxu0 0
  %2707 = vmatpush.bf16.xpose.msra.mxu0 0
  %2708 = vmatpush.bf16.xpose.msra.mxu0 0
  %2709 = vmatpush.bf16.xpose.msra.mxu0 0
  %2710 = vmatpush.bf16.xpose.msra.mxu0 0
  %2711 = vmatpush.bf16.xpose.msra.mxu0 0
  %2712 = vmatpush.bf16.xpose.msra.mxu0 %v2703
  %2713 = vmatmul.bf16.gmra.mxu0 %v2691
  %v2714 = vpop.f32.mrf.mxu0
  %v2715 = vadd.f32 %v2293, %v2714
  %v2716 = vpop.f32.mrf.mxu0
  %v2717 = vadd.f32 %v2293, %v2716
  %2718 = vmatmul.bf16.gmra.mxu0 %v2694
  %v2719 = vpop.f32.mrf.mxu0
  %v2720 = vadd.f32 %v2293, %v2719
  %v2721 = vpop.f32.mrf.mxu0
  %v2722 = vadd.f32 %v2293, %v2721
  %2723 = vmatmul.bf16.gmra.mxu0 %v2697
  %v2724 = vpop.f32.mrf.mxu0
  %v2725 = vadd.f32 %v2293, %v2724
  %v2726 = vpop.f32.mrf.mxu0
  %v2727 = vadd.f32 %v2293, %v2726
  %2728 = vmatmul.bf16.gmra.mxu0 %v2700
  %v2729 = vpop.f32.mrf.mxu0
  %v2730 = vadd.f32 %v2293, %v2729
  %v2731 = vpop.f32.mrf.mxu0
  %v2732 = vadd.f32 %v2293, %v2731
  %2733 = vdwg.mxu0
  %v2734 = vsel %vm2338, %v2715, -inf
  %2735 = vmax.xlane.f32.xlu0 %v2734
  %v2736 = vpop.xlane.xlu0 %2735
  %v2737 = vsel %vm2338, %v2717, -inf
  %2738 = vmax.xlane.f32.xlu0 %v2737
  %v2739 = vpop.xlane.xlu0 %2738
  %v2740 = vsel %vm2338, %v2720, -inf
  %2741 = vmax.xlane.f32.xlu0 %v2740
  %v2742 = vpop.xlane.xlu0 %2741
  %v2743 = vsel %vm2338, %v2722, -inf
  %2744 = vmax.xlane.f32.xlu0 %v2743
  %v2745 = vpop.xlane.xlu0 %2744
  %v2746 = vsel %vm2338, %v2725, -inf
  %2747 = vmax.xlane.f32.xlu0 %v2746
  %v2748 = vpop.xlane.xlu0 %2747
  %v2749 = vsel %vm2338, %v2727, -inf
  %2750 = vmax.xlane.f32.xlu0 %v2749
  %v2751 = vpop.xlane.xlu0 %2750
  %v2752 = vsel %vm2338, %v2730, -inf
  %2753 = vmax.xlane.f32.xlu0 %v2752
  %v2754 = vpop.xlane.xlu0 %2753
  %v2755 = vsel %vm2338, %v2732, -inf
  %2756 = vmax.xlane.f32.xlu0 %v2755
  %v2757 = vpop.xlane.xlu0 %2756
  %v2758 = vsub.f32 %v2715, %v2736
  %v2759 = vsub.f32 %v2717, %v2739
  %v2760 = vsub.f32 %v2720, %v2742
  %v2761 = vsub.f32 %v2722, %v2745
  %v2762 = vsub.f32 %v2725, %v2748
  %v2763 = vsub.f32 %v2727, %v2751
  %v2764 = vsub.f32 %v2730, %v2754
  %v2765 = vsub.f32 %v2732, %v2757
  %v2766 = vmul.f32 %v2758, 1.442695
  %v2767 = vpow.pop %v2766
  %v2768 = vmul.f32 %v2759, 1.442695
  %v2769 = vpow.pop %v2768
  %v2770 = vmul.f32 %v2760, 1.442695
  %v2771 = vpow.pop %v2770
  %v2772 = vmul.f32 %v2761, 1.442695
  %v2773 = vpow.pop %v2772
  %v2774 = vmul.f32 %v2762, 1.442695
  %v2775 = vpow.pop %v2774
  %v2776 = vmul.f32 %v2763, 1.442695
  %v2777 = vpow.pop %v2776
  %v2778 = vmul.f32 %v2764, 1.442695
  %v2779 = vpow.pop %v2778
  %v2780 = vmul.f32 %v2765, 1.442695
  %v2781 = vpow.pop %v2780
  %v2782 = vsel %vm2338, %v2767, 0.0
  %2783 = vadd.xlane.f32.xlu0 %v2782
  %v2784 = vpop.xlane.xlu0 %2783
  %v2785 = vsel %vm2338, %v2769, 0.0
  %2786 = vadd.xlane.f32.xlu0 %v2785
  %v2787 = vpop.xlane.xlu0 %2786
  %v2788 = vsel %vm2338, %v2771, 0.0
  %2789 = vadd.xlane.f32.xlu0 %v2788
  %v2790 = vpop.xlane.xlu0 %2789
  %v2791 = vsel %vm2338, %v2773, 0.0
  %2792 = vadd.xlane.f32.xlu0 %v2791
  %v2793 = vpop.xlane.xlu0 %2792
  %v2794 = vsel %vm2338, %v2775, 0.0
  %2795 = vadd.xlane.f32.xlu0 %v2794
  %v2796 = vpop.xlane.xlu0 %2795
  %v2797 = vsel %vm2338, %v2777, 0.0
  %2798 = vadd.xlane.f32.xlu0 %v2797
  %v2799 = vpop.xlane.xlu0 %2798
  %v2800 = vsel %vm2338, %v2779, 0.0
  %2801 = vadd.xlane.f32.xlu0 %v2800
  %v2802 = vpop.xlane.xlu0 %2801
  %v2803 = vsel %vm2338, %v2781, 0.0
  %2804 = vadd.xlane.f32.xlu0 %v2803
  %v2805 = vpop.xlane.xlu0 %2804
  %v2806 = vpack.c.bf16 %v2769, %v2767
  %v2807 = vpack.c.bf16 %v2773, %v2771
  %v2808 = vpack.c.bf16 %v2777, %v2775
  %v2809 = vpack.c.bf16 %v2781, %v2779
  %2810 = vrot.lane.b32.xlu0 %v2292, 80
  %v2811 = vpop.permute.xlu0 %2810
  %v2813 = vsel %vm2338, %v2806, 0
  %v2816 = vsel %vm2338, %v2807, 0
  %v2819 = vsel %vm2338, %v2808, 0
  %v2822 = vsel %vm2338, %v2809, 0
  %v2825 = vsel %vm2430, %v2811, 0
  %2827 = vmatpush.bf16.msra.mxu0 0
  %2828 = vmatpush.bf16.msra.mxu0 0
  %2829 = vmatpush.bf16.msra.mxu0 0
  %2830 = vmatpush.bf16.msra.mxu0 0
  %2831 = vmatpush.bf16.msra.mxu0 0
  %2832 = vmatpush.bf16.msra.mxu0 0
  %2833 = vmatpush.bf16.msra.mxu0 0
  %2834 = vmatpush.bf16.msra.mxu0 %v2825
  %2835 = vmatmul.bf16.gmra.mxu0 %v2813
  %v2836 = vpop.f32.mrf.mxu0
  %v2837 = vadd.f32 0.0, %v2836
  %v2838 = vpop.f32.mrf.mxu0
  %v2839 = vadd.f32 0.0, %v2838
  %2840 = vmatmul.bf16.gmra.mxu0 %v2816
  %v2841 = vpop.f32.mrf.mxu0
  %v2842 = vadd.f32 0.0, %v2841
  %v2843 = vpop.f32.mrf.mxu0
  %v2844 = vadd.f32 0.0, %v2843
  %2845 = vmatmul.bf16.gmra.mxu0 %v2819
  %v2846 = vpop.f32.mrf.mxu0
  %v2847 = vadd.f32 0.0, %v2846
  %v2848 = vpop.f32.mrf.mxu0
  %v2849 = vadd.f32 0.0, %v2848
  %2850 = vmatmul.bf16.gmra.mxu0 %v2822
  %v2851 = vpop.f32.mrf.mxu0
  %v2852 = vadd.f32 0.0, %v2851
  %v2853 = vpop.f32.mrf.mxu0
  %v2854 = vadd.f32 0.0, %v2853
  %2855 = vdwg.mxu0
  %v2856 = vrcp.pop %v2784
  %v2857 = vrcp.pop %v2787
  %v2858 = vrcp.pop %v2790
  %v2859 = vrcp.pop %v2793
  %v2860 = vrcp.pop %v2796
  %v2861 = vrcp.pop %v2799
  %v2862 = vrcp.pop %v2802
  %v2863 = vrcp.pop %v2805
  %v2864 = vmul.f32 %v2837, %v2856
  %v2865 = vmul.f32 %v2839, %v2857
  %v2866 = vmul.f32 %v2842, %v2858
  %v2867 = vmul.f32 %v2844, %v2859
  %v2868 = vmul.f32 %v2847, %v2860
  %v2869 = vmul.f32 %v2849, %v2861
  %v2870 = vmul.f32 %v2852, %v2862
  %v2871 = vmul.f32 %v2854, %v2863
  %2876 = vrot.lane.b32.xlu0 %v2479, 112
  %v2877 = vpop.permute.xlu0 %2876
  %2878 = vrot.lane.b32.xlu0 %v2480, 112
  %v2879 = vpop.permute.xlu0 %2878
  %2880 = vrot.lane.b32.xlu0 %v2481, 112
  %v2881 = vpop.permute.xlu0 %2880
  %2882 = vrot.lane.b32.xlu0 %v2482, 112
  %v2883 = vpop.permute.xlu0 %2882
  %2884 = vrot.lane.b32.xlu0 %v2483, 112
  %v2885 = vpop.permute.xlu0 %2884
  %v2887 = vsel %vm65, %v2877, 0
  %v2890 = vsel %vm65, %v2879, 0
  %v2893 = vsel %vm65, %v2881, 0
  %v2896 = vsel %vm65, %v2883, 0
  %v2899 = vsel %vm65, %v2885, 0
  %2901 = vmatpush.bf16.xpose.msra.mxu0 0
  %2902 = vmatpush.bf16.xpose.msra.mxu0 0
  %2903 = vmatpush.bf16.xpose.msra.mxu0 0
  %2904 = vmatpush.bf16.xpose.msra.mxu0 0
  %2905 = vmatpush.bf16.xpose.msra.mxu0 0
  %2906 = vmatpush.bf16.xpose.msra.mxu0 0
  %2907 = vmatpush.bf16.xpose.msra.mxu0 0
  %2908 = vmatpush.bf16.xpose.msra.mxu0 %v2899
  %2909 = vmatmul.bf16.gmra.mxu0 %v2887
  %v2910 = vpop.f32.mrf.mxu0
  %v2911 = vadd.f32 %v2484, %v2910
  %v2912 = vpop.f32.mrf.mxu0
  %v2913 = vadd.f32 %v2484, %v2912
  %2914 = vmatmul.bf16.gmra.mxu0 %v2890
  %v2915 = vpop.f32.mrf.mxu0
  %v2916 = vadd.f32 %v2484, %v2915
  %v2917 = vpop.f32.mrf.mxu0
  %v2918 = vadd.f32 %v2484, %v2917
  %2919 = vmatmul.bf16.gmra.mxu0 %v2893
  %v2920 = vpop.f32.mrf.mxu0
  %v2921 = vadd.f32 %v2484, %v2920
  %v2922 = vpop.f32.mrf.mxu0
  %v2923 = vadd.f32 %v2484, %v2922
  %2924 = vmatmul.bf16.gmra.mxu0 %v2896
  %v2925 = vpop.f32.mrf.mxu0
  %v2926 = vadd.f32 %v2484, %v2925
  %v2927 = vpop.f32.mrf.mxu0
  %v2928 = vadd.f32 %v2484, %v2927
  %2929 = vdwg.mxu0
  %v2930 = vsel %vm2338, %v2911, -inf
  %2931 = vmax.xlane.f32.xlu0 %v2930
  %v2932 = vpop.xlane.xlu0 %2931
  %v2933 = vsel %vm2338, %v2913, -inf
  %2934 = vmax.xlane.f32.xlu0 %v2933
  %v2935 = vpop.xlane.xlu0 %2934
  %v2936 = vsel %vm2338, %v2916, -inf
  %2937 = vmax.xlane.f32.xlu0 %v2936
  %v2938 = vpop.xlane.xlu0 %2937
  %v2939 = vsel %vm2338, %v2918, -inf
  %2940 = vmax.xlane.f32.xlu0 %v2939
  %v2941 = vpop.xlane.xlu0 %2940
  %v2942 = vsel %vm2338, %v2921, -inf
  %2943 = vmax.xlane.f32.xlu0 %v2942
  %v2944 = vpop.xlane.xlu0 %2943
  %v2945 = vsel %vm2338, %v2923, -inf
  %2946 = vmax.xlane.f32.xlu0 %v2945
  %v2947 = vpop.xlane.xlu0 %2946
  %v2948 = vsel %vm2338, %v2926, -inf
  %2949 = vmax.xlane.f32.xlu0 %v2948
  %v2950 = vpop.xlane.xlu0 %2949
  %v2951 = vsel %vm2338, %v2928, -inf
  %2952 = vmax.xlane.f32.xlu0 %v2951
  %v2953 = vpop.xlane.xlu0 %2952
  %v2954 = vsub.f32 %v2911, %v2932
  %v2955 = vsub.f32 %v2913, %v2935
  %v2956 = vsub.f32 %v2916, %v2938
  %v2957 = vsub.f32 %v2918, %v2941
  %v2958 = vsub.f32 %v2921, %v2944
  %v2959 = vsub.f32 %v2923, %v2947
  %v2960 = vsub.f32 %v2926, %v2950
  %v2961 = vsub.f32 %v2928, %v2953
  %v2962 = vmul.f32 %v2954, 1.442695
  %v2963 = vpow.pop %v2962
  %v2964 = vmul.f32 %v2955, 1.442695
  %v2965 = vpow.pop %v2964
  %v2966 = vmul.f32 %v2956, 1.442695
  %v2967 = vpow.pop %v2966
  %v2968 = vmul.f32 %v2957, 1.442695
  %v2969 = vpow.pop %v2968
  %v2970 = vmul.f32 %v2958, 1.442695
  %v2971 = vpow.pop %v2970
  %v2972 = vmul.f32 %v2959, 1.442695
  %v2973 = vpow.pop %v2972
  %v2974 = vmul.f32 %v2960, 1.442695
  %v2975 = vpow.pop %v2974
  %v2976 = vmul.f32 %v2961, 1.442695
  %v2977 = vpow.pop %v2976
  %v2978 = vsel %vm2338, %v2963, 0.0
  %2979 = vadd.xlane.f32.xlu0 %v2978
  %v2980 = vpop.xlane.xlu0 %2979
  %v2981 = vsel %vm2338, %v2965, 0.0
  %2982 = vadd.xlane.f32.xlu0 %v2981
  %v2983 = vpop.xlane.xlu0 %2982
  %v2984 = vsel %vm2338, %v2967, 0.0
  %2985 = vadd.xlane.f32.xlu0 %v2984
  %v2986 = vpop.xlane.xlu0 %2985
  %v2987 = vsel %vm2338, %v2969, 0.0
  %2988 = vadd.xlane.f32.xlu0 %v2987
  %v2989 = vpop.xlane.xlu0 %2988
  %v2990 = vsel %vm2338, %v2971, 0.0
  %2991 = vadd.xlane.f32.xlu0 %v2990
  %v2992 = vpop.xlane.xlu0 %2991
  %v2993 = vsel %vm2338, %v2973, 0.0
  %2994 = vadd.xlane.f32.xlu0 %v2993
  %v2995 = vpop.xlane.xlu0 %2994
  %v2996 = vsel %vm2338, %v2975, 0.0
  %2997 = vadd.xlane.f32.xlu0 %v2996
  %v2998 = vpop.xlane.xlu0 %2997
  %v2999 = vsel %vm2338, %v2977, 0.0
  %3000 = vadd.xlane.f32.xlu0 %v2999
  %v3001 = vpop.xlane.xlu0 %3000
  %v3002 = vpack.c.bf16 %v2965, %v2963
  %v3003 = vpack.c.bf16 %v2969, %v2967
  %v3004 = vpack.c.bf16 %v2973, %v2971
  %v3005 = vpack.c.bf16 %v2977, %v2975
  %3006 = vrot.lane.b32.xlu0 %v2483, 80
  %v3007 = vpop.permute.xlu0 %3006
  %v3009 = vsel %vm2338, %v3002, 0
  %v3012 = vsel %vm2338, %v3003, 0
  %v3015 = vsel %vm2338, %v3004, 0
  %v3018 = vsel %vm2338, %v3005, 0
  %v3021 = vsel %vm2430, %v3007, 0
  %3023 = vmatpush.bf16.msra.mxu0 0
  %3024 = vmatpush.bf16.msra.mxu0 0
  %3025 = vmatpush.bf16.msra.mxu0 0
  %3026 = vmatpush.bf16.msra.mxu0 0
  %3027 = vmatpush.bf16.msra.mxu0 0
  %3028 = vmatpush.bf16.msra.mxu0 0
  %3029 = vmatpush.bf16.msra.mxu0 0
  %3030 = vmatpush.bf16.msra.mxu0 %v3021
  %3031 = vmatmul.bf16.gmra.mxu0 %v3009
  %v3032 = vpop.f32.mrf.mxu0
  %v3033 = vadd.f32 0.0, %v3032
  %v3034 = vpop.f32.mrf.mxu0
  %v3035 = vadd.f32 0.0, %v3034
  %3036 = vmatmul.bf16.gmra.mxu0 %v3012
  %v3037 = vpop.f32.mrf.mxu0
  %v3038 = vadd.f32 0.0, %v3037
  %v3039 = vpop.f32.mrf.mxu0
  %v3040 = vadd.f32 0.0, %v3039
  %3041 = vmatmul.bf16.gmra.mxu0 %v3015
  %v3042 = vpop.f32.mrf.mxu0
  %v3043 = vadd.f32 0.0, %v3042
  %v3044 = vpop.f32.mrf.mxu0
  %v3045 = vadd.f32 0.0, %v3044
  %3046 = vmatmul.bf16.gmra.mxu0 %v3018
  %v3047 = vpop.f32.mrf.mxu0
  %v3048 = vadd.f32 0.0, %v3047
  %v3049 = vpop.f32.mrf.mxu0
  %v3050 = vadd.f32 0.0, %v3049
  %3051 = vdwg.mxu0
  %v3052 = vrcp.pop %v2980
  %v3053 = vrcp.pop %v2983
  %v3054 = vrcp.pop %v2986
  %v3055 = vrcp.pop %v2989
  %v3056 = vrcp.pop %v2992
  %v3057 = vrcp.pop %v2995
  %v3058 = vrcp.pop %v2998
  %v3059 = vrcp.pop %v3001
  %v3060 = vmul.f32 %v3033, %v3052
  %v3061 = vmul.f32 %v3035, %v3053
  %v3062 = vmul.f32 %v3038, %v3054
  %v3063 = vmul.f32 %v3040, %v3055
  %v3064 = vmul.f32 %v3043, %v3056
  %v3065 = vmul.f32 %v3045, %v3057
  %v3066 = vmul.f32 %v3048, %v3058
  %v3067 = vmul.f32 %v3050, %v3059
  %v3068 = vpack.c.bf16 %v2865, %v2864
  %v3069 = vpack.c.bf16 %v2867, %v2866
  %v3070 = vpack.c.bf16 %v2869, %v2868
  %v3071 = vpack.c.bf16 %v2871, %v2870
  %v3072 = vpack.c.bf16 %v3061, %v3060
  %v3073 = vpack.c.bf16 %v3063, %v3062
  %v3074 = vpack.c.bf16 %v3065, %v3064
  %v3075 = vpack.c.bf16 %v3067, %v3066
  %v3078 = vunpack.c.l.b16 %v2286
  %v3079 = vunpack.c.l.b16 %v2287
  %v3080 = vpack.c.b16 %v3079, %v3078
  %v3083 = vsel %vm65, %v3068, 0
  %v3086 = vsel %vm65, %v3069, 0
  %v3089 = vsel %vm65, %v3070, 0
  %v3092 = vsel %vm65, %v3071, 0
  %v3095 = vsel %vm65, %v3072, 0
  %v3098 = vsel %vm65, %v3073, 0
  %v3101 = vsel %vm65, %v3074, 0
  %v3104 = vsel %vm65, %v3075, 0
  %3106 = vmatpush.bf16.msra.mxu0 0
  %3107 = vmatpush.bf16.msra.mxu0 0
  %3108 = vmatpush.bf16.msra.mxu0 0
  %3109 = vmatpush.bf16.msra.mxu0 0
  %3110 = vmatpush.bf16.msra.mxu0 0
  %3111 = vmatpush.bf16.msra.mxu0 0
  %3112 = vmatpush.bf16.msra.mxu0 0
  %3113 = vmatpush.bf16.msra.mxu0 %v3080
  %3114 = vmatmul.bf16.gmra.mxu0 %v3083
  %v3115 = vpop.f32.mrf.mxu0
  %v3116 = vadd.f32 0.0, %v3115
  %v3117 = vpop.f32.mrf.mxu0
  %v3118 = vadd.f32 0.0, %v3117
  %3119 = vmatmul.bf16.gmra.mxu0 %v3086
  %v3120 = vpop.f32.mrf.mxu0
  %v3121 = vadd.f32 0.0, %v3120
  %v3122 = vpop.f32.mrf.mxu0
  %v3123 = vadd.f32 0.0, %v3122
  %3124 = vmatmul.bf16.gmra.mxu0 %v3089
  %v3125 = vpop.f32.mrf.mxu0
  %v3126 = vadd.f32 0.0, %v3125
  %v3127 = vpop.f32.mrf.mxu0
  %v3128 = vadd.f32 0.0, %v3127
  %3129 = vmatmul.bf16.gmra.mxu0 %v3092
  %v3130 = vpop.f32.mrf.mxu0
  %v3131 = vadd.f32 0.0, %v3130
  %v3132 = vpop.f32.mrf.mxu0
  %v3133 = vadd.f32 0.0, %v3132
  %3134 = vmatmul.bf16.gmra.mxu0 %v3095
  %v3135 = vpop.f32.mrf.mxu0
  %v3136 = vadd.f32 0.0, %v3135
  %v3137 = vpop.f32.mrf.mxu0
  %v3138 = vadd.f32 0.0, %v3137
  %3139 = vmatmul.bf16.gmra.mxu0 %v3098
  %v3140 = vpop.f32.mrf.mxu0
  %v3141 = vadd.f32 0.0, %v3140
  %v3142 = vpop.f32.mrf.mxu0
  %v3143 = vadd.f32 0.0, %v3142
  %3144 = vmatmul.bf16.gmra.mxu0 %v3101
  %v3145 = vpop.f32.mrf.mxu0
  %v3146 = vadd.f32 0.0, %v3145
  %v3147 = vpop.f32.mrf.mxu0
  %v3148 = vadd.f32 0.0, %v3147
  %3149 = vmatmul.bf16.gmra.mxu0 %v3104
  %v3150 = vpop.f32.mrf.mxu0
  %v3151 = vadd.f32 0.0, %v3150
  %v3152 = vpop.f32.mrf.mxu0
  %v3153 = vadd.f32 0.0, %v3152
  %3154 = vdwg.mxu0
  %v3157 = vunpack.c.l.b16 %v2284
  %v3158 = vunpack.c.l.b16 %v2285
  %v3159 = vpack.c.b16 %v3158, %v3157
  %v3162 = vsel %vm65, %v2668, 0
  %v3165 = vsel %vm65, %v2669, 0
  %v3168 = vsel %vm65, %v2670, 0
  %v3171 = vsel %vm65, %v2671, 0
  %v3174 = vsel %vm65, %v2672, 0
  %v3177 = vsel %vm65, %v2673, 0
  %v3180 = vsel %vm65, %v2674, 0
  %v3183 = vsel %vm65, %v2675, 0
  %3185 = vmatpush.bf16.msra.mxu0 0
  %3186 = vmatpush.bf16.msra.mxu0 0
  %3187 = vmatpush.bf16.msra.mxu0 0
  %3188 = vmatpush.bf16.msra.mxu0 0
  %3189 = vmatpush.bf16.msra.mxu0 0
  %3190 = vmatpush.bf16.msra.mxu0 0
  %3191 = vmatpush.bf16.msra.mxu0 0
  %3192 = vmatpush.bf16.msra.mxu0 %v3159
  %3193 = vmatmul.bf16.gmra.mxu0 %v3162
  %v3194 = vpop.f32.mrf.mxu0
  %v3195 = vadd.f32 %v3116, %v3194
  %v3196 = vpop.f32.mrf.mxu0
  %v3197 = vadd.f32 %v3118, %v3196
  %3198 = vmatmul.bf16.gmra.mxu0 %v3165
  %v3199 = vpop.f32.mrf.mxu0
  %v3200 = vadd.f32 %v3121, %v3199
  %v3201 = vpop.f32.mrf.mxu0
  %v3202 = vadd.f32 %v3123, %v3201
  %3203 = vmatmul.bf16.gmra.mxu0 %v3168
  %v3204 = vpop.f32.mrf.mxu0
  %v3205 = vadd.f32 %v3126, %v3204
  %v3206 = vpop.f32.mrf.mxu0
  %v3207 = vadd.f32 %v3128, %v3206
  %3208 = vmatmul.bf16.gmra.mxu0 %v3171
  %v3209 = vpop.f32.mrf.mxu0
  %v3210 = vadd.f32 %v3131, %v3209
  %v3211 = vpop.f32.mrf.mxu0
  %v3212 = vadd.f32 %v3133, %v3211
  %3213 = vmatmul.bf16.gmra.mxu0 %v3174
  %v3214 = vpop.f32.mrf.mxu0
  %v3215 = vadd.f32 %v3136, %v3214
  %v3216 = vpop.f32.mrf.mxu0
  %v3217 = vadd.f32 %v3138, %v3216
  %3218 = vmatmul.bf16.gmra.mxu0 %v3177
  %v3219 = vpop.f32.mrf.mxu0
  %v3220 = vadd.f32 %v3141, %v3219
  %v3221 = vpop.f32.mrf.mxu0
  %v3222 = vadd.f32 %v3143, %v3221
  %3223 = vmatmul.bf16.gmra.mxu0 %v3180
  %v3224 = vpop.f32.mrf.mxu0
  %v3225 = vadd.f32 %v3146, %v3224
  %v3226 = vpop.f32.mrf.mxu0
  %v3227 = vadd.f32 %v3148, %v3226
  %3228 = vmatmul.bf16.gmra.mxu0 %v3183
  %v3229 = vpop.f32.mrf.mxu0
  %v3230 = vadd.f32 %v3151, %v3229
  %v3231 = vpop.f32.mrf.mxu0
  %v3232 = vadd.f32 %v3153, %v3231
  %3233 = vdwg.mxu0
  %v3234 = vld [vmem:[%s5 + $0x130] ss:$0 sm:$0xff]
  %v3235 = vadd.f32 %v3195, %v3234
  %v3236 = vadd.f32 %v3197, %v3234
  %v3237 = vadd.f32 %v3200, %v3234
  %v3238 = vadd.f32 %v3202, %v3234
  %v3239 = vadd.f32 %v3205, %v3234
  %v3240 = vadd.f32 %v3207, %v3234
  %v3241 = vadd.f32 %v3210, %v3234
  %v3242 = vadd.f32 %v3212, %v3234
  %v3243 = vadd.f32 %v3215, %v3234
  %v3244 = vadd.f32 %v3217, %v3234
  %v3245 = vadd.f32 %v3220, %v3234
  %v3246 = vadd.f32 %v3222, %v3234
  %v3247 = vadd.f32 %v3225, %v3234
  %v3248 = vadd.f32 %v3227, %v3234
  %v3249 = vadd.f32 %v3230, %v3234
  %v3250 = vadd.f32 %v3232, %v3234
  %v3251 = vadd.f32 %v2135, %v3235
  %v3252 = vadd.f32 %v2136, %v3236
  %v3253 = vadd.f32 %v2137, %v3237
  %v3254 = vadd.f32 %v2138, %v3238
  %v3255 = vadd.f32 %v2139, %v3239
  %v3256 = vadd.f32 %v2140, %v3240
  %v3257 = vadd.f32 %v2141, %v3241
  %v3258 = vadd.f32 %v2142, %v3242
  %v3259 = vadd.f32 %v2143, %v3243
  %v3260 = vadd.f32 %v2144, %v3244
  %v3261 = vadd.f32 %v2145, %v3245
  %v3262 = vadd.f32 %v2146, %v3246
  %v3263 = vadd.f32 %v2147, %v3247
  %v3264 = vadd.f32 %v2148, %v3248
  %v3265 = vadd.f32 %v2149, %v3249
  %v3266 = vadd.f32 %v2150, %v3250
  %v3267 = vsel %vm357, %v3251, 0.0
  %3268 = vadd.xlane.f32.xlu0 %v3267
  %v3269 = vpop.xlane.xlu0 %3268
  %v3270 = vsel %vm357, %v3252, 0.0
  %3271 = vadd.xlane.f32.xlu0 %v3270
  %v3272 = vpop.xlane.xlu0 %3271
  %v3273 = vsel %vm357, %v3253, 0.0
  %3274 = vadd.xlane.f32.xlu0 %v3273
  %v3275 = vpop.xlane.xlu0 %3274
  %v3276 = vsel %vm357, %v3254, 0.0
  %3277 = vadd.xlane.f32.xlu0 %v3276
  %v3278 = vpop.xlane.xlu0 %3277
  %v3279 = vsel %vm357, %v3255, 0.0
  %3280 = vadd.xlane.f32.xlu0 %v3279
  %v3281 = vpop.xlane.xlu0 %3280
  %v3282 = vsel %vm357, %v3256, 0.0
  %3283 = vadd.xlane.f32.xlu0 %v3282
  %v3284 = vpop.xlane.xlu0 %3283
  %v3285 = vsel %vm357, %v3257, 0.0
  %3286 = vadd.xlane.f32.xlu0 %v3285
  %v3287 = vpop.xlane.xlu0 %3286
  %v3288 = vsel %vm357, %v3258, 0.0
  %3289 = vadd.xlane.f32.xlu0 %v3288
  %v3290 = vpop.xlane.xlu0 %3289
  %v3291 = vsel %vm357, %v3259, 0.0
  %3292 = vadd.xlane.f32.xlu0 %v3291
  %v3293 = vpop.xlane.xlu0 %3292
  %v3294 = vsel %vm357, %v3260, 0.0
  %3295 = vadd.xlane.f32.xlu0 %v3294
  %v3296 = vpop.xlane.xlu0 %3295
  %v3297 = vsel %vm357, %v3261, 0.0
  %3298 = vadd.xlane.f32.xlu0 %v3297
  %v3299 = vpop.xlane.xlu0 %3298
  %v3300 = vsel %vm357, %v3262, 0.0
  %3301 = vadd.xlane.f32.xlu0 %v3300
  %v3302 = vpop.xlane.xlu0 %3301
  %v3303 = vsel %vm357, %v3263, 0.0
  %3304 = vadd.xlane.f32.xlu0 %v3303
  %v3305 = vpop.xlane.xlu0 %3304
  %v3306 = vsel %vm357, %v3264, 0.0
  %3307 = vadd.xlane.f32.xlu0 %v3306
  %v3308 = vpop.xlane.xlu0 %3307
  %v3309 = vsel %vm357, %v3265, 0.0
  %3310 = vadd.xlane.f32.xlu0 %v3309
  %v3311 = vpop.xlane.xlu0 %3310
  %v3312 = vsel %vm357, %v3266, 0.0
  %3313 = vadd.xlane.f32.xlu0 %v3312
  %v3314 = vpop.xlane.xlu0 %3313
  %v3315 = vmul.f32 %v3269, %v601
  %v3316 = vmul.f32 %v3272, %v601
  %v3317 = vmul.f32 %v3275, %v601
  %v3318 = vmul.f32 %v3278, %v601
  %v3319 = vmul.f32 %v3281, %v601
  %v3320 = vmul.f32 %v3284, %v601
  %v3321 = vmul.f32 %v3287, %v601
  %v3322 = vmul.f32 %v3290, %v601
  %v3323 = vmul.f32 %v3293, %v601
  %v3324 = vmul.f32 %v3296, %v601
  %v3325 = vmul.f32 %v3299, %v601
  %v3326 = vmul.f32 %v3302, %v601
  %v3327 = vmul.f32 %v3305, %v601
  %v3328 = vmul.f32 %v3308, %v601
  %v3329 = vmul.f32 %v3311, %v601
  %v3330 = vmul.f32 %v3314, %v601
  %v3331 = vsub.f32 %v3251, %v3315
  %v3332 = vsub.f32 %v3252, %v3316
  %v3333 = vsub.f32 %v3253, %v3317
  %v3334 = vsub.f32 %v3254, %v3318
  %v3335 = vsub.f32 %v3255, %v3319
  %v3336 = vsub.f32 %v3256, %v3320
  %v3337 = vsub.f32 %v3257, %v3321
  %v3338 = vsub.f32 %v3258, %v3322
  %v3339 = vsub.f32 %v3259, %v3323
  %v3340 = vsub.f32 %v3260, %v3324
  %v3341 = vsub.f32 %v3261, %v3325
  %v3342 = vsub.f32 %v3262, %v3326
  %v3343 = vsub.f32 %v3263, %v3327
  %v3344 = vsub.f32 %v3264, %v3328
  %v3345 = vsub.f32 %v3265, %v3329
  %v3346 = vsub.f32 %v3266, %v3330
  %v3347 = vmul.f32 %v3331, %v3331
  %v3348 = vmul.f32 %v3332, %v3332
  %v3349 = vmul.f32 %v3333, %v3333
  %v3350 = vmul.f32 %v3334, %v3334
  %v3351 = vmul.f32 %v3335, %v3335
  %v3352 = vmul.f32 %v3336, %v3336
  %v3353 = vmul.f32 %v3337, %v3337
  %v3354 = vmul.f32 %v3338, %v3338
  %v3355 = vmul.f32 %v3339, %v3339
  %v3356 = vmul.f32 %v3340, %v3340
  %v3357 = vmul.f32 %v3341, %v3341
  %v3358 = vmul.f32 %v3342, %v3342
  %v3359 = vmul.f32 %v3343, %v3343
  %v3360 = vmul.f32 %v3344, %v3344
  %v3361 = vmul.f32 %v3345, %v3345
  %v3362 = vmul.f32 %v3346, %v3346
  %v3363 = vsel %vm357, %v3347, 0.0
  %3364 = vadd.xlane.f32.xlu0 %v3363
  %v3365 = vpop.xlane.xlu0 %3364
  %v3366 = vsel %vm357, %v3348, 0.0
  %3367 = vadd.xlane.f32.xlu0 %v3366
  %v3368 = vpop.xlane.xlu0 %3367
  %v3369 = vsel %vm357, %v3349, 0.0
  %3370 = vadd.xlane.f32.xlu0 %v3369
  %v3371 = vpop.xlane.xlu0 %3370
  %v3372 = vsel %vm357, %v3350, 0.0
  %3373 = vadd.xlane.f32.xlu0 %v3372
  %v3374 = vpop.xlane.xlu0 %3373
  %v3375 = vsel %vm357, %v3351, 0.0
  %3376 = vadd.xlane.f32.xlu0 %v3375
  %v3377 = vpop.xlane.xlu0 %3376
  %v3378 = vsel %vm357, %v3352, 0.0
  %3379 = vadd.xlane.f32.xlu0 %v3378
  %v3380 = vpop.xlane.xlu0 %3379
  %v3381 = vsel %vm357, %v3353, 0.0
  %3382 = vadd.xlane.f32.xlu0 %v3381
  %v3383 = vpop.xlane.xlu0 %3382
  %v3384 = vsel %vm357, %v3354, 0.0
  %3385 = vadd.xlane.f32.xlu0 %v3384
  %v3386 = vpop.xlane.xlu0 %3385
  %v3387 = vsel %vm357, %v3355, 0.0
  %3388 = vadd.xlane.f32.xlu0 %v3387
  %v3389 = vpop.xlane.xlu0 %3388
  %v3390 = vsel %vm357, %v3356, 0.0
  %3391 = vadd.xlane.f32.xlu0 %v3390
  %v3392 = vpop.xlane.xlu0 %3391
  %v3393 = vsel %vm357, %v3357, 0.0
  %3394 = vadd.xlane.f32.xlu0 %v3393
  %v3395 = vpop.xlane.xlu0 %3394
  %v3396 = vsel %vm357, %v3358, 0.0
  %3397 = vadd.xlane.f32.xlu0 %v3396
  %v3398 = vpop.xlane.xlu0 %3397
  %v3399 = vsel %vm357, %v3359, 0.0
  %3400 = vadd.xlane.f32.xlu0 %v3399
  %v3401 = vpop.xlane.xlu0 %3400
  %v3402 = vsel %vm357, %v3360, 0.0
  %3403 = vadd.xlane.f32.xlu0 %v3402
  %v3404 = vpop.xlane.xlu0 %3403
  %v3405 = vsel %vm357, %v3361, 0.0
  %3406 = vadd.xlane.f32.xlu0 %v3405
  %v3407 = vpop.xlane.xlu0 %3406
  %v3408 = vsel %vm357, %v3362, 0.0
  %3409 = vadd.xlane.f32.xlu0 %v3408
  %v3410 = vpop.xlane.xlu0 %3409
  %v3411 = vmul.f32 %v3365, %v601
  %v3412 = vmul.f32 %v3368, %v601
  %v3413 = vmul.f32 %v3371, %v601
  %v3414 = vmul.f32 %v3374, %v601
  %v3415 = vmul.f32 %v3377, %v601
  %v3416 = vmul.f32 %v3380, %v601
  %v3417 = vmul.f32 %v3383, %v601
  %v3418 = vmul.f32 %v3386, %v601
  %v3419 = vmul.f32 %v3389, %v601
  %v3420 = vmul.f32 %v3392, %v601
  %v3421 = vmul.f32 %v3395, %v601
  %v3422 = vmul.f32 %v3398, %v601
  %v3423 = vmul.f32 %v3401, %v601
  %v3424 = vmul.f32 %v3404, %v601
  %v3425 = vmul.f32 %v3407, %v601
  %v3426 = vmul.f32 %v3410, %v601
  %v3427 = vadd.f32 %v3411, 1e-06
  %v3428 = vadd.f32 %v3412, 1e-06
  %v3429 = vadd.f32 %v3413, 1e-06
  %v3430 = vadd.f32 %v3414, 1e-06
  %v3431 = vadd.f32 %v3415, 1e-06
  %v3432 = vadd.f32 %v3416, 1e-06
  %v3433 = vadd.f32 %v3417, 1e-06
  %v3434 = vadd.f32 %v3418, 1e-06
  %v3435 = vadd.f32 %v3419, 1e-06
  %v3436 = vadd.f32 %v3420, 1e-06
  %v3437 = vadd.f32 %v3421, 1e-06
  %v3438 = vadd.f32 %v3422, 1e-06
  %v3439 = vadd.f32 %v3423, 1e-06
  %v3440 = vadd.f32 %v3424, 1e-06
  %v3441 = vadd.f32 %v3425, 1e-06
  %v3442 = vadd.f32 %v3426, 1e-06
  %v3443 = vrsqrt.pop %v3427
  %v3444 = vmul.f32 %v3443, %v3427
  %v3445 = vmul.f32 %v3444, %v3443
  %v3446 = vmul.f32 0.5, %v3445
  %v3447 = vsub.f32 1.5, %v3446
  %v3448 = vmul.f32 %v3443, %v3447
  %vm3449 = vweird.f32 %v3427
  %vm3450 = vweird.f32 %v3443
  %vm3451 = vmor %vm3449, %vm3450
  %v3452 = vsel %vm3451, %v3443, %v3448
  %v3453 = vrsqrt.pop %v3428
  %v3454 = vmul.f32 %v3453, %v3428
  %v3455 = vmul.f32 %v3454, %v3453
  %v3456 = vmul.f32 0.5, %v3455
  %v3457 = vsub.f32 1.5, %v3456
  %v3458 = vmul.f32 %v3453, %v3457
  %vm3459 = vweird.f32 %v3428
  %vm3460 = vweird.f32 %v3453
  %vm3461 = vmor %vm3459, %vm3460
  %v3462 = vsel %vm3461, %v3453, %v3458
  %v3463 = vrsqrt.pop %v3429
  %v3464 = vmul.f32 %v3463, %v3429
  %v3465 = vmul.f32 %v3464, %v3463
  %v3466 = vmul.f32 0.5, %v3465
  %v3467 = vsub.f32 1.5, %v3466
  %v3468 = vmul.f32 %v3463, %v3467
  %vm3469 = vweird.f32 %v3429
  %vm3470 = vweird.f32 %v3463
  %vm3471 = vmor %vm3469, %vm3470
  %v3472 = vsel %vm3471, %v3463, %v3468
  %v3473 = vrsqrt.pop %v3430
  %v3474 = vmul.f32 %v3473, %v3430
  %v3475 = vmul.f32 %v3474, %v3473
  %v3476 = vmul.f32 0.5, %v3475
  %v3477 = vsub.f32 1.5, %v3476
  %v3478 = vmul.f32 %v3473, %v3477
  %vm3479 = vweird.f32 %v3430
  %vm3480 = vweird.f32 %v3473
  %vm3481 = vmor %vm3479, %vm3480
  %v3482 = vsel %vm3481, %v3473, %v3478
  %v3483 = vrsqrt.pop %v3431
  %v3484 = vmul.f32 %v3483, %v3431
  %v3485 = vmul.f32 %v3484, %v3483
  %v3486 = vmul.f32 0.5, %v3485
  %v3487 = vsub.f32 1.5, %v3486
  %v3488 = vmul.f32 %v3483, %v3487
  %vm3489 = vweird.f32 %v3431
  %vm3490 = vweird.f32 %v3483
  %vm3491 = vmor %vm3489, %vm3490
  %v3492 = vsel %vm3491, %v3483, %v3488
  %v3493 = vrsqrt.pop %v3432
  %v3494 = vmul.f32 %v3493, %v3432
  %v3495 = vmul.f32 %v3494, %v3493
  %v3496 = vmul.f32 0.5, %v3495
  %v3497 = vsub.f32 1.5, %v3496
  %v3498 = vmul.f32 %v3493, %v3497
  %vm3499 = vweird.f32 %v3432
  %vm3500 = vweird.f32 %v3493
  %vm3501 = vmor %vm3499, %vm3500
  %v3502 = vsel %vm3501, %v3493, %v3498
  %v3503 = vrsqrt.pop %v3433
  %v3504 = vmul.f32 %v3503, %v3433
  %v3505 = vmul.f32 %v3504, %v3503
  %v3506 = vmul.f32 0.5, %v3505
  %v3507 = vsub.f32 1.5, %v3506
  %v3508 = vmul.f32 %v3503, %v3507
  %vm3509 = vweird.f32 %v3433
  %vm3510 = vweird.f32 %v3503
  %vm3511 = vmor %vm3509, %vm3510
  %v3512 = vsel %vm3511, %v3503, %v3508
  %v3513 = vrsqrt.pop %v3434
  %v3514 = vmul.f32 %v3513, %v3434
  %v3515 = vmul.f32 %v3514, %v3513
  %v3516 = vmul.f32 0.5, %v3515
  %v3517 = vsub.f32 1.5, %v3516
  %v3518 = vmul.f32 %v3513, %v3517
  %vm3519 = vweird.f32 %v3434
  %vm3520 = vweird.f32 %v3513
  %vm3521 = vmor %vm3519, %vm3520
  %v3522 = vsel %vm3521, %v3513, %v3518
  %v3523 = vrsqrt.pop %v3435
  %v3524 = vmul.f32 %v3523, %v3435
  %v3525 = vmul.f32 %v3524, %v3523
  %v3526 = vmul.f32 0.5, %v3525
  %v3527 = vsub.f32 1.5, %v3526
  %v3528 = vmul.f32 %v3523, %v3527
  %vm3529 = vweird.f32 %v3435
  %vm3530 = vweird.f32 %v3523
  %vm3531 = vmor %vm3529, %vm3530
  %v3532 = vsel %vm3531, %v3523, %v3528
  %v3533 = vrsqrt.pop %v3436
  %v3534 = vmul.f32 %v3533, %v3436
  %v3535 = vmul.f32 %v3534, %v3533
  %v3536 = vmul.f32 0.5, %v3535
  %v3537 = vsub.f32 1.5, %v3536
  %v3538 = vmul.f32 %v3533, %v3537
  %vm3539 = vweird.f32 %v3436
  %vm3540 = vweird.f32 %v3533
  %vm3541 = vmor %vm3539, %vm3540
  %v3542 = vsel %vm3541, %v3533, %v3538
  %v3543 = vrsqrt.pop %v3437
  %v3544 = vmul.f32 %v3543, %v3437
  %v3545 = vmul.f32 %v3544, %v3543
  %v3546 = vmul.f32 0.5, %v3545
  %v3547 = vsub.f32 1.5, %v3546
  %v3548 = vmul.f32 %v3543, %v3547
  %vm3549 = vweird.f32 %v3437
  %vm3550 = vweird.f32 %v3543
  %vm3551 = vmor %vm3549, %vm3550
  %v3552 = vsel %vm3551, %v3543, %v3548
  %v3553 = vrsqrt.pop %v3438
  %v3554 = vmul.f32 %v3553, %v3438
  %v3555 = vmul.f32 %v3554, %v3553
  %v3556 = vmul.f32 0.5, %v3555
  %v3557 = vsub.f32 1.5, %v3556
  %v3558 = vmul.f32 %v3553, %v3557
  %vm3559 = vweird.f32 %v3438
  %vm3560 = vweird.f32 %v3553
  %vm3561 = vmor %vm3559, %vm3560
  %v3562 = vsel %vm3561, %v3553, %v3558
  %v3563 = vrsqrt.pop %v3439
  %v3564 = vmul.f32 %v3563, %v3439
  %v3565 = vmul.f32 %v3564, %v3563
  %v3566 = vmul.f32 0.5, %v3565
  %v3567 = vsub.f32 1.5, %v3566
  %v3568 = vmul.f32 %v3563, %v3567
  %vm3569 = vweird.f32 %v3439
  %vm3570 = vweird.f32 %v3563
  %vm3571 = vmor %vm3569, %vm3570
  %v3572 = vsel %vm3571, %v3563, %v3568
  %v3573 = vrsqrt.pop %v3440
  %v3574 = vmul.f32 %v3573, %v3440
  %v3575 = vmul.f32 %v3574, %v3573
  %v3576 = vmul.f32 0.5, %v3575
  %v3577 = vsub.f32 1.5, %v3576
  %v3578 = vmul.f32 %v3573, %v3577
  %vm3579 = vweird.f32 %v3440
  %vm3580 = vweird.f32 %v3573
  %vm3581 = vmor %vm3579, %vm3580
  %v3582 = vsel %vm3581, %v3573, %v3578
  %v3583 = vrsqrt.pop %v3441
  %v3584 = vmul.f32 %v3583, %v3441
  %v3585 = vmul.f32 %v3584, %v3583
  %v3586 = vmul.f32 0.5, %v3585
  %v3587 = vsub.f32 1.5, %v3586
  %v3588 = vmul.f32 %v3583, %v3587
  %vm3589 = vweird.f32 %v3441
  %vm3590 = vweird.f32 %v3583
  %vm3591 = vmor %vm3589, %vm3590
  %v3592 = vsel %vm3591, %v3583, %v3588
  %v3593 = vrsqrt.pop %v3442
  %v3594 = vmul.f32 %v3593, %v3442
  %v3595 = vmul.f32 %v3594, %v3593
  %v3596 = vmul.f32 0.5, %v3595
  %v3597 = vsub.f32 1.5, %v3596
  %v3598 = vmul.f32 %v3593, %v3597
  %vm3599 = vweird.f32 %v3442
  %vm3600 = vweird.f32 %v3593
  %vm3601 = vmor %vm3599, %vm3600
  %v3602 = vsel %vm3601, %v3593, %v3598
  %v3603 = vmul.f32 %v3331, %v3452
  %v3604 = vmul.f32 %v3332, %v3462
  %v3605 = vmul.f32 %v3333, %v3472
  %v3606 = vmul.f32 %v3334, %v3482
  %v3607 = vmul.f32 %v3335, %v3492
  %v3608 = vmul.f32 %v3336, %v3502
  %v3609 = vmul.f32 %v3337, %v3512
  %v3610 = vmul.f32 %v3338, %v3522
  %v3611 = vmul.f32 %v3339, %v3532
  %v3612 = vmul.f32 %v3340, %v3542
  %v3613 = vmul.f32 %v3341, %v3552
  %v3614 = vmul.f32 %v3342, %v3562
  %v3615 = vmul.f32 %v3343, %v3572
  %v3616 = vmul.f32 %v3344, %v3582
  %v3617 = vmul.f32 %v3345, %v3592
  %v3618 = vmul.f32 %v3346, %v3602
  %v3619 = vrot.slane %v439, 5
  %3620 = vrot.lane.b32.xlu0 %v3619, 32
  %v3621 = vpop.permute.xlu0 %3620
  %v3623 = vadd.f32 %v546, %v3621
  %v3625 = vrot.slane %v452, 4
  %v3627 = vadd.f32 %v546, %v3625
  %v3628 = vadd.f32 %v3627, 1.0
  %v3629 = vperm.slane %v3628, 4
  %v3630 = vmul.f32 %v3603, %v3629
  %v3631 = vmul.f32 %v3604, %v3629
  %v3632 = vmul.f32 %v3605, %v3629
  %v3633 = vmul.f32 %v3606, %v3629
  %v3634 = vmul.f32 %v3607, %v3629
  %v3635 = vmul.f32 %v3608, %v3629
  %v3636 = vmul.f32 %v3609, %v3629
  %v3637 = vmul.f32 %v3610, %v3629
  %v3638 = vperm.slane %v3623, 3
  %v3639 = vadd.f32 %v3630, %v3638
  %v3640 = vadd.f32 %v3631, %v3638
  %v3641 = vadd.f32 %v3632, %v3638
  %v3642 = vadd.f32 %v3633, %v3638
  %v3643 = vadd.f32 %v3634, %v3638
  %v3644 = vadd.f32 %v3635, %v3638
  %v3645 = vadd.f32 %v3636, %v3638
  %v3646 = vadd.f32 %v3637, %v3638
  %3647 = vrot.lane.b32.xlu0 %v2108, 32
  %v3648 = vpop.permute.xlu0 %3647
  %v3650 = vadd.f32 %v546, %v3648
  %v3651 = vrot.slane %v452, 5
  %v3653 = vadd.f32 %v546, %v3651
  %v3654 = vadd.f32 %v3653, 1.0
  %v3655 = vperm.slane %v3654, 4
  %v3656 = vmul.f32 %v3611, %v3655
  %v3657 = vmul.f32 %v3612, %v3655
  %v3658 = vmul.f32 %v3613, %v3655
  %v3659 = vmul.f32 %v3614, %v3655
  %v3660 = vmul.f32 %v3615, %v3655
  %v3661 = vmul.f32 %v3616, %v3655
  %v3662 = vmul.f32 %v3617, %v3655
  %v3663 = vmul.f32 %v3618, %v3655
  %v3664 = vperm.slane %v3650, 3
  %v3665 = vadd.f32 %v3656, %v3664
  %v3666 = vadd.f32 %v3657, %v3664
  %v3667 = vadd.f32 %v3658, %v3664
  %v3668 = vadd.f32 %v3659, %v3664
  %v3669 = vadd.f32 %v3660, %v3664
  %v3670 = vadd.f32 %v3661, %v3664
  %v3671 = vadd.f32 %v3662, %v3664
  %v3672 = vadd.f32 %v3663, %v3664
  %v3673 = vld [vmem:[%s4 + $0x230] sm:$0xf]
  %v3674 = vld [vmem:[%s4 + $0x238] sm:$0xf]
  %v3675 = vld [vmem:[%s4 + $0x240] sm:$0xf]
  %v3676 = vld [vmem:[%s4 + $0x248] sm:$0xf]
  %v3677 = vpack.c.bf16 %v3640, %v3639
  %v3678 = vpack.c.bf16 %v3642, %v3641
  %v3679 = vpack.c.bf16 %v3644, %v3643
  %v3680 = vpack.c.bf16 %v3646, %v3645
  %v3681 = vpack.c.bf16 %v3666, %v3665
  %v3682 = vpack.c.bf16 %v3668, %v3667
  %v3683 = vpack.c.bf16 %v3670, %v3669
  %v3684 = vpack.c.bf16 %v3672, %v3671
  %v3685 = vld [vmem:[%s5 + $0x140] ss:$0 sm:$0xff]
  %v3690 = vunpack.c.l.b16 %v3673
  %v3691 = vunpack.c.l.b16 %v3674
  %v3692 = vunpack.c.l.b16 %v3675
  %v3693 = vunpack.c.l.b16 %v3676
  %v3694 = vpack.c.b16 %v3691, %v3690
  %v3695 = vpack.c.b16 %v3693, %v3692
  %v3699 = vsel %vm357, %v3677, 0
  %v3702 = vsel %vm357, %v3678, 0
  %v3705 = vsel %vm357, %v3679, 0
  %v3708 = vsel %vm357, %v3680, 0
  %v3711 = vsel %vm357, %v3681, 0
  %v3714 = vsel %vm357, %v3682, 0
  %v3717 = vsel %vm357, %v3683, 0
  %v3720 = vsel %vm357, %v3684, 0
  %3722 = vmatpush.bf16.msra.mxu0 0
  %3723 = vmatpush.bf16.msra.mxu0 0
  %3724 = vmatpush.bf16.msra.mxu0 0
  %3725 = vmatpush.bf16.msra.mxu0 0
  %3726 = vmatpush.bf16.msra.mxu0 0
  %3727 = vmatpush.bf16.msra.mxu0 0
  %3728 = vmatpush.bf16.msra.mxu0 %v3695
  %3729 = vmatpush.bf16.msra.mxu0 %v3694
  %3730 = vmatmul.bf16.gmra.mxu0 %v3699
  %v3731 = vpop.f32.mrf.mxu0
  %v3732 = vadd.f32 %v3685, %v3731
  %v3733 = vpop.f32.mrf.mxu0
  %v3734 = vadd.f32 %v3685, %v3733
  %3735 = vmatmul.bf16.gmra.mxu0 %v3702
  %v3736 = vpop.f32.mrf.mxu0
  %v3737 = vadd.f32 %v3685, %v3736
  %v3738 = vpop.f32.mrf.mxu0
  %v3739 = vadd.f32 %v3685, %v3738
  %3740 = vmatmul.bf16.gmra.mxu0 %v3705
  %v3741 = vpop.f32.mrf.mxu0
  %v3742 = vadd.f32 %v3685, %v3741
  %v3743 = vpop.f32.mrf.mxu0
  %v3744 = vadd.f32 %v3685, %v3743
  %3745 = vmatmul.bf16.gmra.mxu0 %v3708
  %v3746 = vpop.f32.mrf.mxu0
  %v3747 = vadd.f32 %v3685, %v3746
  %v3748 = vpop.f32.mrf.mxu0
  %v3749 = vadd.f32 %v3685, %v3748
  %3750 = vmatmul.bf16.gmra.mxu0 %v3711
  %v3751 = vpop.f32.mrf.mxu0
  %v3752 = vadd.f32 %v3685, %v3751
  %v3753 = vpop.f32.mrf.mxu0
  %v3754 = vadd.f32 %v3685, %v3753
  %3755 = vmatmul.bf16.gmra.mxu0 %v3714
  %v3756 = vpop.f32.mrf.mxu0
  %v3757 = vadd.f32 %v3685, %v3756
  %v3758 = vpop.f32.mrf.mxu0
  %v3759 = vadd.f32 %v3685, %v3758
  %3760 = vmatmul.bf16.gmra.mxu0 %v3717
  %v3761 = vpop.f32.mrf.mxu0
  %v3762 = vadd.f32 %v3685, %v3761
  %v3763 = vpop.f32.mrf.mxu0
  %v3764 = vadd.f32 %v3685, %v3763
  %3765 = vmatmul.bf16.gmra.mxu0 %v3720
  %v3766 = vpop.f32.mrf.mxu0
  %v3767 = vadd.f32 %v3685, %v3766
  %v3768 = vpop.f32.mrf.mxu0
  %v3769 = vadd.f32 %v3685, %v3768
  %3770 = vdwg.mxu0
  %v3771 = vmul.f32 %v3732, 0.5
  %v3772 = vmul.f32 %v3734, 0.5
  %v3773 = vmul.f32 %v3737, 0.5
  %v3774 = vmul.f32 %v3739, 0.5
  %v3775 = vmul.f32 %v3742, 0.5
  %v3776 = vmul.f32 %v3744, 0.5
  %v3777 = vmul.f32 %v3747, 0.5
  %v3778 = vmul.f32 %v3749, 0.5
  %v3779 = vmul.f32 %v3752, 0.5
  %v3780 = vmul.f32 %v3754, 0.5
  %v3781 = vmul.f32 %v3757, 0.5
  %v3782 = vmul.f32 %v3759, 0.5
  %v3783 = vmul.f32 %v3762, 0.5
  %v3784 = vmul.f32 %v3764, 0.5
  %v3785 = vmul.f32 %v3767, 0.5
  %v3786 = vmul.f32 %v3769, 0.5
  %v3787 = vmul.f32 %v3732, 0.044715
  %v3788 = vmul.f32 %v3734, 0.044715
  %v3789 = vmul.f32 %v3737, 0.044715
  %v3790 = vmul.f32 %v3739, 0.044715
  %v3791 = vmul.f32 %v3742, 0.044715
  %v3792 = vmul.f32 %v3744, 0.044715
  %v3793 = vmul.f32 %v3747, 0.044715
  %v3794 = vmul.f32 %v3749, 0.044715
  %v3795 = vmul.f32 %v3752, 0.044715
  %v3796 = vmul.f32 %v3754, 0.044715
  %v3797 = vmul.f32 %v3757, 0.044715
  %v3798 = vmul.f32 %v3759, 0.044715
  %v3799 = vmul.f32 %v3762, 0.044715
  %v3800 = vmul.f32 %v3764, 0.044715
  %v3801 = vmul.f32 %v3767, 0.044715
  %v3802 = vmul.f32 %v3769, 0.044715
  %v3803 = vmul.f32 %v3787, %v3732
  %v3804 = vmul.f32 %v3788, %v3734
  %v3805 = vmul.f32 %v3789, %v3737
  %v3806 = vmul.f32 %v3790, %v3739
  %v3807 = vmul.f32 %v3791, %v3742
  %v3808 = vmul.f32 %v3792, %v3744
  %v3809 = vmul.f32 %v3793, %v3747
  %v3810 = vmul.f32 %v3794, %v3749
  %v3811 = vmul.f32 %v3795, %v3752
  %v3812 = vmul.f32 %v3796, %v3754
  %v3813 = vmul.f32 %v3797, %v3757
  %v3814 = vmul.f32 %v3798, %v3759
  %v3815 = vmul.f32 %v3799, %v3762
  %v3816 = vmul.f32 %v3800, %v3764
  %v3817 = vmul.f32 %v3801, %v3767
  %v3818 = vmul.f32 %v3802, %v3769
  %v3819 = vmul.f32 %v3803, %v3732
  %v3820 = vmul.f32 %v3804, %v3734
  %v3821 = vmul.f32 %v3805, %v3737
  %v3822 = vmul.f32 %v3806, %v3739
  %v3823 = vmul.f32 %v3807, %v3742
  %v3824 = vmul.f32 %v3808, %v3744
  %v3825 = vmul.f32 %v3809, %v3747
  %v3826 = vmul.f32 %v3810, %v3749
  %v3827 = vmul.f32 %v3811, %v3752
  %v3828 = vmul.f32 %v3812, %v3754
  %v3829 = vmul.f32 %v3813, %v3757
  %v3830 = vmul.f32 %v3814, %v3759
  %v3831 = vmul.f32 %v3815, %v3762
  %v3832 = vmul.f32 %v3816, %v3764
  %v3833 = vmul.f32 %v3817, %v3767
  %v3834 = vmul.f32 %v3818, %v3769
  %v3835 = vadd.f32 %v3732, %v3819
  %v3836 = vadd.f32 %v3734, %v3820
  %v3837 = vadd.f32 %v3737, %v3821
  %v3838 = vadd.f32 %v3739, %v3822
  %v3839 = vadd.f32 %v3742, %v3823
  %v3840 = vadd.f32 %v3744, %v3824
  %v3841 = vadd.f32 %v3747, %v3825
  %v3842 = vadd.f32 %v3749, %v3826
  %v3843 = vadd.f32 %v3752, %v3827
  %v3844 = vadd.f32 %v3754, %v3828
  %v3845 = vadd.f32 %v3757, %v3829
  %v3846 = vadd.f32 %v3759, %v3830
  %v3847 = vadd.f32 %v3762, %v3831
  %v3848 = vadd.f32 %v3764, %v3832
  %v3849 = vadd.f32 %v3767, %v3833
  %v3850 = vadd.f32 %v3769, %v3834
  %v3851 = vmul.f32 %v3835, 0.7978846
  %v3852 = vmul.f32 %v3836, 0.7978846
  %v3853 = vmul.f32 %v3837, 0.7978846
  %v3854 = vmul.f32 %v3838, 0.7978846
  %v3855 = vmul.f32 %v3839, 0.7978846
  %v3856 = vmul.f32 %v3840, 0.7978846
  %v3857 = vmul.f32 %v3841, 0.7978846
  %v3858 = vmul.f32 %v3842, 0.7978846
  %v3859 = vmul.f32 %v3843, 0.7978846
  %v3860 = vmul.f32 %v3844, 0.7978846
  %v3861 = vmul.f32 %v3845, 0.7978846
  %v3862 = vmul.f32 %v3846, 0.7978846
  %v3863 = vmul.f32 %v3847, 0.7978846
  %v3864 = vmul.f32 %v3848, 0.7978846
  %v3865 = vmul.f32 %v3849, 0.7978846
  %v3866 = vmul.f32 %v3850, 0.7978846
  %v3867 = vtanh.pop %v3851
  %v3868 = vtanh.pop %v3852
  %v3869 = vtanh.pop %v3853
  %v3870 = vtanh.pop %v3854
  %v3871 = vtanh.pop %v3855
  %v3872 = vtanh.pop %v3856
  %v3873 = vtanh.pop %v3857
  %v3874 = vtanh.pop %v3858
  %v3875 = vtanh.pop %v3859
  %v3876 = vtanh.pop %v3860
  %v3877 = vtanh.pop %v3861
  %v3878 = vtanh.pop %v3862
  %v3879 = vtanh.pop %v3863
  %v3880 = vtanh.pop %v3864
  %v3881 = vtanh.pop %v3865
  %v3882 = vtanh.pop %v3866
  %v3883 = vadd.f32 %v3867, 1.0
  %v3884 = vadd.f32 %v3868, 1.0
  %v3885 = vadd.f32 %v3869, 1.0
  %v3886 = vadd.f32 %v3870, 1.0
  %v3887 = vadd.f32 %v3871, 1.0
  %v3888 = vadd.f32 %v3872, 1.0
  %v3889 = vadd.f32 %v3873, 1.0
  %v3890 = vadd.f32 %v3874, 1.0
  %v3891 = vadd.f32 %v3875, 1.0
  %v3892 = vadd.f32 %v3876, 1.0
  %v3893 = vadd.f32 %v3877, 1.0
  %v3894 = vadd.f32 %v3878, 1.0
  %v3895 = vadd.f32 %v3879, 1.0
  %v3896 = vadd.f32 %v3880, 1.0
  %v3897 = vadd.f32 %v3881, 1.0
  %v3898 = vadd.f32 %v3882, 1.0
  %v3899 = vmul.f32 %v3771, %v3883
  %v3900 = vmul.f32 %v3772, %v3884
  %v3901 = vmul.f32 %v3773, %v3885
  %v3902 = vmul.f32 %v3774, %v3886
  %v3903 = vmul.f32 %v3775, %v3887
  %v3904 = vmul.f32 %v3776, %v3888
  %v3905 = vmul.f32 %v3777, %v3889
  %v3906 = vmul.f32 %v3778, %v3890
  %v3907 = vmul.f32 %v3779, %v3891
  %v3908 = vmul.f32 %v3780, %v3892
  %v3909 = vmul.f32 %v3781, %v3893
  %v3910 = vmul.f32 %v3782, %v3894
  %v3911 = vmul.f32 %v3783, %v3895
  %v3912 = vmul.f32 %v3784, %v3896
  %v3913 = vmul.f32 %v3785, %v3897
  %v3914 = vmul.f32 %v3786, %v3898
  %v3915 = vld [vmem:[%s4 + $0x250] sm:$0xf]
  %v3916 = vld [vmem:[%s4 + $0x258] sm:$0xf]
  %v3917 = vld [vmem:[%s4 + $0x260] sm:$0xf]
  %v3918 = vld [vmem:[%s4 + $0x268] sm:$0xf]
  %v3919 = vld [vmem:[%s4 + $0x270] sm:$0xf]
  %v3920 = vld [vmem:[%s4 + $0x278] sm:$0xf]
  %v3921 = vld [vmem:[%s4 + $0x280] sm:$0xf]
  %v3922 = vld [vmem:[%s4 + $0x288] sm:$0xf]
  %v3923 = vld [vmem:[%s4 + $0x290] sm:$0xf]
  %v3924 = vld [vmem:[%s4 + $0x298] sm:$0xf]
  %v3925 = vld [vmem:[%s4 + $0x2a0] sm:$0xf]
  %v3926 = vld [vmem:[%s4 + $0x2a8] sm:$0xf]
  %v3927 = vld [vmem:[%s4 + $0x2b0] sm:$0xf]
  %v3928 = vld [vmem:[%s4 + $0x2b8] sm:$0xf]
  %v3929 = vld [vmem:[%s4 + $0x2c0] sm:$0xf]
  %v3930 = vld [vmem:[%s4 + $0x2c8] sm:$0xf]
  %v3931 = vpack.c.bf16 %v3900, %v3899
  %v3932 = vpack.c.bf16 %v3902, %v3901
  %v3933 = vpack.c.bf16 %v3904, %v3903
  %v3934 = vpack.c.bf16 %v3906, %v3905
  %v3935 = vpack.c.bf16 %v3908, %v3907
  %v3936 = vpack.c.bf16 %v3910, %v3909
  %v3937 = vpack.c.bf16 %v3912, %v3911
  %v3938 = vpack.c.bf16 %v3914, %v3913
  %v3939 = vld [vmem:[%s5 + $0x150] ss:$0 sm:$0xff]
  %v3956 = vunpack.c.l.b16 %v3915
  %v3957 = vunpack.c.l.b16 %v3916
  %v3958 = vunpack.c.l.b16 %v3917
  %v3959 = vunpack.c.l.b16 %v3918
  %v3960 = vunpack.c.l.b16 %v3919
  %v3961 = vunpack.c.l.b16 %v3920
  %v3962 = vunpack.c.l.b16 %v3921
  %v3963 = vunpack.c.l.b16 %v3922
  %v3964 = vunpack.c.l.b16 %v3923
  %v3965 = vunpack.c.l.b16 %v3924
  %v3966 = vunpack.c.l.b16 %v3925
  %v3967 = vunpack.c.l.b16 %v3926
  %v3968 = vunpack.c.l.b16 %v3927
  %v3969 = vunpack.c.l.b16 %v3928
  %v3970 = vunpack.c.l.b16 %v3929
  %v3971 = vunpack.c.l.b16 %v3930
  %v3972 = vpack.c.b16 %v3957, %v3956
  %v3973 = vpack.c.b16 %v3959, %v3958
  %v3974 = vpack.c.b16 %v3961, %v3960
  %v3975 = vpack.c.b16 %v3963, %v3962
  %v3976 = vpack.c.b16 %v3965, %v3964
  %v3977 = vpack.c.b16 %v3967, %v3966
  %v3978 = vpack.c.b16 %v3969, %v3968
  %v3979 = vpack.c.b16 %v3971, %v3970
  %3988 = vmatpush.bf16.msra.mxu0 %v3979
  %3989 = vmatpush.bf16.msra.mxu0 %v3978
  %3990 = vmatpush.bf16.msra.mxu0 %v3977
  %3991 = vmatpush.bf16.msra.mxu0 %v3976
  %3992 = vmatpush.bf16.msra.mxu0 %v3975
  %3993 = vmatpush.bf16.msra.mxu0 %v3974
  %3994 = vmatpush.bf16.msra.mxu0 %v3973
  %3995 = vmatpush.bf16.msra.mxu0 %v3972
  %3996 = vmatmul.bf16.gmra.mxu0 %v3931
  %v3997 = vpop.f32.mrf.mxu0
  %v3998 = vadd.f32 %v3939, %v3997
  %v3999 = vpop.f32.mrf.mxu0
  %v4000 = vadd.f32 %v3939, %v3999
  %4001 = vmatmul.bf16.gmra.mxu0 %v3932
  %v4002 = vpop.f32.mrf.mxu0
  %v4003 = vadd.f32 %v3939, %v4002
  %v4004 = vpop.f32.mrf.mxu0
  %v4005 = vadd.f32 %v3939, %v4004
  %4006 = vmatmul.bf16.gmra.mxu0 %v3933
  %v4007 = vpop.f32.mrf.mxu0
  %v4008 = vadd.f32 %v3939, %v4007
  %v4009 = vpop.f32.mrf.mxu0
  %v4010 = vadd.f32 %v3939, %v4009
  %4011 = vmatmul.bf16.gmra.mxu0 %v3934
  %v4012 = vpop.f32.mrf.mxu0
  %v4013 = vadd.f32 %v3939, %v4012
  %v4014 = vpop.f32.mrf.mxu0
  %v4015 = vadd.f32 %v3939, %v4014
  %4016 = vmatmul.bf16.gmra.mxu0 %v3935
  %v4017 = vpop.f32.mrf.mxu0
  %v4018 = vadd.f32 %v3939, %v4017
  %v4019 = vpop.f32.mrf.mxu0
  %v4020 = vadd.f32 %v3939, %v4019
  %4021 = vmatmul.bf16.gmra.mxu0 %v3936
  %v4022 = vpop.f32.mrf.mxu0
  %v4023 = vadd.f32 %v3939, %v4022
  %v4024 = vpop.f32.mrf.mxu0
  %v4025 = vadd.f32 %v3939, %v4024
  %4026 = vmatmul.bf16.gmra.mxu0 %v3937
  %v4027 = vpop.f32.mrf.mxu0
  %v4028 = vadd.f32 %v3939, %v4027
  %v4029 = vpop.f32.mrf.mxu0
  %v4030 = vadd.f32 %v3939, %v4029
  %4031 = vmatmul.bf16.gmra.mxu0 %v3938
  %v4032 = vpop.f32.mrf.mxu0
  %v4033 = vadd.f32 %v3939, %v4032
  %v4034 = vpop.f32.mrf.mxu0
  %v4035 = vadd.f32 %v3939, %v4034
  %4036 = vdwg.mxu0
  %v4037 = vrot.slane %v452, 3
  %4038 = vrot.lane.b32.xlu0 %v4037, 96
  %v4039 = vpop.permute.xlu0 %4038
  %v4041 = vadd.f32 %v546, %v4039
  %v4042 = vperm.slane %v4041, 5
  %v4043 = vmul.f32 %v3998, %v4042
  %v4044 = vmul.f32 %v4000, %v4042
  %v4045 = vmul.f32 %v4003, %v4042
  %v4046 = vmul.f32 %v4005, %v4042
  %v4047 = vmul.f32 %v4008, %v4042
  %v4048 = vmul.f32 %v4010, %v4042
  %v4049 = vmul.f32 %v4013, %v4042
  %v4050 = vmul.f32 %v4015, %v4042
  %4051 = vrot.lane.b32.xlu0 %v3625, 96
  %v4052 = vpop.permute.xlu0 %4051
  %v4054 = vadd.f32 %v546, %v4052
  %v4055 = vperm.slane %v4054, 5
  %v4056 = vmul.f32 %v4018, %v4055
  %v4057 = vmul.f32 %v4020, %v4055
  %v4058 = vmul.f32 %v4023, %v4055
  %v4059 = vmul.f32 %v4025, %v4055
  %v4060 = vmul.f32 %v4028, %v4055
  %v4061 = vmul.f32 %v4030, %v4055
  %v4062 = vmul.f32 %v4033, %v4055
  %v4063 = vmul.f32 %v4035, %v4055
  %v4064 = vadd.f32 %v3251, %v4043
  %v4065 = vadd.f32 %v3252, %v4044
  %v4066 = vadd.f32 %v3253, %v4045
  %v4067 = vadd.f32 %v3254, %v4046
  %v4068 = vadd.f32 %v3255, %v4047
  %v4069 = vadd.f32 %v3256, %v4048
  %v4070 = vadd.f32 %v3257, %v4049
  %v4071 = vadd.f32 %v3258, %v4050
  %v4072 = vadd.f32 %v3259, %v4056
  %v4073 = vadd.f32 %v3260, %v4057
  %v4074 = vadd.f32 %v3261, %v4058
  %v4075 = vadd.f32 %v3262, %v4059
  %v4076 = vadd.f32 %v3263, %v4060
  %v4077 = vadd.f32 %v3264, %v4061
  %v4078 = vadd.f32 %v3265, %v4062
  %v4079 = vadd.f32 %v3266, %v4063
  %v4080 = vld [vmem:[%s5 + $0x160] sm:$0x3f]
  %v4081 = vsel %vm357, %v4064, 0.0
  %4082 = vadd.xlane.f32.xlu0 %v4081
  %v4083 = vpop.xlane.xlu0 %4082
  %v4084 = vsel %vm357, %v4065, 0.0
  %4085 = vadd.xlane.f32.xlu0 %v4084
  %v4086 = vpop.xlane.xlu0 %4085
  %v4087 = vsel %vm357, %v4066, 0.0
  %4088 = vadd.xlane.f32.xlu0 %v4087
  %v4089 = vpop.xlane.xlu0 %4088
  %v4090 = vsel %vm357, %v4067, 0.0
  %4091 = vadd.xlane.f32.xlu0 %v4090
  %v4092 = vpop.xlane.xlu0 %4091
  %v4093 = vsel %vm357, %v4068, 0.0
  %4094 = vadd.xlane.f32.xlu0 %v4093
  %v4095 = vpop.xlane.xlu0 %4094
  %v4096 = vsel %vm357, %v4069, 0.0
  %4097 = vadd.xlane.f32.xlu0 %v4096
  %v4098 = vpop.xlane.xlu0 %4097
  %v4099 = vsel %vm357, %v4070, 0.0
  %4100 = vadd.xlane.f32.xlu0 %v4099
  %v4101 = vpop.xlane.xlu0 %4100
  %v4102 = vsel %vm357, %v4071, 0.0
  %4103 = vadd.xlane.f32.xlu0 %v4102
  %v4104 = vpop.xlane.xlu0 %4103
  %v4105 = vsel %vm357, %v4072, 0.0
  %4106 = vadd.xlane.f32.xlu0 %v4105
  %v4107 = vpop.xlane.xlu0 %4106
  %v4108 = vsel %vm357, %v4073, 0.0
  %4109 = vadd.xlane.f32.xlu0 %v4108
  %v4110 = vpop.xlane.xlu0 %4109
  %v4111 = vsel %vm357, %v4074, 0.0
  %4112 = vadd.xlane.f32.xlu0 %v4111
  %v4113 = vpop.xlane.xlu0 %4112
  %v4114 = vsel %vm357, %v4075, 0.0
  %4115 = vadd.xlane.f32.xlu0 %v4114
  %v4116 = vpop.xlane.xlu0 %4115
  %v4117 = vsel %vm357, %v4076, 0.0
  %4118 = vadd.xlane.f32.xlu0 %v4117
  %v4119 = vpop.xlane.xlu0 %4118
  %v4120 = vsel %vm357, %v4077, 0.0
  %4121 = vadd.xlane.f32.xlu0 %v4120
  %v4122 = vpop.xlane.xlu0 %4121
  %v4123 = vsel %vm357, %v4078, 0.0
  %4124 = vadd.xlane.f32.xlu0 %v4123
  %v4125 = vpop.xlane.xlu0 %4124
  %v4126 = vsel %vm357, %v4079, 0.0
  %4127 = vadd.xlane.f32.xlu0 %v4126
  %v4128 = vpop.xlane.xlu0 %4127
  %v4129 = vmul.f32 %v4083, %v601
  %v4130 = vmul.f32 %v4086, %v601
  %v4131 = vmul.f32 %v4089, %v601
  %v4132 = vmul.f32 %v4092, %v601
  %v4133 = vmul.f32 %v4095, %v601
  %v4134 = vmul.f32 %v4098, %v601
  %v4135 = vmul.f32 %v4101, %v601
  %v4136 = vmul.f32 %v4104, %v601
  %v4137 = vmul.f32 %v4107, %v601
  %v4138 = vmul.f32 %v4110, %v601
  %v4139 = vmul.f32 %v4113, %v601
  %v4140 = vmul.f32 %v4116, %v601
  %v4141 = vmul.f32 %v4119, %v601
  %v4142 = vmul.f32 %v4122, %v601
  %v4143 = vmul.f32 %v4125, %v601
  %v4144 = vmul.f32 %v4128, %v601
  %v4145 = vsub.f32 %v4064, %v4129
  %v4146 = vsub.f32 %v4065, %v4130
  %v4147 = vsub.f32 %v4066, %v4131
  %v4148 = vsub.f32 %v4067, %v4132
  %v4149 = vsub.f32 %v4068, %v4133
  %v4150 = vsub.f32 %v4069, %v4134
  %v4151 = vsub.f32 %v4070, %v4135
  %v4152 = vsub.f32 %v4071, %v4136
  %v4153 = vsub.f32 %v4072, %v4137
  %v4154 = vsub.f32 %v4073, %v4138
  %v4155 = vsub.f32 %v4074, %v4139
  %v4156 = vsub.f32 %v4075, %v4140
  %v4157 = vsub.f32 %v4076, %v4141
  %v4158 = vsub.f32 %v4077, %v4142
  %v4159 = vsub.f32 %v4078, %v4143
  %v4160 = vsub.f32 %v4079, %v4144
  %v4161 = vmul.f32 %v4145, %v4145
  %v4162 = vmul.f32 %v4146, %v4146
  %v4163 = vmul.f32 %v4147, %v4147
  %v4164 = vmul.f32 %v4148, %v4148
  %v4165 = vmul.f32 %v4149, %v4149
  %v4166 = vmul.f32 %v4150, %v4150
  %v4167 = vmul.f32 %v4151, %v4151
  %v4168 = vmul.f32 %v4152, %v4152
  %v4169 = vmul.f32 %v4153, %v4153
  %v4170 = vmul.f32 %v4154, %v4154
  %v4171 = vmul.f32 %v4155, %v4155
  %v4172 = vmul.f32 %v4156, %v4156
  %v4173 = vmul.f32 %v4157, %v4157
  %v4174 = vmul.f32 %v4158, %v4158
  %v4175 = vmul.f32 %v4159, %v4159
  %v4176 = vmul.f32 %v4160, %v4160
  %v4177 = vsel %vm357, %v4161, 0.0
  %4178 = vadd.xlane.f32.xlu0 %v4177
  %v4179 = vpop.xlane.xlu0 %4178
  %v4180 = vsel %vm357, %v4162, 0.0
  %4181 = vadd.xlane.f32.xlu0 %v4180
  %v4182 = vpop.xlane.xlu0 %4181
  %v4183 = vsel %vm357, %v4163, 0.0
  %4184 = vadd.xlane.f32.xlu0 %v4183
  %v4185 = vpop.xlane.xlu0 %4184
  %v4186 = vsel %vm357, %v4164, 0.0
  %4187 = vadd.xlane.f32.xlu0 %v4186
  %v4188 = vpop.xlane.xlu0 %4187
  %v4189 = vsel %vm357, %v4165, 0.0
  %4190 = vadd.xlane.f32.xlu0 %v4189
  %v4191 = vpop.xlane.xlu0 %4190
  %v4192 = vsel %vm357, %v4166, 0.0
  %4193 = vadd.xlane.f32.xlu0 %v4192
  %v4194 = vpop.xlane.xlu0 %4193
  %v4195 = vsel %vm357, %v4167, 0.0
  %4196 = vadd.xlane.f32.xlu0 %v4195
  %v4197 = vpop.xlane.xlu0 %4196
  %v4198 = vsel %vm357, %v4168, 0.0
  %4199 = vadd.xlane.f32.xlu0 %v4198
  %v4200 = vpop.xlane.xlu0 %4199
  %v4201 = vsel %vm357, %v4169, 0.0
  %4202 = vadd.xlane.f32.xlu0 %v4201
  %v4203 = vpop.xlane.xlu0 %4202
  %v4204 = vsel %vm357, %v4170, 0.0
  %4205 = vadd.xlane.f32.xlu0 %v4204
  %v4206 = vpop.xlane.xlu0 %4205
  %v4207 = vsel %vm357, %v4171, 0.0
  %4208 = vadd.xlane.f32.xlu0 %v4207
  %v4209 = vpop.xlane.xlu0 %4208
  %v4210 = vsel %vm357, %v4172, 0.0
  %4211 = vadd.xlane.f32.xlu0 %v4210
  %v4212 = vpop.xlane.xlu0 %4211
  %v4213 = vsel %vm357, %v4173, 0.0
  %4214 = vadd.xlane.f32.xlu0 %v4213
  %v4215 = vpop.xlane.xlu0 %4214
  %v4216 = vsel %vm357, %v4174, 0.0
  %4217 = vadd.xlane.f32.xlu0 %v4216
  %v4218 = vpop.xlane.xlu0 %4217
  %v4219 = vsel %vm357, %v4175, 0.0
  %4220 = vadd.xlane.f32.xlu0 %v4219
  %v4221 = vpop.xlane.xlu0 %4220
  %v4222 = vsel %vm357, %v4176, 0.0
  %4223 = vadd.xlane.f32.xlu0 %v4222
  %v4224 = vpop.xlane.xlu0 %4223
  %v4225 = vmul.f32 %v4179, %v601
  %v4226 = vmul.f32 %v4182, %v601
  %v4227 = vmul.f32 %v4185, %v601
  %v4228 = vmul.f32 %v4188, %v601
  %v4229 = vmul.f32 %v4191, %v601
  %v4230 = vmul.f32 %v4194, %v601
  %v4231 = vmul.f32 %v4197, %v601
  %v4232 = vmul.f32 %v4200, %v601
  %v4233 = vmul.f32 %v4203, %v601
  %v4234 = vmul.f32 %v4206, %v601
  %v4235 = vmul.f32 %v4209, %v601
  %v4236 = vmul.f32 %v4212, %v601
  %v4237 = vmul.f32 %v4215, %v601
  %v4238 = vmul.f32 %v4218, %v601
  %v4239 = vmul.f32 %v4221, %v601
  %v4240 = vmul.f32 %v4224, %v601
  %v4241 = vadd.f32 %v4225, 1e-06
  %v4242 = vadd.f32 %v4226, 1e-06
  %v4243 = vadd.f32 %v4227, 1e-06
  %v4244 = vadd.f32 %v4228, 1e-06
  %v4245 = vadd.f32 %v4229, 1e-06
  %v4246 = vadd.f32 %v4230, 1e-06
  %v4247 = vadd.f32 %v4231, 1e-06
  %v4248 = vadd.f32 %v4232, 1e-06
  %v4249 = vadd.f32 %v4233, 1e-06
  %v4250 = vadd.f32 %v4234, 1e-06
  %v4251 = vadd.f32 %v4235, 1e-06
  %v4252 = vadd.f32 %v4236, 1e-06
  %v4253 = vadd.f32 %v4237, 1e-06
  %v4254 = vadd.f32 %v4238, 1e-06
  %v4255 = vadd.f32 %v4239, 1e-06
  %v4256 = vadd.f32 %v4240, 1e-06
  %v4257 = vrsqrt.pop %v4241
  %v4258 = vmul.f32 %v4257, %v4241
  %v4259 = vmul.f32 %v4258, %v4257
  %v4260 = vmul.f32 0.5, %v4259
  %v4261 = vsub.f32 1.5, %v4260
  %v4262 = vmul.f32 %v4257, %v4261
  %vm4263 = vweird.f32 %v4241
  %vm4264 = vweird.f32 %v4257
  %vm4265 = vmor %vm4263, %vm4264
  %v4266 = vsel %vm4265, %v4257, %v4262
  %v4267 = vrsqrt.pop %v4242
  %v4268 = vmul.f32 %v4267, %v4242
  %v4269 = vmul.f32 %v4268, %v4267
  %v4270 = vmul.f32 0.5, %v4269
  %v4271 = vsub.f32 1.5, %v4270
  %v4272 = vmul.f32 %v4267, %v4271
  %vm4273 = vweird.f32 %v4242
  %vm4274 = vweird.f32 %v4267
  %vm4275 = vmor %vm4273, %vm4274
  %v4276 = vsel %vm4275, %v4267, %v4272
  %v4277 = vrsqrt.pop %v4243
  %v4278 = vmul.f32 %v4277, %v4243
  %v4279 = vmul.f32 %v4278, %v4277
  %v4280 = vmul.f32 0.5, %v4279
  %v4281 = vsub.f32 1.5, %v4280
  %v4282 = vmul.f32 %v4277, %v4281
  %vm4283 = vweird.f32 %v4243
  %vm4284 = vweird.f32 %v4277
  %vm4285 = vmor %vm4283, %vm4284
  %v4286 = vsel %vm4285, %v4277, %v4282
  %v4287 = vrsqrt.pop %v4244
  %v4288 = vmul.f32 %v4287, %v4244
  %v4289 = vmul.f32 %v4288, %v4287
  %v4290 = vmul.f32 0.5, %v4289
  %v4291 = vsub.f32 1.5, %v4290
  %v4292 = vmul.f32 %v4287, %v4291
  %vm4293 = vweird.f32 %v4244
  %vm4294 = vweird.f32 %v4287
  %vm4295 = vmor %vm4293, %vm4294
  %v4296 = vsel %vm4295, %v4287, %v4292
  %v4297 = vrsqrt.pop %v4245
  %v4298 = vmul.f32 %v4297, %v4245
  %v4299 = vmul.f32 %v4298, %v4297
  %v4300 = vmul.f32 0.5, %v4299
  %v4301 = vsub.f32 1.5, %v4300
  %v4302 = vmul.f32 %v4297, %v4301
  %vm4303 = vweird.f32 %v4245
  %vm4304 = vweird.f32 %v4297
  %vm4305 = vmor %vm4303, %vm4304
  %v4306 = vsel %vm4305, %v4297, %v4302
  %v4307 = vrsqrt.pop %v4246
  %v4308 = vmul.f32 %v4307, %v4246
  %v4309 = vmul.f32 %v4308, %v4307
  %v4310 = vmul.f32 0.5, %v4309
  %v4311 = vsub.f32 1.5, %v4310
  %v4312 = vmul.f32 %v4307, %v4311
  %vm4313 = vweird.f32 %v4246
  %vm4314 = vweird.f32 %v4307
  %vm4315 = vmor %vm4313, %vm4314
  %v4316 = vsel %vm4315, %v4307, %v4312
  %v4317 = vrsqrt.pop %v4247
  %v4318 = vmul.f32 %v4317, %v4247
  %v4319 = vmul.f32 %v4318, %v4317
  %v4320 = vmul.f32 0.5, %v4319
  %v4321 = vsub.f32 1.5, %v4320
  %v4322 = vmul.f32 %v4317, %v4321
  %vm4323 = vweird.f32 %v4247
  %vm4324 = vweird.f32 %v4317
  %vm4325 = vmor %vm4323, %vm4324
  %v4326 = vsel %vm4325, %v4317, %v4322
  %v4327 = vrsqrt.pop %v4248
  %v4328 = vmul.f32 %v4327, %v4248
  %v4329 = vmul.f32 %v4328, %v4327
  %v4330 = vmul.f32 0.5, %v4329
  %v4331 = vsub.f32 1.5, %v4330
  %v4332 = vmul.f32 %v4327, %v4331
  %vm4333 = vweird.f32 %v4248
  %vm4334 = vweird.f32 %v4327
  %vm4335 = vmor %vm4333, %vm4334
  %v4336 = vsel %vm4335, %v4327, %v4332
  %v4337 = vrsqrt.pop %v4249
  %v4338 = vmul.f32 %v4337, %v4249
  %v4339 = vmul.f32 %v4338, %v4337
  %v4340 = vmul.f32 0.5, %v4339
  %v4341 = vsub.f32 1.5, %v4340
  %v4342 = vmul.f32 %v4337, %v4341
  %vm4343 = vweird.f32 %v4249
  %vm4344 = vweird.f32 %v4337
  %vm4345 = vmor %vm4343, %vm4344
  %v4346 = vsel %vm4345, %v4337, %v4342
  %v4347 = vrsqrt.pop %v4250
  %v4348 = vmul.f32 %v4347, %v4250
  %v4349 = vmul.f32 %v4348, %v4347
  %v4350 = vmul.f32 0.5, %v4349
  %v4351 = vsub.f32 1.5, %v4350
  %v4352 = vmul.f32 %v4347, %v4351
  %vm4353 = vweird.f32 %v4250
  %vm4354 = vweird.f32 %v4347
  %vm4355 = vmor %vm4353, %vm4354
  %v4356 = vsel %vm4355, %v4347, %v4352
  %v4357 = vrsqrt.pop %v4251
  %v4358 = vmul.f32 %v4357, %v4251
  %v4359 = vmul.f32 %v4358, %v4357
  %v4360 = vmul.f32 0.5, %v4359
  %v4361 = vsub.f32 1.5, %v4360
  %v4362 = vmul.f32 %v4357, %v4361
  %vm4363 = vweird.f32 %v4251
  %vm4364 = vweird.f32 %v4357
  %vm4365 = vmor %vm4363, %vm4364
  %v4366 = vsel %vm4365, %v4357, %v4362
  %v4367 = vrsqrt.pop %v4252
  %v4368 = vmul.f32 %v4367, %v4252
  %v4369 = vmul.f32 %v4368, %v4367
  %v4370 = vmul.f32 0.5, %v4369
  %v4371 = vsub.f32 1.5, %v4370
  %v4372 = vmul.f32 %v4367, %v4371
  %vm4373 = vweird.f32 %v4252
  %vm4374 = vweird.f32 %v4367
  %vm4375 = vmor %vm4373, %vm4374
  %v4376 = vsel %vm4375, %v4367, %v4372
  %v4377 = vrsqrt.pop %v4253
  %v4378 = vmul.f32 %v4377, %v4253
  %v4379 = vmul.f32 %v4378, %v4377
  %v4380 = vmul.f32 0.5, %v4379
  %v4381 = vsub.f32 1.5, %v4380
  %v4382 = vmul.f32 %v4377, %v4381
  %vm4383 = vweird.f32 %v4253
  %vm4384 = vweird.f32 %v4377
  %vm4385 = vmor %vm4383, %vm4384
  %v4386 = vsel %vm4385, %v4377, %v4382
  %v4387 = vrsqrt.pop %v4254
  %v4388 = vmul.f32 %v4387, %v4254
  %v4389 = vmul.f32 %v4388, %v4387
  %v4390 = vmul.f32 0.5, %v4389
  %v4391 = vsub.f32 1.5, %v4390
  %v4392 = vmul.f32 %v4387, %v4391
  %vm4393 = vweird.f32 %v4254
  %vm4394 = vweird.f32 %v4387
  %vm4395 = vmor %vm4393, %vm4394
  %v4396 = vsel %vm4395, %v4387, %v4392
  %v4397 = vrsqrt.pop %v4255
  %v4398 = vmul.f32 %v4397, %v4255
  %v4399 = vmul.f32 %v4398, %v4397
  %v4400 = vmul.f32 0.5, %v4399
  %v4401 = vsub.f32 1.5, %v4400
  %v4402 = vmul.f32 %v4397, %v4401
  %vm4403 = vweird.f32 %v4255
  %vm4404 = vweird.f32 %v4397
  %vm4405 = vmor %vm4403, %vm4404
  %v4406 = vsel %vm4405, %v4397, %v4402
  %v4407 = vrsqrt.pop %v4256
  %v4408 = vmul.f32 %v4407, %v4256
  %v4409 = vmul.f32 %v4408, %v4407
  %v4410 = vmul.f32 0.5, %v4409
  %v4411 = vsub.f32 1.5, %v4410
  %v4412 = vmul.f32 %v4407, %v4411
  %vm4413 = vweird.f32 %v4256
  %vm4414 = vweird.f32 %v4407
  %vm4415 = vmor %vm4413, %vm4414
  %v4416 = vsel %vm4415, %v4407, %v4412
  %v4417 = vmul.f32 %v4145, %v4266
  %v4418 = vmul.f32 %v4146, %v4276
  %v4419 = vmul.f32 %v4147, %v4286
  %v4420 = vmul.f32 %v4148, %v4296
  %v4421 = vmul.f32 %v4149, %v4306
  %v4422 = vmul.f32 %v4150, %v4316
  %v4423 = vmul.f32 %v4151, %v4326
  %v4424 = vmul.f32 %v4152, %v4336
  %v4425 = vmul.f32 %v4153, %v4346
  %v4426 = vmul.f32 %v4154, %v4356
  %v4427 = vmul.f32 %v4155, %v4366
  %v4428 = vmul.f32 %v4156, %v4376
  %v4429 = vmul.f32 %v4157, %v4386
  %v4430 = vmul.f32 %v4158, %v4396
  %v4431 = vmul.f32 %v4159, %v4406
  %v4432 = vmul.f32 %v4160, %v4416
  %v4433 = vadd.f32 %v4080, %v439
  %v4434 = vadd.f32 %v4080, %v910
  %v4435 = vadd.f32 %v4434, 1.0
  %v4436 = vperm.slane %v4435, 1
  %v4437 = vmul.f32 %v4417, %v4436
  %v4438 = vmul.f32 %v4418, %v4436
  %v4439 = vmul.f32 %v4419, %v4436
  %v4440 = vmul.f32 %v4420, %v4436
  %v4441 = vmul.f32 %v4421, %v4436
  %v4442 = vmul.f32 %v4422, %v4436
  %v4443 = vmul.f32 %v4423, %v4436
  %v4444 = vmul.f32 %v4424, %v4436
  %v4445 = vperm.slane %v4433, 0
  %v4446 = vadd.f32 %v4437, %v4445
  %v4447 = vadd.f32 %v4438, %v4445
  %v4448 = vadd.f32 %v4439, %v4445
  %v4449 = vadd.f32 %v4440, %v4445
  %v4450 = vadd.f32 %v4441, %v4445
  %v4451 = vadd.f32 %v4442, %v4445
  %v4452 = vadd.f32 %v4443, %v4445
  %v4453 = vadd.f32 %v4444, %v4445
  %v4454 = vadd.f32 %v4080, %v932
  %v4455 = vadd.f32 %v4080, %v936
  %v4456 = vadd.f32 %v4455, 1.0
  %v4457 = vperm.slane %v4456, 1
  %v4458 = vmul.f32 %v4425, %v4457
  %v4459 = vmul.f32 %v4426, %v4457
  %v4460 = vmul.f32 %v4427, %v4457
  %v4461 = vmul.f32 %v4428, %v4457
  %v4462 = vmul.f32 %v4429, %v4457
  %v4463 = vmul.f32 %v4430, %v4457
  %v4464 = vmul.f32 %v4431, %v4457
  %v4465 = vmul.f32 %v4432, %v4457
  %v4466 = vperm.slane %v4454, 0
  %v4467 = vadd.f32 %v4458, %v4466
  %v4468 = vadd.f32 %v4459, %v4466
  %v4469 = vadd.f32 %v4460, %v4466
  %v4470 = vadd.f32 %v4461, %v4466
  %v4471 = vadd.f32 %v4462, %v4466
  %v4472 = vadd.f32 %v4463, %v4466
  %v4473 = vadd.f32 %v4464, %v4466
  %v4474 = vadd.f32 %v4465, %v4466
  %v4475 = vld [vmem:[%s4 + $0x2d0] sm:$0xf]
  %v4476 = vld [vmem:[%s4 + $0x2d8] sm:$0xf]
  %v4477 = vld [vmem:[%s4 + $0x2e0] sm:$0xf]
  %v4478 = vld [vmem:[%s4 + $0x2e8] sm:$0xf]
  %v4479 = vpack.c.bf16 %v4447, %v4446
  %v4480 = vpack.c.bf16 %v4449, %v4448
  %v4481 = vpack.c.bf16 %v4451, %v4450
  %v4482 = vpack.c.bf16 %v4453, %v4452
  %v4483 = vpack.c.bf16 %v4468, %v4467
  %v4484 = vpack.c.bf16 %v4470, %v4469
  %v4485 = vpack.c.bf16 %v4472, %v4471
  %v4486 = vpack.c.bf16 %v4474, %v4473
  %v4487 = vld [vmem:[%s5 + $0x170] ss:$0 sm:$0xff]
  %v4492 = vunpack.c.l.b16 %v4475
  %v4493 = vunpack.c.l.b16 %v4476
  %v4494 = vunpack.c.l.b16 %v4477
  %v4495 = vunpack.c.l.b16 %v4478
  %v4496 = vpack.c.b16 %v4493, %v4492
  %v4497 = vpack.c.b16 %v4495, %v4494
  %v4501 = vsel %vm357, %v4479, 0
  %v4504 = vsel %vm357, %v4480, 0
  %v4507 = vsel %vm357, %v4481, 0
  %v4510 = vsel %vm357, %v4482, 0
  %v4513 = vsel %vm357, %v4483, 0
  %v4516 = vsel %vm357, %v4484, 0
  %v4519 = vsel %vm357, %v4485, 0
  %v4522 = vsel %vm357, %v4486, 0
  %4524 = vmatpush.bf16.msra.mxu0 0
  %4525 = vmatpush.bf16.msra.mxu0 0
  %4526 = vmatpush.bf16.msra.mxu0 0
  %4527 = vmatpush.bf16.msra.mxu0 0
  %4528 = vmatpush.bf16.msra.mxu0 0
  %4529 = vmatpush.bf16.msra.mxu0 0
  %4530 = vmatpush.bf16.msra.mxu0 %v4497
  %4531 = vmatpush.bf16.msra.mxu0 %v4496
  %4532 = vmatmul.bf16.gmra.mxu0 %v4501
  %v4533 = vpop.f32.mrf.mxu0
  %v4534 = vadd.f32 %v4487, %v4533
  %v4535 = vpop.f32.mrf.mxu0
  %v4536 = vadd.f32 %v4487, %v4535
  %4537 = vmatmul.bf16.gmra.mxu0 %v4504
  %v4538 = vpop.f32.mrf.mxu0
  %v4539 = vadd.f32 %v4487, %v4538
  %v4540 = vpop.f32.mrf.mxu0
  %v4541 = vadd.f32 %v4487, %v4540
  %4542 = vmatmul.bf16.gmra.mxu0 %v4507
  %v4543 = vpop.f32.mrf.mxu0
  %v4544 = vadd.f32 %v4487, %v4543
  %v4545 = vpop.f32.mrf.mxu0
  %v4546 = vadd.f32 %v4487, %v4545
  %4547 = vmatmul.bf16.gmra.mxu0 %v4510
  %v4548 = vpop.f32.mrf.mxu0
  %v4549 = vadd.f32 %v4487, %v4548
  %v4550 = vpop.f32.mrf.mxu0
  %v4551 = vadd.f32 %v4487, %v4550
  %4552 = vmatmul.bf16.gmra.mxu0 %v4513
  %v4553 = vpop.f32.mrf.mxu0
  %v4554 = vadd.f32 %v4487, %v4553
  %v4555 = vpop.f32.mrf.mxu0
  %v4556 = vadd.f32 %v4487, %v4555
  %4557 = vmatmul.bf16.gmra.mxu0 %v4516
  %v4558 = vpop.f32.mrf.mxu0
  %v4559 = vadd.f32 %v4487, %v4558
  %v4560 = vpop.f32.mrf.mxu0
  %v4561 = vadd.f32 %v4487, %v4560
  %4562 = vmatmul.bf16.gmra.mxu0 %v4519
  %v4563 = vpop.f32.mrf.mxu0
  %v4564 = vadd.f32 %v4487, %v4563
  %v4565 = vpop.f32.mrf.mxu0
  %v4566 = vadd.f32 %v4487, %v4565
  %4567 = vmatmul.bf16.gmra.mxu0 %v4522
  %v4568 = vpop.f32.mrf.mxu0
  %v4569 = vadd.f32 %v4487, %v4568
  %v4570 = vpop.f32.mrf.mxu0
  %v4571 = vadd.f32 %v4487, %v4570
  %4572 = vdwg.mxu0
  %v4573 = vld [vmem:[%s4 + $0x2f0] sm:$0xf]
  %v4574 = vld [vmem:[%s4 + $0x2f8] sm:$0xf]
  %v4575 = vld [vmem:[%s4 + $0x300] sm:$0xf]
  %v4576 = vld [vmem:[%s4 + $0x308] sm:$0xf]
  %v4577 = vpack.c.bf16 %v4536, %v4534
  %v4578 = vpack.c.bf16 %v4541, %v4539
  %v4579 = vpack.c.bf16 %v4546, %v4544
  %v4580 = vpack.c.bf16 %v4551, %v4549
  %4585 = vrot.lane.b32.xlu0 %v4577, 96
  %v4586 = vpop.permute.xlu0 %4585
  %4587 = vrot.lane.b32.xlu0 %v4578, 96
  %v4588 = vpop.permute.xlu0 %4587
  %4589 = vrot.lane.b32.xlu0 %v4579, 96
  %v4590 = vpop.permute.xlu0 %4589
  %4591 = vrot.lane.b32.xlu0 %v4580, 96
  %v4592 = vpop.permute.xlu0 %4591
  %v4594 = vsel %vm65, %v4577, 0
  %v4597 = vsel %vm65, %v4578, 0
  %v4600 = vsel %vm65, %v4579, 0
  %v4603 = vsel %vm65, %v4580, 0
  %v4606 = vsel %vm65, %v4586, 0
  %v4609 = vsel %vm65, %v4588, 0
  %v4612 = vsel %vm65, %v4590, 0
  %v4615 = vsel %vm65, %v4592, 0
  %4617 = vmatpush.bf16.xpose.msra.mxu0 0
  %4618 = vmatpush.bf16.xpose.msra.mxu0 0
  %4619 = vmatpush.bf16.xpose.msra.mxu0 0
  %4620 = vmatpush.bf16.xpose.msra.mxu0 0
  %4621 = vmatpush.bf16.xpose.msra.mxu0 %v4615
  %4622 = vmatpush.bf16.xpose.msra.mxu0 %v4612
  %4623 = vmatpush.bf16.xpose.msra.mxu0 %v4609
  %4624 = vmatpush.bf16.xpose.msra.mxu0 %v4606
  %4625 = vmatmul.bf16.gmra.mxu0 %v4594
  %v4626 = vpop.f32.mrf.mxu0
  %v4627 = vadd.f32 0.0, %v4626
  %v4628 = vpop.f32.mrf.mxu0
  %v4629 = vadd.f32 0.0, %v4628
  %4630 = vmatmul.bf16.gmra.mxu0 %v4597
  %v4631 = vpop.f32.mrf.mxu0
  %v4632 = vadd.f32 0.0, %v4631
  %v4633 = vpop.f32.mrf.mxu0
  %v4634 = vadd.f32 0.0, %v4633
  %4635 = vmatmul.bf16.gmra.mxu0 %v4600
  %v4636 = vpop.f32.mrf.mxu0
  %v4637 = vadd.f32 0.0, %v4636
  %v4638 = vpop.f32.mrf.mxu0
  %v4639 = vadd.f32 0.0, %v4638
  %4640 = vmatmul.bf16.gmra.mxu0 %v4603
  %v4641 = vpop.f32.mrf.mxu0
  %v4642 = vadd.f32 0.0, %v4641
  %v4643 = vpop.f32.mrf.mxu0
  %v4644 = vadd.f32 0.0, %v4643
  %4645 = vdwg.mxu0
  %v4646 = vsel %vm1129, %v4627, -inf
  %4647 = vmax.xlane.f32.xlu0 %v4646
  %v4648 = vpop.xlane.xlu0 %4647
  %v4649 = vsel %vm1129, %v4629, -inf
  %4650 = vmax.xlane.f32.xlu0 %v4649
  %v4651 = vpop.xlane.xlu0 %4650
  %v4652 = vsel %vm1129, %v4632, -inf
  %4653 = vmax.xlane.f32.xlu0 %v4652
  %v4654 = vpop.xlane.xlu0 %4653
  %v4655 = vsel %vm1129, %v4634, -inf
  %4656 = vmax.xlane.f32.xlu0 %v4655
  %v4657 = vpop.xlane.xlu0 %4656
  %v4658 = vsel %vm1129, %v4637, -inf
  %4659 = vmax.xlane.f32.xlu0 %v4658
  %v4660 = vpop.xlane.xlu0 %4659
  %v4661 = vsel %vm1129, %v4639, -inf
  %4662 = vmax.xlane.f32.xlu0 %v4661
  %v4663 = vpop.xlane.xlu0 %4662
  %v4664 = vsel %vm1129, %v4642, -inf
  %4665 = vmax.xlane.f32.xlu0 %v4664
  %v4666 = vpop.xlane.xlu0 %4665
  %v4667 = vsel %vm1129, %v4644, -inf
  %4668 = vmax.xlane.f32.xlu0 %v4667
  %v4669 = vpop.xlane.xlu0 %4668
  %v4670 = vsub.f32 %v4627, %v4648
  %v4671 = vsub.f32 %v4629, %v4651
  %v4672 = vsub.f32 %v4632, %v4654
  %v4673 = vsub.f32 %v4634, %v4657
  %v4674 = vsub.f32 %v4637, %v4660
  %v4675 = vsub.f32 %v4639, %v4663
  %v4676 = vsub.f32 %v4642, %v4666
  %v4677 = vsub.f32 %v4644, %v4669
  %v4678 = vmul.f32 %v4670, 1.442695
  %v4679 = vpow.pop %v4678
  %v4680 = vmul.f32 %v4671, 1.442695
  %v4681 = vpow.pop %v4680
  %v4682 = vmul.f32 %v4672, 1.442695
  %v4683 = vpow.pop %v4682
  %v4684 = vmul.f32 %v4673, 1.442695
  %v4685 = vpow.pop %v4684
  %v4686 = vmul.f32 %v4674, 1.442695
  %v4687 = vpow.pop %v4686
  %v4688 = vmul.f32 %v4675, 1.442695
  %v4689 = vpow.pop %v4688
  %v4690 = vmul.f32 %v4676, 1.442695
  %v4691 = vpow.pop %v4690
  %v4692 = vmul.f32 %v4677, 1.442695
  %v4693 = vpow.pop %v4692
  %v4694 = vsel %vm1129, %v4679, 0.0
  %4695 = vadd.xlane.f32.xlu0 %v4694
  %v4696 = vpop.xlane.xlu0 %4695
  %v4697 = vsel %vm1129, %v4681, 0.0
  %4698 = vadd.xlane.f32.xlu0 %v4697
  %v4699 = vpop.xlane.xlu0 %4698
  %v4700 = vsel %vm1129, %v4683, 0.0
  %4701 = vadd.xlane.f32.xlu0 %v4700
  %v4702 = vpop.xlane.xlu0 %4701
  %v4703 = vsel %vm1129, %v4685, 0.0
  %4704 = vadd.xlane.f32.xlu0 %v4703
  %v4705 = vpop.xlane.xlu0 %4704
  %v4706 = vsel %vm1129, %v4687, 0.0
  %4707 = vadd.xlane.f32.xlu0 %v4706
  %v4708 = vpop.xlane.xlu0 %4707
  %v4709 = vsel %vm1129, %v4689, 0.0
  %4710 = vadd.xlane.f32.xlu0 %v4709
  %v4711 = vpop.xlane.xlu0 %4710
  %v4712 = vsel %vm1129, %v4691, 0.0
  %4713 = vadd.xlane.f32.xlu0 %v4712
  %v4714 = vpop.xlane.xlu0 %4713
  %v4715 = vsel %vm1129, %v4693, 0.0
  %4716 = vadd.xlane.f32.xlu0 %v4715
  %v4717 = vpop.xlane.xlu0 %4716
  %v4718 = vpack.c.bf16 %v4681, %v4679
  %v4719 = vpack.c.bf16 %v4685, %v4683
  %v4720 = vpack.c.bf16 %v4689, %v4687
  %v4721 = vpack.c.bf16 %v4693, %v4691
  %4722 = vrot.lane.b32.xlu0 %v4577, 64
  %v4723 = vpop.permute.xlu0 %4722
  %4724 = vrot.lane.b32.xlu0 %v4578, 64
  %v4725 = vpop.permute.xlu0 %4724
  %4726 = vrot.lane.b32.xlu0 %v4579, 64
  %v4727 = vpop.permute.xlu0 %4726
  %4728 = vrot.lane.b32.xlu0 %v4580, 64
  %v4729 = vpop.permute.xlu0 %4728
  %v4735 = vsel %vm1129, %v4718, 0
  %v4738 = vsel %vm1129, %v4719, 0
  %v4741 = vsel %vm1129, %v4720, 0
  %v4744 = vsel %vm1129, %v4721, 0
  %4746 = vmatpush.bf16.msra.mxu0 0
  %4747 = vmatpush.bf16.msra.mxu0 0
  %4748 = vmatpush.bf16.msra.mxu0 0
  %4749 = vmatpush.bf16.msra.mxu0 0
  %4750 = vmatpush.bf16.msra.mxu0 %v4729
  %4751 = vmatpush.bf16.msra.mxu0 %v4727
  %4752 = vmatpush.bf16.msra.mxu0 %v4725
  %4753 = vmatpush.bf16.msra.mxu0 %v4723
  %4754 = vmatmul.bf16.gmra.mxu0 %v4735
  %v4755 = vpop.f32.mrf.mxu0
  %v4756 = vadd.f32 0.0, %v4755
  %v4757 = vpop.f32.mrf.mxu0
  %v4758 = vadd.f32 0.0, %v4757
  %4759 = vmatmul.bf16.gmra.mxu0 %v4738
  %v4760 = vpop.f32.mrf.mxu0
  %v4761 = vadd.f32 0.0, %v4760
  %v4762 = vpop.f32.mrf.mxu0
  %v4763 = vadd.f32 0.0, %v4762
  %4764 = vmatmul.bf16.gmra.mxu0 %v4741
  %v4765 = vpop.f32.mrf.mxu0
  %v4766 = vadd.f32 0.0, %v4765
  %v4767 = vpop.f32.mrf.mxu0
  %v4768 = vadd.f32 0.0, %v4767
  %4769 = vmatmul.bf16.gmra.mxu0 %v4744
  %v4770 = vpop.f32.mrf.mxu0
  %v4771 = vadd.f32 0.0, %v4770
  %v4772 = vpop.f32.mrf.mxu0
  %v4773 = vadd.f32 0.0, %v4772
  %4774 = vdwg.mxu0
  %v4775 = vrcp.pop %v4696
  %v4776 = vrcp.pop %v4699
  %v4777 = vrcp.pop %v4702
  %v4778 = vrcp.pop %v4705
  %v4779 = vrcp.pop %v4708
  %v4780 = vrcp.pop %v4711
  %v4781 = vrcp.pop %v4714
  %v4782 = vrcp.pop %v4717
  %v4783 = vmul.f32 %v4756, %v4775
  %v4784 = vmul.f32 %v4758, %v4776
  %v4785 = vmul.f32 %v4761, %v4777
  %v4786 = vmul.f32 %v4763, %v4778
  %v4787 = vmul.f32 %v4766, %v4779
  %v4788 = vmul.f32 %v4768, %v4780
  %v4789 = vmul.f32 %v4771, %v4781
  %v4790 = vmul.f32 %v4773, %v4782
  %v4791 = vpack.c.bf16 %v4556, %v4554
  %v4792 = vpack.c.bf16 %v4561, %v4559
  %v4793 = vpack.c.bf16 %v4566, %v4564
  %v4794 = vpack.c.bf16 %v4571, %v4569
  %4799 = vrot.lane.b32.xlu0 %v4791, 96
  %v4800 = vpop.permute.xlu0 %4799
  %4801 = vrot.lane.b32.xlu0 %v4792, 96
  %v4802 = vpop.permute.xlu0 %4801
  %4803 = vrot.lane.b32.xlu0 %v4793, 96
  %v4804 = vpop.permute.xlu0 %4803
  %4805 = vrot.lane.b32.xlu0 %v4794, 96
  %v4806 = vpop.permute.xlu0 %4805
  %v4808 = vsel %vm65, %v4791, 0
  %v4811 = vsel %vm65, %v4792, 0
  %v4814 = vsel %vm65, %v4793, 0
  %v4817 = vsel %vm65, %v4794, 0
  %v4820 = vsel %vm65, %v4800, 0
  %v4823 = vsel %vm65, %v4802, 0
  %v4826 = vsel %vm65, %v4804, 0
  %v4829 = vsel %vm65, %v4806, 0
  %4831 = vmatpush.bf16.xpose.msra.mxu0 0
  %4832 = vmatpush.bf16.xpose.msra.mxu0 0
  %4833 = vmatpush.bf16.xpose.msra.mxu0 0
  %4834 = vmatpush.bf16.xpose.msra.mxu0 0
  %4835 = vmatpush.bf16.xpose.msra.mxu0 %v4829
  %4836 = vmatpush.bf16.xpose.msra.mxu0 %v4826
  %4837 = vmatpush.bf16.xpose.msra.mxu0 %v4823
  %4838 = vmatpush.bf16.xpose.msra.mxu0 %v4820
  %4839 = vmatmul.bf16.gmra.mxu0 %v4808
  %v4840 = vpop.f32.mrf.mxu0
  %v4841 = vadd.f32 0.0, %v4840
  %v4842 = vpop.f32.mrf.mxu0
  %v4843 = vadd.f32 0.0, %v4842
  %4844 = vmatmul.bf16.gmra.mxu0 %v4811
  %v4845 = vpop.f32.mrf.mxu0
  %v4846 = vadd.f32 0.0, %v4845
  %v4847 = vpop.f32.mrf.mxu0
  %v4848 = vadd.f32 0.0, %v4847
  %4849 = vmatmul.bf16.gmra.mxu0 %v4814
  %v4850 = vpop.f32.mrf.mxu0
  %v4851 = vadd.f32 0.0, %v4850
  %v4852 = vpop.f32.mrf.mxu0
  %v4853 = vadd.f32 0.0, %v4852
  %4854 = vmatmul.bf16.gmra.mxu0 %v4817
  %v4855 = vpop.f32.mrf.mxu0
  %v4856 = vadd.f32 0.0, %v4855
  %v4857 = vpop.f32.mrf.mxu0
  %v4858 = vadd.f32 0.0, %v4857
  %4859 = vdwg.mxu0
  %v4860 = vsel %vm1129, %v4841, -inf
  %4861 = vmax.xlane.f32.xlu0 %v4860
  %v4862 = vpop.xlane.xlu0 %4861
  %v4863 = vsel %vm1129, %v4843, -inf
  %4864 = vmax.xlane.f32.xlu0 %v4863
  %v4865 = vpop.xlane.xlu0 %4864
  %v4866 = vsel %vm1129, %v4846, -inf
  %4867 = vmax.xlane.f32.xlu0 %v4866
  %v4868 = vpop.xlane.xlu0 %4867
  %v4869 = vsel %vm1129, %v4848, -inf
  %4870 = vmax.xlane.f32.xlu0 %v4869
  %v4871 = vpop.xlane.xlu0 %4870
  %v4872 = vsel %vm1129, %v4851, -inf
  %4873 = vmax.xlane.f32.xlu0 %v4872
  %v4874 = vpop.xlane.xlu0 %4873
  %v4875 = vsel %vm1129, %v4853, -inf
  %4876 = vmax.xlane.f32.xlu0 %v4875
  %v4877 = vpop.xlane.xlu0 %4876
  %v4878 = vsel %vm1129, %v4856, -inf
  %4879 = vmax.xlane.f32.xlu0 %v4878
  %v4880 = vpop.xlane.xlu0 %4879
  %v4881 = vsel %vm1129, %v4858, -inf
  %4882 = vmax.xlane.f32.xlu0 %v4881
  %v4883 = vpop.xlane.xlu0 %4882
  %v4884 = vsub.f32 %v4841, %v4862
  %v4885 = vsub.f32 %v4843, %v4865
  %v4886 = vsub.f32 %v4846, %v4868
  %v4887 = vsub.f32 %v4848, %v4871
  %v4888 = vsub.f32 %v4851, %v4874
  %v4889 = vsub.f32 %v4853, %v4877
  %v4890 = vsub.f32 %v4856, %v4880
  %v4891 = vsub.f32 %v4858, %v4883
  %v4892 = vmul.f32 %v4884, 1.442695
  %v4893 = vpow.pop %v4892
  %v4894 = vmul.f32 %v4885, 1.442695
  %v4895 = vpow.pop %v4894
  %v4896 = vmul.f32 %v4886, 1.442695
  %v4897 = vpow.pop %v4896
  %v4898 = vmul.f32 %v4887, 1.442695
  %v4899 = vpow.pop %v4898
  %v4900 = vmul.f32 %v4888, 1.442695
  %v4901 = vpow.pop %v4900
  %v4902 = vmul.f32 %v4889, 1.442695
  %v4903 = vpow.pop %v4902
  %v4904 = vmul.f32 %v4890, 1.442695
  %v4905 = vpow.pop %v4904
  %v4906 = vmul.f32 %v4891, 1.442695
  %v4907 = vpow.pop %v4906
  %v4908 = vsel %vm1129, %v4893, 0.0
  %4909 = vadd.xlane.f32.xlu0 %v4908
  %v4910 = vpop.xlane.xlu0 %4909
  %v4911 = vsel %vm1129, %v4895, 0.0
  %4912 = vadd.xlane.f32.xlu0 %v4911
  %v4913 = vpop.xlane.xlu0 %4912
  %v4914 = vsel %vm1129, %v4897, 0.0
  %4915 = vadd.xlane.f32.xlu0 %v4914
  %v4916 = vpop.xlane.xlu0 %4915
  %v4917 = vsel %vm1129, %v4899, 0.0
  %4918 = vadd.xlane.f32.xlu0 %v4917
  %v4919 = vpop.xlane.xlu0 %4918
  %v4920 = vsel %vm1129, %v4901, 0.0
  %4921 = vadd.xlane.f32.xlu0 %v4920
  %v4922 = vpop.xlane.xlu0 %4921
  %v4923 = vsel %vm1129, %v4903, 0.0
  %4924 = vadd.xlane.f32.xlu0 %v4923
  %v4925 = vpop.xlane.xlu0 %4924
  %v4926 = vsel %vm1129, %v4905, 0.0
  %4927 = vadd.xlane.f32.xlu0 %v4926
  %v4928 = vpop.xlane.xlu0 %4927
  %v4929 = vsel %vm1129, %v4907, 0.0
  %4930 = vadd.xlane.f32.xlu0 %v4929
  %v4931 = vpop.xlane.xlu0 %4930
  %v4932 = vpack.c.bf16 %v4895, %v4893
  %v4933 = vpack.c.bf16 %v4899, %v4897
  %v4934 = vpack.c.bf16 %v4903, %v4901
  %v4935 = vpack.c.bf16 %v4907, %v4905
  %4936 = vrot.lane.b32.xlu0 %v4791, 64
  %v4937 = vpop.permute.xlu0 %4936
  %4938 = vrot.lane.b32.xlu0 %v4792, 64
  %v4939 = vpop.permute.xlu0 %4938
  %4940 = vrot.lane.b32.xlu0 %v4793, 64
  %v4941 = vpop.permute.xlu0 %4940
  %4942 = vrot.lane.b32.xlu0 %v4794, 64
  %v4943 = vpop.permute.xlu0 %4942
  %v4949 = vsel %vm1129, %v4932, 0
  %v4952 = vsel %vm1129, %v4933, 0
  %v4955 = vsel %vm1129, %v4934, 0
  %v4958 = vsel %vm1129, %v4935, 0
  %4960 = vmatpush.bf16.msra.mxu0 0
  %4961 = vmatpush.bf16.msra.mxu0 0
  %4962 = vmatpush.bf16.msra.mxu0 0
  %4963 = vmatpush.bf16.msra.mxu0 0
  %4964 = vmatpush.bf16.msra.mxu0 %v4943
  %4965 = vmatpush.bf16.msra.mxu0 %v4941
  %4966 = vmatpush.bf16.msra.mxu0 %v4939
  %4967 = vmatpush.bf16.msra.mxu0 %v4937
  %4968 = vmatmul.bf16.gmra.mxu0 %v4949
  %v4969 = vpop.f32.mrf.mxu0
  %v4970 = vadd.f32 0.0, %v4969
  %v4971 = vpop.f32.mrf.mxu0
  %v4972 = vadd.f32 0.0, %v4971
  %4973 = vmatmul.bf16.gmra.mxu0 %v4952
  %v4974 = vpop.f32.mrf.mxu0
  %v4975 = vadd.f32 0.0, %v4974
  %v4976 = vpop.f32.mrf.mxu0
  %v4977 = vadd.f32 0.0, %v4976
  %4978 = vmatmul.bf16.gmra.mxu0 %v4955
  %v4979 = vpop.f32.mrf.mxu0
  %v4980 = vadd.f32 0.0, %v4979
  %v4981 = vpop.f32.mrf.mxu0
  %v4982 = vadd.f32 0.0, %v4981
  %4983 = vmatmul.bf16.gmra.mxu0 %v4958
  %v4984 = vpop.f32.mrf.mxu0
  %v4985 = vadd.f32 0.0, %v4984
  %v4986 = vpop.f32.mrf.mxu0
  %v4987 = vadd.f32 0.0, %v4986
  %4988 = vdwg.mxu0
  %v4989 = vrcp.pop %v4910
  %v4990 = vrcp.pop %v4913
  %v4991 = vrcp.pop %v4916
  %v4992 = vrcp.pop %v4919
  %v4993 = vrcp.pop %v4922
  %v4994 = vrcp.pop %v4925
  %v4995 = vrcp.pop %v4928
  %v4996 = vrcp.pop %v4931
  %v4997 = vmul.f32 %v4970, %v4989
  %v4998 = vmul.f32 %v4972, %v4990
  %v4999 = vmul.f32 %v4975, %v4991
  %v5000 = vmul.f32 %v4977, %v4992
  %v5001 = vmul.f32 %v4980, %v4993
  %v5002 = vmul.f32 %v4982, %v4994
  %v5003 = vmul.f32 %v4985, %v4995
  %v5004 = vmul.f32 %v4987, %v4996
  %v5005 = vpack.c.bf16 %v4784, %v4783
  %v5006 = vpack.c.bf16 %v4786, %v4785
  %v5007 = vpack.c.bf16 %v4788, %v4787
  %v5008 = vpack.c.bf16 %v4790, %v4789
  %v5009 = vpack.c.bf16 %v4998, %v4997
  %v5010 = vpack.c.bf16 %v5000, %v4999
  %v5011 = vpack.c.bf16 %v5002, %v5001
  %v5012 = vpack.c.bf16 %v5004, %v5003
  %5013 = vrot.lane.b32.xlu0 %v4577, 112
  %v5014 = vpop.permute.xlu0 %5013
  %5015 = vrot.lane.b32.xlu0 %v4578, 112
  %v5016 = vpop.permute.xlu0 %5015
  %5017 = vrot.lane.b32.xlu0 %v4579, 112
  %v5018 = vpop.permute.xlu0 %5017
  %5019 = vrot.lane.b32.xlu0 %v4580, 112
  %v5020 = vpop.permute.xlu0 %5019
  %5021 = vrot.lane.b32.xlu0 %v4577, 80
  %v5022 = vpop.permute.xlu0 %5021
  %5023 = vrot.lane.b32.xlu0 %v4578, 80
  %v5024 = vpop.permute.xlu0 %5023
  %5025 = vrot.lane.b32.xlu0 %v4579, 80
  %v5026 = vpop.permute.xlu0 %5025
  %5027 = vrot.lane.b32.xlu0 %v4580, 80
  %v5028 = vpop.permute.xlu0 %5027
  %v5030 = vsel %vm65, %v5014, 0
  %v5033 = vsel %vm65, %v5016, 0
  %v5036 = vsel %vm65, %v5018, 0
  %v5039 = vsel %vm65, %v5020, 0
  %v5042 = vsel %vm65, %v5022, 0
  %v5045 = vsel %vm65, %v5024, 0
  %v5048 = vsel %vm65, %v5026, 0
  %v5051 = vsel %vm65, %v5028, 0
  %5053 = vmatpush.bf16.xpose.msra.mxu0 0
  %5054 = vmatpush.bf16.xpose.msra.mxu0 0
  %5055 = vmatpush.bf16.xpose.msra.mxu0 0
  %5056 = vmatpush.bf16.xpose.msra.mxu0 0
  %5057 = vmatpush.bf16.xpose.msra.mxu0 %v5051
  %5058 = vmatpush.bf16.xpose.msra.mxu0 %v5048
  %5059 = vmatpush.bf16.xpose.msra.mxu0 %v5045
  %5060 = vmatpush.bf16.xpose.msra.mxu0 %v5042
  %5061 = vmatmul.bf16.gmra.mxu0 %v5030
  %v5062 = vpop.f32.mrf.mxu0
  %v5063 = vadd.f32 0.0, %v5062
  %v5064 = vpop.f32.mrf.mxu0
  %v5065 = vadd.f32 0.0, %v5064
  %5066 = vmatmul.bf16.gmra.mxu0 %v5033
  %v5067 = vpop.f32.mrf.mxu0
  %v5068 = vadd.f32 0.0, %v5067
  %v5069 = vpop.f32.mrf.mxu0
  %v5070 = vadd.f32 0.0, %v5069
  %5071 = vmatmul.bf16.gmra.mxu0 %v5036
  %v5072 = vpop.f32.mrf.mxu0
  %v5073 = vadd.f32 0.0, %v5072
  %v5074 = vpop.f32.mrf.mxu0
  %v5075 = vadd.f32 0.0, %v5074
  %5076 = vmatmul.bf16.gmra.mxu0 %v5039
  %v5077 = vpop.f32.mrf.mxu0
  %v5078 = vadd.f32 0.0, %v5077
  %v5079 = vpop.f32.mrf.mxu0
  %v5080 = vadd.f32 0.0, %v5079
  %5081 = vdwg.mxu0
  %v5082 = vsel %vm1129, %v5063, -inf
  %5083 = vmax.xlane.f32.xlu0 %v5082
  %v5084 = vpop.xlane.xlu0 %5083
  %v5085 = vsel %vm1129, %v5065, -inf
  %5086 = vmax.xlane.f32.xlu0 %v5085
  %v5087 = vpop.xlane.xlu0 %5086
  %v5088 = vsel %vm1129, %v5068, -inf
  %5089 = vmax.xlane.f32.xlu0 %v5088
  %v5090 = vpop.xlane.xlu0 %5089
  %v5091 = vsel %vm1129, %v5070, -inf
  %5092 = vmax.xlane.f32.xlu0 %v5091
  %v5093 = vpop.xlane.xlu0 %5092
  %v5094 = vsel %vm1129, %v5073, -inf
  %5095 = vmax.xlane.f32.xlu0 %v5094
  %v5096 = vpop.xlane.xlu0 %5095
  %v5097 = vsel %vm1129, %v5075, -inf
  %5098 = vmax.xlane.f32.xlu0 %v5097
  %v5099 = vpop.xlane.xlu0 %5098
  %v5100 = vsel %vm1129, %v5078, -inf
  %5101 = vmax.xlane.f32.xlu0 %v5100
  %v5102 = vpop.xlane.xlu0 %5101
  %v5103 = vsel %vm1129, %v5080, -inf
  %5104 = vmax.xlane.f32.xlu0 %v5103
  %v5105 = vpop.xlane.xlu0 %5104
  %v5106 = vsub.f32 %v5063, %v5084
  %v5107 = vsub.f32 %v5065, %v5087
  %v5108 = vsub.f32 %v5068, %v5090
  %v5109 = vsub.f32 %v5070, %v5093
  %v5110 = vsub.f32 %v5073, %v5096
  %v5111 = vsub.f32 %v5075, %v5099
  %v5112 = vsub.f32 %v5078, %v5102
  %v5113 = vsub.f32 %v5080, %v5105
  %v5114 = vmul.f32 %v5106, 1.442695
  %v5115 = vpow.pop %v5114
  %v5116 = vmul.f32 %v5107, 1.442695
  %v5117 = vpow.pop %v5116
  %v5118 = vmul.f32 %v5108, 1.442695
  %v5119 = vpow.pop %v5118
  %v5120 = vmul.f32 %v5109, 1.442695
  %v5121 = vpow.pop %v5120
  %v5122 = vmul.f32 %v5110, 1.442695
  %v5123 = vpow.pop %v5122
  %v5124 = vmul.f32 %v5111, 1.442695
  %v5125 = vpow.pop %v5124
  %v5126 = vmul.f32 %v5112, 1.442695
  %v5127 = vpow.pop %v5126
  %v5128 = vmul.f32 %v5113, 1.442695
  %v5129 = vpow.pop %v5128
  %v5130 = vsel %vm1129, %v5115, 0.0
  %5131 = vadd.xlane.f32.xlu0 %v5130
  %v5132 = vpop.xlane.xlu0 %5131
  %v5133 = vsel %vm1129, %v5117, 0.0
  %5134 = vadd.xlane.f32.xlu0 %v5133
  %v5135 = vpop.xlane.xlu0 %5134
  %v5136 = vsel %vm1129, %v5119, 0.0
  %5137 = vadd.xlane.f32.xlu0 %v5136
  %v5138 = vpop.xlane.xlu0 %5137
  %v5139 = vsel %vm1129, %v5121, 0.0
  %5140 = vadd.xlane.f32.xlu0 %v5139
  %v5141 = vpop.xlane.xlu0 %5140
  %v5142 = vsel %vm1129, %v5123, 0.0
  %5143 = vadd.xlane.f32.xlu0 %v5142
  %v5144 = vpop.xlane.xlu0 %5143
  %v5145 = vsel %vm1129, %v5125, 0.0
  %5146 = vadd.xlane.f32.xlu0 %v5145
  %v5147 = vpop.xlane.xlu0 %5146
  %v5148 = vsel %vm1129, %v5127, 0.0
  %5149 = vadd.xlane.f32.xlu0 %v5148
  %v5150 = vpop.xlane.xlu0 %5149
  %v5151 = vsel %vm1129, %v5129, 0.0
  %5152 = vadd.xlane.f32.xlu0 %v5151
  %v5153 = vpop.xlane.xlu0 %5152
  %v5154 = vpack.c.bf16 %v5117, %v5115
  %v5155 = vpack.c.bf16 %v5121, %v5119
  %v5156 = vpack.c.bf16 %v5125, %v5123
  %v5157 = vpack.c.bf16 %v5129, %v5127
  %5158 = vrot.lane.b32.xlu0 %v4577, 48
  %v5159 = vpop.permute.xlu0 %5158
  %5160 = vrot.lane.b32.xlu0 %v4578, 48
  %v5161 = vpop.permute.xlu0 %5160
  %5162 = vrot.lane.b32.xlu0 %v4579, 48
  %v5163 = vpop.permute.xlu0 %5162
  %5164 = vrot.lane.b32.xlu0 %v4580, 48
  %v5165 = vpop.permute.xlu0 %5164
  %v5171 = vsel %vm1129, %v5154, 0
  %v5174 = vsel %vm1129, %v5155, 0
  %v5177 = vsel %vm1129, %v5156, 0
  %v5180 = vsel %vm1129, %v5157, 0
  %5182 = vmatpush.bf16.msra.mxu0 0
  %5183 = vmatpush.bf16.msra.mxu0 0
  %5184 = vmatpush.bf16.msra.mxu0 0
  %5185 = vmatpush.bf16.msra.mxu0 0
  %5186 = vmatpush.bf16.msra.mxu0 %v5165
  %5187 = vmatpush.bf16.msra.mxu0 %v5163
  %5188 = vmatpush.bf16.msra.mxu0 %v5161
  %5189 = vmatpush.bf16.msra.mxu0 %v5159
  %5190 = vmatmul.bf16.gmra.mxu0 %v5171
  %v5191 = vpop.f32.mrf.mxu0
  %v5192 = vadd.f32 0.0, %v5191
  %v5193 = vpop.f32.mrf.mxu0
  %v5194 = vadd.f32 0.0, %v5193
  %5195 = vmatmul.bf16.gmra.mxu0 %v5174
  %v5196 = vpop.f32.mrf.mxu0
  %v5197 = vadd.f32 0.0, %v5196
  %v5198 = vpop.f32.mrf.mxu0
  %v5199 = vadd.f32 0.0, %v5198
  %5200 = vmatmul.bf16.gmra.mxu0 %v5177
  %v5201 = vpop.f32.mrf.mxu0
  %v5202 = vadd.f32 0.0, %v5201
  %v5203 = vpop.f32.mrf.mxu0
  %v5204 = vadd.f32 0.0, %v5203
  %5205 = vmatmul.bf16.gmra.mxu0 %v5180
  %v5206 = vpop.f32.mrf.mxu0
  %v5207 = vadd.f32 0.0, %v5206
  %v5208 = vpop.f32.mrf.mxu0
  %v5209 = vadd.f32 0.0, %v5208
  %5210 = vdwg.mxu0
  %v5211 = vrcp.pop %v5132
  %v5212 = vrcp.pop %v5135
  %v5213 = vrcp.pop %v5138
  %v5214 = vrcp.pop %v5141
  %v5215 = vrcp.pop %v5144
  %v5216 = vrcp.pop %v5147
  %v5217 = vrcp.pop %v5150
  %v5218 = vrcp.pop %v5153
  %v5219 = vmul.f32 %v5192, %v5211
  %v5220 = vmul.f32 %v5194, %v5212
  %v5221 = vmul.f32 %v5197, %v5213
  %v5222 = vmul.f32 %v5199, %v5214
  %v5223 = vmul.f32 %v5202, %v5215
  %v5224 = vmul.f32 %v5204, %v5216
  %v5225 = vmul.f32 %v5207, %v5217
  %v5226 = vmul.f32 %v5209, %v5218
  %5227 = vrot.lane.b32.xlu0 %v4791, 112
  %v5228 = vpop.permute.xlu0 %5227
  %5229 = vrot.lane.b32.xlu0 %v4792, 112
  %v5230 = vpop.permute.xlu0 %5229
  %5231 = vrot.lane.b32.xlu0 %v4793, 112
  %v5232 = vpop.permute.xlu0 %5231
  %5233 = vrot.lane.b32.xlu0 %v4794, 112
  %v5234 = vpop.permute.xlu0 %5233
  %5235 = vrot.lane.b32.xlu0 %v4791, 80
  %v5236 = vpop.permute.xlu0 %5235
  %5237 = vrot.lane.b32.xlu0 %v4792, 80
  %v5238 = vpop.permute.xlu0 %5237
  %5239 = vrot.lane.b32.xlu0 %v4793, 80
  %v5240 = vpop.permute.xlu0 %5239
  %5241 = vrot.lane.b32.xlu0 %v4794, 80
  %v5242 = vpop.permute.xlu0 %5241
  %v5244 = vsel %vm65, %v5228, 0
  %v5247 = vsel %vm65, %v5230, 0
  %v5250 = vsel %vm65, %v5232, 0
  %v5253 = vsel %vm65, %v5234, 0
  %v5256 = vsel %vm65, %v5236, 0
  %v5259 = vsel %vm65, %v5238, 0
  %v5262 = vsel %vm65, %v5240, 0
  %v5265 = vsel %vm65, %v5242, 0
  %5267 = vmatpush.bf16.xpose.msra.mxu0 0
  %5268 = vmatpush.bf16.xpose.msra.mxu0 0
  %5269 = vmatpush.bf16.xpose.msra.mxu0 0
  %5270 = vmatpush.bf16.xpose.msra.mxu0 0
  %5271 = vmatpush.bf16.xpose.msra.mxu0 %v5265
  %5272 = vmatpush.bf16.xpose.msra.mxu0 %v5262
  %5273 = vmatpush.bf16.xpose.msra.mxu0 %v5259
  %5274 = vmatpush.bf16.xpose.msra.mxu0 %v5256
  %5275 = vmatmul.bf16.gmra.mxu0 %v5244
  %v5276 = vpop.f32.mrf.mxu0
  %v5277 = vadd.f32 0.0, %v5276
  %v5278 = vpop.f32.mrf.mxu0
  %v5279 = vadd.f32 0.0, %v5278
  %5280 = vmatmul.bf16.gmra.mxu0 %v5247
  %v5281 = vpop.f32.mrf.mxu0
  %v5282 = vadd.f32 0.0, %v5281
  %v5283 = vpop.f32.mrf.mxu0
  %v5284 = vadd.f32 0.0, %v5283
  %5285 = vmatmul.bf16.gmra.mxu0 %v5250
  %v5286 = vpop.f32.mrf.mxu0
  %v5287 = vadd.f32 0.0, %v5286
  %v5288 = vpop.f32.mrf.mxu0
  %v5289 = vadd.f32 0.0, %v5288
  %5290 = vmatmul.bf16.gmra.mxu0 %v5253
  %v5291 = vpop.f32.mrf.mxu0
  %v5292 = vadd.f32 0.0, %v5291
  %v5293 = vpop.f32.mrf.mxu0
  %v5294 = vadd.f32 0.0, %v5293
  %5295 = vdwg.mxu0
  %v5296 = vsel %vm1129, %v5277, -inf
  %5297 = vmax.xlane.f32.xlu0 %v5296
  %v5298 = vpop.xlane.xlu0 %5297
  %v5299 = vsel %vm1129, %v5279, -inf
  %5300 = vmax.xlane.f32.xlu0 %v5299
  %v5301 = vpop.xlane.xlu0 %5300
  %v5302 = vsel %vm1129, %v5282, -inf
  %5303 = vmax.xlane.f32.xlu0 %v5302
  %v5304 = vpop.xlane.xlu0 %5303
  %v5305 = vsel %vm1129, %v5284, -inf
  %5306 = vmax.xlane.f32.xlu0 %v5305
  %v5307 = vpop.xlane.xlu0 %5306
  %v5308 = vsel %vm1129, %v5287, -inf
  %5309 = vmax.xlane.f32.xlu0 %v5308
  %v5310 = vpop.xlane.xlu0 %5309
  %v5311 = vsel %vm1129, %v5289, -inf
  %5312 = vmax.xlane.f32.xlu0 %v5311
  %v5313 = vpop.xlane.xlu0 %5312
  %v5314 = vsel %vm1129, %v5292, -inf
  %5315 = vmax.xlane.f32.xlu0 %v5314
  %v5316 = vpop.xlane.xlu0 %5315
  %v5317 = vsel %vm1129, %v5294, -inf
  %5318 = vmax.xlane.f32.xlu0 %v5317
  %v5319 = vpop.xlane.xlu0 %5318
  %v5320 = vsub.f32 %v5277, %v5298
  %v5321 = vsub.f32 %v5279, %v5301
  %v5322 = vsub.f32 %v5282, %v5304
  %v5323 = vsub.f32 %v5284, %v5307
  %v5324 = vsub.f32 %v5287, %v5310
  %v5325 = vsub.f32 %v5289, %v5313
  %v5326 = vsub.f32 %v5292, %v5316
  %v5327 = vsub.f32 %v5294, %v5319
  %v5328 = vmul.f32 %v5320, 1.442695
  %v5329 = vpow.pop %v5328
  %v5330 = vmul.f32 %v5321, 1.442695
  %v5331 = vpow.pop %v5330
  %v5332 = vmul.f32 %v5322, 1.442695
  %v5333 = vpow.pop %v5332
  %v5334 = vmul.f32 %v5323, 1.442695
  %v5335 = vpow.pop %v5334
  %v5336 = vmul.f32 %v5324, 1.442695
  %v5337 = vpow.pop %v5336
  %v5338 = vmul.f32 %v5325, 1.442695
  %v5339 = vpow.pop %v5338
  %v5340 = vmul.f32 %v5326, 1.442695
  %v5341 = vpow.pop %v5340
  %v5342 = vmul.f32 %v5327, 1.442695
  %v5343 = vpow.pop %v5342
  %v5344 = vsel %vm1129, %v5329, 0.0
  %5345 = vadd.xlane.f32.xlu0 %v5344
  %v5346 = vpop.xlane.xlu0 %5345
  %v5347 = vsel %vm1129, %v5331, 0.0
  %5348 = vadd.xlane.f32.xlu0 %v5347
  %v5349 = vpop.xlane.xlu0 %5348
  %v5350 = vsel %vm1129, %v5333, 0.0
  %5351 = vadd.xlane.f32.xlu0 %v5350
  %v5352 = vpop.xlane.xlu0 %5351
  %v5353 = vsel %vm1129, %v5335, 0.0
  %5354 = vadd.xlane.f32.xlu0 %v5353
  %v5355 = vpop.xlane.xlu0 %5354
  %v5356 = vsel %vm1129, %v5337, 0.0
  %5357 = vadd.xlane.f32.xlu0 %v5356
  %v5358 = vpop.xlane.xlu0 %5357
  %v5359 = vsel %vm1129, %v5339, 0.0
  %5360 = vadd.xlane.f32.xlu0 %v5359
  %v5361 = vpop.xlane.xlu0 %5360
  %v5362 = vsel %vm1129, %v5341, 0.0
  %5363 = vadd.xlane.f32.xlu0 %v5362
  %v5364 = vpop.xlane.xlu0 %5363
  %v5365 = vsel %vm1129, %v5343, 0.0
  %5366 = vadd.xlane.f32.xlu0 %v5365
  %v5367 = vpop.xlane.xlu0 %5366
  %v5368 = vpack.c.bf16 %v5331, %v5329
  %v5369 = vpack.c.bf16 %v5335, %v5333
  %v5370 = vpack.c.bf16 %v5339, %v5337
  %v5371 = vpack.c.bf16 %v5343, %v5341
  %5372 = vrot.lane.b32.xlu0 %v4791, 48
  %v5373 = vpop.permute.xlu0 %5372
  %5374 = vrot.lane.b32.xlu0 %v4792, 48
  %v5375 = vpop.permute.xlu0 %5374
  %5376 = vrot.lane.b32.xlu0 %v4793, 48
  %v5377 = vpop.permute.xlu0 %5376
  %5378 = vrot.lane.b32.xlu0 %v4794, 48
  %v5379 = vpop.permute.xlu0 %5378
  %v5385 = vsel %vm1129, %v5368, 0
  %v5388 = vsel %vm1129, %v5369, 0
  %v5391 = vsel %vm1129, %v5370, 0
  %v5394 = vsel %vm1129, %v5371, 0
  %5396 = vmatpush.bf16.msra.mxu0 0
  %5397 = vmatpush.bf16.msra.mxu0 0
  %5398 = vmatpush.bf16.msra.mxu0 0
  %5399 = vmatpush.bf16.msra.mxu0 0
  %5400 = vmatpush.bf16.msra.mxu0 %v5379
  %5401 = vmatpush.bf16.msra.mxu0 %v5377
  %5402 = vmatpush.bf16.msra.mxu0 %v5375
  %5403 = vmatpush.bf16.msra.mxu0 %v5373
  %5404 = vmatmul.bf16.gmra.mxu0 %v5385
  %v5405 = vpop.f32.mrf.mxu0
  %v5406 = vadd.f32 0.0, %v5405
  %v5407 = vpop.f32.mrf.mxu0
  %v5408 = vadd.f32 0.0, %v5407
  %5409 = vmatmul.bf16.gmra.mxu0 %v5388
  %v5410 = vpop.f32.mrf.mxu0
  %v5411 = vadd.f32 0.0, %v5410
  %v5412 = vpop.f32.mrf.mxu0
  %v5413 = vadd.f32 0.0, %v5412
  %5414 = vmatmul.bf16.gmra.mxu0 %v5391
  %v5415 = vpop.f32.mrf.mxu0
  %v5416 = vadd.f32 0.0, %v5415
  %v5417 = vpop.f32.mrf.mxu0
  %v5418 = vadd.f32 0.0, %v5417
  %5419 = vmatmul.bf16.gmra.mxu0 %v5394
  %v5420 = vpop.f32.mrf.mxu0
  %v5421 = vadd.f32 0.0, %v5420
  %v5422 = vpop.f32.mrf.mxu0
  %v5423 = vadd.f32 0.0, %v5422
  %5424 = vdwg.mxu0
  %v5425 = vrcp.pop %v5346
  %v5426 = vrcp.pop %v5349
  %v5427 = vrcp.pop %v5352
  %v5428 = vrcp.pop %v5355
  %v5429 = vrcp.pop %v5358
  %v5430 = vrcp.pop %v5361
  %v5431 = vrcp.pop %v5364
  %v5432 = vrcp.pop %v5367
  %v5433 = vmul.f32 %v5406, %v5425
  %v5434 = vmul.f32 %v5408, %v5426
  %v5435 = vmul.f32 %v5411, %v5427
  %v5436 = vmul.f32 %v5413, %v5428
  %v5437 = vmul.f32 %v5416, %v5429
  %v5438 = vmul.f32 %v5418, %v5430
  %v5439 = vmul.f32 %v5421, %v5431
  %v5440 = vmul.f32 %v5423, %v5432
  %v5441 = vpack.c.bf16 %v5220, %v5219
  %v5442 = vpack.c.bf16 %v5222, %v5221
  %v5443 = vpack.c.bf16 %v5224, %v5223
  %v5444 = vpack.c.bf16 %v5226, %v5225
  %v5445 = vpack.c.bf16 %v5434, %v5433
  %v5446 = vpack.c.bf16 %v5436, %v5435
  %v5447 = vpack.c.bf16 %v5438, %v5437
  %v5448 = vpack.c.bf16 %v5440, %v5439
  %v5451 = vunpack.c.l.b16 %v4575
  %v5452 = vunpack.c.l.b16 %v4576
  %v5453 = vpack.c.b16 %v5452, %v5451
  %v5456 = vsel %vm65, %v5441, 0
  %v5459 = vsel %vm65, %v5442, 0
  %v5462 = vsel %vm65, %v5443, 0
  %v5465 = vsel %vm65, %v5444, 0
  %v5468 = vsel %vm65, %v5445, 0
  %v5471 = vsel %vm65, %v5446, 0
  %v5474 = vsel %vm65, %v5447, 0
  %v5477 = vsel %vm65, %v5448, 0
  %5479 = vmatpush.bf16.msra.mxu0 0
  %5480 = vmatpush.bf16.msra.mxu0 0
  %5481 = vmatpush.bf16.msra.mxu0 0
  %5482 = vmatpush.bf16.msra.mxu0 0
  %5483 = vmatpush.bf16.msra.mxu0 0
  %5484 = vmatpush.bf16.msra.mxu0 0
  %5485 = vmatpush.bf16.msra.mxu0 0
  %5486 = vmatpush.bf16.msra.mxu0 %v5453
  %5487 = vmatmul.bf16.gmra.mxu0 %v5456
  %v5488 = vpop.f32.mrf.mxu0
  %v5489 = vadd.f32 0.0, %v5488
  %v5490 = vpop.f32.mrf.mxu0
  %v5491 = vadd.f32 0.0, %v5490
  %5492 = vmatmul.bf16.gmra.mxu0 %v5459
  %v5493 = vpop.f32.mrf.mxu0
  %v5494 = vadd.f32 0.0, %v5493
  %v5495 = vpop.f32.mrf.mxu0
  %v5496 = vadd.f32 0.0, %v5495
  %5497 = vmatmul.bf16.gmra.mxu0 %v5462
  %v5498 = vpop.f32.mrf.mxu0
  %v5499 = vadd.f32 0.0, %v5498
  %v5500 = vpop.f32.mrf.mxu0
  %v5501 = vadd.f32 0.0, %v5500
  %5502 = vmatmul.bf16.gmra.mxu0 %v5465
  %v5503 = vpop.f32.mrf.mxu0
  %v5504 = vadd.f32 0.0, %v5503
  %v5505 = vpop.f32.mrf.mxu0
  %v5506 = vadd.f32 0.0, %v5505
  %5507 = vmatmul.bf16.gmra.mxu0 %v5468
  %v5508 = vpop.f32.mrf.mxu0
  %v5509 = vadd.f32 0.0, %v5508
  %v5510 = vpop.f32.mrf.mxu0
  %v5511 = vadd.f32 0.0, %v5510
  %5512 = vmatmul.bf16.gmra.mxu0 %v5471
  %v5513 = vpop.f32.mrf.mxu0
  %v5514 = vadd.f32 0.0, %v5513
  %v5515 = vpop.f32.mrf.mxu0
  %v5516 = vadd.f32 0.0, %v5515
  %5517 = vmatmul.bf16.gmra.mxu0 %v5474
  %v5518 = vpop.f32.mrf.mxu0
  %v5519 = vadd.f32 0.0, %v5518
  %v5520 = vpop.f32.mrf.mxu0
  %v5521 = vadd.f32 0.0, %v5520
  %5522 = vmatmul.bf16.gmra.mxu0 %v5477
  %v5523 = vpop.f32.mrf.mxu0
  %v5524 = vadd.f32 0.0, %v5523
  %v5525 = vpop.f32.mrf.mxu0
  %v5526 = vadd.f32 0.0, %v5525
  %5527 = vdwg.mxu0
  %v5530 = vunpack.c.l.b16 %v4573
  %v5531 = vunpack.c.l.b16 %v4574
  %v5532 = vpack.c.b16 %v5531, %v5530
  %v5535 = vsel %vm65, %v5005, 0
  %v5538 = vsel %vm65, %v5006, 0
  %v5541 = vsel %vm65, %v5007, 0
  %v5544 = vsel %vm65, %v5008, 0
  %v5547 = vsel %vm65, %v5009, 0
  %v5550 = vsel %vm65, %v5010, 0
  %v5553 = vsel %vm65, %v5011, 0
  %v5556 = vsel %vm65, %v5012, 0
  %5558 = vmatpush.bf16.msra.mxu0 0
  %5559 = vmatpush.bf16.msra.mxu0 0
  %5560 = vmatpush.bf16.msra.mxu0 0
  %5561 = vmatpush.bf16.msra.mxu0 0
  %5562 = vmatpush.bf16.msra.mxu0 0
  %5563 = vmatpush.bf16.msra.mxu0 0
  %5564 = vmatpush.bf16.msra.mxu0 0
  %5565 = vmatpush.bf16.msra.mxu0 %v5532
  %5566 = vmatmul.bf16.gmra.mxu0 %v5535
  %v5567 = vpop.f32.mrf.mxu0
  %v5568 = vadd.f32 %v5489, %v5567
  %v5569 = vpop.f32.mrf.mxu0
  %v5570 = vadd.f32 %v5491, %v5569
  %5571 = vmatmul.bf16.gmra.mxu0 %v5538
  %v5572 = vpop.f32.mrf.mxu0
  %v5573 = vadd.f32 %v5494, %v5572
  %v5574 = vpop.f32.mrf.mxu0
  %v5575 = vadd.f32 %v5496, %v5574
  %5576 = vmatmul.bf16.gmra.mxu0 %v5541
  %v5577 = vpop.f32.mrf.mxu0
  %v5578 = vadd.f32 %v5499, %v5577
  %v5579 = vpop.f32.mrf.mxu0
  %v5580 = vadd.f32 %v5501, %v5579
  %5581 = vmatmul.bf16.gmra.mxu0 %v5544
  %v5582 = vpop.f32.mrf.mxu0
  %v5583 = vadd.f32 %v5504, %v5582
  %v5584 = vpop.f32.mrf.mxu0
  %v5585 = vadd.f32 %v5506, %v5584
  %5586 = vmatmul.bf16.gmra.mxu0 %v5547
  %v5587 = vpop.f32.mrf.mxu0
  %v5588 = vadd.f32 %v5509, %v5587
  %v5589 = vpop.f32.mrf.mxu0
  %v5590 = vadd.f32 %v5511, %v5589
  %5591 = vmatmul.bf16.gmra.mxu0 %v5550
  %v5592 = vpop.f32.mrf.mxu0
  %v5593 = vadd.f32 %v5514, %v5592
  %v5594 = vpop.f32.mrf.mxu0
  %v5595 = vadd.f32 %v5516, %v5594
  %5596 = vmatmul.bf16.gmra.mxu0 %v5553
  %v5597 = vpop.f32.mrf.mxu0
  %v5598 = vadd.f32 %v5519, %v5597
  %v5599 = vpop.f32.mrf.mxu0
  %v5600 = vadd.f32 %v5521, %v5599
  %5601 = vmatmul.bf16.gmra.mxu0 %v5556
  %v5602 = vpop.f32.mrf.mxu0
  %v5603 = vadd.f32 %v5524, %v5602
  %v5604 = vpop.f32.mrf.mxu0
  %v5605 = vadd.f32 %v5526, %v5604
  %5606 = vdwg.mxu0
  %v5607 = vld [vmem:[%s5 + $0x180] ss:$0 sm:$0xff]
  %v5608 = vadd.f32 %v5568, %v5607
  %v5609 = vadd.f32 %v5570, %v5607
  %v5610 = vadd.f32 %v5573, %v5607
  %v5611 = vadd.f32 %v5575, %v5607
  %v5612 = vadd.f32 %v5578, %v5607
  %v5613 = vadd.f32 %v5580, %v5607
  %v5614 = vadd.f32 %v5583, %v5607
  %v5615 = vadd.f32 %v5585, %v5607
  %v5616 = vadd.f32 %v5588, %v5607
  %v5617 = vadd.f32 %v5590, %v5607
  %v5618 = vadd.f32 %v5593, %v5607
  %v5619 = vadd.f32 %v5595, %v5607
  %v5620 = vadd.f32 %v5598, %v5607
  %v5621 = vadd.f32 %v5600, %v5607
  %v5622 = vadd.f32 %v5603, %v5607
  %v5623 = vadd.f32 %v5605, %v5607
  %v5624 = vadd.f32 %v4080, %v2110
  %v5625 = vperm.slane %v5624, 2
  %v5626 = vmul.f32 %v5608, %v5625
  %v5627 = vmul.f32 %v5609, %v5625
  %v5628 = vmul.f32 %v5610, %v5625
  %v5629 = vmul.f32 %v5611, %v5625
  %v5630 = vmul.f32 %v5612, %v5625
  %v5631 = vmul.f32 %v5613, %v5625
  %v5632 = vmul.f32 %v5614, %v5625
  %v5633 = vmul.f32 %v5615, %v5625
  %v5634 = vadd.f32 %v4080, %v2123
  %v5635 = vperm.slane %v5634, 2
  %v5636 = vmul.f32 %v5616, %v5635
  %v5637 = vmul.f32 %v5617, %v5635
  %v5638 = vmul.f32 %v5618, %v5635
  %v5639 = vmul.f32 %v5619, %v5635
  %v5640 = vmul.f32 %v5620, %v5635
  %v5641 = vmul.f32 %v5621, %v5635
  %v5642 = vmul.f32 %v5622, %v5635
  %v5643 = vmul.f32 %v5623, %v5635
  %v5644 = vadd.f32 %v4064, %v5626
  %v5645 = vadd.f32 %v4065, %v5627
  %v5646 = vadd.f32 %v4066, %v5628
  %v5647 = vadd.f32 %v4067, %v5629
  %v5648 = vadd.f32 %v4068, %v5630
  %v5649 = vadd.f32 %v4069, %v5631
  %v5650 = vadd.f32 %v4070, %v5632
  %v5651 = vadd.f32 %v4071, %v5633
  %v5652 = vadd.f32 %v4072, %v5636
  %v5653 = vadd.f32 %v4073, %v5637
  %v5654 = vadd.f32 %v4074, %v5638
  %v5655 = vadd.f32 %v4075, %v5639
  %v5656 = vadd.f32 %v4076, %v5640
  %v5657 = vadd.f32 %v4077, %v5641
  %v5658 = vadd.f32 %v4078, %v5642
  %v5659 = vadd.f32 %v4079, %v5643
  %v5660 = vld [vmem:[%s4 + $0x310] sm:$0xf]
  %v5661 = vld [vmem:[%s4 + $0x318] sm:$0xf]
  %v5662 = vld [vmem:[%s4 + $0x320] sm:$0xf]
  %v5663 = vld [vmem:[%s4 + $0x328] sm:$0xf]
  %v5664 = vpack.c.bf16 %v5645, %v5644
  %v5665 = vpack.c.bf16 %v5647, %v5646
  %v5666 = vpack.c.bf16 %v5649, %v5648
  %v5667 = vpack.c.bf16 %v5651, %v5650
  %v5668 = vpack.c.bf16 %v5653, %v5652
  %v5669 = vpack.c.bf16 %v5655, %v5654
  %v5670 = vpack.c.bf16 %v5657, %v5656
  %v5671 = vpack.c.bf16 %v5659, %v5658
  %v5672 = vld [vmem:[%s5 + $0x190] ss:$0 sm:$0xff]
  %v5677 = vunpack.c.l.b16 %v5660
  %v5678 = vunpack.c.l.b16 %v5661
  %v5679 = vunpack.c.l.b16 %v5662
  %v5680 = vunpack.c.l.b16 %v5663
  %v5681 = vpack.c.b16 %v5678, %v5677
  %v5682 = vpack.c.b16 %v5680, %v5679
  %v5686 = vsel %vm357, %v5664, 0
  %v5689 = vsel %vm357, %v5665, 0
  %v5692 = vsel %vm357, %v5666, 0
  %v5695 = vsel %vm357, %v5667, 0
  %v5698 = vsel %vm357, %v5668, 0
  %v5701 = vsel %vm357, %v5669, 0
  %v5704 = vsel %vm357, %v5670, 0
  %v5707 = vsel %vm357, %v5671, 0
  %5709 = vmatpush.bf16.msra.mxu0 0
  %5710 = vmatpush.bf16.msra.mxu0 0
  %5711 = vmatpush.bf16.msra.mxu0 0
  %5712 = vmatpush.bf16.msra.mxu0 0
  %5713 = vmatpush.bf16.msra.mxu0 0
  %5714 = vmatpush.bf16.msra.mxu0 0
  %5715 = vmatpush.bf16.msra.mxu0 %v5682
  %5716 = vmatpush.bf16.msra.mxu0 %v5681
  %5717 = vmatmul.bf16.gmra.mxu0 %v5686
  %v5718 = vpop.f32.mrf.mxu0
  %v5719 = vadd.f32 %v5672, %v5718
  %v5720 = vpop.f32.mrf.mxu0
  %v5721 = vadd.f32 %v5672, %v5720
  %5722 = vmatmul.bf16.gmra.mxu0 %v5689
  %v5723 = vpop.f32.mrf.mxu0
  %v5724 = vadd.f32 %v5672, %v5723
  %v5725 = vpop.f32.mrf.mxu0
  %v5726 = vadd.f32 %v5672, %v5725
  %5727 = vmatmul.bf16.gmra.mxu0 %v5692
  %v5728 = vpop.f32.mrf.mxu0
  %v5729 = vadd.f32 %v5672, %v5728
  %v5730 = vpop.f32.mrf.mxu0
  %v5731 = vadd.f32 %v5672, %v5730
  %5732 = vmatmul.bf16.gmra.mxu0 %v5695
  %v5733 = vpop.f32.mrf.mxu0
  %v5734 = vadd.f32 %v5672, %v5733
  %v5735 = vpop.f32.mrf.mxu0
  %v5736 = vadd.f32 %v5672, %v5735
  %5737 = vmatmul.bf16.gmra.mxu0 %v5698
  %v5738 = vpop.f32.mrf.mxu0
  %v5739 = vadd.f32 %v5672, %v5738
  %v5740 = vpop.f32.mrf.mxu0
  %v5741 = vadd.f32 %v5672, %v5740
  %5742 = vmatmul.bf16.gmra.mxu0 %v5701
  %v5743 = vpop.f32.mrf.mxu0
  %v5744 = vadd.f32 %v5672, %v5743
  %v5745 = vpop.f32.mrf.mxu0
  %v5746 = vadd.f32 %v5672, %v5745
  %5747 = vmatmul.bf16.gmra.mxu0 %v5704
  %v5748 = vpop.f32.mrf.mxu0
  %v5749 = vadd.f32 %v5672, %v5748
  %v5750 = vpop.f32.mrf.mxu0
  %v5751 = vadd.f32 %v5672, %v5750
  %5752 = vmatmul.bf16.gmra.mxu0 %v5707
  %v5753 = vpop.f32.mrf.mxu0
  %v5754 = vadd.f32 %v5672, %v5753
  %v5755 = vpop.f32.mrf.mxu0
  %v5756 = vadd.f32 %v5672, %v5755
  %5757 = vdwg.mxu0
  %v5758 = vld [vmem:[%s4 + $0x330] sm:$0xf]
  %v5759 = vld [vmem:[%s4 + $0x338] sm:$0xf]
  %v5760 = vld [vmem:[%s4 + $0x340] sm:$0xf]
  %v5761 = vld [vmem:[%s4 + $0x348] sm:$0xf]
  %v5762 = vld [vmem:[%s5 + $0x1a0] ss:$0 sm:$0xff]
  %v5767 = vunpack.c.l.b16 %v5758
  %v5768 = vunpack.c.l.b16 %v5759
  %v5769 = vunpack.c.l.b16 %v5760
  %v5770 = vunpack.c.l.b16 %v5761
  %v5771 = vpack.c.b16 %v5768, %v5767
  %v5772 = vpack.c.b16 %v5770, %v5769
  %5775 = vmatpush.bf16.msra.mxu0 0
  %5776 = vmatpush.bf16.msra.mxu0 0
  %5777 = vmatpush.bf16.msra.mxu0 0
  %5778 = vmatpush.bf16.msra.mxu0 0
  %5779 = vmatpush.bf16.msra.mxu0 0
  %5780 = vmatpush.bf16.msra.mxu0 0
  %5781 = vmatpush.bf16.msra.mxu0 %v5772
  %5782 = vmatpush.bf16.msra.mxu0 %v5771
  %5783 = vmatmul.bf16.gmra.mxu0 %v2268
  %v5784 = vpop.f32.mrf.mxu0
  %v5785 = vadd.f32 %v5762, %v5784
  %v5786 = vpop.f32.mrf.mxu0
  %v5787 = vadd.f32 %v5762, %v5786
  %5788 = vdwg.mxu0
  %v5789 = vld [vmem:[%s4 + $0x350] sm:$0xf]
  %v5790 = vld [vmem:[%s4 + $0x358] sm:$0xf]
  %v5791 = vld [vmem:[%s4 + $0x360] sm:$0xf]
  %v5792 = vld [vmem:[%s4 + $0x368] sm:$0xf]
  %v5793 = vpack.c.bf16 %v5721, %v5719
  %v5794 = vpack.c.bf16 %v5726, %v5724
  %v5795 = vpack.c.bf16 %v5731, %v5729
  %v5796 = vpack.c.bf16 %v5736, %v5734
  %v5797 = vpack.c.bf16 %v5785, %v5785
  %v5799 = vsel %vm65, %v5793, 0
  %v5802 = vsel %vm65, %v5794, 0
  %v5805 = vsel %vm65, %v5795, 0
  %v5808 = vsel %vm65, %v5796, 0
  %v5811 = vsel %vm65, %v5797, 0
  %5813 = vmatpush.bf16.xpose.msra.mxu0 0
  %5814 = vmatpush.bf16.xpose.msra.mxu0 0
  %5815 = vmatpush.bf16.xpose.msra.mxu0 0
  %5816 = vmatpush.bf16.xpose.msra.mxu0 0
  %5817 = vmatpush.bf16.xpose.msra.mxu0 0
  %5818 = vmatpush.bf16.xpose.msra.mxu0 0
  %5819 = vmatpush.bf16.xpose.msra.mxu0 0
  %5820 = vmatpush.bf16.xpose.msra.mxu0 %v5811
  %5821 = vmatmul.bf16.gmra.mxu0 %v5799
  %v5822 = vpop.f32.mrf.mxu0
  %v5823 = vadd.f32 %v2293, %v5822
  %v5824 = vpop.f32.mrf.mxu0
  %v5825 = vadd.f32 %v2293, %v5824
  %5826 = vmatmul.bf16.gmra.mxu0 %v5802
  %v5827 = vpop.f32.mrf.mxu0
  %v5828 = vadd.f32 %v2293, %v5827
  %v5829 = vpop.f32.mrf.mxu0
  %v5830 = vadd.f32 %v2293, %v5829
  %5831 = vmatmul.bf16.gmra.mxu0 %v5805
  %v5832 = vpop.f32.mrf.mxu0
  %v5833 = vadd.f32 %v2293, %v5832
  %v5834 = vpop.f32.mrf.mxu0
  %v5835 = vadd.f32 %v2293, %v5834
  %5836 = vmatmul.bf16.gmra.mxu0 %v5808
  %v5837 = vpop.f32.mrf.mxu0
  %v5838 = vadd.f32 %v2293, %v5837
  %v5839 = vpop.f32.mrf.mxu0
  %v5840 = vadd.f32 %v2293, %v5839
  %5841 = vdwg.mxu0
  %v5842 = vsel %vm2338, %v5823, -inf
  %5843 = vmax.xlane.f32.xlu0 %v5842
  %v5844 = vpop.xlane.xlu0 %5843
  %v5845 = vsel %vm2338, %v5825, -inf
  %5846 = vmax.xlane.f32.xlu0 %v5845
  %v5847 = vpop.xlane.xlu0 %5846
  %v5848 = vsel %vm2338, %v5828, -inf
  %5849 = vmax.xlane.f32.xlu0 %v5848
  %v5850 = vpop.xlane.xlu0 %5849
  %v5851 = vsel %vm2338, %v5830, -inf
  %5852 = vmax.xlane.f32.xlu0 %v5851
  %v5853 = vpop.xlane.xlu0 %5852
  %v5854 = vsel %vm2338, %v5833, -inf
  %5855 = vmax.xlane.f32.xlu0 %v5854
  %v5856 = vpop.xlane.xlu0 %5855
  %v5857 = vsel %vm2338, %v5835, -inf
  %5858 = vmax.xlane.f32.xlu0 %v5857
  %v5859 = vpop.xlane.xlu0 %5858
  %v5860 = vsel %vm2338, %v5838, -inf
  %5861 = vmax.xlane.f32.xlu0 %v5860
  %v5862 = vpop.xlane.xlu0 %5861
  %v5863 = vsel %vm2338, %v5840, -inf
  %5864 = vmax.xlane.f32.xlu0 %v5863
  %v5865 = vpop.xlane.xlu0 %5864
  %v5866 = vsub.f32 %v5823, %v5844
  %v5867 = vsub.f32 %v5825, %v5847
  %v5868 = vsub.f32 %v5828, %v5850
  %v5869 = vsub.f32 %v5830, %v5853
  %v5870 = vsub.f32 %v5833, %v5856
  %v5871 = vsub.f32 %v5835, %v5859
  %v5872 = vsub.f32 %v5838, %v5862
  %v5873 = vsub.f32 %v5840, %v5865
  %v5874 = vmul.f32 %v5866, 1.442695
  %v5875 = vpow.pop %v5874
  %v5876 = vmul.f32 %v5867, 1.442695
  %v5877 = vpow.pop %v5876
  %v5878 = vmul.f32 %v5868, 1.442695
  %v5879 = vpow.pop %v5878
  %v5880 = vmul.f32 %v5869, 1.442695
  %v5881 = vpow.pop %v5880
  %v5882 = vmul.f32 %v5870, 1.442695
  %v5883 = vpow.pop %v5882
  %v5884 = vmul.f32 %v5871, 1.442695
  %v5885 = vpow.pop %v5884
  %v5886 = vmul.f32 %v5872, 1.442695
  %v5887 = vpow.pop %v5886
  %v5888 = vmul.f32 %v5873, 1.442695
  %v5889 = vpow.pop %v5888
  %v5890 = vsel %vm2338, %v5875, 0.0
  %5891 = vadd.xlane.f32.xlu0 %v5890
  %v5892 = vpop.xlane.xlu0 %5891
  %v5893 = vsel %vm2338, %v5877, 0.0
  %5894 = vadd.xlane.f32.xlu0 %v5893
  %v5895 = vpop.xlane.xlu0 %5894
  %v5896 = vsel %vm2338, %v5879, 0.0
  %5897 = vadd.xlane.f32.xlu0 %v5896
  %v5898 = vpop.xlane.xlu0 %5897
  %v5899 = vsel %vm2338, %v5881, 0.0
  %5900 = vadd.xlane.f32.xlu0 %v5899
  %v5901 = vpop.xlane.xlu0 %5900
  %v5902 = vsel %vm2338, %v5883, 0.0
  %5903 = vadd.xlane.f32.xlu0 %v5902
  %v5904 = vpop.xlane.xlu0 %5903
  %v5905 = vsel %vm2338, %v5885, 0.0
  %5906 = vadd.xlane.f32.xlu0 %v5905
  %v5907 = vpop.xlane.xlu0 %5906
  %v5908 = vsel %vm2338, %v5887, 0.0
  %5909 = vadd.xlane.f32.xlu0 %v5908
  %v5910 = vpop.xlane.xlu0 %5909
  %v5911 = vsel %vm2338, %v5889, 0.0
  %5912 = vadd.xlane.f32.xlu0 %v5911
  %v5913 = vpop.xlane.xlu0 %5912
  %v5914 = vpack.c.bf16 %v5877, %v5875
  %v5915 = vpack.c.bf16 %v5881, %v5879
  %v5916 = vpack.c.bf16 %v5885, %v5883
  %v5917 = vpack.c.bf16 %v5889, %v5887
  %5919 = vrot.lane.b32.xlu0 %v5797, 96
  %v5920 = vpop.permute.xlu0 %5919
  %v5922 = vsel %vm2338, %v5914, 0
  %v5925 = vsel %vm2338, %v5915, 0
  %v5928 = vsel %vm2338, %v5916, 0
  %v5931 = vsel %vm2338, %v5917, 0
  %v5934 = vsel %vm2430, %v5920, 0
  %5936 = vmatpush.bf16.msra.mxu0 0
  %5937 = vmatpush.bf16.msra.mxu0 0
  %5938 = vmatpush.bf16.msra.mxu0 0
  %5939 = vmatpush.bf16.msra.mxu0 0
  %5940 = vmatpush.bf16.msra.mxu0 0
  %5941 = vmatpush.bf16.msra.mxu0 0
  %5942 = vmatpush.bf16.msra.mxu0 0
  %5943 = vmatpush.bf16.msra.mxu0 %v5934
  %5944 = vmatmul.bf16.gmra.mxu0 %v5922
  %v5945 = vpop.f32.mrf.mxu0
  %v5946 = vadd.f32 0.0, %v5945
  %v5947 = vpop.f32.mrf.mxu0
  %v5948 = vadd.f32 0.0, %v5947
  %5949 = vmatmul.bf16.gmra.mxu0 %v5925
  %v5950 = vpop.f32.mrf.mxu0
  %v5951 = vadd.f32 0.0, %v5950
  %v5952 = vpop.f32.mrf.mxu0
  %v5953 = vadd.f32 0.0, %v5952
  %5954 = vmatmul.bf16.gmra.mxu0 %v5928
  %v5955 = vpop.f32.mrf.mxu0
  %v5956 = vadd.f32 0.0, %v5955
  %v5957 = vpop.f32.mrf.mxu0
  %v5958 = vadd.f32 0.0, %v5957
  %5959 = vmatmul.bf16.gmra.mxu0 %v5931
  %v5960 = vpop.f32.mrf.mxu0
  %v5961 = vadd.f32 0.0, %v5960
  %v5962 = vpop.f32.mrf.mxu0
  %v5963 = vadd.f32 0.0, %v5962
  %5964 = vdwg.mxu0
  %v5965 = vrcp.pop %v5892
  %v5966 = vrcp.pop %v5895
  %v5967 = vrcp.pop %v5898
  %v5968 = vrcp.pop %v5901
  %v5969 = vrcp.pop %v5904
  %v5970 = vrcp.pop %v5907
  %v5971 = vrcp.pop %v5910
  %v5972 = vrcp.pop %v5913
  %v5973 = vmul.f32 %v5946, %v5965
  %v5974 = vmul.f32 %v5948, %v5966
  %v5975 = vmul.f32 %v5951, %v5967
  %v5976 = vmul.f32 %v5953, %v5968
  %v5977 = vmul.f32 %v5956, %v5969
  %v5978 = vmul.f32 %v5958, %v5970
  %v5979 = vmul.f32 %v5961, %v5971
  %v5980 = vmul.f32 %v5963, %v5972
  %v5981 = vpack.c.bf16 %v5741, %v5739
  %v5982 = vpack.c.bf16 %v5746, %v5744
  %v5983 = vpack.c.bf16 %v5751, %v5749
  %v5984 = vpack.c.bf16 %v5756, %v5754
  %v5985 = vpack.c.bf16 %v5787, %v5787
  %v5987 = vsel %vm65, %v5981, 0
  %v5990 = vsel %vm65, %v5982, 0
  %v5993 = vsel %vm65, %v5983, 0
  %v5996 = vsel %vm65, %v5984, 0
  %v5999 = vsel %vm65, %v5985, 0
  %6001 = vmatpush.bf16.xpose.msra.mxu0 0
  %6002 = vmatpush.bf16.xpose.msra.mxu0 0
  %6003 = vmatpush.bf16.xpose.msra.mxu0 0
  %6004 = vmatpush.bf16.xpose.msra.mxu0 0
  %6005 = vmatpush.bf16.xpose.msra.mxu0 0
  %6006 = vmatpush.bf16.xpose.msra.mxu0 0
  %6007 = vmatpush.bf16.xpose.msra.mxu0 0
  %6008 = vmatpush.bf16.xpose.msra.mxu0 %v5999
  %6009 = vmatmul.bf16.gmra.mxu0 %v5987
  %v6010 = vpop.f32.mrf.mxu0
  %v6011 = vadd.f32 %v2484, %v6010
  %v6012 = vpop.f32.mrf.mxu0
  %v6013 = vadd.f32 %v2484, %v6012
  %6014 = vmatmul.bf16.gmra.mxu0 %v5990
  %v6015 = vpop.f32.mrf.mxu0
  %v6016 = vadd.f32 %v2484, %v6015
  %v6017 = vpop.f32.mrf.mxu0
  %v6018 = vadd.f32 %v2484, %v6017
  %6019 = vmatmul.bf16.gmra.mxu0 %v5993
  %v6020 = vpop.f32.mrf.mxu0
  %v6021 = vadd.f32 %v2484, %v6020
  %v6022 = vpop.f32.mrf.mxu0
  %v6023 = vadd.f32 %v2484, %v6022
  %6024 = vmatmul.bf16.gmra.mxu0 %v5996
  %v6025 = vpop.f32.mrf.mxu0
  %v6026 = vadd.f32 %v2484, %v6025
  %v6027 = vpop.f32.mrf.mxu0
  %v6028 = vadd.f32 %v2484, %v6027
  %6029 = vdwg.mxu0
  %v6030 = vsel %vm2338, %v6011, -inf
  %6031 = vmax.xlane.f32.xlu0 %v6030
  %v6032 = vpop.xlane.xlu0 %6031
  %v6033 = vsel %vm2338, %v6013, -inf
  %6034 = vmax.xlane.f32.xlu0 %v6033
  %v6035 = vpop.xlane.xlu0 %6034
  %v6036 = vsel %vm2338, %v6016, -inf
  %6037 = vmax.xlane.f32.xlu0 %v6036
  %v6038 = vpop.xlane.xlu0 %6037
  %v6039 = vsel %vm2338, %v6018, -inf
  %6040 = vmax.xlane.f32.xlu0 %v6039
  %v6041 = vpop.xlane.xlu0 %6040
  %v6042 = vsel %vm2338, %v6021, -inf
  %6043 = vmax.xlane.f32.xlu0 %v6042
  %v6044 = vpop.xlane.xlu0 %6043
  %v6045 = vsel %vm2338, %v6023, -inf
  %6046 = vmax.xlane.f32.xlu0 %v6045
  %v6047 = vpop.xlane.xlu0 %6046
  %v6048 = vsel %vm2338, %v6026, -inf
  %6049 = vmax.xlane.f32.xlu0 %v6048
  %v6050 = vpop.xlane.xlu0 %6049
  %v6051 = vsel %vm2338, %v6028, -inf
  %6052 = vmax.xlane.f32.xlu0 %v6051
  %v6053 = vpop.xlane.xlu0 %6052
  %v6054 = vsub.f32 %v6011, %v6032
  %v6055 = vsub.f32 %v6013, %v6035
  %v6056 = vsub.f32 %v6016, %v6038
  %v6057 = vsub.f32 %v6018, %v6041
  %v6058 = vsub.f32 %v6021, %v6044
  %v6059 = vsub.f32 %v6023, %v6047
  %v6060 = vsub.f32 %v6026, %v6050
  %v6061 = vsub.f32 %v6028, %v6053
  %v6062 = vmul.f32 %v6054, 1.442695
  %v6063 = vpow.pop %v6062
  %v6064 = vmul.f32 %v6055, 1.442695
  %v6065 = vpow.pop %v6064
  %v6066 = vmul.f32 %v6056, 1.442695
  %v6067 = vpow.pop %v6066
  %v6068 = vmul.f32 %v6057, 1.442695
  %v6069 = vpow.pop %v6068
  %v6070 = vmul.f32 %v6058, 1.442695
  %v6071 = vpow.pop %v6070
  %v6072 = vmul.f32 %v6059, 1.442695
  %v6073 = vpow.pop %v6072
  %v6074 = vmul.f32 %v6060, 1.442695
  %v6075 = vpow.pop %v6074
  %v6076 = vmul.f32 %v6061, 1.442695
  %v6077 = vpow.pop %v6076
  %v6078 = vsel %vm2338, %v6063, 0.0
  %6079 = vadd.xlane.f32.xlu0 %v6078
  %v6080 = vpop.xlane.xlu0 %6079
  %v6081 = vsel %vm2338, %v6065, 0.0
  %6082 = vadd.xlane.f32.xlu0 %v6081
  %v6083 = vpop.xlane.xlu0 %6082
  %v6084 = vsel %vm2338, %v6067, 0.0
  %6085 = vadd.xlane.f32.xlu0 %v6084
  %v6086 = vpop.xlane.xlu0 %6085
  %v6087 = vsel %vm2338, %v6069, 0.0
  %6088 = vadd.xlane.f32.xlu0 %v6087
  %v6089 = vpop.xlane.xlu0 %6088
  %v6090 = vsel %vm2338, %v6071, 0.0
  %6091 = vadd.xlane.f32.xlu0 %v6090
  %v6092 = vpop.xlane.xlu0 %6091
  %v6093 = vsel %vm2338, %v6073, 0.0
  %6094 = vadd.xlane.f32.xlu0 %v6093
  %v6095 = vpop.xlane.xlu0 %6094
  %v6096 = vsel %vm2338, %v6075, 0.0
  %6097 = vadd.xlane.f32.xlu0 %v6096
  %v6098 = vpop.xlane.xlu0 %6097
  %v6099 = vsel %vm2338, %v6077, 0.0
  %6100 = vadd.xlane.f32.xlu0 %v6099
  %v6101 = vpop.xlane.xlu0 %6100
  %v6102 = vpack.c.bf16 %v6065, %v6063
  %v6103 = vpack.c.bf16 %v6069, %v6067
  %v6104 = vpack.c.bf16 %v6073, %v6071
  %v6105 = vpack.c.bf16 %v6077, %v6075
  %6107 = vrot.lane.b32.xlu0 %v5985, 96
  %v6108 = vpop.permute.xlu0 %6107
  %v6110 = vsel %vm2338, %v6102, 0
  %v6113 = vsel %vm2338, %v6103, 0
  %v6116 = vsel %vm2338, %v6104, 0
  %v6119 = vsel %vm2338, %v6105, 0
  %v6122 = vsel %vm2430, %v6108, 0
  %6124 = vmatpush.bf16.msra.mxu0 0
  %6125 = vmatpush.bf16.msra.mxu0 0
  %6126 = vmatpush.bf16.msra.mxu0 0
  %6127 = vmatpush.bf16.msra.mxu0 0
  %6128 = vmatpush.bf16.msra.mxu0 0
  %6129 = vmatpush.bf16.msra.mxu0 0
  %6130 = vmatpush.bf16.msra.mxu0 0
  %6131 = vmatpush.bf16.msra.mxu0 %v6122
  %6132 = vmatmul.bf16.gmra.mxu0 %v6110
  %v6133 = vpop.f32.mrf.mxu0
  %v6134 = vadd.f32 0.0, %v6133
  %v6135 = vpop.f32.mrf.mxu0
  %v6136 = vadd.f32 0.0, %v6135
  %6137 = vmatmul.bf16.gmra.mxu0 %v6113
  %v6138 = vpop.f32.mrf.mxu0
  %v6139 = vadd.f32 0.0, %v6138
  %v6140 = vpop.f32.mrf.mxu0
  %v6141 = vadd.f32 0.0, %v6140
  %6142 = vmatmul.bf16.gmra.mxu0 %v6116
  %v6143 = vpop.f32.mrf.mxu0
  %v6144 = vadd.f32 0.0, %v6143
  %v6145 = vpop.f32.mrf.mxu0
  %v6146 = vadd.f32 0.0, %v6145
  %6147 = vmatmul.bf16.gmra.mxu0 %v6119
  %v6148 = vpop.f32.mrf.mxu0
  %v6149 = vadd.f32 0.0, %v6148
  %v6150 = vpop.f32.mrf.mxu0
  %v6151 = vadd.f32 0.0, %v6150
  %6152 = vdwg.mxu0
  %v6153 = vrcp.pop %v6080
  %v6154 = vrcp.pop %v6083
  %v6155 = vrcp.pop %v6086
  %v6156 = vrcp.pop %v6089
  %v6157 = vrcp.pop %v6092
  %v6158 = vrcp.pop %v6095
  %v6159 = vrcp.pop %v6098
  %v6160 = vrcp.pop %v6101
  %v6161 = vmul.f32 %v6134, %v6153
  %v6162 = vmul.f32 %v6136, %v6154
  %v6163 = vmul.f32 %v6139, %v6155
  %v6164 = vmul.f32 %v6141, %v6156
  %v6165 = vmul.f32 %v6144, %v6157
  %v6166 = vmul.f32 %v6146, %v6158
  %v6167 = vmul.f32 %v6149, %v6159
  %v6168 = vmul.f32 %v6151, %v6160
  %v6169 = vpack.c.bf16 %v5974, %v5973
  %v6170 = vpack.c.bf16 %v5976, %v5975
  %v6171 = vpack.c.bf16 %v5978, %v5977
  %v6172 = vpack.c.bf16 %v5980, %v5979
  %v6173 = vpack.c.bf16 %v6162, %v6161
  %v6174 = vpack.c.bf16 %v6164, %v6163
  %v6175 = vpack.c.bf16 %v6166, %v6165
  %v6176 = vpack.c.bf16 %v6168, %v6167
  %6181 = vrot.lane.b32.xlu0 %v5793, 112
  %v6182 = vpop.permute.xlu0 %6181
  %6183 = vrot.lane.b32.xlu0 %v5794, 112
  %v6184 = vpop.permute.xlu0 %6183
  %6185 = vrot.lane.b32.xlu0 %v5795, 112
  %v6186 = vpop.permute.xlu0 %6185
  %6187 = vrot.lane.b32.xlu0 %v5796, 112
  %v6188 = vpop.permute.xlu0 %6187
  %6189 = vrot.lane.b32.xlu0 %v5797, 112
  %v6190 = vpop.permute.xlu0 %6189
  %v6192 = vsel %vm65, %v6182, 0
  %v6195 = vsel %vm65, %v6184, 0
  %v6198 = vsel %vm65, %v6186, 0
  %v6201 = vsel %vm65, %v6188, 0
  %v6204 = vsel %vm65, %v6190, 0
  %6206 = vmatpush.bf16.xpose.msra.mxu0 0
  %6207 = vmatpush.bf16.xpose.msra.mxu0 0
  %6208 = vmatpush.bf16.xpose.msra.mxu0 0
  %6209 = vmatpush.bf16.xpose.msra.mxu0 0
  %6210 = vmatpush.bf16.xpose.msra.mxu0 0
  %6211 = vmatpush.bf16.xpose.msra.mxu0 0
  %6212 = vmatpush.bf16.xpose.msra.mxu0 0
  %6213 = vmatpush.bf16.xpose.msra.mxu0 %v6204
  %6214 = vmatmul.bf16.gmra.mxu0 %v6192
  %v6215 = vpop.f32.mrf.mxu0
  %v6216 = vadd.f32 %v2293, %v6215
  %v6217 = vpop.f32.mrf.mxu0
  %v6218 = vadd.f32 %v2293, %v6217
  %6219 = vmatmul.bf16.gmra.mxu0 %v6195
  %v6220 = vpop.f32.mrf.mxu0
  %v6221 = vadd.f32 %v2293, %v6220
  %v6222 = vpop.f32.mrf.mxu0
  %v6223 = vadd.f32 %v2293, %v6222
  %6224 = vmatmul.bf16.gmra.mxu0 %v6198
  %v6225 = vpop.f32.mrf.mxu0
  %v6226 = vadd.f32 %v2293, %v6225
  %v6227 = vpop.f32.mrf.mxu0
  %v6228 = vadd.f32 %v2293, %v6227
  %6229 = vmatmul.bf16.gmra.mxu0 %v6201
  %v6230 = vpop.f32.mrf.mxu0
  %v6231 = vadd.f32 %v2293, %v6230
  %v6232 = vpop.f32.mrf.mxu0
  %v6233 = vadd.f32 %v2293, %v6232
  %6234 = vdwg.mxu0
  %v6235 = vsel %vm2338, %v6216, -inf
  %6236 = vmax.xlane.f32.xlu0 %v6235
  %v6237 = vpop.xlane.xlu0 %6236
  %v6238 = vsel %vm2338, %v6218, -inf
  %6239 = vmax.xlane.f32.xlu0 %v6238
  %v6240 = vpop.xlane.xlu0 %6239
  %v6241 = vsel %vm2338, %v6221, -inf
  %6242 = vmax.xlane.f32.xlu0 %v6241
  %v6243 = vpop.xlane.xlu0 %6242
  %v6244 = vsel %vm2338, %v6223, -inf
  %6245 = vmax.xlane.f32.xlu0 %v6244
  %v6246 = vpop.xlane.xlu0 %6245
  %v6247 = vsel %vm2338, %v6226, -inf
  %6248 = vmax.xlane.f32.xlu0 %v6247
  %v6249 = vpop.xlane.xlu0 %6248
  %v6250 = vsel %vm2338, %v6228, -inf
  %6251 = vmax.xlane.f32.xlu0 %v6250
  %v6252 = vpop.xlane.xlu0 %6251
  %v6253 = vsel %vm2338, %v6231, -inf
  %6254 = vmax.xlane.f32.xlu0 %v6253
  %v6255 = vpop.xlane.xlu0 %6254
  %v6256 = vsel %vm2338, %v6233, -inf
  %6257 = vmax.xlane.f32.xlu0 %v6256
  %v6258 = vpop.xlane.xlu0 %6257
  %v6259 = vsub.f32 %v6216, %v6237
  %v6260 = vsub.f32 %v6218, %v6240
  %v6261 = vsub.f32 %v6221, %v6243
  %v6262 = vsub.f32 %v6223, %v6246
  %v6263 = vsub.f32 %v6226, %v6249
  %v6264 = vsub.f32 %v6228, %v6252
  %v6265 = vsub.f32 %v6231, %v6255
  %v6266 = vsub.f32 %v6233, %v6258
  %v6267 = vmul.f32 %v6259, 1.442695
  %v6268 = vpow.pop %v6267
  %v6269 = vmul.f32 %v6260, 1.442695
  %v6270 = vpow.pop %v6269
  %v6271 = vmul.f32 %v6261, 1.442695
  %v6272 = vpow.pop %v6271
  %v6273 = vmul.f32 %v6262, 1.442695
  %v6274 = vpow.pop %v6273
  %v6275 = vmul.f32 %v6263, 1.442695
  %v6276 = vpow.pop %v6275
  %v6277 = vmul.f32 %v6264, 1.442695
  %v6278 = vpow.pop %v6277
  %v6279 = vmul.f32 %v6265, 1.442695
  %v6280 = vpow.pop %v6279
  %v6281 = vmul.f32 %v6266, 1.442695
  %v6282 = vpow.pop %v6281
  %v6283 = vsel %vm2338, %v6268, 0.0
  %6284 = vadd.xlane.f32.xlu0 %v6283
  %v6285 = vpop.xlane.xlu0 %6284
  %v6286 = vsel %vm2338, %v6270, 0.0
  %6287 = vadd.xlane.f32.xlu0 %v6286
  %v6288 = vpop.xlane.xlu0 %6287
  %v6289 = vsel %vm2338, %v6272, 0.0
  %6290 = vadd.xlane.f32.xlu0 %v6289
  %v6291 = vpop.xlane.xlu0 %6290
  %v6292 = vsel %vm2338, %v6274, 0.0
  %6293 = vadd.xlane.f32.xlu0 %v6292
  %v6294 = vpop.xlane.xlu0 %6293
  %v6295 = vsel %vm2338, %v6276, 0.0
  %6296 = vadd.xlane.f32.xlu0 %v6295
  %v6297 = vpop.xlane.xlu0 %6296
  %v6298 = vsel %vm2338, %v6278, 0.0
  %6299 = vadd.xlane.f32.xlu0 %v6298
  %v6300 = vpop.xlane.xlu0 %6299
  %v6301 = vsel %vm2338, %v6280, 0.0
  %6302 = vadd.xlane.f32.xlu0 %v6301
  %v6303 = vpop.xlane.xlu0 %6302
  %v6304 = vsel %vm2338, %v6282, 0.0
  %6305 = vadd.xlane.f32.xlu0 %v6304
  %v6306 = vpop.xlane.xlu0 %6305
  %v6307 = vpack.c.bf16 %v6270, %v6268
  %v6308 = vpack.c.bf16 %v6274, %v6272
  %v6309 = vpack.c.bf16 %v6278, %v6276
  %v6310 = vpack.c.bf16 %v6282, %v6280
  %6311 = vrot.lane.b32.xlu0 %v5797, 80
  %v6312 = vpop.permute.xlu0 %6311
  %v6314 = vsel %vm2338, %v6307, 0
  %v6317 = vsel %vm2338, %v6308, 0
  %v6320 = vsel %vm2338, %v6309, 0
  %v6323 = vsel %vm2338, %v6310, 0
  %v6326 = vsel %vm2430, %v6312, 0
  %6328 = vmatpush.bf16.msra.mxu0 0
  %6329 = vmatpush.bf16.msra.mxu0 0
  %6330 = vmatpush.bf16.msra.mxu0 0
  %6331 = vmatpush.bf16.msra.mxu0 0
  %6332 = vmatpush.bf16.msra.mxu0 0
  %6333 = vmatpush.bf16.msra.mxu0 0
  %6334 = vmatpush.bf16.msra.mxu0 0
  %6335 = vmatpush.bf16.msra.mxu0 %v6326
  %6336 = vmatmul.bf16.gmra.mxu0 %v6314
  %v6337 = vpop.f32.mrf.mxu0
  %v6338 = vadd.f32 0.0, %v6337
  %v6339 = vpop.f32.mrf.mxu0
  %v6340 = vadd.f32 0.0, %v6339
  %6341 = vmatmul.bf16.gmra.mxu0 %v6317
  %v6342 = vpop.f32.mrf.mxu0
  %v6343 = vadd.f32 0.0, %v6342
  %v6344 = vpop.f32.mrf.mxu0
  %v6345 = vadd.f32 0.0, %v6344
  %6346 = vmatmul.bf16.gmra.mxu0 %v6320
  %v6347 = vpop.f32.mrf.mxu0
  %v6348 = vadd.f32 0.0, %v6347
  %v6349 = vpop.f32.mrf.mxu0
  %v6350 = vadd.f32 0.0, %v6349
  %6351 = vmatmul.bf16.gmra.mxu0 %v6323
  %v6352 = vpop.f32.mrf.mxu0
  %v6353 = vadd.f32 0.0, %v6352
  %v6354 = vpop.f32.mrf.mxu0
  %v6355 = vadd.f32 0.0, %v6354
  %6356 = vdwg.mxu0
  %v6357 = vrcp.pop %v6285
  %v6358 = vrcp.pop %v6288
  %v6359 = vrcp.pop %v6291
  %v6360 = vrcp.pop %v6294
  %v6361 = vrcp.pop %v6297
  %v6362 = vrcp.pop %v6300
  %v6363 = vrcp.pop %v6303
  %v6364 = vrcp.pop %v6306
  %v6365 = vmul.f32 %v6338, %v6357
  %v6366 = vmul.f32 %v6340, %v6358
  %v6367 = vmul.f32 %v6343, %v6359
  %v6368 = vmul.f32 %v6345, %v6360
  %v6369 = vmul.f32 %v6348, %v6361
  %v6370 = vmul.f32 %v6350, %v6362
  %v6371 = vmul.f32 %v6353, %v6363
  %v6372 = vmul.f32 %v6355, %v6364
  %6377 = vrot.lane.b32.xlu0 %v5981, 112
  %v6378 = vpop.permute.xlu0 %6377
  %6379 = vrot.lane.b32.xlu0 %v5982, 112
  %v6380 = vpop.permute.xlu0 %6379
  %6381 = vrot.lane.b32.xlu0 %v5983, 112
  %v6382 = vpop.permute.xlu0 %6381
  %6383 = vrot.lane.b32.xlu0 %v5984, 112
  %v6384 = vpop.permute.xlu0 %6383
  %6385 = vrot.lane.b32.xlu0 %v5985, 112
  %v6386 = vpop.permute.xlu0 %6385
  %v6388 = vsel %vm65, %v6378, 0
  %v6391 = vsel %vm65, %v6380, 0
  %v6394 = vsel %vm65, %v6382, 0
  %v6397 = vsel %vm65, %v6384, 0
  %v6400 = vsel %vm65, %v6386, 0
  %6402 = vmatpush.bf16.xpose.msra.mxu0 0
  %6403 = vmatpush.bf16.xpose.msra.mxu0 0
  %6404 = vmatpush.bf16.xpose.msra.mxu0 0
  %6405 = vmatpush.bf16.xpose.msra.mxu0 0
  %6406 = vmatpush.bf16.xpose.msra.mxu0 0
  %6407 = vmatpush.bf16.xpose.msra.mxu0 0
  %6408 = vmatpush.bf16.xpose.msra.mxu0 0
  %6409 = vmatpush.bf16.xpose.msra.mxu0 %v6400
  %6410 = vmatmul.bf16.gmra.mxu0 %v6388
  %v6411 = vpop.f32.mrf.mxu0
  %v6412 = vadd.f32 %v2484, %v6411
  %v6413 = vpop.f32.mrf.mxu0
  %v6414 = vadd.f32 %v2484, %v6413
  %6415 = vmatmul.bf16.gmra.mxu0 %v6391
  %v6416 = vpop.f32.mrf.mxu0
  %v6417 = vadd.f32 %v2484, %v6416
  %v6418 = vpop.f32.mrf.mxu0
  %v6419 = vadd.f32 %v2484, %v6418
  %6420 = vmatmul.bf16.gmra.mxu0 %v6394
  %v6421 = vpop.f32.mrf.mxu0
  %v6422 = vadd.f32 %v2484, %v6421
  %v6423 = vpop.f32.mrf.mxu0
  %v6424 = vadd.f32 %v2484, %v6423
  %6425 = vmatmul.bf16.gmra.mxu0 %v6397
  %v6426 = vpop.f32.mrf.mxu0
  %v6427 = vadd.f32 %v2484, %v6426
  %v6428 = vpop.f32.mrf.mxu0
  %v6429 = vadd.f32 %v2484, %v6428
  %6430 = vdwg.mxu0
  %v6431 = vsel %vm2338, %v6412, -inf
  %6432 = vmax.xlane.f32.xlu0 %v6431
  %v6433 = vpop.xlane.xlu0 %6432
  %v6434 = vsel %vm2338, %v6414, -inf
  %6435 = vmax.xlane.f32.xlu0 %v6434
  %v6436 = vpop.xlane.xlu0 %6435
  %v6437 = vsel %vm2338, %v6417, -inf
  %6438 = vmax.xlane.f32.xlu0 %v6437
  %v6439 = vpop.xlane.xlu0 %6438
  %v6440 = vsel %vm2338, %v6419, -inf
  %6441 = vmax.xlane.f32.xlu0 %v6440
  %v6442 = vpop.xlane.xlu0 %6441
  %v6443 = vsel %vm2338, %v6422, -inf
  %6444 = vmax.xlane.f32.xlu0 %v6443
  %v6445 = vpop.xlane.xlu0 %6444
  %v6446 = vsel %vm2338, %v6424, -inf
  %6447 = vmax.xlane.f32.xlu0 %v6446
  %v6448 = vpop.xlane.xlu0 %6447
  %v6449 = vsel %vm2338, %v6427, -inf
  %6450 = vmax.xlane.f32.xlu0 %v6449
  %v6451 = vpop.xlane.xlu0 %6450
  %v6452 = vsel %vm2338, %v6429, -inf
  %6453 = vmax.xlane.f32.xlu0 %v6452
  %v6454 = vpop.xlane.xlu0 %6453
  %v6455 = vsub.f32 %v6412, %v6433
  %v6456 = vsub.f32 %v6414, %v6436
  %v6457 = vsub.f32 %v6417, %v6439
  %v6458 = vsub.f32 %v6419, %v6442
  %v6459 = vsub.f32 %v6422, %v6445
  %v6460 = vsub.f32 %v6424, %v6448
  %v6461 = vsub.f32 %v6427, %v6451
  %v6462 = vsub.f32 %v6429, %v6454
  %v6463 = vmul.f32 %v6455, 1.442695
  %v6464 = vpow.pop %v6463
  %v6465 = vmul.f32 %v6456, 1.442695
  %v6466 = vpow.pop %v6465
  %v6467 = vmul.f32 %v6457, 1.442695
  %v6468 = vpow.pop %v6467
  %v6469 = vmul.f32 %v6458, 1.442695
  %v6470 = vpow.pop %v6469
  %v6471 = vmul.f32 %v6459, 1.442695
  %v6472 = vpow.pop %v6471
  %v6473 = vmul.f32 %v6460, 1.442695
  %v6474 = vpow.pop %v6473
  %v6475 = vmul.f32 %v6461, 1.442695
  %v6476 = vpow.pop %v6475
  %v6477 = vmul.f32 %v6462, 1.442695
  %v6478 = vpow.pop %v6477
  %v6479 = vsel %vm2338, %v6464, 0.0
  %6480 = vadd.xlane.f32.xlu0 %v6479
  %v6481 = vpop.xlane.xlu0 %6480
  %v6482 = vsel %vm2338, %v6466, 0.0
  %6483 = vadd.xlane.f32.xlu0 %v6482
  %v6484 = vpop.xlane.xlu0 %6483
  %v6485 = vsel %vm2338, %v6468, 0.0
  %6486 = vadd.xlane.f32.xlu0 %v6485
  %v6487 = vpop.xlane.xlu0 %6486
  %v6488 = vsel %vm2338, %v6470, 0.0
  %6489 = vadd.xlane.f32.xlu0 %v6488
  %v6490 = vpop.xlane.xlu0 %6489
  %v6491 = vsel %vm2338, %v6472, 0.0
  %6492 = vadd.xlane.f32.xlu0 %v6491
  %v6493 = vpop.xlane.xlu0 %6492
  %v6494 = vsel %vm2338, %v6474, 0.0
  %6495 = vadd.xlane.f32.xlu0 %v6494
  %v6496 = vpop.xlane.xlu0 %6495
  %v6497 = vsel %vm2338, %v6476, 0.0
  %6498 = vadd.xlane.f32.xlu0 %v6497
  %v6499 = vpop.xlane.xlu0 %6498
  %v6500 = vsel %vm2338, %v6478, 0.0
  %6501 = vadd.xlane.f32.xlu0 %v6500
  %v6502 = vpop.xlane.xlu0 %6501
  %v6503 = vpack.c.bf16 %v6466, %v6464
  %v6504 = vpack.c.bf16 %v6470, %v6468
  %v6505 = vpack.c.bf16 %v6474, %v6472
  %v6506 = vpack.c.bf16 %v6478, %v6476
  %6507 = vrot.lane.b32.xlu0 %v5985, 80
  %v6508 = vpop.permute.xlu0 %6507
  %v6510 = vsel %vm2338, %v6503, 0
  %v6513 = vsel %vm2338, %v6504, 0
  %v6516 = vsel %vm2338, %v6505, 0
  %v6519 = vsel %vm2338, %v6506, 0
  %v6522 = vsel %vm2430, %v6508, 0
  %6524 = vmatpush.bf16.msra.mxu0 0
  %6525 = vmatpush.bf16.msra.mxu0 0
  %6526 = vmatpush.bf16.msra.mxu0 0
  %6527 = vmatpush.bf16.msra.mxu0 0
  %6528 = vmatpush.bf16.msra.mxu0 0
  %6529 = vmatpush.bf16.msra.mxu0 0
  %6530 = vmatpush.bf16.msra.mxu0 0
  %6531 = vmatpush.bf16.msra.mxu0 %v6522
  %6532 = vmatmul.bf16.gmra.mxu0 %v6510
  %v6533 = vpop.f32.mrf.mxu0
  %v6534 = vadd.f32 0.0, %v6533
  %v6535 = vpop.f32.mrf.mxu0
  %v6536 = vadd.f32 0.0, %v6535
  %6537 = vmatmul.bf16.gmra.mxu0 %v6513
  %v6538 = vpop.f32.mrf.mxu0
  %v6539 = vadd.f32 0.0, %v6538
  %v6540 = vpop.f32.mrf.mxu0
  %v6541 = vadd.f32 0.0, %v6540
  %6542 = vmatmul.bf16.gmra.mxu0 %v6516
  %v6543 = vpop.f32.mrf.mxu0
  %v6544 = vadd.f32 0.0, %v6543
  %v6545 = vpop.f32.mrf.mxu0
  %v6546 = vadd.f32 0.0, %v6545
  %6547 = vmatmul.bf16.gmra.mxu0 %v6519
  %v6548 = vpop.f32.mrf.mxu0
  %v6549 = vadd.f32 0.0, %v6548
  %v6550 = vpop.f32.mrf.mxu0
  %v6551 = vadd.f32 0.0, %v6550
  %6552 = vdwg.mxu0
  %v6553 = vrcp.pop %v6481
  %v6554 = vrcp.pop %v6484
  %v6555 = vrcp.pop %v6487
  %v6556 = vrcp.pop %v6490
  %v6557 = vrcp.pop %v6493
  %v6558 = vrcp.pop %v6496
  %v6559 = vrcp.pop %v6499
  %v6560 = vrcp.pop %v6502
  %v6561 = vmul.f32 %v6534, %v6553
  %v6562 = vmul.f32 %v6536, %v6554
  %v6563 = vmul.f32 %v6539, %v6555
  %v6564 = vmul.f32 %v6541, %v6556
  %v6565 = vmul.f32 %v6544, %v6557
  %v6566 = vmul.f32 %v6546, %v6558
  %v6567 = vmul.f32 %v6549, %v6559
  %v6568 = vmul.f32 %v6551, %v6560
  %v6569 = vpack.c.bf16 %v6366, %v6365
  %v6570 = vpack.c.bf16 %v6368, %v6367
  %v6571 = vpack.c.bf16 %v6370, %v6369
  %v6572 = vpack.c.bf16 %v6372, %v6371
  %v6573 = vpack.c.bf16 %v6562, %v6561
  %v6574 = vpack.c.bf16 %v6564, %v6563
  %v6575 = vpack.c.bf16 %v6566, %v6565
  %v6576 = vpack.c.bf16 %v6568, %v6567
  %v6579 = vunpack.c.l.b16 %v5791
  %v6580 = vunpack.c.l.b16 %v5792
  %v6581 = vpack.c.b16 %v6580, %v6579
  %v6584 = vsel %vm65, %v6569, 0
  %v6587 = vsel %vm65, %v6570, 0
  %v6590 = vsel %vm65, %v6571, 0
  %v6593 = vsel %vm65, %v6572, 0
  %v6596 = vsel %vm65, %v6573, 0
  %v6599 = vsel %vm65, %v6574, 0
  %v6602 = vsel %vm65, %v6575, 0
  %v6605 = vsel %vm65, %v6576, 0
  %6607 = vmatpush.bf16.msra.mxu0 0
  %6608 = vmatpush.bf16.msra.mxu0 0
  %6609 = vmatpush.bf16.msra.mxu0 0
  %6610 = vmatpush.bf16.msra.mxu0 0
  %6611 = vmatpush.bf16.msra.mxu0 0
  %6612 = vmatpush.bf16.msra.mxu0 0
  %6613 = vmatpush.bf16.msra.mxu0 0
  %6614 = vmatpush.bf16.msra.mxu0 %v6581
  %6615 = vmatmul.bf16.gmra.mxu0 %v6584
  %v6616 = vpop.f32.mrf.mxu0
  %v6617 = vadd.f32 0.0, %v6616
  %v6618 = vpop.f32.mrf.mxu0
  %v6619 = vadd.f32 0.0, %v6618
  %6620 = vmatmul.bf16.gmra.mxu0 %v6587
  %v6621 = vpop.f32.mrf.mxu0
  %v6622 = vadd.f32 0.0, %v6621
  %v6623 = vpop.f32.mrf.mxu0
  %v6624 = vadd.f32 0.0, %v6623
  %6625 = vmatmul.bf16.gmra.mxu0 %v6590
  %v6626 = vpop.f32.mrf.mxu0
  %v6627 = vadd.f32 0.0, %v6626
  %v6628 = vpop.f32.mrf.mxu0
  %v6629 = vadd.f32 0.0, %v6628
  %6630 = vmatmul.bf16.gmra.mxu0 %v6593
  %v6631 = vpop.f32.mrf.mxu0
  %v6632 = vadd.f32 0.0, %v6631
  %v6633 = vpop.f32.mrf.mxu0
  %v6634 = vadd.f32 0.0, %v6633
  %6635 = vmatmul.bf16.gmra.mxu0 %v6596
  %v6636 = vpop.f32.mrf.mxu0
  %v6637 = vadd.f32 0.0, %v6636
  %v6638 = vpop.f32.mrf.mxu0
  %v6639 = vadd.f32 0.0, %v6638
  %6640 = vmatmul.bf16.gmra.mxu0 %v6599
  %v6641 = vpop.f32.mrf.mxu0
  %v6642 = vadd.f32 0.0, %v6641
  %v6643 = vpop.f32.mrf.mxu0
  %v6644 = vadd.f32 0.0, %v6643
  %6645 = vmatmul.bf16.gmra.mxu0 %v6602
  %v6646 = vpop.f32.mrf.mxu0
  %v6647 = vadd.f32 0.0, %v6646
  %v6648 = vpop.f32.mrf.mxu0
  %v6649 = vadd.f32 0.0, %v6648
  %6650 = vmatmul.bf16.gmra.mxu0 %v6605
  %v6651 = vpop.f32.mrf.mxu0
  %v6652 = vadd.f32 0.0, %v6651
  %v6653 = vpop.f32.mrf.mxu0
  %v6654 = vadd.f32 0.0, %v6653
  %6655 = vdwg.mxu0
  %v6658 = vunpack.c.l.b16 %v5789
  %v6659 = vunpack.c.l.b16 %v5790
  %v6660 = vpack.c.b16 %v6659, %v6658
  %v6663 = vsel %vm65, %v6169, 0
  %v6666 = vsel %vm65, %v6170, 0
  %v6669 = vsel %vm65, %v6171, 0
  %v6672 = vsel %vm65, %v6172, 0
  %v6675 = vsel %vm65, %v6173, 0
  %v6678 = vsel %vm65, %v6174, 0
  %v6681 = vsel %vm65, %v6175, 0
  %v6684 = vsel %vm65, %v6176, 0
  %6686 = vmatpush.bf16.msra.mxu0 0
  %6687 = vmatpush.bf16.msra.mxu0 0
  %6688 = vmatpush.bf16.msra.mxu0 0
  %6689 = vmatpush.bf16.msra.mxu0 0
  %6690 = vmatpush.bf16.msra.mxu0 0
  %6691 = vmatpush.bf16.msra.mxu0 0
  %6692 = vmatpush.bf16.msra.mxu0 0
  %6693 = vmatpush.bf16.msra.mxu0 %v6660
  %6694 = vmatmul.bf16.gmra.mxu0 %v6663
  %v6695 = vpop.f32.mrf.mxu0
  %v6696 = vadd.f32 %v6617, %v6695
  %v6697 = vpop.f32.mrf.mxu0
  %v6698 = vadd.f32 %v6619, %v6697
  %6699 = vmatmul.bf16.gmra.mxu0 %v6666
  %v6700 = vpop.f32.mrf.mxu0
  %v6701 = vadd.f32 %v6622, %v6700
  %v6702 = vpop.f32.mrf.mxu0
  %v6703 = vadd.f32 %v6624, %v6702
  %6704 = vmatmul.bf16.gmra.mxu0 %v6669
  %v6705 = vpop.f32.mrf.mxu0
  %v6706 = vadd.f32 %v6627, %v6705
  %v6707 = vpop.f32.mrf.mxu0
  %v6708 = vadd.f32 %v6629, %v6707
  %6709 = vmatmul.bf16.gmra.mxu0 %v6672
  %v6710 = vpop.f32.mrf.mxu0
  %v6711 = vadd.f32 %v6632, %v6710
  %v6712 = vpop.f32.mrf.mxu0
  %v6713 = vadd.f32 %v6634, %v6712
  %6714 = vmatmul.bf16.gmra.mxu0 %v6675
  %v6715 = vpop.f32.mrf.mxu0
  %v6716 = vadd.f32 %v6637, %v6715
  %v6717 = vpop.f32.mrf.mxu0
  %v6718 = vadd.f32 %v6639, %v6717
  %6719 = vmatmul.bf16.gmra.mxu0 %v6678
  %v6720 = vpop.f32.mrf.mxu0
  %v6721 = vadd.f32 %v6642, %v6720
  %v6722 = vpop.f32.mrf.mxu0
  %v6723 = vadd.f32 %v6644, %v6722
  %6724 = vmatmul.bf16.gmra.mxu0 %v6681
  %v6725 = vpop.f32.mrf.mxu0
  %v6726 = vadd.f32 %v6647, %v6725
  %v6727 = vpop.f32.mrf.mxu0
  %v6728 = vadd.f32 %v6649, %v6727
  %6729 = vmatmul.bf16.gmra.mxu0 %v6684
  %v6730 = vpop.f32.mrf.mxu0
  %v6731 = vadd.f32 %v6652, %v6730
  %v6732 = vpop.f32.mrf.mxu0
  %v6733 = vadd.f32 %v6654, %v6732
  %6734 = vdwg.mxu0
  %v6735 = vld [vmem:[%s5 + $0x1b0] ss:$0 sm:$0xff]
  %v6736 = vadd.f32 %v6696, %v6735
  %v6737 = vadd.f32 %v6698, %v6735
  %v6738 = vadd.f32 %v6701, %v6735
  %v6739 = vadd.f32 %v6703, %v6735
  %v6740 = vadd.f32 %v6706, %v6735
  %v6741 = vadd.f32 %v6708, %v6735
  %v6742 = vadd.f32 %v6711, %v6735
  %v6743 = vadd.f32 %v6713, %v6735
  %v6744 = vadd.f32 %v6716, %v6735
  %v6745 = vadd.f32 %v6718, %v6735
  %v6746 = vadd.f32 %v6721, %v6735
  %v6747 = vadd.f32 %v6723, %v6735
  %v6748 = vadd.f32 %v6726, %v6735
  %v6749 = vadd.f32 %v6728, %v6735
  %v6750 = vadd.f32 %v6731, %v6735
  %v6751 = vadd.f32 %v6733, %v6735
  %v6752 = vadd.f32 %v5644, %v6736
  %v6753 = vadd.f32 %v5645, %v6737
  %v6754 = vadd.f32 %v5646, %v6738
  %v6755 = vadd.f32 %v5647, %v6739
  %v6756 = vadd.f32 %v5648, %v6740
  %v6757 = vadd.f32 %v5649, %v6741
  %v6758 = vadd.f32 %v5650, %v6742
  %v6759 = vadd.f32 %v5651, %v6743
  %v6760 = vadd.f32 %v5652, %v6744
  %v6761 = vadd.f32 %v5653, %v6745
  %v6762 = vadd.f32 %v5654, %v6746
  %v6763 = vadd.f32 %v5655, %v6747
  %v6764 = vadd.f32 %v5656, %v6748
  %v6765 = vadd.f32 %v5657, %v6749
  %v6766 = vadd.f32 %v5658, %v6750
  %v6767 = vadd.f32 %v5659, %v6751
  %v6768 = vsel %vm357, %v6752, 0.0
  %6769 = vadd.xlane.f32.xlu0 %v6768
  %v6770 = vpop.xlane.xlu0 %6769
  %v6771 = vsel %vm357, %v6753, 0.0
  %6772 = vadd.xlane.f32.xlu0 %v6771
  %v6773 = vpop.xlane.xlu0 %6772
  %v6774 = vsel %vm357, %v6754, 0.0
  %6775 = vadd.xlane.f32.xlu0 %v6774
  %v6776 = vpop.xlane.xlu0 %6775
  %v6777 = vsel %vm357, %v6755, 0.0
  %6778 = vadd.xlane.f32.xlu0 %v6777
  %v6779 = vpop.xlane.xlu0 %6778
  %v6780 = vsel %vm357, %v6756, 0.0
  %6781 = vadd.xlane.f32.xlu0 %v6780
  %v6782 = vpop.xlane.xlu0 %6781
  %v6783 = vsel %vm357, %v6757, 0.0
  %6784 = vadd.xlane.f32.xlu0 %v6783
  %v6785 = vpop.xlane.xlu0 %6784
  %v6786 = vsel %vm357, %v6758, 0.0
  %6787 = vadd.xlane.f32.xlu0 %v6786
  %v6788 = vpop.xlane.xlu0 %6787
  %v6789 = vsel %vm357, %v6759, 0.0
  %6790 = vadd.xlane.f32.xlu0 %v6789
  %v6791 = vpop.xlane.xlu0 %6790
  %v6792 = vsel %vm357, %v6760, 0.0
  %6793 = vadd.xlane.f32.xlu0 %v6792
  %v6794 = vpop.xlane.xlu0 %6793
  %v6795 = vsel %vm357, %v6761, 0.0
  %6796 = vadd.xlane.f32.xlu0 %v6795
  %v6797 = vpop.xlane.xlu0 %6796
  %v6798 = vsel %vm357, %v6762, 0.0
  %6799 = vadd.xlane.f32.xlu0 %v6798
  %v6800 = vpop.xlane.xlu0 %6799
  %v6801 = vsel %vm357, %v6763, 0.0
  %6802 = vadd.xlane.f32.xlu0 %v6801
  %v6803 = vpop.xlane.xlu0 %6802
  %v6804 = vsel %vm357, %v6764, 0.0
  %6805 = vadd.xlane.f32.xlu0 %v6804
  %v6806 = vpop.xlane.xlu0 %6805
  %v6807 = vsel %vm357, %v6765, 0.0
  %6808 = vadd.xlane.f32.xlu0 %v6807
  %v6809 = vpop.xlane.xlu0 %6808
  %v6810 = vsel %vm357, %v6766, 0.0
  %6811 = vadd.xlane.f32.xlu0 %v6810
  %v6812 = vpop.xlane.xlu0 %6811
  %v6813 = vsel %vm357, %v6767, 0.0
  %6814 = vadd.xlane.f32.xlu0 %v6813
  %v6815 = vpop.xlane.xlu0 %6814
  %v6816 = vmul.f32 %v6770, %v601
  %v6817 = vmul.f32 %v6773, %v601
  %v6818 = vmul.f32 %v6776, %v601
  %v6819 = vmul.f32 %v6779, %v601
  %v6820 = vmul.f32 %v6782, %v601
  %v6821 = vmul.f32 %v6785, %v601
  %v6822 = vmul.f32 %v6788, %v601
  %v6823 = vmul.f32 %v6791, %v601
  %v6824 = vmul.f32 %v6794, %v601
  %v6825 = vmul.f32 %v6797, %v601
  %v6826 = vmul.f32 %v6800, %v601
  %v6827 = vmul.f32 %v6803, %v601
  %v6828 = vmul.f32 %v6806, %v601
  %v6829 = vmul.f32 %v6809, %v601
  %v6830 = vmul.f32 %v6812, %v601
  %v6831 = vmul.f32 %v6815, %v601
  %v6832 = vsub.f32 %v6752, %v6816
  %v6833 = vsub.f32 %v6753, %v6817
  %v6834 = vsub.f32 %v6754, %v6818
  %v6835 = vsub.f32 %v6755, %v6819
  %v6836 = vsub.f32 %v6756, %v6820
  %v6837 = vsub.f32 %v6757, %v6821
  %v6838 = vsub.f32 %v6758, %v6822
  %v6839 = vsub.f32 %v6759, %v6823
  %v6840 = vsub.f32 %v6760, %v6824
  %v6841 = vsub.f32 %v6761, %v6825
  %v6842 = vsub.f32 %v6762, %v6826
  %v6843 = vsub.f32 %v6763, %v6827
  %v6844 = vsub.f32 %v6764, %v6828
  %v6845 = vsub.f32 %v6765, %v6829
  %v6846 = vsub.f32 %v6766, %v6830
  %v6847 = vsub.f32 %v6767, %v6831
  %v6848 = vmul.f32 %v6832, %v6832
  %v6849 = vmul.f32 %v6833, %v6833
  %v6850 = vmul.f32 %v6834, %v6834
  %v6851 = vmul.f32 %v6835, %v6835
  %v6852 = vmul.f32 %v6836, %v6836
  %v6853 = vmul.f32 %v6837, %v6837
  %v6854 = vmul.f32 %v6838, %v6838
  %v6855 = vmul.f32 %v6839, %v6839
  %v6856 = vmul.f32 %v6840, %v6840
  %v6857 = vmul.f32 %v6841, %v6841
  %v6858 = vmul.f32 %v6842, %v6842
  %v6859 = vmul.f32 %v6843, %v6843
  %v6860 = vmul.f32 %v6844, %v6844
  %v6861 = vmul.f32 %v6845, %v6845
  %v6862 = vmul.f32 %v6846, %v6846
  %v6863 = vmul.f32 %v6847, %v6847
  %v6864 = vsel %vm357, %v6848, 0.0
  %6865 = vadd.xlane.f32.xlu0 %v6864
  %v6866 = vpop.xlane.xlu0 %6865
  %v6867 = vsel %vm357, %v6849, 0.0
  %6868 = vadd.xlane.f32.xlu0 %v6867
  %v6869 = vpop.xlane.xlu0 %6868
  %v6870 = vsel %vm357, %v6850, 0.0
  %6871 = vadd.xlane.f32.xlu0 %v6870
  %v6872 = vpop.xlane.xlu0 %6871
  %v6873 = vsel %vm357, %v6851, 0.0
  %6874 = vadd.xlane.f32.xlu0 %v6873
  %v6875 = vpop.xlane.xlu0 %6874
  %v6876 = vsel %vm357, %v6852, 0.0
  %6877 = vadd.xlane.f32.xlu0 %v6876
  %v6878 = vpop.xlane.xlu0 %6877
  %v6879 = vsel %vm357, %v6853, 0.0
  %6880 = vadd.xlane.f32.xlu0 %v6879
  %v6881 = vpop.xlane.xlu0 %6880
  %v6882 = vsel %vm357, %v6854, 0.0
  %6883 = vadd.xlane.f32.xlu0 %v6882
  %v6884 = vpop.xlane.xlu0 %6883
  %v6885 = vsel %vm357, %v6855, 0.0
  %6886 = vadd.xlane.f32.xlu0 %v6885
  %v6887 = vpop.xlane.xlu0 %6886
  %v6888 = vsel %vm357, %v6856, 0.0
  %6889 = vadd.xlane.f32.xlu0 %v6888
  %v6890 = vpop.xlane.xlu0 %6889
  %v6891 = vsel %vm357, %v6857, 0.0
  %6892 = vadd.xlane.f32.xlu0 %v6891
  %v6893 = vpop.xlane.xlu0 %6892
  %v6894 = vsel %vm357, %v6858, 0.0
  %6895 = vadd.xlane.f32.xlu0 %v6894
  %v6896 = vpop.xlane.xlu0 %6895
  %v6897 = vsel %vm357, %v6859, 0.0
  %6898 = vadd.xlane.f32.xlu0 %v6897
  %v6899 = vpop.xlane.xlu0 %6898
  %v6900 = vsel %vm357, %v6860, 0.0
  %6901 = vadd.xlane.f32.xlu0 %v6900
  %v6902 = vpop.xlane.xlu0 %6901
  %v6903 = vsel %vm357, %v6861, 0.0
  %6904 = vadd.xlane.f32.xlu0 %v6903
  %v6905 = vpop.xlane.xlu0 %6904
  %v6906 = vsel %vm357, %v6862, 0.0
  %6907 = vadd.xlane.f32.xlu0 %v6906
  %v6908 = vpop.xlane.xlu0 %6907
  %v6909 = vsel %vm357, %v6863, 0.0
  %6910 = vadd.xlane.f32.xlu0 %v6909
  %v6911 = vpop.xlane.xlu0 %6910
  %v6912 = vmul.f32 %v6866, %v601
  %v6913 = vmul.f32 %v6869, %v601
  %v6914 = vmul.f32 %v6872, %v601
  %v6915 = vmul.f32 %v6875, %v601
  %v6916 = vmul.f32 %v6878, %v601
  %v6917 = vmul.f32 %v6881, %v601
  %v6918 = vmul.f32 %v6884, %v601
  %v6919 = vmul.f32 %v6887, %v601
  %v6920 = vmul.f32 %v6890, %v601
  %v6921 = vmul.f32 %v6893, %v601
  %v6922 = vmul.f32 %v6896, %v601
  %v6923 = vmul.f32 %v6899, %v601
  %v6924 = vmul.f32 %v6902, %v601
  %v6925 = vmul.f32 %v6905, %v601
  %v6926 = vmul.f32 %v6908, %v601
  %v6927 = vmul.f32 %v6911, %v601
  %v6928 = vadd.f32 %v6912, 1e-06
  %v6929 = vadd.f32 %v6913, 1e-06
  %v6930 = vadd.f32 %v6914, 1e-06
  %v6931 = vadd.f32 %v6915, 1e-06
  %v6932 = vadd.f32 %v6916, 1e-06
  %v6933 = vadd.f32 %v6917, 1e-06
  %v6934 = vadd.f32 %v6918, 1e-06
  %v6935 = vadd.f32 %v6919, 1e-06
  %v6936 = vadd.f32 %v6920, 1e-06
  %v6937 = vadd.f32 %v6921, 1e-06
  %v6938 = vadd.f32 %v6922, 1e-06
  %v6939 = vadd.f32 %v6923, 1e-06
  %v6940 = vadd.f32 %v6924, 1e-06
  %v6941 = vadd.f32 %v6925, 1e-06
  %v6942 = vadd.f32 %v6926, 1e-06
  %v6943 = vadd.f32 %v6927, 1e-06
  %v6944 = vrsqrt.pop %v6928
  %v6945 = vmul.f32 %v6944, %v6928
  %v6946 = vmul.f32 %v6945, %v6944
  %v6947 = vmul.f32 0.5, %v6946
  %v6948 = vsub.f32 1.5, %v6947
  %v6949 = vmul.f32 %v6944, %v6948
  %vm6950 = vweird.f32 %v6928
  %vm6951 = vweird.f32 %v6944
  %vm6952 = vmor %vm6950, %vm6951
  %v6953 = vsel %vm6952, %v6944, %v6949
  %v6954 = vrsqrt.pop %v6929
  %v6955 = vmul.f32 %v6954, %v6929
  %v6956 = vmul.f32 %v6955, %v6954
  %v6957 = vmul.f32 0.5, %v6956
  %v6958 = vsub.f32 1.5, %v6957
  %v6959 = vmul.f32 %v6954, %v6958
  %vm6960 = vweird.f32 %v6929
  %vm6961 = vweird.f32 %v6954
  %vm6962 = vmor %vm6960, %vm6961
  %v6963 = vsel %vm6962, %v6954, %v6959
  %v6964 = vrsqrt.pop %v6930
  %v6965 = vmul.f32 %v6964, %v6930
  %v6966 = vmul.f32 %v6965, %v6964
  %v6967 = vmul.f32 0.5, %v6966
  %v6968 = vsub.f32 1.5, %v6967
  %v6969 = vmul.f32 %v6964, %v6968
  %vm6970 = vweird.f32 %v6930
  %vm6971 = vweird.f32 %v6964
  %vm6972 = vmor %vm6970, %vm6971
  %v6973 = vsel %vm6972, %v6964, %v6969
  %v6974 = vrsqrt.pop %v6931
  %v6975 = vmul.f32 %v6974, %v6931
  %v6976 = vmul.f32 %v6975, %v6974
  %v6977 = vmul.f32 0.5, %v6976
  %v6978 = vsub.f32 1.5, %v6977
  %v6979 = vmul.f32 %v6974, %v6978
  %vm6980 = vweird.f32 %v6931
  %vm6981 = vweird.f32 %v6974
  %vm6982 = vmor %vm6980, %vm6981
  %v6983 = vsel %vm6982, %v6974, %v6979
  %v6984 = vrsqrt.pop %v6932
  %v6985 = vmul.f32 %v6984, %v6932
  %v6986 = vmul.f32 %v6985, %v6984
  %v6987 = vmul.f32 0.5, %v6986
  %v6988 = vsub.f32 1.5, %v6987
  %v6989 = vmul.f32 %v6984, %v6988
  %vm6990 = vweird.f32 %v6932
  %vm6991 = vweird.f32 %v6984
  %vm6992 = vmor %vm6990, %vm6991
  %v6993 = vsel %vm6992, %v6984, %v6989
  %v6994 = vrsqrt.pop %v6933
  %v6995 = vmul.f32 %v6994, %v6933
  %v6996 = vmul.f32 %v6995, %v6994
  %v6997 = vmul.f32 0.5, %v6996
  %v6998 = vsub.f32 1.5, %v6997
  %v6999 = vmul.f32 %v6994, %v6998
  %vm7000 = vweird.f32 %v6933
  %vm7001 = vweird.f32 %v6994
  %vm7002 = vmor %vm7000, %vm7001
  %v7003 = vsel %vm7002, %v6994, %v6999
  %v7004 = vrsqrt.pop %v6934
  %v7005 = vmul.f32 %v7004, %v6934
  %v7006 = vmul.f32 %v7005, %v7004
  %v7007 = vmul.f32 0.5, %v7006
  %v7008 = vsub.f32 1.5, %v7007
  %v7009 = vmul.f32 %v7004, %v7008
  %vm7010 = vweird.f32 %v6934
  %vm7011 = vweird.f32 %v7004
  %vm7012 = vmor %vm7010, %vm7011
  %v7013 = vsel %vm7012, %v7004, %v7009
  %v7014 = vrsqrt.pop %v6935
  %v7015 = vmul.f32 %v7014, %v6935
  %v7016 = vmul.f32 %v7015, %v7014
  %v7017 = vmul.f32 0.5, %v7016
  %v7018 = vsub.f32 1.5, %v7017
  %v7019 = vmul.f32 %v7014, %v7018
  %vm7020 = vweird.f32 %v6935
  %vm7021 = vweird.f32 %v7014
  %vm7022 = vmor %vm7020, %vm7021
  %v7023 = vsel %vm7022, %v7014, %v7019
  %v7024 = vrsqrt.pop %v6936
  %v7025 = vmul.f32 %v7024, %v6936
  %v7026 = vmul.f32 %v7025, %v7024
  %v7027 = vmul.f32 0.5, %v7026
  %v7028 = vsub.f32 1.5, %v7027
  %v7029 = vmul.f32 %v7024, %v7028
  %vm7030 = vweird.f32 %v6936
  %vm7031 = vweird.f32 %v7024
  %vm7032 = vmor %vm7030, %vm7031
  %v7033 = vsel %vm7032, %v7024, %v7029
  %v7034 = vrsqrt.pop %v6937
  %v7035 = vmul.f32 %v7034, %v6937
  %v7036 = vmul.f32 %v7035, %v7034
  %v7037 = vmul.f32 0.5, %v7036
  %v7038 = vsub.f32 1.5, %v7037
  %v7039 = vmul.f32 %v7034, %v7038
  %vm7040 = vweird.f32 %v6937
  %vm7041 = vweird.f32 %v7034
  %vm7042 = vmor %vm7040, %vm7041
  %v7043 = vsel %vm7042, %v7034, %v7039
  %v7044 = vrsqrt.pop %v6938
  %v7045 = vmul.f32 %v7044, %v6938
  %v7046 = vmul.f32 %v7045, %v7044
  %v7047 = vmul.f32 0.5, %v7046
  %v7048 = vsub.f32 1.5, %v7047
  %v7049 = vmul.f32 %v7044, %v7048
  %vm7050 = vweird.f32 %v6938
  %vm7051 = vweird.f32 %v7044
  %vm7052 = vmor %vm7050, %vm7051
  %v7053 = vsel %vm7052, %v7044, %v7049
  %v7054 = vrsqrt.pop %v6939
  %v7055 = vmul.f32 %v7054, %v6939
  %v7056 = vmul.f32 %v7055, %v7054
  %v7057 = vmul.f32 0.5, %v7056
  %v7058 = vsub.f32 1.5, %v7057
  %v7059 = vmul.f32 %v7054, %v7058
  %vm7060 = vweird.f32 %v6939
  %vm7061 = vweird.f32 %v7054
  %vm7062 = vmor %vm7060, %vm7061
  %v7063 = vsel %vm7062, %v7054, %v7059
  %v7064 = vrsqrt.pop %v6940
  %v7065 = vmul.f32 %v7064, %v6940
  %v7066 = vmul.f32 %v7065, %v7064
  %v7067 = vmul.f32 0.5, %v7066
  %v7068 = vsub.f32 1.5, %v7067
  %v7069 = vmul.f32 %v7064, %v7068
  %vm7070 = vweird.f32 %v6940
  %vm7071 = vweird.f32 %v7064
  %vm7072 = vmor %vm7070, %vm7071
  %v7073 = vsel %vm7072, %v7064, %v7069
  %v7074 = vrsqrt.pop %v6941
  %v7075 = vmul.f32 %v7074, %v6941
  %v7076 = vmul.f32 %v7075, %v7074
  %v7077 = vmul.f32 0.5, %v7076
  %v7078 = vsub.f32 1.5, %v7077
  %v7079 = vmul.f32 %v7074, %v7078
  %vm7080 = vweird.f32 %v6941
  %vm7081 = vweird.f32 %v7074
  %vm7082 = vmor %vm7080, %vm7081
  %v7083 = vsel %vm7082, %v7074, %v7079
  %v7084 = vrsqrt.pop %v6942
  %v7085 = vmul.f32 %v7084, %v6942
  %v7086 = vmul.f32 %v7085, %v7084
  %v7087 = vmul.f32 0.5, %v7086
  %v7088 = vsub.f32 1.5, %v7087
  %v7089 = vmul.f32 %v7084, %v7088
  %vm7090 = vweird.f32 %v6942
  %vm7091 = vweird.f32 %v7084
  %vm7092 = vmor %vm7090, %vm7091
  %v7093 = vsel %vm7092, %v7084, %v7089
  %v7094 = vrsqrt.pop %v6943
  %v7095 = vmul.f32 %v7094, %v6943
  %v7096 = vmul.f32 %v7095, %v7094
  %v7097 = vmul.f32 0.5, %v7096
  %v7098 = vsub.f32 1.5, %v7097
  %v7099 = vmul.f32 %v7094, %v7098
  %vm7100 = vweird.f32 %v6943
  %vm7101 = vweird.f32 %v7094
  %vm7102 = vmor %vm7100, %vm7101
  %v7103 = vsel %vm7102, %v7094, %v7099
  %v7104 = vmul.f32 %v6832, %v6953
  %v7105 = vmul.f32 %v6833, %v6963
  %v7106 = vmul.f32 %v6834, %v6973
  %v7107 = vmul.f32 %v6835, %v6983
  %v7108 = vmul.f32 %v6836, %v6993
  %v7109 = vmul.f32 %v6837, %v7003
  %v7110 = vmul.f32 %v6838, %v7013
  %v7111 = vmul.f32 %v6839, %v7023
  %v7112 = vmul.f32 %v6840, %v7033
  %v7113 = vmul.f32 %v6841, %v7043
  %v7114 = vmul.f32 %v6842, %v7053
  %v7115 = vmul.f32 %v6843, %v7063
  %v7116 = vmul.f32 %v6844, %v7073
  %v7117 = vmul.f32 %v6845, %v7083
  %v7118 = vmul.f32 %v6846, %v7093
  %v7119 = vmul.f32 %v6847, %v7103
  %v7120 = vadd.f32 %v4080, %v3621
  %v7121 = vadd.f32 %v4080, %v3625
  %v7122 = vadd.f32 %v7121, 1.0
  %v7123 = vperm.slane %v7122, 4
  %v7124 = vmul.f32 %v7104, %v7123
  %v7125 = vmul.f32 %v7105, %v7123
  %v7126 = vmul.f32 %v7106, %v7123
  %v7127 = vmul.f32 %v7107, %v7123
  %v7128 = vmul.f32 %v7108, %v7123
  %v7129 = vmul.f32 %v7109, %v7123
  %v7130 = vmul.f32 %v7110, %v7123
  %v7131 = vmul.f32 %v7111, %v7123
  %v7132 = vperm.slane %v7120, 3
  %v7133 = vadd.f32 %v7124, %v7132
  %v7134 = vadd.f32 %v7125, %v7132
  %v7135 = vadd.f32 %v7126, %v7132
  %v7136 = vadd.f32 %v7127, %v7132
  %v7137 = vadd.f32 %v7128, %v7132
  %v7138 = vadd.f32 %v7129, %v7132
  %v7139 = vadd.f32 %v7130, %v7132
  %v7140 = vadd.f32 %v7131, %v7132
  %v7141 = vadd.f32 %v4080, %v3648
  %v7142 = vadd.f32 %v4080, %v3651
  %v7143 = vadd.f32 %v7142, 1.0
  %v7144 = vperm.slane %v7143, 4
  %v7145 = vmul.f32 %v7112, %v7144
  %v7146 = vmul.f32 %v7113, %v7144
  %v7147 = vmul.f32 %v7114, %v7144
  %v7148 = vmul.f32 %v7115, %v7144
  %v7149 = vmul.f32 %v7116, %v7144
  %v7150 = vmul.f32 %v7117, %v7144
  %v7151 = vmul.f32 %v7118, %v7144
  %v7152 = vmul.f32 %v7119, %v7144
  %v7153 = vperm.slane %v7141, 3
  %v7154 = vadd.f32 %v7145, %v7153
  %v7155 = vadd.f32 %v7146, %v7153
  %v7156 = vadd.f32 %v7147, %v7153
  %v7157 = vadd.f32 %v7148, %v7153
  %v7158 = vadd.f32 %v7149, %v7153
  %v7159 = vadd.f32 %v7150, %v7153
  %v7160 = vadd.f32 %v7151, %v7153
  %v7161 = vadd.f32 %v7152, %v7153
  %v7162 = vld [vmem:[%s4 + $0x370] sm:$0xf]
  %v7163 = vld [vmem:[%s4 + $0x378] sm:$0xf]
  %v7164 = vld [vmem:[%s4 + $0x380] sm:$0xf]
  %v7165 = vld [vmem:[%s4 + $0x388] sm:$0xf]
  %v7166 = vpack.c.bf16 %v7134, %v7133
  %v7167 = vpack.c.bf16 %v7136, %v7135
  %v7168 = vpack.c.bf16 %v7138, %v7137
  %v7169 = vpack.c.bf16 %v7140, %v7139
  %v7170 = vpack.c.bf16 %v7155, %v7154
  %v7171 = vpack.c.bf16 %v7157, %v7156
  %v7172 = vpack.c.bf16 %v7159, %v7158
  %v7173 = vpack.c.bf16 %v7161, %v7160
  %v7174 = vld [vmem:[%s5 + $0x1c0] ss:$0 sm:$0xff]
  %v7179 = vunpack.c.l.b16 %v7162
  %v7180 = vunpack.c.l.b16 %v7163
  %v7181 = vunpack.c.l.b16 %v7164
  %v7182 = vunpack.c.l.b16 %v7165
  %v7183 = vpack.c.b16 %v7180, %v7179
  %v7184 = vpack.c.b16 %v7182, %v7181
  %v7188 = vsel %vm357, %v7166, 0
  %v7191 = vsel %vm357, %v7167, 0
  %v7194 = vsel %vm357, %v7168, 0
  %v7197 = vsel %vm357, %v7169, 0
  %v7200 = vsel %vm357, %v7170, 0
  %v7203 = vsel %vm357, %v7171, 0
  %v7206 = vsel %vm357, %v7172, 0
  %v7209 = vsel %vm357, %v7173, 0
  %7211 = vmatpush.bf16.msra.mxu0 0
  %7212 = vmatpush.bf16.msra.mxu0 0
  %7213 = vmatpush.bf16.msra.mxu0 0
  %7214 = vmatpush.bf16.msra.mxu0 0
  %7215 = vmatpush.bf16.msra.mxu0 0
  %7216 = vmatpush.bf16.msra.mxu0 0
  %7217 = vmatpush.bf16.msra.mxu0 %v7184
  %7218 = vmatpush.bf16.msra.mxu0 %v7183
  %7219 = vmatmul.bf16.gmra.mxu0 %v7188
  %v7220 = vpop.f32.mrf.mxu0
  %v7221 = vadd.f32 %v7174, %v7220
  %v7222 = vpop.f32.mrf.mxu0
  %v7223 = vadd.f32 %v7174, %v7222
  %7224 = vmatmul.bf16.gmra.mxu0 %v7191
  %v7225 = vpop.f32.mrf.mxu0
  %v7226 = vadd.f32 %v7174, %v7225
  %v7227 = vpop.f32.mrf.mxu0
  %v7228 = vadd.f32 %v7174, %v7227
  %7229 = vmatmul.bf16.gmra.mxu0 %v7194
  %v7230 = vpop.f32.mrf.mxu0
  %v7231 = vadd.f32 %v7174, %v7230
  %v7232 = vpop.f32.mrf.mxu0
  %v7233 = vadd.f32 %v7174, %v7232
  %7234 = vmatmul.bf16.gmra.mxu0 %v7197
  %v7235 = vpop.f32.mrf.mxu0
  %v7236 = vadd.f32 %v7174, %v7235
  %v7237 = vpop.f32.mrf.mxu0
  %v7238 = vadd.f32 %v7174, %v7237
  %7239 = vmatmul.bf16.gmra.mxu0 %v7200
  %v7240 = vpop.f32.mrf.mxu0
  %v7241 = vadd.f32 %v7174, %v7240
  %v7242 = vpop.f32.mrf.mxu0
  %v7243 = vadd.f32 %v7174, %v7242
  %7244 = vmatmul.bf16.gmra.mxu0 %v7203
  %v7245 = vpop.f32.mrf.mxu0
  %v7246 = vadd.f32 %v7174, %v7245
  %v7247 = vpop.f32.mrf.mxu0
  %v7248 = vadd.f32 %v7174, %v7247
  %7249 = vmatmul.bf16.gmra.mxu0 %v7206
  %v7250 = vpop.f32.mrf.mxu0
  %v7251 = vadd.f32 %v7174, %v7250
  %v7252 = vpop.f32.mrf.mxu0
  %v7253 = vadd.f32 %v7174, %v7252
  %7254 = vmatmul.bf16.gmra.mxu0 %v7209
  %v7255 = vpop.f32.mrf.mxu0
  %v7256 = vadd.f32 %v7174, %v7255
  %v7257 = vpop.f32.mrf.mxu0
  %v7258 = vadd.f32 %v7174, %v7257
  %7259 = vdwg.mxu0
  %v7260 = vmul.f32 %v7221, 0.5
  %v7261 = vmul.f32 %v7223, 0.5
  %v7262 = vmul.f32 %v7226, 0.5
  %v7263 = vmul.f32 %v7228, 0.5
  %v7264 = vmul.f32 %v7231, 0.5
  %v7265 = vmul.f32 %v7233, 0.5
  %v7266 = vmul.f32 %v7236, 0.5
  %v7267 = vmul.f32 %v7238, 0.5
  %v7268 = vmul.f32 %v7241, 0.5
  %v7269 = vmul.f32 %v7243, 0.5
  %v7270 = vmul.f32 %v7246, 0.5
  %v7271 = vmul.f32 %v7248, 0.5
  %v7272 = vmul.f32 %v7251, 0.5
  %v7273 = vmul.f32 %v7253, 0.5
  %v7274 = vmul.f32 %v7256, 0.5
  %v7275 = vmul.f32 %v7258, 0.5
  %v7276 = vmul.f32 %v7221, 0.044715
  %v7277 = vmul.f32 %v7223, 0.044715
  %v7278 = vmul.f32 %v7226, 0.044715
  %v7279 = vmul.f32 %v7228, 0.044715
  %v7280 = vmul.f32 %v7231, 0.044715
  %v7281 = vmul.f32 %v7233, 0.044715
  %v7282 = vmul.f32 %v7236, 0.044715
  %v7283 = vmul.f32 %v7238, 0.044715
  %v7284 = vmul.f32 %v7241, 0.044715
  %v7285 = vmul.f32 %v7243, 0.044715
  %v7286 = vmul.f32 %v7246, 0.044715
  %v7287 = vmul.f32 %v7248, 0.044715
  %v7288 = vmul.f32 %v7251, 0.044715
  %v7289 = vmul.f32 %v7253, 0.044715
  %v7290 = vmul.f32 %v7256, 0.044715
  %v7291 = vmul.f32 %v7258, 0.044715
  %v7292 = vmul.f32 %v7276, %v7221
  %v7293 = vmul.f32 %v7277, %v7223
  %v7294 = vmul.f32 %v7278, %v7226
  %v7295 = vmul.f32 %v7279, %v7228
  %v7296 = vmul.f32 %v7280, %v7231
  %v7297 = vmul.f32 %v7281, %v7233
  %v7298 = vmul.f32 %v7282, %v7236
  %v7299 = vmul.f32 %v7283, %v7238
  %v7300 = vmul.f32 %v7284, %v7241
  %v7301 = vmul.f32 %v7285, %v7243
  %v7302 = vmul.f32 %v7286, %v7246
  %v7303 = vmul.f32 %v7287, %v7248
  %v7304 = vmul.f32 %v7288, %v7251
  %v7305 = vmul.f32 %v7289, %v7253
  %v7306 = vmul.f32 %v7290, %v7256
  %v7307 = vmul.f32 %v7291, %v7258
  %v7308 = vmul.f32 %v7292, %v7221
  %v7309 = vmul.f32 %v7293, %v7223
  %v7310 = vmul.f32 %v7294, %v7226
  %v7311 = vmul.f32 %v7295, %v7228
  %v7312 = vmul.f32 %v7296, %v7231
  %v7313 = vmul.f32 %v7297, %v7233
  %v7314 = vmul.f32 %v7298, %v7236
  %v7315 = vmul.f32 %v7299, %v7238
  %v7316 = vmul.f32 %v7300, %v7241
  %v7317 = vmul.f32 %v7301, %v7243
  %v7318 = vmul.f32 %v7302, %v7246
  %v7319 = vmul.f32 %v7303, %v7248
  %v7320 = vmul.f32 %v7304, %v7251
  %v7321 = vmul.f32 %v7305, %v7253
  %v7322 = vmul.f32 %v7306, %v7256
  %v7323 = vmul.f32 %v7307, %v7258
  %v7324 = vadd.f32 %v7221, %v7308
  %v7325 = vadd.f32 %v7223, %v7309
  %v7326 = vadd.f32 %v7226, %v7310
  %v7327 = vadd.f32 %v7228, %v7311
  %v7328 = vadd.f32 %v7231, %v7312
  %v7329 = vadd.f32 %v7233, %v7313
  %v7330 = vadd.f32 %v7236, %v7314
  %v7331 = vadd.f32 %v7238, %v7315
  %v7332 = vadd.f32 %v7241, %v7316
  %v7333 = vadd.f32 %v7243, %v7317
  %v7334 = vadd.f32 %v7246, %v7318
  %v7335 = vadd.f32 %v7248, %v7319
  %v7336 = vadd.f32 %v7251, %v7320
  %v7337 = vadd.f32 %v7253, %v7321
  %v7338 = vadd.f32 %v7256, %v7322
  %v7339 = vadd.f32 %v7258, %v7323
  %v7340 = vmul.f32 %v7324, 0.7978846
  %v7341 = vmul.f32 %v7325, 0.7978846
  %v7342 = vmul.f32 %v7326, 0.7978846
  %v7343 = vmul.f32 %v7327, 0.7978846
  %v7344 = vmul.f32 %v7328, 0.7978846
  %v7345 = vmul.f32 %v7329, 0.7978846
  %v7346 = vmul.f32 %v7330, 0.7978846
  %v7347 = vmul.f32 %v7331, 0.7978846
  %v7348 = vmul.f32 %v7332, 0.7978846
  %v7349 = vmul.f32 %v7333, 0.7978846
  %v7350 = vmul.f32 %v7334, 0.7978846
  %v7351 = vmul.f32 %v7335, 0.7978846
  %v7352 = vmul.f32 %v7336, 0.7978846
  %v7353 = vmul.f32 %v7337, 0.7978846
  %v7354 = vmul.f32 %v7338, 0.7978846
  %v7355 = vmul.f32 %v7339, 0.7978846
  %v7356 = vtanh.pop %v7340
  %v7357 = vtanh.pop %v7341
  %v7358 = vtanh.pop %v7342
  %v7359 = vtanh.pop %v7343
  %v7360 = vtanh.pop %v7344
  %v7361 = vtanh.pop %v7345
  %v7362 = vtanh.pop %v7346
  %v7363 = vtanh.pop %v7347
  %v7364 = vtanh.pop %v7348
  %v7365 = vtanh.pop %v7349
  %v7366 = vtanh.pop %v7350
  %v7367 = vtanh.pop %v7351
  %v7368 = vtanh.pop %v7352
  %v7369 = vtanh.pop %v7353
  %v7370 = vtanh.pop %v7354
  %v7371 = vtanh.pop %v7355
  %v7372 = vadd.f32 %v7356, 1.0
  %v7373 = vadd.f32 %v7357, 1.0
  %v7374 = vadd.f32 %v7358, 1.0
  %v7375 = vadd.f32 %v7359, 1.0
  %v7376 = vadd.f32 %v7360, 1.0
  %v7377 = vadd.f32 %v7361, 1.0
  %v7378 = vadd.f32 %v7362, 1.0
  %v7379 = vadd.f32 %v7363, 1.0
  %v7380 = vadd.f32 %v7364, 1.0
  %v7381 = vadd.f32 %v7365, 1.0
  %v7382 = vadd.f32 %v7366, 1.0
  %v7383 = vadd.f32 %v7367, 1.0
  %v7384 = vadd.f32 %v7368, 1.0
  %v7385 = vadd.f32 %v7369, 1.0
  %v7386 = vadd.f32 %v7370, 1.0
  %v7387 = vadd.f32 %v7371, 1.0
  %v7388 = vmul.f32 %v7260, %v7372
  %v7389 = vmul.f32 %v7261, %v7373
  %v7390 = vmul.f32 %v7262, %v7374
  %v7391 = vmul.f32 %v7263, %v7375
  %v7392 = vmul.f32 %v7264, %v7376
  %v7393 = vmul.f32 %v7265, %v7377
  %v7394 = vmul.f32 %v7266, %v7378
  %v7395 = vmul.f32 %v7267, %v7379
  %v7396 = vmul.f32 %v7268, %v7380
  %v7397 = vmul.f32 %v7269, %v7381
  %v7398 = vmul.f32 %v7270, %v7382
  %v7399 = vmul.f32 %v7271, %v7383
  %v7400 = vmul.f32 %v7272, %v7384
  %v7401 = vmul.f32 %v7273, %v7385
  %v7402 = vmul.f32 %v7274, %v7386
  %v7403 = vmul.f32 %v7275, %v7387
  %v7404 = vld [vmem:[%s4 + $0x390] sm:$0xf]
  %v7405 = vld [vmem:[%s4 + $0x398] sm:$0xf]
  %v7406 = vld [vmem:[%s4 + $0x3a0] sm:$0xf]
  %v7407 = vld [vmem:[%s4 + $0x3a8] sm:$0xf]
  %v7408 = vld [vmem:[%s4 + $0x3b0] sm:$0xf]
  %v7409 = vld [vmem:[%s4 + $0x3b8] sm:$0xf]
  %v7410 = vld [vmem:[%s4 + $0x3c0] sm:$0xf]
  %v7411 = vld [vmem:[%s4 + $0x3c8] sm:$0xf]
  %v7412 = vld [vmem:[%s4 + $0x3d0] sm:$0xf]
  %v7413 = vld [vmem:[%s4 + $0x3d8] sm:$0xf]
  %v7414 = vld [vmem:[%s4 + $0x3e0] sm:$0xf]
  %v7415 = vld [vmem:[%s4 + $0x3e8] sm:$0xf]
  %v7416 = vld [vmem:[%s4 + $0x3f0] sm:$0xf]
  %v7417 = vld [vmem:[%s4 + $0x3f8] sm:$0xf]
  %v7418 = vld [vmem:[%s4 + $0x400] sm:$0xf]
  %v7419 = vld [vmem:[%s4 + $0x408] sm:$0xf]
  %v7420 = vpack.c.bf16 %v7389, %v7388
  %v7421 = vpack.c.bf16 %v7391, %v7390
  %v7422 = vpack.c.bf16 %v7393, %v7392
  %v7423 = vpack.c.bf16 %v7395, %v7394
  %v7424 = vpack.c.bf16 %v7397, %v7396
  %v7425 = vpack.c.bf16 %v7399, %v7398
  %v7426 = vpack.c.bf16 %v7401, %v7400
  %v7427 = vpack.c.bf16 %v7403, %v7402
  %v7428 = vld [vmem:[%s5 + $0x1d0] ss:$0 sm:$0xff]
  %v7445 = vunpack.c.l.b16 %v7404
  %v7446 = vunpack.c.l.b16 %v7405
  %v7447 = vunpack.c.l.b16 %v7406
  %v7448 = vunpack.c.l.b16 %v7407
  %v7449 = vunpack.c.l.b16 %v7408
  %v7450 = vunpack.c.l.b16 %v7409
  %v7451 = vunpack.c.l.b16 %v7410
  %v7452 = vunpack.c.l.b16 %v7411
  %v7453 = vunpack.c.l.b16 %v7412
  %v7454 = vunpack.c.l.b16 %v7413
  %v7455 = vunpack.c.l.b16 %v7414
  %v7456 = vunpack.c.l.b16 %v7415
  %v7457 = vunpack.c.l.b16 %v7416
  %v7458 = vunpack.c.l.b16 %v7417
  %v7459 = vunpack.c.l.b16 %v7418
  %v7460 = vunpack.c.l.b16 %v7419
  %v7461 = vpack.c.b16 %v7446, %v7445
  %v7462 = vpack.c.b16 %v7448, %v7447
  %v7463 = vpack.c.b16 %v7450, %v7449
  %v7464 = vpack.c.b16 %v7452, %v7451
  %v7465 = vpack.c.b16 %v7454, %v7453
  %v7466 = vpack.c.b16 %v7456, %v7455
  %v7467 = vpack.c.b16 %v7458, %v7457
  %v7468 = vpack.c.b16 %v7460, %v7459
  %7477 = vmatpush.bf16.msra.mxu0 %v7468
  %7478 = vmatpush.bf16.msra.mxu0 %v7467
  %7479 = vmatpush.bf16.msra.mxu0 %v7466
  %7480 = vmatpush.bf16.msra.mxu0 %v7465
  %7481 = vmatpush.bf16.msra.mxu0 %v7464
  %7482 = vmatpush.bf16.msra.mxu0 %v7463
  %7483 = vmatpush.bf16.msra.mxu0 %v7462
  %7484 = vmatpush.bf16.msra.mxu0 %v7461
  %7485 = vmatmul.bf16.gmra.mxu0 %v7420
  %v7486 = vpop.f32.mrf.mxu0
  %v7487 = vadd.f32 %v7428, %v7486
  %v7488 = vpop.f32.mrf.mxu0
  %v7489 = vadd.f32 %v7428, %v7488
  %7490 = vmatmul.bf16.gmra.mxu0 %v7421
  %v7491 = vpop.f32.mrf.mxu0
  %v7492 = vadd.f32 %v7428, %v7491
  %v7493 = vpop.f32.mrf.mxu0
  %v7494 = vadd.f32 %v7428, %v7493
  %7495 = vmatmul.bf16.gmra.mxu0 %v7422
  %v7496 = vpop.f32.mrf.mxu0
  %v7497 = vadd.f32 %v7428, %v7496
  %v7498 = vpop.f32.mrf.mxu0
  %v7499 = vadd.f32 %v7428, %v7498
  %7500 = vmatmul.bf16.gmra.mxu0 %v7423
  %v7501 = vpop.f32.mrf.mxu0
  %v7502 = vadd.f32 %v7428, %v7501
  %v7503 = vpop.f32.mrf.mxu0
  %v7504 = vadd.f32 %v7428, %v7503
  %7505 = vmatmul.bf16.gmra.mxu0 %v7424
  %v7506 = vpop.f32.mrf.mxu0
  %v7507 = vadd.f32 %v7428, %v7506
  %v7508 = vpop.f32.mrf.mxu0
  %v7509 = vadd.f32 %v7428, %v7508
  %7510 = vmatmul.bf16.gmra.mxu0 %v7425
  %v7511 = vpop.f32.mrf.mxu0
  %v7512 = vadd.f32 %v7428, %v7511
  %v7513 = vpop.f32.mrf.mxu0
  %v7514 = vadd.f32 %v7428, %v7513
  %7515 = vmatmul.bf16.gmra.mxu0 %v7426
  %v7516 = vpop.f32.mrf.mxu0
  %v7517 = vadd.f32 %v7428, %v7516
  %v7518 = vpop.f32.mrf.mxu0
  %v7519 = vadd.f32 %v7428, %v7518
  %7520 = vmatmul.bf16.gmra.mxu0 %v7427
  %v7521 = vpop.f32.mrf.mxu0
  %v7522 = vadd.f32 %v7428, %v7521
  %v7523 = vpop.f32.mrf.mxu0
  %v7524 = vadd.f32 %v7428, %v7523
  %7525 = vdwg.mxu0
  %v7526 = vadd.f32 %v4080, %v4039
  %v7527 = vperm.slane %v7526, 5
  %v7528 = vmul.f32 %v7487, %v7527
  %v7529 = vmul.f32 %v7489, %v7527
  %v7530 = vmul.f32 %v7492, %v7527
  %v7531 = vmul.f32 %v7494, %v7527
  %v7532 = vmul.f32 %v7497, %v7527
  %v7533 = vmul.f32 %v7499, %v7527
  %v7534 = vmul.f32 %v7502, %v7527
  %v7535 = vmul.f32 %v7504, %v7527
  %v7536 = vadd.f32 %v4080, %v4052
  %v7537 = vperm.slane %v7536, 5
  %v7538 = vmul.f32 %v7507, %v7537
  %v7539 = vmul.f32 %v7509, %v7537
  %v7540 = vmul.f32 %v7512, %v7537
  %v7541 = vmul.f32 %v7514, %v7537
  %v7542 = vmul.f32 %v7517, %v7537
  %v7543 = vmul.f32 %v7519, %v7537
  %v7544 = vmul.f32 %v7522, %v7537
  %v7545 = vmul.f32 %v7524, %v7537
  %v7546 = vadd.f32 %v6752, %v7528
  %v7547 = vadd.f32 %v6753, %v7529
  %v7548 = vadd.f32 %v6754, %v7530
  %v7549 = vadd.f32 %v6755, %v7531
  %v7550 = vadd.f32 %v6756, %v7532
  %v7551 = vadd.f32 %v6757, %v7533
  %v7552 = vadd.f32 %v6758, %v7534
  %v7553 = vadd.f32 %v6759, %v7535
  %v7554 = vadd.f32 %v6760, %v7538
  %v7555 = vadd.f32 %v6761, %v7539
  %v7556 = vadd.f32 %v6762, %v7540
  %v7557 = vadd.f32 %v6763, %v7541
  %v7558 = vadd.f32 %v6764, %v7542
  %v7559 = vadd.f32 %v6765, %v7543
  %v7560 = vadd.f32 %v6766, %v7544
  %v7561 = vadd.f32 %v6767, %v7545
  %v7562 = vld [vmem:[%s5 + $0x1e0] sm:$0x3]
  %v7563 = vsel %vm357, %v7546, 0.0
  %7564 = vadd.xlane.f32.xlu0 %v7563
  %v7565 = vpop.xlane.xlu0 %7564
  %v7566 = vsel %vm357, %v7547, 0.0
  %7567 = vadd.xlane.f32.xlu0 %v7566
  %v7568 = vpop.xlane.xlu0 %7567
  %v7569 = vsel %vm357, %v7548, 0.0
  %7570 = vadd.xlane.f32.xlu0 %v7569
  %v7571 = vpop.xlane.xlu0 %7570
  %v7572 = vsel %vm357, %v7549, 0.0
  %7573 = vadd.xlane.f32.xlu0 %v7572
  %v7574 = vpop.xlane.xlu0 %7573
  %v7575 = vsel %vm357, %v7550, 0.0
  %7576 = vadd.xlane.f32.xlu0 %v7575
  %v7577 = vpop.xlane.xlu0 %7576
  %v7578 = vsel %vm357, %v7551, 0.0
  %7579 = vadd.xlane.f32.xlu0 %v7578
  %v7580 = vpop.xlane.xlu0 %7579
  %v7581 = vsel %vm357, %v7552, 0.0
  %7582 = vadd.xlane.f32.xlu0 %v7581
  %v7583 = vpop.xlane.xlu0 %7582
  %v7584 = vsel %vm357, %v7553, 0.0
  %7585 = vadd.xlane.f32.xlu0 %v7584
  %v7586 = vpop.xlane.xlu0 %7585
  %v7587 = vsel %vm357, %v7554, 0.0
  %7588 = vadd.xlane.f32.xlu0 %v7587
  %v7589 = vpop.xlane.xlu0 %7588
  %v7590 = vsel %vm357, %v7555, 0.0
  %7591 = vadd.xlane.f32.xlu0 %v7590
  %v7592 = vpop.xlane.xlu0 %7591
  %v7593 = vsel %vm357, %v7556, 0.0
  %7594 = vadd.xlane.f32.xlu0 %v7593
  %v7595 = vpop.xlane.xlu0 %7594
  %v7596 = vsel %vm357, %v7557, 0.0
  %7597 = vadd.xlane.f32.xlu0 %v7596
  %v7598 = vpop.xlane.xlu0 %7597
  %v7599 = vsel %vm357, %v7558, 0.0
  %7600 = vadd.xlane.f32.xlu0 %v7599
  %v7601 = vpop.xlane.xlu0 %7600
  %v7602 = vsel %vm357, %v7559, 0.0
  %7603 = vadd.xlane.f32.xlu0 %v7602
  %v7604 = vpop.xlane.xlu0 %7603
  %v7605 = vsel %vm357, %v7560, 0.0
  %7606 = vadd.xlane.f32.xlu0 %v7605
  %v7607 = vpop.xlane.xlu0 %7606
  %v7608 = vsel %vm357, %v7561, 0.0
  %7609 = vadd.xlane.f32.xlu0 %v7608
  %v7610 = vpop.xlane.xlu0 %7609
  %v7611 = vmul.f32 %v7565, %v601
  %v7612 = vmul.f32 %v7568, %v601
  %v7613 = vmul.f32 %v7571, %v601
  %v7614 = vmul.f32 %v7574, %v601
  %v7615 = vmul.f32 %v7577, %v601
  %v7616 = vmul.f32 %v7580, %v601
  %v7617 = vmul.f32 %v7583, %v601
  %v7618 = vmul.f32 %v7586, %v601
  %v7619 = vmul.f32 %v7589, %v601
  %v7620 = vmul.f32 %v7592, %v601
  %v7621 = vmul.f32 %v7595, %v601
  %v7622 = vmul.f32 %v7598, %v601
  %v7623 = vmul.f32 %v7601, %v601
  %v7624 = vmul.f32 %v7604, %v601
  %v7625 = vmul.f32 %v7607, %v601
  %v7626 = vmul.f32 %v7610, %v601
  %v7627 = vsub.f32 %v7546, %v7611
  %v7628 = vsub.f32 %v7547, %v7612
  %v7629 = vsub.f32 %v7548, %v7613
  %v7630 = vsub.f32 %v7549, %v7614
  %v7631 = vsub.f32 %v7550, %v7615
  %v7632 = vsub.f32 %v7551, %v7616
  %v7633 = vsub.f32 %v7552, %v7617
  %v7634 = vsub.f32 %v7553, %v7618
  %v7635 = vsub.f32 %v7554, %v7619
  %v7636 = vsub.f32 %v7555, %v7620
  %v7637 = vsub.f32 %v7556, %v7621
  %v7638 = vsub.f32 %v7557, %v7622
  %v7639 = vsub.f32 %v7558, %v7623
  %v7640 = vsub.f32 %v7559, %v7624
  %v7641 = vsub.f32 %v7560, %v7625
  %v7642 = vsub.f32 %v7561, %v7626
  %v7643 = vmul.f32 %v7627, %v7627
  %v7644 = vmul.f32 %v7628, %v7628
  %v7645 = vmul.f32 %v7629, %v7629
  %v7646 = vmul.f32 %v7630, %v7630
  %v7647 = vmul.f32 %v7631, %v7631
  %v7648 = vmul.f32 %v7632, %v7632
  %v7649 = vmul.f32 %v7633, %v7633
  %v7650 = vmul.f32 %v7634, %v7634
  %v7651 = vmul.f32 %v7635, %v7635
  %v7652 = vmul.f32 %v7636, %v7636
  %v7653 = vmul.f32 %v7637, %v7637
  %v7654 = vmul.f32 %v7638, %v7638
  %v7655 = vmul.f32 %v7639, %v7639
  %v7656 = vmul.f32 %v7640, %v7640
  %v7657 = vmul.f32 %v7641, %v7641
  %v7658 = vmul.f32 %v7642, %v7642
  %v7659 = vsel %vm357, %v7643, 0.0
  %7660 = vadd.xlane.f32.xlu0 %v7659
  %v7661 = vpop.xlane.xlu0 %7660
  %v7662 = vsel %vm357, %v7644, 0.0
  %7663 = vadd.xlane.f32.xlu0 %v7662
  %v7664 = vpop.xlane.xlu0 %7663
  %v7665 = vsel %vm357, %v7645, 0.0
  %7666 = vadd.xlane.f32.xlu0 %v7665
  %v7667 = vpop.xlane.xlu0 %7666
  %v7668 = vsel %vm357, %v7646, 0.0
  %7669 = vadd.xlane.f32.xlu0 %v7668
  %v7670 = vpop.xlane.xlu0 %7669
  %v7671 = vsel %vm357, %v7647, 0.0
  %7672 = vadd.xlane.f32.xlu0 %v7671
  %v7673 = vpop.xlane.xlu0 %7672
  %v7674 = vsel %vm357, %v7648, 0.0
  %7675 = vadd.xlane.f32.xlu0 %v7674
  %v7676 = vpop.xlane.xlu0 %7675
  %v7677 = vsel %vm357, %v7649, 0.0
  %7678 = vadd.xlane.f32.xlu0 %v7677
  %v7679 = vpop.xlane.xlu0 %7678
  %v7680 = vsel %vm357, %v7650, 0.0
  %7681 = vadd.xlane.f32.xlu0 %v7680
  %v7682 = vpop.xlane.xlu0 %7681
  %v7683 = vsel %vm357, %v7651, 0.0
  %7684 = vadd.xlane.f32.xlu0 %v7683
  %v7685 = vpop.xlane.xlu0 %7684
  %v7686 = vsel %vm357, %v7652, 0.0
  %7687 = vadd.xlane.f32.xlu0 %v7686
  %v7688 = vpop.xlane.xlu0 %7687
  %v7689 = vsel %vm357, %v7653, 0.0
  %7690 = vadd.xlane.f32.xlu0 %v7689
  %v7691 = vpop.xlane.xlu0 %7690
  %v7692 = vsel %vm357, %v7654, 0.0
  %7693 = vadd.xlane.f32.xlu0 %v7692
  %v7694 = vpop.xlane.xlu0 %7693
  %v7695 = vsel %vm357, %v7655, 0.0
  %7696 = vadd.xlane.f32.xlu0 %v7695
  %v7697 = vpop.xlane.xlu0 %7696
  %v7698 = vsel %vm357, %v7656, 0.0
  %7699 = vadd.xlane.f32.xlu0 %v7698
  %v7700 = vpop.xlane.xlu0 %7699
  %v7701 = vsel %vm357, %v7657, 0.0
  %7702 = vadd.xlane.f32.xlu0 %v7701
  %v7703 = vpop.xlane.xlu0 %7702
  %v7704 = vsel %vm357, %v7658, 0.0
  %7705 = vadd.xlane.f32.xlu0 %v7704
  %v7706 = vpop.xlane.xlu0 %7705
  %v7707 = vmul.f32 %v7661, %v601
  %v7708 = vmul.f32 %v7664, %v601
  %v7709 = vmul.f32 %v7667, %v601
  %v7710 = vmul.f32 %v7670, %v601
  %v7711 = vmul.f32 %v7673, %v601
  %v7712 = vmul.f32 %v7676, %v601
  %v7713 = vmul.f32 %v7679, %v601
  %v7714 = vmul.f32 %v7682, %v601
  %v7715 = vmul.f32 %v7685, %v601
  %v7716 = vmul.f32 %v7688, %v601
  %v7717 = vmul.f32 %v7691, %v601
  %v7718 = vmul.f32 %v7694, %v601
  %v7719 = vmul.f32 %v7697, %v601
  %v7720 = vmul.f32 %v7700, %v601
  %v7721 = vmul.f32 %v7703, %v601
  %v7722 = vmul.f32 %v7706, %v601
  %v7723 = vadd.f32 %v7707, 1e-06
  %v7724 = vadd.f32 %v7708, 1e-06
  %v7725 = vadd.f32 %v7709, 1e-06
  %v7726 = vadd.f32 %v7710, 1e-06
  %v7727 = vadd.f32 %v7711, 1e-06
  %v7728 = vadd.f32 %v7712, 1e-06
  %v7729 = vadd.f32 %v7713, 1e-06
  %v7730 = vadd.f32 %v7714, 1e-06
  %v7731 = vadd.f32 %v7715, 1e-06
  %v7732 = vadd.f32 %v7716, 1e-06
  %v7733 = vadd.f32 %v7717, 1e-06
  %v7734 = vadd.f32 %v7718, 1e-06
  %v7735 = vadd.f32 %v7719, 1e-06
  %v7736 = vadd.f32 %v7720, 1e-06
  %v7737 = vadd.f32 %v7721, 1e-06
  %v7738 = vadd.f32 %v7722, 1e-06
  %v7739 = vrsqrt.pop %v7723
  %v7740 = vmul.f32 %v7739, %v7723
  %v7741 = vmul.f32 %v7740, %v7739
  %v7742 = vmul.f32 0.5, %v7741
  %v7743 = vsub.f32 1.5, %v7742
  %v7744 = vmul.f32 %v7739, %v7743
  %vm7745 = vweird.f32 %v7723
  %vm7746 = vweird.f32 %v7739
  %vm7747 = vmor %vm7745, %vm7746
  %v7748 = vsel %vm7747, %v7739, %v7744
  %v7749 = vrsqrt.pop %v7724
  %v7750 = vmul.f32 %v7749, %v7724
  %v7751 = vmul.f32 %v7750, %v7749
  %v7752 = vmul.f32 0.5, %v7751
  %v7753 = vsub.f32 1.5, %v7752
  %v7754 = vmul.f32 %v7749, %v7753
  %vm7755 = vweird.f32 %v7724
  %vm7756 = vweird.f32 %v7749
  %vm7757 = vmor %vm7755, %vm7756
  %v7758 = vsel %vm7757, %v7749, %v7754
  %v7759 = vrsqrt.pop %v7725
  %v7760 = vmul.f32 %v7759, %v7725
  %v7761 = vmul.f32 %v7760, %v7759
  %v7762 = vmul.f32 0.5, %v7761
  %v7763 = vsub.f32 1.5, %v7762
  %v7764 = vmul.f32 %v7759, %v7763
  %vm7765 = vweird.f32 %v7725
  %vm7766 = vweird.f32 %v7759
  %vm7767 = vmor %vm7765, %vm7766
  %v7768 = vsel %vm7767, %v7759, %v7764
  %v7769 = vrsqrt.pop %v7726
  %v7770 = vmul.f32 %v7769, %v7726
  %v7771 = vmul.f32 %v7770, %v7769
  %v7772 = vmul.f32 0.5, %v7771
  %v7773 = vsub.f32 1.5, %v7772
  %v7774 = vmul.f32 %v7769, %v7773
  %vm7775 = vweird.f32 %v7726
  %vm7776 = vweird.f32 %v7769
  %vm7777 = vmor %vm7775, %vm7776
  %v7778 = vsel %vm7777, %v7769, %v7774
  %v7779 = vrsqrt.pop %v7727
  %v7780 = vmul.f32 %v7779, %v7727
  %v7781 = vmul.f32 %v7780, %v7779
  %v7782 = vmul.f32 0.5, %v7781
  %v7783 = vsub.f32 1.5, %v7782
  %v7784 = vmul.f32 %v7779, %v7783
  %vm7785 = vweird.f32 %v7727
  %vm7786 = vweird.f32 %v7779
  %vm7787 = vmor %vm7785, %vm7786
  %v7788 = vsel %vm7787, %v7779, %v7784
  %v7789 = vrsqrt.pop %v7728
  %v7790 = vmul.f32 %v7789, %v7728
  %v7791 = vmul.f32 %v7790, %v7789
  %v7792 = vmul.f32 0.5, %v7791
  %v7793 = vsub.f32 1.5, %v7792
  %v7794 = vmul.f32 %v7789, %v7793
  %vm7795 = vweird.f32 %v7728
  %vm7796 = vweird.f32 %v7789
  %vm7797 = vmor %vm7795, %vm7796
  %v7798 = vsel %vm7797, %v7789, %v7794
  %v7799 = vrsqrt.pop %v7729
  %v7800 = vmul.f32 %v7799, %v7729
  %v7801 = vmul.f32 %v7800, %v7799
  %v7802 = vmul.f32 0.5, %v7801
  %v7803 = vsub.f32 1.5, %v7802
  %v7804 = vmul.f32 %v7799, %v7803
  %vm7805 = vweird.f32 %v7729
  %vm7806 = vweird.f32 %v7799
  %vm7807 = vmor %vm7805, %vm7806
  %v7808 = vsel %vm7807, %v7799, %v7804
  %v7809 = vrsqrt.pop %v7730
  %v7810 = vmul.f32 %v7809, %v7730
  %v7811 = vmul.f32 %v7810, %v7809
  %v7812 = vmul.f32 0.5, %v7811
  %v7813 = vsub.f32 1.5, %v7812
  %v7814 = vmul.f32 %v7809, %v7813
  %vm7815 = vweird.f32 %v7730
  %vm7816 = vweird.f32 %v7809
  %vm7817 = vmor %vm7815, %vm7816
  %v7818 = vsel %vm7817, %v7809, %v7814
  %v7819 = vrsqrt.pop %v7731
  %v7820 = vmul.f32 %v7819, %v7731
  %v7821 = vmul.f32 %v7820, %v7819
  %v7822 = vmul.f32 0.5, %v7821
  %v7823 = vsub.f32 1.5, %v7822
  %v7824 = vmul.f32 %v7819, %v7823
  %vm7825 = vweird.f32 %v7731
  %vm7826 = vweird.f32 %v7819
  %vm7827 = vmor %vm7825, %vm7826
  %v7828 = vsel %vm7827, %v7819, %v7824
  %v7829 = vrsqrt.pop %v7732
  %v7830 = vmul.f32 %v7829, %v7732
  %v7831 = vmul.f32 %v7830, %v7829
  %v7832 = vmul.f32 0.5, %v7831
  %v7833 = vsub.f32 1.5, %v7832
  %v7834 = vmul.f32 %v7829, %v7833
  %vm7835 = vweird.f32 %v7732
  %vm7836 = vweird.f32 %v7829
  %vm7837 = vmor %vm7835, %vm7836
  %v7838 = vsel %vm7837, %v7829, %v7834
  %v7839 = vrsqrt.pop %v7733
  %v7840 = vmul.f32 %v7839, %v7733
  %v7841 = vmul.f32 %v7840, %v7839
  %v7842 = vmul.f32 0.5, %v7841
  %v7843 = vsub.f32 1.5, %v7842
  %v7844 = vmul.f32 %v7839, %v7843
  %vm7845 = vweird.f32 %v7733
  %vm7846 = vweird.f32 %v7839
  %vm7847 = vmor %vm7845, %vm7846
  %v7848 = vsel %vm7847, %v7839, %v7844
  %v7849 = vrsqrt.pop %v7734
  %v7850 = vmul.f32 %v7849, %v7734
  %v7851 = vmul.f32 %v7850, %v7849
  %v7852 = vmul.f32 0.5, %v7851
  %v7853 = vsub.f32 1.5, %v7852
  %v7854 = vmul.f32 %v7849, %v7853
  %vm7855 = vweird.f32 %v7734
  %vm7856 = vweird.f32 %v7849
  %vm7857 = vmor %vm7855, %vm7856
  %v7858 = vsel %vm7857, %v7849, %v7854
  %v7859 = vrsqrt.pop %v7735
  %v7860 = vmul.f32 %v7859, %v7735
  %v7861 = vmul.f32 %v7860, %v7859
  %v7862 = vmul.f32 0.5, %v7861
  %v7863 = vsub.f32 1.5, %v7862
  %v7864 = vmul.f32 %v7859, %v7863
  %vm7865 = vweird.f32 %v7735
  %vm7866 = vweird.f32 %v7859
  %vm7867 = vmor %vm7865, %vm7866
  %v7868 = vsel %vm7867, %v7859, %v7864
  %v7869 = vrsqrt.pop %v7736
  %v7870 = vmul.f32 %v7869, %v7736
  %v7871 = vmul.f32 %v7870, %v7869
  %v7872 = vmul.f32 0.5, %v7871
  %v7873 = vsub.f32 1.5, %v7872
  %v7874 = vmul.f32 %v7869, %v7873
  %vm7875 = vweird.f32 %v7736
  %vm7876 = vweird.f32 %v7869
  %vm7877 = vmor %vm7875, %vm7876
  %v7878 = vsel %vm7877, %v7869, %v7874
  %v7879 = vrsqrt.pop %v7737
  %v7880 = vmul.f32 %v7879, %v7737
  %v7881 = vmul.f32 %v7880, %v7879
  %v7882 = vmul.f32 0.5, %v7881
  %v7883 = vsub.f32 1.5, %v7882
  %v7884 = vmul.f32 %v7879, %v7883
  %vm7885 = vweird.f32 %v7737
  %vm7886 = vweird.f32 %v7879
  %vm7887 = vmor %vm7885, %vm7886
  %v7888 = vsel %vm7887, %v7879, %v7884
  %v7889 = vrsqrt.pop %v7738
  %v7890 = vmul.f32 %v7889, %v7738
  %v7891 = vmul.f32 %v7890, %v7889
  %v7892 = vmul.f32 0.5, %v7891
  %v7893 = vsub.f32 1.5, %v7892
  %v7894 = vmul.f32 %v7889, %v7893
  %vm7895 = vweird.f32 %v7738
  %vm7896 = vweird.f32 %v7889
  %vm7897 = vmor %vm7895, %vm7896
  %v7898 = vsel %vm7897, %v7889, %v7894
  %v7899 = vmul.f32 %v7627, %v7748
  %v7900 = vmul.f32 %v7628, %v7758
  %v7901 = vmul.f32 %v7629, %v7768
  %v7902 = vmul.f32 %v7630, %v7778
  %v7903 = vmul.f32 %v7631, %v7788
  %v7904 = vmul.f32 %v7632, %v7798
  %v7905 = vmul.f32 %v7633, %v7808
  %v7906 = vmul.f32 %v7634, %v7818
  %v7907 = vmul.f32 %v7635, %v7828
  %v7908 = vmul.f32 %v7636, %v7838
  %v7909 = vmul.f32 %v7637, %v7848
  %v7910 = vmul.f32 %v7638, %v7858
  %v7911 = vmul.f32 %v7639, %v7868
  %v7912 = vmul.f32 %v7640, %v7878
  %v7913 = vmul.f32 %v7641, %v7888
  %v7914 = vmul.f32 %v7642, %v7898
  %v7915 = vadd.f32 %v7562, %v371
  %v7917 = vrot.slane %v371, 7
  %v7919 = vadd.f32 %v7562, %v7917
  %v7920 = vadd.f32 %v7919, 1.0
  %v7921 = vperm.slane %v7920, 1
  %v7922 = vmul.f32 %v7899, %v7921
  %v7923 = vmul.f32 %v7900, %v7921
  %v7924 = vmul.f32 %v7901, %v7921
  %v7925 = vmul.f32 %v7902, %v7921
  %v7926 = vmul.f32 %v7903, %v7921
  %v7927 = vmul.f32 %v7904, %v7921
  %v7928 = vmul.f32 %v7905, %v7921
  %v7929 = vmul.f32 %v7906, %v7921
  %v7930 = vperm.slane %v7915, 0
  %v7931 = vadd.f32 %v7922, %v7930
  %v7932 = vadd.f32 %v7923, %v7930
  %v7933 = vadd.f32 %v7924, %v7930
  %v7934 = vadd.f32 %v7925, %v7930
  %v7935 = vadd.f32 %v7926, %v7930
  %v7936 = vadd.f32 %v7927, %v7930
  %v7937 = vadd.f32 %v7928, %v7930
  %v7938 = vadd.f32 %v7929, %v7930
  %v7939 = vrot.slane %v371, 1
  %v7941 = vadd.f32 %v7562, %v7939
  %v7942 = vadd.f32 %v7915, 1.0
  %v7943 = vperm.slane %v7942, 1
  %v7944 = vmul.f32 %v7907, %v7943
  %v7945 = vmul.f32 %v7908, %v7943
  %v7946 = vmul.f32 %v7909, %v7943
  %v7947 = vmul.f32 %v7910, %v7943
  %v7948 = vmul.f32 %v7911, %v7943
  %v7949 = vmul.f32 %v7912, %v7943
  %v7950 = vmul.f32 %v7913, %v7943
  %v7951 = vmul.f32 %v7914, %v7943
  %v7952 = vperm.slane %v7941, 0
  %v7953 = vadd.f32 %v7944, %v7952
  %v7954 = vadd.f32 %v7945, %v7952
  %v7955 = vadd.f32 %v7946, %v7952
  %v7956 = vadd.f32 %v7947, %v7952
  %v7957 = vadd.f32 %v7948, %v7952
  %v7958 = vadd.f32 %v7949, %v7952
  %v7959 = vadd.f32 %v7950, %v7952
  %v7960 = vadd.f32 %v7951, %v7952
  %v7961 = vld [vmem:[%s4 + $0x410] sm:$0xf]
  %v7962 = vld [vmem:[%s4 + $0x418] sm:$0xf]
  %v7963 = vld [vmem:[%s4 + $0x420] sm:$0xf]
  %v7964 = vld [vmem:[%s4 + $0x428] sm:$0xf]
  %v7965 = vpack.c.bf16 %v7932, %v7931
  %v7966 = vpack.c.bf16 %v7934, %v7933
  %v7967 = vpack.c.bf16 %v7936, %v7935
  %v7968 = vpack.c.bf16 %v7938, %v7937
  %v7969 = vpack.c.bf16 %v7954, %v7953
  %v7970 = vpack.c.bf16 %v7956, %v7955
  %v7971 = vpack.c.bf16 %v7958, %v7957
  %v7972 = vpack.c.bf16 %v7960, %v7959
  %v7973 = vld [vmem:[%s5 + $0x1f0] ss:$0 sm:$0xff]
  %v7978 = vunpack.c.l.b16 %v7961
  %v7979 = vunpack.c.l.b16 %v7962
  %v7980 = vunpack.c.l.b16 %v7963
  %v7981 = vunpack.c.l.b16 %v7964
  %v7982 = vpack.c.b16 %v7979, %v7978
  %v7983 = vpack.c.b16 %v7981, %v7980
  %v7987 = vsel %vm357, %v7965, 0
  %v7990 = vsel %vm357, %v7966, 0
  %v7993 = vsel %vm357, %v7967, 0
  %v7996 = vsel %vm357, %v7968, 0
  %v7999 = vsel %vm357, %v7969, 0
  %v8002 = vsel %vm357, %v7970, 0
  %v8005 = vsel %vm357, %v7971, 0
  %v8008 = vsel %vm357, %v7972, 0
  %8010 = vmatpush.bf16.msra.mxu0 0
  %8011 = vmatpush.bf16.msra.mxu0 0
  %8012 = vmatpush.bf16.msra.mxu0 0
  %8013 = vmatpush.bf16.msra.mxu0 0
  %8014 = vmatpush.bf16.msra.mxu0 0
  %8015 = vmatpush.bf16.msra.mxu0 0
  %8016 = vmatpush.bf16.msra.mxu0 %v7983
  %8017 = vmatpush.bf16.msra.mxu0 %v7982
  %8018 = vmatmul.bf16.gmra.mxu0 %v7987
  %v8019 = vpop.f32.mrf.mxu0
  %v8020 = vadd.f32 %v7973, %v8019
  %v8021 = vpop.f32.mrf.mxu0
  %v8022 = vadd.f32 %v7973, %v8021
  %8023 = vmatmul.bf16.gmra.mxu0 %v7990
  %v8024 = vpop.f32.mrf.mxu0
  %v8025 = vadd.f32 %v7973, %v8024
  %v8026 = vpop.f32.mrf.mxu0
  %v8027 = vadd.f32 %v7973, %v8026
  %8028 = vmatmul.bf16.gmra.mxu0 %v7993
  %v8029 = vpop.f32.mrf.mxu0
  %v8030 = vadd.f32 %v7973, %v8029
  %v8031 = vpop.f32.mrf.mxu0
  %v8032 = vadd.f32 %v7973, %v8031
  %8033 = vmatmul.bf16.gmra.mxu0 %v7996
  %v8034 = vpop.f32.mrf.mxu0
  %v8035 = vadd.f32 %v7973, %v8034
  %v8036 = vpop.f32.mrf.mxu0
  %v8037 = vadd.f32 %v7973, %v8036
  %8038 = vmatmul.bf16.gmra.mxu0 %v7999
  %v8039 = vpop.f32.mrf.mxu0
  %v8040 = vadd.f32 %v7973, %v8039
  %v8041 = vpop.f32.mrf.mxu0
  %v8042 = vadd.f32 %v7973, %v8041
  %8043 = vmatmul.bf16.gmra.mxu0 %v8002
  %v8044 = vpop.f32.mrf.mxu0
  %v8045 = vadd.f32 %v7973, %v8044
  %v8046 = vpop.f32.mrf.mxu0
  %v8047 = vadd.f32 %v7973, %v8046
  %8048 = vmatmul.bf16.gmra.mxu0 %v8005
  %v8049 = vpop.f32.mrf.mxu0
  %v8050 = vadd.f32 %v7973, %v8049
  %v8051 = vpop.f32.mrf.mxu0
  %v8052 = vadd.f32 %v7973, %v8051
  %8053 = vmatmul.bf16.gmra.mxu0 %v8008
  %v8054 = vpop.f32.mrf.mxu0
  %v8055 = vadd.f32 %v7973, %v8054
  %v8056 = vpop.f32.mrf.mxu0
  %v8057 = vadd.f32 %v7973, %v8056
  %8058 = vdwg.mxu0
  %8059 = vst [vmem:[%s6] sm:$0xff] %v8020
  %8060 = vst [vmem:[%s6 + $0x8] sm:$0xff] %v8022
  %8061 = vst [vmem:[%s6 + $0x10] sm:$0xff] %v8025
  %8062 = vst [vmem:[%s6 + $0x18] sm:$0xff] %v8027
  %8063 = vst [vmem:[%s6 + $0x20] sm:$0xff] %v8030
  %8064 = vst [vmem:[%s6 + $0x28] sm:$0xff] %v8032
  %8065 = vst [vmem:[%s6 + $0x30] sm:$0xff] %v8035
  %8066 = vst [vmem:[%s6 + $0x38] sm:$0xff] %v8037
  %8067 = vst [vmem:[%s6 + $0x40] sm:$0xff] %v8040
  %8068 = vst [vmem:[%s6 + $0x48] sm:$0xff] %v8042
  %8069 = vst [vmem:[%s6 + $0x50] sm:$0xff] %v8045
  %8070 = vst [vmem:[%s6 + $0x58] sm:$0xff] %v8047
  %8071 = vst [vmem:[%s6 + $0x60] sm:$0xff] %v8050
  %8072 = vst [vmem:[%s6 + $0x68] sm:$0xff] %v8052
  %8073 = vst [vmem:[%s6 + $0x70] sm:$0xff] %v8055
  %8074 = vst [vmem:[%s6 + $0x78] sm:$0xff] %v8057
  // Predicated region
  $region26: #{forward.1} parent=0 // pred_check
    _
  $region27: #{forward.1} parent=0 // pred_check_branch
    %8076 = sbr.rel (0) target = $region29
  $region28: #{forward.1} parent=0 // pred_region
    _
  $region29: #{forward.1} parent=0 // pred_fallthru
    _
  // Predicated region
  $region30: #{forward.1} parent=0 // pred_check
    _
  $region31: #{forward.1} parent=0 // pred_check_branch
    %8078 = sbr.rel (0) target = $region33
  $region32: #{forward.1} parent=0 // pred_region
    _
  $region33: #{forward.1} parent=0 // pred_fallthru
    _

</llo_original>
